<compile_context>
chip_gen: v6e
topology: v6e:2x2x1
jax: 0.10.0
libtpu: 0.0.40
codegen_flags: <defaults>
</compile_context>

<pallas_src>
import functools
import math

import jax
import jax.numpy as jnp
from jax import lax
from jax.experimental import pallas as pl
from jax.experimental.pallas import tpu as pltpu

_LANES = 128  # lane width of the packed output slab


def _act_kernel(B, T, D, H, max_ponder, epsilon,
                x_ref, w_ref, scal_ref, out_ref):
    """Single-invocation ACT forward.

    x_ref   : (T*B, D)    VMEM  time-major input rows
    w_ref   : (D+H+4, H)  VMEM  packed: [0:D]     = W_ih[:, :D]^T
                                         [D:D+H]   = W_hh^T
                                         [D+H]     = b_ih + b_hh
                                         [D+H+1]   = W_ih[:, D] (flag column)
                                         [D+H+2]   = ponder_linear.weight
                                         [D+H+3]   = fc1.weight
    scal_ref: (2,)        SMEM  [ponder_linear.bias, fc1.bias]
    out_ref : (B, 128)    VMEM  lanes [0:T)=fc1(rnn_out), [T:2T)=ponder_times,
                                [2T]=ponder_cost, rest zero.
    """
    thresh = jnp.float32(1.0 - epsilon)
    r = D + H

    wx = w_ref[0:D, :]                 # (D, H)
    whh = w_ref[D:r, :]                # (H, H)
    b_total = w_ref[r:r + 1, :]        # (1, H) b_ih + b_hh
    w_flag = w_ref[r + 1:r + 2, :]     # (1, H) flag column of W_ih
    wp_row = w_ref[r + 2:r + 3, :]     # (1, H) ponder_linear weight
    wfc_row = w_ref[r + 3:r + 4, :]    # (1, H) fc1 weight

    # Scalar -> vector broadcasts hoisted once (not re-materialized 48x).
    bp_col = jnp.full((B, 1), scal_ref[0], jnp.float32)
    bfc_col = jnp.full((B, 1), scal_ref[1], jnp.float32)

    # Input projection for every time step at once, outside the serial region.
    xc_all = jnp.dot(x_ref[...], wx,
                     preferred_element_type=jnp.float32) + b_total   # (T*B, H)

    def halting(h_state):
        # sigmoid(ponder_linear(h)): VPU mul + XLU lane-reduce (MXU stays free).
        return jax.nn.sigmoid(
            jnp.sum(h_state * wp_row, axis=-1, keepdims=True) + bp_col)

    hx = jnp.zeros((B, H), jnp.float32)      # carried hidden state
    pcost = jnp.zeros((B, 1), jnp.float32)   # ponder_cost accumulator
    fc_cols = []
    step_cols = []

    for t in range(T):                       # static unroll (T tiny)
        xc0 = xc_all[t * B:(t + 1) * B, :]   # (B, H), flag = 0
        xc1 = xc0 + w_flag                   # flag = 1 (ponder steps >= 1)

        # ---- ponder step 0 (all rows active) peeled out of the loop --------
        hx = jnp.tanh(xc0 + jnp.dot(hx, whh,
                                    preferred_element_type=jnp.float32))
        h = halting(hx)
        accum_h = h
        accum_hx = hx + h * hx               # p == h at step 0 (sigmoid < 1)
        step_count = jnp.ones((B, 1), jnp.float32)
        spc = jnp.zeros((B, 1), jnp.float32)  # step_ponder_cost (= -0 at step 0)

        # ---- ponder steps 1..max_ponder-1, masked (no scalar early exit) ----
        def body(_, carry):
            hx, accum_h, accum_hx, step_count, spc = carry
            active = accum_h < thresh                   # (B, 1) selector
            spc = jnp.where(active, -accum_h, spc)
            # Serial chain is just matmul -> tanh: hx is carried
            # UNconditionally; all consumers of a post-halt hx are gated below.
            hx = jnp.tanh(
                xc1 + jnp.dot(hx, whh, preferred_element_type=jnp.float32))
            h = halting(hx)
            accum_h_new = accum_h + h
            p = h - jnp.maximum(accum_h_new - 1.0, 0.0)  # h - clamp(accum_h-1,0)
            accum_hx = jnp.where(active, accum_hx + hx + p * hx, accum_hx)
            accum_h = jnp.where(active, accum_h_new, accum_h)
            step_count = jnp.where(active, step_count + 1.0, step_count)
            return hx, accum_h, accum_hx, step_count, spc

        hx, accum_h, accum_hx, step_count, spc = lax.fori_loop(
            1, max_ponder, body,
            (hx, accum_h, accum_hx, step_count, spc), unroll=True)

        # hx for the next time step: exact division (off the critical path).
        hx = accum_hx / step_count
        pcost = pcost + spc
        fc_cols.append(jnp.sum(hx * wfc_row, axis=-1, keepdims=True) + bfc_col)
        step_cols.append(step_count)

    # One unmasked (B, 128) store instead of a zero pre-fill + 9 masked stores.
    pad = jnp.zeros((B, _LANES - 2 * T - 1), jnp.float32)
    out_ref[...] = jnp.concatenate(fc_cols + step_cols + [pcost, pad], axis=1)


def _build_call(B, T, D, H, max_ponder, epsilon):
    kernel = functools.partial(_act_kernel, B, T, D, H,
                               int(max_ponder), float(epsilon))
    return pl.pallas_call(
        kernel,
        out_shape=jax.ShapeDtypeStruct((B, _LANES), jnp.float32),
        in_specs=[
            pl.BlockSpec(memory_space=pltpu.MemorySpace.VMEM),   # x (T*B, D)
            pl.BlockSpec(memory_space=pltpu.MemorySpace.VMEM),   # weight slab
            pl.BlockSpec(memory_space=pltpu.MemorySpace.SMEM),   # [bp, bfc]
        ],
        out_specs=pl.BlockSpec(memory_space=pltpu.MemorySpace.VMEM),
    )


@functools.partial(jax.jit, static_argnames=("max_ponder", "epsilon"))
def logic_act_forward(x_btd, params, *, max_ponder, epsilon):
    """x_btd: (B, T, D) float32, batch-first like the PyTorch module."""
    B, T, D = x_btd.shape
    H = params["w"].shape[1]
    assert 2 * T + 1 <= _LANES
    # Time-major 2-D layout so the kernel does one input-projection matmul.
    # (Layout plumbing only; fuses into the surrounding jit.)
    x_tbd = jnp.transpose(x_btd.astype(jnp.float32), (1, 0, 2)).reshape(T * B, D)
    slab = _build_call(B, T, D, H, max_ponder, epsilon)(
        x_tbd, params["w"], params["scal"])

    logits = slab[:, :T][:, :, None]   # fc1(rnn_out): (B, T, 1) batch-first
    ptimes = slab[:, T:2 * T]          # (B, T) step counts
    pcost = slab[:, 2 * T]             # (B,)

    # torch: .squeeze(1).squeeze(1) only squeezes size-1 dims.
    def _torch_squeeze(a, dim):
        return jnp.squeeze(a, axis=dim) if a.shape[dim] == 1 else a
    out = _torch_squeeze(_torch_squeeze(logits, 1), 1)
    return out, {"ponder_cost": pcost, "ponder_times": ptimes}


def init_raw_params(key, input_size, hidden_size):
    """Deterministic init matching the PyTorch module's reset_parameters shapes."""
    stdv = 1.0 / math.sqrt(hidden_size)
    ks = jax.random.split(key, 7)
    u = lambda k, shape: jax.random.uniform(k, shape, jnp.float32, -stdv, stdv)
    return {
        "w_ih": u(ks[0], (hidden_size, input_size + 1)),  # RNNCell.weight_ih (x+flag)
        "b_ih": u(ks[1], (hidden_size,)),
        "w_hh": u(ks[2], (hidden_size, hidden_size)),
        "b_hh": u(ks[3], (hidden_size,)),
        "w_p": u(ks[4], (1, hidden_size)),                # ponder_linear.weight
        "b_p": jnp.ones((1,), jnp.float32),               # ponder_linear.bias.fill_(1)
        "w_fc": u(ks[5], (1, hidden_size)),               # fc1.weight
        "b_fc": u(ks[6], (1,)),                           # fc1.bias
    }


def pack_params(raw, input_size):
    """Pack weights into one VMEM slab + one SMEM scalar pair (3 input DMAs)."""
    wslab = jnp.concatenate([
        jnp.transpose(raw["w_ih"][:, :input_size]),       # (D, H)
        jnp.transpose(raw["w_hh"]),                       # (H, H)
        (raw["b_ih"] + raw["b_hh"])[None, :],             # (1, H) combined bias
        raw["w_ih"][:, input_size][None, :],              # (1, H) flag column
        raw["w_p"],                                       # (1, H)
        raw["w_fc"],                                      # (1, H)
    ], axis=0).astype(jnp.float32)                        # (D+H+4, H)
    scal = jnp.array([raw["b_p"][0], raw["b_fc"][0]], jnp.float32)
    return {"w": wslab, "scal": scal}


@functools.partial(jax.jit, static_argnames=("max_ponder", "epsilon"))
def reference_forward(x_btd, raw, *, max_ponder, epsilon):
    """Pure-JAX mirror of the PyTorch LogicACTModel forward (RNNCell path)."""
    B, T, _ = x_btd.shape
    H = raw["w_hh"].shape[0]
    dot = functools.partial(jnp.dot, precision=jax.lax.Precision.HIGHEST)

    hx = jnp.zeros((B, H), jnp.float32)
    ponder_cost = jnp.zeros((B,), jnp.float32)
    hx_list, pt_list = [], []
    for t in range(T):
        x_row = x_btd[:, t, :]
        accum_h = jnp.zeros((B,), jnp.float32)
        accum_hx = jnp.zeros((B, H), jnp.float32)
        selector = jnp.ones((B,), bool)
        step_count = jnp.zeros((B,), jnp.float32)
        spc = jnp.zeros((B,), jnp.float32)
        flag = 0.0
        for _ in range(max_ponder):
            spc = jnp.where(selector, -accum_h, spc)
            x_flag = jnp.concatenate(
                [x_row, jnp.full((B, 1), flag, jnp.float32)], axis=1)
            hx_new = jnp.tanh(dot(x_flag, raw["w_ih"].T) + raw["b_ih"]
                              + dot(hx, raw["w_hh"].T) + raw["b_hh"])
            hx = jnp.where(selector[:, None], hx_new, hx)
            h = jax.nn.sigmoid(dot(hx_new, raw["w_p"].T)[:, 0] + raw["b_p"][0])
            accum_h_new = accum_h + h
            p = h - jnp.maximum(accum_h_new - 1.0, 0.0)
            accum_hx = jnp.where(selector[:, None],
                                 accum_hx + hx_new + p[:, None] * hx_new,
                                 accum_hx)
            accum_h = jnp.where(selector, accum_h_new, accum_h)
            step_count = jnp.where(selector, step_count + 1.0, step_count)
            selector = accum_h < (1.0 - epsilon)
            flag = 1.0
        ponder_cost = ponder_cost + spc
        hx = accum_hx / step_count[:, None]
        hx_list.append(hx)
        pt_list.append(step_count)
    rnn_out = jnp.stack(hx_list, axis=1)                       # (B, T, H)
    logits = dot(rnn_out, raw["w_fc"].T) + raw["b_fc"]         # (B, T, 1)
    return logits, ponder_cost, jnp.stack(pt_list, axis=1)


if __name__ == "__main__":
    # config: logic_rnn_type='RNN', logic_input_size=16, logic_rnn_size=32,
    #         act_max_ponder=12, act_epsilon=0.01
    B, T, D, H = 8, 4, 16, 32
    MAX_PONDER, EPSILON = 12, 0.01

    key = jax.random.PRNGKey(0)
    kx, kp = jax.random.split(key)
    x = jax.random.normal(kx, (B, T, D), jnp.float32)
    raw = init_raw_params(kp, D, H)
    params = pack_params(raw, D)

    out, ponder = logic_act_forward(x, params,
                                    max_ponder=MAX_PONDER, epsilon=EPSILON)
    out = jax.block_until_ready(out)
    pc = jax.block_until_ready(ponder["ponder_cost"])
    pt = jax.block_until_ready(ponder["ponder_times"])

    assert out.shape == (B, T, 1)       # squeeze(1) is a no-op since T != 1
    assert pc.shape == (B,)
    assert pt.shape == (B, T)
    assert bool(jnp.all(jnp.isfinite(out)))
    assert bool(jnp.all(pt >= 1.0))

    # Pure-JAX reference check (guards the critical-path `where` removal).
    ref_out, ref_pc, ref_pt = reference_forward(
        x, raw, max_ponder=MAX_PONDER, epsilon=EPSILON)
    ref_out = jax.block_until_ready(ref_out)
    assert bool(jnp.array_equal(pt, ref_pt)), "ponder_times mismatch vs reference"
    assert bool(jnp.allclose(out, ref_out, rtol=1e-2, atol=1e-2)), (
        "logits mismatch, max abs err = %g" % float(jnp.max(jnp.abs(out - ref_out))))
    assert bool(jnp.allclose(pc, ref_pc, rtol=1e-2, atol=1e-2)), (
        "ponder_cost mismatch, max abs err = %g" % float(jnp.max(jnp.abs(pc - ref_pc))))

    print("KERNEL_OK")
</pallas_src>

<mosaic_0001>
module attributes {stable_mosaic.version = 11 : i64} {
  func.func @_act_kernel(%arg0: memref<32x16xf32, #tpu.memory_space<vmem>>, %arg1: memref<52x32xf32, #tpu.memory_space<vmem>>, %arg2: memref<2xf32, #tpu.memory_space<smem>>, %arg3: memref<8x128xf32, #tpu.memory_space<vmem>>) attributes {dimension_semantics = [], scalar_prefetch = 0 : i64, scratch_operands = 0 : i64, tpu.core_type = #tpu.core_type<tc>} {
    %c0 = arith.constant 0 : index
    %c0_0 = arith.constant 0 : index
    %0 = vector.load %arg1[%c0, %c0_0] : memref<52x32xf32, #tpu.memory_space<vmem>>, vector<16x32xf32>
    %c16 = arith.constant 16 : index
    %c0_1 = arith.constant 0 : index
    %1 = vector.load %arg1[%c16, %c0_1] : memref<52x32xf32, #tpu.memory_space<vmem>>, vector<32x32xf32>
    %c48 = arith.constant 48 : index
    %c0_2 = arith.constant 0 : index
    %2 = vector.load %arg1[%c48, %c0_2] : memref<52x32xf32, #tpu.memory_space<vmem>>, vector<1x32xf32>
    %c49 = arith.constant 49 : index
    %c0_3 = arith.constant 0 : index
    %3 = vector.load %arg1[%c49, %c0_3] : memref<52x32xf32, #tpu.memory_space<vmem>>, vector<1x32xf32>
    %c50 = arith.constant 50 : index
    %c0_4 = arith.constant 0 : index
    %4 = vector.load %arg1[%c50, %c0_4] : memref<52x32xf32, #tpu.memory_space<vmem>>, vector<1x32xf32>
    %c51 = arith.constant 51 : index
    %c0_5 = arith.constant 0 : index
    %5 = vector.load %arg1[%c51, %c0_5] : memref<52x32xf32, #tpu.memory_space<vmem>>, vector<1x32xf32>
    %c0_6 = arith.constant 0 : index
    %6 = memref.load %arg2[%c0_6] : memref<2xf32, #tpu.memory_space<smem>>
    %7 = vector.broadcast %6 : f32 to vector<8x1xf32>
    %c1 = arith.constant 1 : index
    %8 = memref.load %arg2[%c1] : memref<2xf32, #tpu.memory_space<smem>>
    %9 = vector.broadcast %8 : f32 to vector<8x1xf32>
    %c0_7 = arith.constant 0 : index
    %c0_8 = arith.constant 0 : index
    %10 = vector.load %arg0[%c0_7, %c0_8] : memref<32x16xf32, #tpu.memory_space<vmem>>, vector<32x16xf32>
    %cst = arith.constant dense<0.000000e+00> : vector<32x32xf32>
    %11 = tpu.matmul %10, %0, %cst {dimension_numbers = #tpu.dot_dimension_numbers<[1], [0], [0], [1], [0, 0, 1, 1], [], []>} : vector<32x16xf32>, vector<16x32xf32>, vector<32x32xf32> -> vector<32x32xf32>
    %12 = vector.broadcast %2 : vector<1x32xf32> to vector<32x32xf32>
    %13 = arith.addf %11, %12 : vector<32x32xf32>
    %cst_9 = arith.constant 0.000000e+00 : f32
    %14 = vector.broadcast %cst_9 : f32 to vector<8x32xf32>
    %cst_10 = arith.constant 0.000000e+00 : f32
    %15 = vector.broadcast %cst_10 : f32 to vector<8x1xf32>
    %16 = vector.extract_strided_slice %13 {offsets = [0, 0], sizes = [8, 32], strides = [1, 1]} : vector<32x32xf32> to vector<8x32xf32>
    %17 = vector.broadcast %3 : vector<1x32xf32> to vector<8x32xf32>
    %18 = arith.addf %16, %17 : vector<8x32xf32>
    %cst_11 = arith.constant dense<0.000000e+00> : vector<8x32xf32>
    %19 = tpu.matmul %14, %1, %cst_11 {dimension_numbers = #tpu.dot_dimension_numbers<[1], [0], [0], [1], [0, 0, 1, 1], [], []>} : vector<8x32xf32>, vector<32x32xf32>, vector<8x32xf32> -> vector<8x32xf32>
    %20 = arith.addf %16, %19 : vector<8x32xf32>
    %21 = math.tanh %20 : vector<8x32xf32>
    %22 = vector.broadcast %4 : vector<1x32xf32> to vector<8x32xf32>
    %23 = arith.mulf %21, %22 : vector<8x32xf32>
    %cst_12 = arith.constant dense<0.000000e+00> : vector<8xf32>
    %24 = vector.multi_reduction <add>, %23, %cst_12 [1] : vector<8x32xf32> to vector<8xf32>
    %25 = vector.shape_cast %24 : vector<8xf32> to vector<8x1xf32>
    %26 = arith.addf %25, %7 : vector<8x1xf32>
    %27 = arith.negf %26 : vector<8x1xf32>
    %28 = math.exp %27 : vector<8x1xf32>
    %cst_13 = arith.constant 1.000000e+00 : f32
    %29 = vector.broadcast %cst_13 : f32 to vector<8x1xf32>
    %30 = arith.addf %29, %28 : vector<8x1xf32>
    %31 = arith.divf %29, %30 : vector<8x1xf32>
    %32 = vector.broadcast %31 : vector<8x1xf32> to vector<8x32xf32>
    %33 = arith.mulf %32, %21 : vector<8x32xf32>
    %34 = arith.addf %21, %33 : vector<8x32xf32>
    %cst_14 = arith.constant 1.000000e+00 : f32
    %35 = vector.broadcast %cst_14 : f32 to vector<8x1xf32>
    %cst_15 = arith.constant 0.000000e+00 : f32
    %36 = vector.broadcast %cst_15 : f32 to vector<8x1xf32>
    %cst_16 = arith.constant 9.900000e-01 : f32
    %c0_i32 = arith.constant 0 : i32
    %37 = vector.broadcast %cst_16 : f32 to vector<8x1xf32>
    %38 = arith.cmpf olt, %31, %37 : vector<8x1xf32>
    %cst_17 = arith.constant 0.000000e+00 : f32
    %39 = vector.broadcast %cst_17 : f32 to vector<8x1xf32>
    %40 = arith.subf %39, %31 : vector<8x1xf32>
    %41 = arith.select %38, %40, %36 : vector<8x1xi1>, vector<8x1xf32>
    %cst_18 = arith.constant dense<0.000000e+00> : vector<8x32xf32>
    %42 = tpu.matmul %21, %1, %cst_18 {dimension_numbers = #tpu.dot_dimension_numbers<[1], [0], [0], [1], [0, 0, 1, 1], [], []>} : vector<8x32xf32>, vector<32x32xf32>, vector<8x32xf32> -> vector<8x32xf32>
    %43 = arith.addf %18, %42 : vector<8x32xf32>
    %44 = math.tanh %43 : vector<8x32xf32>
    %45 = vector.broadcast %4 : vector<1x32xf32> to vector<8x32xf32>
    %46 = arith.mulf %44, %45 : vector<8x32xf32>
    %cst_19 = arith.constant dense<0.000000e+00> : vector<8xf32>
    %47 = vector.multi_reduction <add>, %46, %cst_19 [1] : vector<8x32xf32> to vector<8xf32>
    %48 = vector.shape_cast %47 : vector<8xf32> to vector<8x1xf32>
    %49 = arith.addf %48, %7 : vector<8x1xf32>
    %50 = arith.negf %49 : vector<8x1xf32>
    %51 = math.exp %50 : vector<8x1xf32>
    %cst_20 = arith.constant 1.000000e+00 : f32
    %52 = vector.broadcast %cst_20 : f32 to vector<8x1xf32>
    %53 = arith.addf %52, %51 : vector<8x1xf32>
    %54 = arith.divf %52, %53 : vector<8x1xf32>
    %55 = arith.addf %31, %54 : vector<8x1xf32>
    %cst_21 = arith.constant 1.000000e+00 : f32
    %56 = vector.broadcast %cst_21 : f32 to vector<8x1xf32>
    %57 = arith.subf %55, %56 : vector<8x1xf32>
    %cst_22 = arith.constant 0.000000e+00 : f32
    %58 = vector.broadcast %cst_22 : f32 to vector<8x1xf32>
    %59 = arith.maximumf %57, %58 : vector<8x1xf32>
    %60 = arith.subf %54, %59 : vector<8x1xf32>
    %61 = arith.addf %34, %44 : vector<8x32xf32>
    %62 = vector.broadcast %60 : vector<8x1xf32> to vector<8x32xf32>
    %63 = arith.mulf %62, %44 : vector<8x32xf32>
    %64 = arith.addf %61, %63 : vector<8x32xf32>
    %65 = vector.shape_cast %38 : vector<8x1xi1> to vector<8x1xi1>
    %66 = vector.broadcast %65 : vector<8x1xi1> to vector<8x32xi1>
    %67 = arith.select %66, %64, %34 : vector<8x32xi1>, vector<8x32xf32>
    %68 = arith.select %38, %55, %31 : vector<8x1xi1>, vector<8x1xf32>
    %cst_23 = arith.constant 1.000000e+00 : f32
    %69 = vector.broadcast %cst_23 : f32 to vector<8x1xf32>
    %70 = arith.addf %35, %69 : vector<8x1xf32>
    %71 = arith.select %38, %70, %35 : vector<8x1xi1>, vector<8x1xf32>
    %c1_i32 = arith.constant 1 : i32
    %72 = vector.broadcast %cst_16 : f32 to vector<8x1xf32>
    %73 = arith.cmpf olt, %68, %72 : vector<8x1xf32>
    %cst_24 = arith.constant 0.000000e+00 : f32
    %74 = vector.broadcast %cst_24 : f32 to vector<8x1xf32>
    %75 = arith.subf %74, %68 : vector<8x1xf32>
    %76 = arith.select %73, %75, %41 : vector<8x1xi1>, vector<8x1xf32>
    %cst_25 = arith.constant dense<0.000000e+00> : vector<8x32xf32>
    %77 = tpu.matmul %44, %1, %cst_25 {dimension_numbers = #tpu.dot_dimension_numbers<[1], [0], [0], [1], [0, 0, 1, 1], [], []>} : vector<8x32xf32>, vector<32x32xf32>, vector<8x32xf32> -> vector<8x32xf32>
    %78 = arith.addf %18, %77 : vector<8x32xf32>
    %79 = math.tanh %78 : vector<8x32xf32>
    %80 = vector.broadcast %4 : vector<1x32xf32> to vector<8x32xf32>
    %81 = arith.mulf %79, %80 : vector<8x32xf32>
    %cst_26 = arith.constant dense<0.000000e+00> : vector<8xf32>
    %82 = vector.multi_reduction <add>, %81, %cst_26 [1] : vector<8x32xf32> to vector<8xf32>
    %83 = vector.shape_cast %82 : vector<8xf32> to vector<8x1xf32>
    %84 = arith.addf %83, %7 : vector<8x1xf32>
    %85 = arith.negf %84 : vector<8x1xf32>
    %86 = math.exp %85 : vector<8x1xf32>
    %cst_27 = arith.constant 1.000000e+00 : f32
    %87 = vector.broadcast %cst_27 : f32 to vector<8x1xf32>
    %88 = arith.addf %87, %86 : vector<8x1xf32>
    %89 = arith.divf %87, %88 : vector<8x1xf32>
    %90 = arith.addf %68, %89 : vector<8x1xf32>
    %cst_28 = arith.constant 1.000000e+00 : f32
    %91 = vector.broadcast %cst_28 : f32 to vector<8x1xf32>
    %92 = arith.subf %90, %91 : vector<8x1xf32>
    %cst_29 = arith.constant 0.000000e+00 : f32
    %93 = vector.broadcast %cst_29 : f32 to vector<8x1xf32>
    %94 = arith.maximumf %92, %93 : vector<8x1xf32>
    %95 = arith.subf %89, %94 : vector<8x1xf32>
    %96 = arith.addf %67, %79 : vector<8x32xf32>
    %97 = vector.broadcast %95 : vector<8x1xf32> to vector<8x32xf32>
    %98 = arith.mulf %97, %79 : vector<8x32xf32>
    %99 = arith.addf %96, %98 : vector<8x32xf32>
    %100 = vector.shape_cast %73 : vector<8x1xi1> to vector<8x1xi1>
    %101 = vector.broadcast %100 : vector<8x1xi1> to vector<8x32xi1>
    %102 = arith.select %101, %99, %67 : vector<8x32xi1>, vector<8x32xf32>
    %103 = arith.select %73, %90, %68 : vector<8x1xi1>, vector<8x1xf32>
    %cst_30 = arith.constant 1.000000e+00 : f32
    %104 = vector.broadcast %cst_30 : f32 to vector<8x1xf32>
    %105 = arith.addf %71, %104 : vector<8x1xf32>
    %106 = arith.select %73, %105, %71 : vector<8x1xi1>, vector<8x1xf32>
    %c2_i32 = arith.constant 2 : i32
    %107 = vector.broadcast %cst_16 : f32 to vector<8x1xf32>
    %108 = arith.cmpf olt, %103, %107 : vector<8x1xf32>
    %cst_31 = arith.constant 0.000000e+00 : f32
    %109 = vector.broadcast %cst_31 : f32 to vector<8x1xf32>
    %110 = arith.subf %109, %103 : vector<8x1xf32>
    %111 = arith.select %108, %110, %76 : vector<8x1xi1>, vector<8x1xf32>
    %cst_32 = arith.constant dense<0.000000e+00> : vector<8x32xf32>
    %112 = tpu.matmul %79, %1, %cst_32 {dimension_numbers = #tpu.dot_dimension_numbers<[1], [0], [0], [1], [0, 0, 1, 1], [], []>} : vector<8x32xf32>, vector<32x32xf32>, vector<8x32xf32> -> vector<8x32xf32>
    %113 = arith.addf %18, %112 : vector<8x32xf32>
    %114 = math.tanh %113 : vector<8x32xf32>
    %115 = vector.broadcast %4 : vector<1x32xf32> to vector<8x32xf32>
    %116 = arith.mulf %114, %115 : vector<8x32xf32>
    %cst_33 = arith.constant dense<0.000000e+00> : vector<8xf32>
    %117 = vector.multi_reduction <add>, %116, %cst_33 [1] : vector<8x32xf32> to vector<8xf32>
    %118 = vector.shape_cast %117 : vector<8xf32> to vector<8x1xf32>
    %119 = arith.addf %118, %7 : vector<8x1xf32>
    %120 = arith.negf %119 : vector<8x1xf32>
    %121 = math.exp %120 : vector<8x1xf32>
    %cst_34 = arith.constant 1.000000e+00 : f32
    %122 = vector.broadcast %cst_34 : f32 to vector<8x1xf32>
    %123 = arith.addf %122, %121 : vector<8x1xf32>
    %124 = arith.divf %122, %123 : vector<8x1xf32>
    %125 = arith.addf %103, %124 : vector<8x1xf32>
    %cst_35 = arith.constant 1.000000e+00 : f32
    %126 = vector.broadcast %cst_35 : f32 to vector<8x1xf32>
    %127 = arith.subf %125, %126 : vector<8x1xf32>
    %cst_36 = arith.constant 0.000000e+00 : f32
    %128 = vector.broadcast %cst_36 : f32 to vector<8x1xf32>
    %129 = arith.maximumf %127, %128 : vector<8x1xf32>
    %130 = arith.subf %124, %129 : vector<8x1xf32>
    %131 = arith.addf %102, %114 : vector<8x32xf32>
    %132 = vector.broadcast %130 : vector<8x1xf32> to vector<8x32xf32>
    %133 = arith.mulf %132, %114 : vector<8x32xf32>
    %134 = arith.addf %131, %133 : vector<8x32xf32>
    %135 = vector.shape_cast %108 : vector<8x1xi1> to vector<8x1xi1>
    %136 = vector.broadcast %135 : vector<8x1xi1> to vector<8x32xi1>
    %137 = arith.select %136, %134, %102 : vector<8x32xi1>, vector<8x32xf32>
    %138 = arith.select %108, %125, %103 : vector<8x1xi1>, vector<8x1xf32>
    %cst_37 = arith.constant 1.000000e+00 : f32
    %139 = vector.broadcast %cst_37 : f32 to vector<8x1xf32>
    %140 = arith.addf %106, %139 : vector<8x1xf32>
    %141 = arith.select %108, %140, %106 : vector<8x1xi1>, vector<8x1xf32>
    %c3_i32 = arith.constant 3 : i32
    %142 = vector.broadcast %cst_16 : f32 to vector<8x1xf32>
    %143 = arith.cmpf olt, %138, %142 : vector<8x1xf32>
    %cst_38 = arith.constant 0.000000e+00 : f32
    %144 = vector.broadcast %cst_38 : f32 to vector<8x1xf32>
    %145 = arith.subf %144, %138 : vector<8x1xf32>
    %146 = arith.select %143, %145, %111 : vector<8x1xi1>, vector<8x1xf32>
    %cst_39 = arith.constant dense<0.000000e+00> : vector<8x32xf32>
    %147 = tpu.matmul %114, %1, %cst_39 {dimension_numbers = #tpu.dot_dimension_numbers<[1], [0], [0], [1], [0, 0, 1, 1], [], []>} : vector<8x32xf32>, vector<32x32xf32>, vector<8x32xf32> -> vector<8x32xf32>
    %148 = arith.addf %18, %147 : vector<8x32xf32>
    %149 = math.tanh %148 : vector<8x32xf32>
    %150 = vector.broadcast %4 : vector<1x32xf32> to vector<8x32xf32>
    %151 = arith.mulf %149, %150 : vector<8x32xf32>
    %cst_40 = arith.constant dense<0.000000e+00> : vector<8xf32>
    %152 = vector.multi_reduction <add>, %151, %cst_40 [1] : vector<8x32xf32> to vector<8xf32>
    %153 = vector.shape_cast %152 : vector<8xf32> to vector<8x1xf32>
    %154 = arith.addf %153, %7 : vector<8x1xf32>
    %155 = arith.negf %154 : vector<8x1xf32>
    %156 = math.exp %155 : vector<8x1xf32>
    %cst_41 = arith.constant 1.000000e+00 : f32
    %157 = vector.broadcast %cst_41 : f32 to vector<8x1xf32>
    %158 = arith.addf %157, %156 : vector<8x1xf32>
    %159 = arith.divf %157, %158 : vector<8x1xf32>
    %160 = arith.addf %138, %159 : vector<8x1xf32>
    %cst_42 = arith.constant 1.000000e+00 : f32
    %161 = vector.broadcast %cst_42 : f32 to vector<8x1xf32>
    %162 = arith.subf %160, %161 : vector<8x1xf32>
    %cst_43 = arith.constant 0.000000e+00 : f32
    %163 = vector.broadcast %cst_43 : f32 to vector<8x1xf32>
    %164 = arith.maximumf %162, %163 : vector<8x1xf32>
    %165 = arith.subf %159, %164 : vector<8x1xf32>
    %166 = arith.addf %137, %149 : vector<8x32xf32>
    %167 = vector.broadcast %165 : vector<8x1xf32> to vector<8x32xf32>
    %168 = arith.mulf %167, %149 : vector<8x32xf32>
    %169 = arith.addf %166, %168 : vector<8x32xf32>
    %170 = vector.shape_cast %143 : vector<8x1xi1> to vector<8x1xi1>
    %171 = vector.broadcast %170 : vector<8x1xi1> to vector<8x32xi1>
    %172 = arith.select %171, %169, %137 : vector<8x32xi1>, vector<8x32xf32>
    %173 = arith.select %143, %160, %138 : vector<8x1xi1>, vector<8x1xf32>
    %cst_44 = arith.constant 1.000000e+00 : f32
    %174 = vector.broadcast %cst_44 : f32 to vector<8x1xf32>
    %175 = arith.addf %141, %174 : vector<8x1xf32>
    %176 = arith.select %143, %175, %141 : vector<8x1xi1>, vector<8x1xf32>
    %c4_i32 = arith.constant 4 : i32
    %177 = vector.broadcast %cst_16 : f32 to vector<8x1xf32>
    %178 = arith.cmpf olt, %173, %177 : vector<8x1xf32>
    %cst_45 = arith.constant 0.000000e+00 : f32
    %179 = vector.broadcast %cst_45 : f32 to vector<8x1xf32>
    %180 = arith.subf %179, %173 : vector<8x1xf32>
    %181 = arith.select %178, %180, %146 : vector<8x1xi1>, vector<8x1xf32>
    %cst_46 = arith.constant dense<0.000000e+00> : vector<8x32xf32>
    %182 = tpu.matmul %149, %1, %cst_46 {dimension_numbers = #tpu.dot_dimension_numbers<[1], [0], [0], [1], [0, 0, 1, 1], [], []>} : vector<8x32xf32>, vector<32x32xf32>, vector<8x32xf32> -> vector<8x32xf32>
    %183 = arith.addf %18, %182 : vector<8x32xf32>
    %184 = math.tanh %183 : vector<8x32xf32>
    %185 = vector.broadcast %4 : vector<1x32xf32> to vector<8x32xf32>
    %186 = arith.mulf %184, %185 : vector<8x32xf32>
    %cst_47 = arith.constant dense<0.000000e+00> : vector<8xf32>
    %187 = vector.multi_reduction <add>, %186, %cst_47 [1] : vector<8x32xf32> to vector<8xf32>
    %188 = vector.shape_cast %187 : vector<8xf32> to vector<8x1xf32>
    %189 = arith.addf %188, %7 : vector<8x1xf32>
    %190 = arith.negf %189 : vector<8x1xf32>
    %191 = math.exp %190 : vector<8x1xf32>
    %cst_48 = arith.constant 1.000000e+00 : f32
    %192 = vector.broadcast %cst_48 : f32 to vector<8x1xf32>
    %193 = arith.addf %192, %191 : vector<8x1xf32>
    %194 = arith.divf %192, %193 : vector<8x1xf32>
    %195 = arith.addf %173, %194 : vector<8x1xf32>
    %cst_49 = arith.constant 1.000000e+00 : f32
    %196 = vector.broadcast %cst_49 : f32 to vector<8x1xf32>
    %197 = arith.subf %195, %196 : vector<8x1xf32>
    %cst_50 = arith.constant 0.000000e+00 : f32
    %198 = vector.broadcast %cst_50 : f32 to vector<8x1xf32>
    %199 = arith.maximumf %197, %198 : vector<8x1xf32>
    %200 = arith.subf %194, %199 : vector<8x1xf32>
    %201 = arith.addf %172, %184 : vector<8x32xf32>
    %202 = vector.broadcast %200 : vector<8x1xf32> to vector<8x32xf32>
    %203 = arith.mulf %202, %184 : vector<8x32xf32>
    %204 = arith.addf %201, %203 : vector<8x32xf32>
    %205 = vector.shape_cast %178 : vector<8x1xi1> to vector<8x1xi1>
    %206 = vector.broadcast %205 : vector<8x1xi1> to vector<8x32xi1>
    %207 = arith.select %206, %204, %172 : vector<8x32xi1>, vector<8x32xf32>
    %208 = arith.select %178, %195, %173 : vector<8x1xi1>, vector<8x1xf32>
    %cst_51 = arith.constant 1.000000e+00 : f32
    %209 = vector.broadcast %cst_51 : f32 to vector<8x1xf32>
    %210 = arith.addf %176, %209 : vector<8x1xf32>
    %211 = arith.select %178, %210, %176 : vector<8x1xi1>, vector<8x1xf32>
    %c5_i32 = arith.constant 5 : i32
    %212 = vector.broadcast %cst_16 : f32 to vector<8x1xf32>
    %213 = arith.cmpf olt, %208, %212 : vector<8x1xf32>
    %cst_52 = arith.constant 0.000000e+00 : f32
    %214 = vector.broadcast %cst_52 : f32 to vector<8x1xf32>
    %215 = arith.subf %214, %208 : vector<8x1xf32>
    %216 = arith.select %213, %215, %181 : vector<8x1xi1>, vector<8x1xf32>
    %cst_53 = arith.constant dense<0.000000e+00> : vector<8x32xf32>
    %217 = tpu.matmul %184, %1, %cst_53 {dimension_numbers = #tpu.dot_dimension_numbers<[1], [0], [0], [1], [0, 0, 1, 1], [], []>} : vector<8x32xf32>, vector<32x32xf32>, vector<8x32xf32> -> vector<8x32xf32>
    %218 = arith.addf %18, %217 : vector<8x32xf32>
    %219 = math.tanh %218 : vector<8x32xf32>
    %220 = vector.broadcast %4 : vector<1x32xf32> to vector<8x32xf32>
    %221 = arith.mulf %219, %220 : vector<8x32xf32>
    %cst_54 = arith.constant dense<0.000000e+00> : vector<8xf32>
    %222 = vector.multi_reduction <add>, %221, %cst_54 [1] : vector<8x32xf32> to vector<8xf32>
    %223 = vector.shape_cast %222 : vector<8xf32> to vector<8x1xf32>
    %224 = arith.addf %223, %7 : vector<8x1xf32>
    %225 = arith.negf %224 : vector<8x1xf32>
    %226 = math.exp %225 : vector<8x1xf32>
    %cst_55 = arith.constant 1.000000e+00 : f32
    %227 = vector.broadcast %cst_55 : f32 to vector<8x1xf32>
    %228 = arith.addf %227, %226 : vector<8x1xf32>
    %229 = arith.divf %227, %228 : vector<8x1xf32>
    %230 = arith.addf %208, %229 : vector<8x1xf32>
    %cst_56 = arith.constant 1.000000e+00 : f32
    %231 = vector.broadcast %cst_56 : f32 to vector<8x1xf32>
    %232 = arith.subf %230, %231 : vector<8x1xf32>
    %cst_57 = arith.constant 0.000000e+00 : f32
    %233 = vector.broadcast %cst_57 : f32 to vector<8x1xf32>
    %234 = arith.maximumf %232, %233 : vector<8x1xf32>
    %235 = arith.subf %229, %234 : vector<8x1xf32>
    %236 = arith.addf %207, %219 : vector<8x32xf32>
    %237 = vector.broadcast %235 : vector<8x1xf32> to vector<8x32xf32>
    %238 = arith.mulf %237, %219 : vector<8x32xf32>
    %239 = arith.addf %236, %238 : vector<8x32xf32>
    %240 = vector.shape_cast %213 : vector<8x1xi1> to vector<8x1xi1>
    %241 = vector.broadcast %240 : vector<8x1xi1> to vector<8x32xi1>
    %242 = arith.select %241, %239, %207 : vector<8x32xi1>, vector<8x32xf32>
    %243 = arith.select %213, %230, %208 : vector<8x1xi1>, vector<8x1xf32>
    %cst_58 = arith.constant 1.000000e+00 : f32
    %244 = vector.broadcast %cst_58 : f32 to vector<8x1xf32>
    %245 = arith.addf %211, %244 : vector<8x1xf32>
    %246 = arith.select %213, %245, %211 : vector<8x1xi1>, vector<8x1xf32>
    %c6_i32 = arith.constant 6 : i32
    %247 = vector.broadcast %cst_16 : f32 to vector<8x1xf32>
    %248 = arith.cmpf olt, %243, %247 : vector<8x1xf32>
    %cst_59 = arith.constant 0.000000e+00 : f32
    %249 = vector.broadcast %cst_59 : f32 to vector<8x1xf32>
    %250 = arith.subf %249, %243 : vector<8x1xf32>
    %251 = arith.select %248, %250, %216 : vector<8x1xi1>, vector<8x1xf32>
    %cst_60 = arith.constant dense<0.000000e+00> : vector<8x32xf32>
    %252 = tpu.matmul %219, %1, %cst_60 {dimension_numbers = #tpu.dot_dimension_numbers<[1], [0], [0], [1], [0, 0, 1, 1], [], []>} : vector<8x32xf32>, vector<32x32xf32>, vector<8x32xf32> -> vector<8x32xf32>
    %253 = arith.addf %18, %252 : vector<8x32xf32>
    %254 = math.tanh %253 : vector<8x32xf32>
    %255 = vector.broadcast %4 : vector<1x32xf32> to vector<8x32xf32>
    %256 = arith.mulf %254, %255 : vector<8x32xf32>
    %cst_61 = arith.constant dense<0.000000e+00> : vector<8xf32>
    %257 = vector.multi_reduction <add>, %256, %cst_61 [1] : vector<8x32xf32> to vector<8xf32>
    %258 = vector.shape_cast %257 : vector<8xf32> to vector<8x1xf32>
    %259 = arith.addf %258, %7 : vector<8x1xf32>
    %260 = arith.negf %259 : vector<8x1xf32>
    %261 = math.exp %260 : vector<8x1xf32>
    %cst_62 = arith.constant 1.000000e+00 : f32
    %262 = vector.broadcast %cst_62 : f32 to vector<8x1xf32>
    %263 = arith.addf %262, %261 : vector<8x1xf32>
    %264 = arith.divf %262, %263 : vector<8x1xf32>
    %265 = arith.addf %243, %264 : vector<8x1xf32>
    %cst_63 = arith.constant 1.000000e+00 : f32
    %266 = vector.broadcast %cst_63 : f32 to vector<8x1xf32>
    %267 = arith.subf %265, %266 : vector<8x1xf32>
    %cst_64 = arith.constant 0.000000e+00 : f32
    %268 = vector.broadcast %cst_64 : f32 to vector<8x1xf32>
    %269 = arith.maximumf %267, %268 : vector<8x1xf32>
    %270 = arith.subf %264, %269 : vector<8x1xf32>
    %271 = arith.addf %242, %254 : vector<8x32xf32>
    %272 = vector.broadcast %270 : vector<8x1xf32> to vector<8x32xf32>
    %273 = arith.mulf %272, %254 : vector<8x32xf32>
    %274 = arith.addf %271, %273 : vector<8x32xf32>
    %275 = vector.shape_cast %248 : vector<8x1xi1> to vector<8x1xi1>
    %276 = vector.broadcast %275 : vector<8x1xi1> to vector<8x32xi1>
    %277 = arith.select %276, %274, %242 : vector<8x32xi1>, vector<8x32xf32>
    %278 = arith.select %248, %265, %243 : vector<8x1xi1>, vector<8x1xf32>
    %cst_65 = arith.constant 1.000000e+00 : f32
    %279 = vector.broadcast %cst_65 : f32 to vector<8x1xf32>
    %280 = arith.addf %246, %279 : vector<8x1xf32>
    %281 = arith.select %248, %280, %246 : vector<8x1xi1>, vector<8x1xf32>
    %c7_i32 = arith.constant 7 : i32
    %282 = vector.broadcast %cst_16 : f32 to vector<8x1xf32>
    %283 = arith.cmpf olt, %278, %282 : vector<8x1xf32>
    %cst_66 = arith.constant 0.000000e+00 : f32
    %284 = vector.broadcast %cst_66 : f32 to vector<8x1xf32>
    %285 = arith.subf %284, %278 : vector<8x1xf32>
    %286 = arith.select %283, %285, %251 : vector<8x1xi1>, vector<8x1xf32>
    %cst_67 = arith.constant dense<0.000000e+00> : vector<8x32xf32>
    %287 = tpu.matmul %254, %1, %cst_67 {dimension_numbers = #tpu.dot_dimension_numbers<[1], [0], [0], [1], [0, 0, 1, 1], [], []>} : vector<8x32xf32>, vector<32x32xf32>, vector<8x32xf32> -> vector<8x32xf32>
    %288 = arith.addf %18, %287 : vector<8x32xf32>
    %289 = math.tanh %288 : vector<8x32xf32>
    %290 = vector.broadcast %4 : vector<1x32xf32> to vector<8x32xf32>
    %291 = arith.mulf %289, %290 : vector<8x32xf32>
    %cst_68 = arith.constant dense<0.000000e+00> : vector<8xf32>
    %292 = vector.multi_reduction <add>, %291, %cst_68 [1] : vector<8x32xf32> to vector<8xf32>
    %293 = vector.shape_cast %292 : vector<8xf32> to vector<8x1xf32>
    %294 = arith.addf %293, %7 : vector<8x1xf32>
    %295 = arith.negf %294 : vector<8x1xf32>
    %296 = math.exp %295 : vector<8x1xf32>
    %cst_69 = arith.constant 1.000000e+00 : f32
    %297 = vector.broadcast %cst_69 : f32 to vector<8x1xf32>
    %298 = arith.addf %297, %296 : vector<8x1xf32>
    %299 = arith.divf %297, %298 : vector<8x1xf32>
    %300 = arith.addf %278, %299 : vector<8x1xf32>
    %cst_70 = arith.constant 1.000000e+00 : f32
    %301 = vector.broadcast %cst_70 : f32 to vector<8x1xf32>
    %302 = arith.subf %300, %301 : vector<8x1xf32>
    %cst_71 = arith.constant 0.000000e+00 : f32
    %303 = vector.broadcast %cst_71 : f32 to vector<8x1xf32>
    %304 = arith.maximumf %302, %303 : vector<8x1xf32>
    %305 = arith.subf %299, %304 : vector<8x1xf32>
    %306 = arith.addf %277, %289 : vector<8x32xf32>
    %307 = vector.broadcast %305 : vector<8x1xf32> to vector<8x32xf32>
    %308 = arith.mulf %307, %289 : vector<8x32xf32>
    %309 = arith.addf %306, %308 : vector<8x32xf32>
    %310 = vector.shape_cast %283 : vector<8x1xi1> to vector<8x1xi1>
    %311 = vector.broadcast %310 : vector<8x1xi1> to vector<8x32xi1>
    %312 = arith.select %311, %309, %277 : vector<8x32xi1>, vector<8x32xf32>
    %313 = arith.select %283, %300, %278 : vector<8x1xi1>, vector<8x1xf32>
    %cst_72 = arith.constant 1.000000e+00 : f32
    %314 = vector.broadcast %cst_72 : f32 to vector<8x1xf32>
    %315 = arith.addf %281, %314 : vector<8x1xf32>
    %316 = arith.select %283, %315, %281 : vector<8x1xi1>, vector<8x1xf32>
    %c8_i32 = arith.constant 8 : i32
    %317 = vector.broadcast %cst_16 : f32 to vector<8x1xf32>
    %318 = arith.cmpf olt, %313, %317 : vector<8x1xf32>
    %cst_73 = arith.constant 0.000000e+00 : f32
    %319 = vector.broadcast %cst_73 : f32 to vector<8x1xf32>
    %320 = arith.subf %319, %313 : vector<8x1xf32>
    %321 = arith.select %318, %320, %286 : vector<8x1xi1>, vector<8x1xf32>
    %cst_74 = arith.constant dense<0.000000e+00> : vector<8x32xf32>
    %322 = tpu.matmul %289, %1, %cst_74 {dimension_numbers = #tpu.dot_dimension_numbers<[1], [0], [0], [1], [0, 0, 1, 1], [], []>} : vector<8x32xf32>, vector<32x32xf32>, vector<8x32xf32> -> vector<8x32xf32>
    %323 = arith.addf %18, %322 : vector<8x32xf32>
    %324 = math.tanh %323 : vector<8x32xf32>
    %325 = vector.broadcast %4 : vector<1x32xf32> to vector<8x32xf32>
    %326 = arith.mulf %324, %325 : vector<8x32xf32>
    %cst_75 = arith.constant dense<0.000000e+00> : vector<8xf32>
    %327 = vector.multi_reduction <add>, %326, %cst_75 [1] : vector<8x32xf32> to vector<8xf32>
    %328 = vector.shape_cast %327 : vector<8xf32> to vector<8x1xf32>
    %329 = arith.addf %328, %7 : vector<8x1xf32>
    %330 = arith.negf %329 : vector<8x1xf32>
    %331 = math.exp %330 : vector<8x1xf32>
    %cst_76 = arith.constant 1.000000e+00 : f32
    %332 = vector.broadcast %cst_76 : f32 to vector<8x1xf32>
    %333 = arith.addf %332, %331 : vector<8x1xf32>
    %334 = arith.divf %332, %333 : vector<8x1xf32>
    %335 = arith.addf %313, %334 : vector<8x1xf32>
    %cst_77 = arith.constant 1.000000e+00 : f32
    %336 = vector.broadcast %cst_77 : f32 to vector<8x1xf32>
    %337 = arith.subf %335, %336 : vector<8x1xf32>
    %cst_78 = arith.constant 0.000000e+00 : f32
    %338 = vector.broadcast %cst_78 : f32 to vector<8x1xf32>
    %339 = arith.maximumf %337, %338 : vector<8x1xf32>
    %340 = arith.subf %334, %339 : vector<8x1xf32>
    %341 = arith.addf %312, %324 : vector<8x32xf32>
    %342 = vector.broadcast %340 : vector<8x1xf32> to vector<8x32xf32>
    %343 = arith.mulf %342, %324 : vector<8x32xf32>
    %344 = arith.addf %341, %343 : vector<8x32xf32>
    %345 = vector.shape_cast %318 : vector<8x1xi1> to vector<8x1xi1>
    %346 = vector.broadcast %345 : vector<8x1xi1> to vector<8x32xi1>
    %347 = arith.select %346, %344, %312 : vector<8x32xi1>, vector<8x32xf32>
    %348 = arith.select %318, %335, %313 : vector<8x1xi1>, vector<8x1xf32>
    %cst_79 = arith.constant 1.000000e+00 : f32
    %349 = vector.broadcast %cst_79 : f32 to vector<8x1xf32>
    %350 = arith.addf %316, %349 : vector<8x1xf32>
    %351 = arith.select %318, %350, %316 : vector<8x1xi1>, vector<8x1xf32>
    %c9_i32 = arith.constant 9 : i32
    %352 = vector.broadcast %cst_16 : f32 to vector<8x1xf32>
    %353 = arith.cmpf olt, %348, %352 : vector<8x1xf32>
    %cst_80 = arith.constant 0.000000e+00 : f32
    %354 = vector.broadcast %cst_80 : f32 to vector<8x1xf32>
    %355 = arith.subf %354, %348 : vector<8x1xf32>
    %356 = arith.select %353, %355, %321 : vector<8x1xi1>, vector<8x1xf32>
    %cst_81 = arith.constant dense<0.000000e+00> : vector<8x32xf32>
    %357 = tpu.matmul %324, %1, %cst_81 {dimension_numbers = #tpu.dot_dimension_numbers<[1], [0], [0], [1], [0, 0, 1, 1], [], []>} : vector<8x32xf32>, vector<32x32xf32>, vector<8x32xf32> -> vector<8x32xf32>
    %358 = arith.addf %18, %357 : vector<8x32xf32>
    %359 = math.tanh %358 : vector<8x32xf32>
    %360 = vector.broadcast %4 : vector<1x32xf32> to vector<8x32xf32>
    %361 = arith.mulf %359, %360 : vector<8x32xf32>
    %cst_82 = arith.constant dense<0.000000e+00> : vector<8xf32>
    %362 = vector.multi_reduction <add>, %361, %cst_82 [1] : vector<8x32xf32> to vector<8xf32>
    %363 = vector.shape_cast %362 : vector<8xf32> to vector<8x1xf32>
    %364 = arith.addf %363, %7 : vector<8x1xf32>
    %365 = arith.negf %364 : vector<8x1xf32>
    %366 = math.exp %365 : vector<8x1xf32>
    %cst_83 = arith.constant 1.000000e+00 : f32
    %367 = vector.broadcast %cst_83 : f32 to vector<8x1xf32>
    %368 = arith.addf %367, %366 : vector<8x1xf32>
    %369 = arith.divf %367, %368 : vector<8x1xf32>
    %370 = arith.addf %348, %369 : vector<8x1xf32>
    %cst_84 = arith.constant 1.000000e+00 : f32
    %371 = vector.broadcast %cst_84 : f32 to vector<8x1xf32>
    %372 = arith.subf %370, %371 : vector<8x1xf32>
    %cst_85 = arith.constant 0.000000e+00 : f32
    %373 = vector.broadcast %cst_85 : f32 to vector<8x1xf32>
    %374 = arith.maximumf %372, %373 : vector<8x1xf32>
    %375 = arith.subf %369, %374 : vector<8x1xf32>
    %376 = arith.addf %347, %359 : vector<8x32xf32>
    %377 = vector.broadcast %375 : vector<8x1xf32> to vector<8x32xf32>
    %378 = arith.mulf %377, %359 : vector<8x32xf32>
    %379 = arith.addf %376, %378 : vector<8x32xf32>
    %380 = vector.shape_cast %353 : vector<8x1xi1> to vector<8x1xi1>
    %381 = vector.broadcast %380 : vector<8x1xi1> to vector<8x32xi1>
    %382 = arith.select %381, %379, %347 : vector<8x32xi1>, vector<8x32xf32>
    %383 = arith.select %353, %370, %348 : vector<8x1xi1>, vector<8x1xf32>
    %cst_86 = arith.constant 1.000000e+00 : f32
    %384 = vector.broadcast %cst_86 : f32 to vector<8x1xf32>
    %385 = arith.addf %351, %384 : vector<8x1xf32>
    %386 = arith.select %353, %385, %351 : vector<8x1xi1>, vector<8x1xf32>
    %c10_i32 = arith.constant 10 : i32
    %387 = vector.broadcast %cst_16 : f32 to vector<8x1xf32>
    %388 = arith.cmpf olt, %383, %387 : vector<8x1xf32>
    %cst_87 = arith.constant 0.000000e+00 : f32
    %389 = vector.broadcast %cst_87 : f32 to vector<8x1xf32>
    %390 = arith.subf %389, %383 : vector<8x1xf32>
    %391 = arith.select %388, %390, %356 : vector<8x1xi1>, vector<8x1xf32>
    %cst_88 = arith.constant dense<0.000000e+00> : vector<8x32xf32>
    %392 = tpu.matmul %359, %1, %cst_88 {dimension_numbers = #tpu.dot_dimension_numbers<[1], [0], [0], [1], [0, 0, 1, 1], [], []>} : vector<8x32xf32>, vector<32x32xf32>, vector<8x32xf32> -> vector<8x32xf32>
    %393 = arith.addf %18, %392 : vector<8x32xf32>
    %394 = math.tanh %393 : vector<8x32xf32>
    %395 = vector.broadcast %4 : vector<1x32xf32> to vector<8x32xf32>
    %396 = arith.mulf %394, %395 : vector<8x32xf32>
    %cst_89 = arith.constant dense<0.000000e+00> : vector<8xf32>
    %397 = vector.multi_reduction <add>, %396, %cst_89 [1] : vector<8x32xf32> to vector<8xf32>
    %398 = vector.shape_cast %397 : vector<8xf32> to vector<8x1xf32>
    %399 = arith.addf %398, %7 : vector<8x1xf32>
    %400 = arith.negf %399 : vector<8x1xf32>
    %401 = math.exp %400 : vector<8x1xf32>
    %cst_90 = arith.constant 1.000000e+00 : f32
    %402 = vector.broadcast %cst_90 : f32 to vector<8x1xf32>
    %403 = arith.addf %402, %401 : vector<8x1xf32>
    %404 = arith.divf %402, %403 : vector<8x1xf32>
    %405 = arith.addf %383, %404 : vector<8x1xf32>
    %cst_91 = arith.constant 1.000000e+00 : f32
    %406 = vector.broadcast %cst_91 : f32 to vector<8x1xf32>
    %407 = arith.subf %405, %406 : vector<8x1xf32>
    %cst_92 = arith.constant 0.000000e+00 : f32
    %408 = vector.broadcast %cst_92 : f32 to vector<8x1xf32>
    %409 = arith.maximumf %407, %408 : vector<8x1xf32>
    %410 = arith.subf %404, %409 : vector<8x1xf32>
    %411 = arith.addf %382, %394 : vector<8x32xf32>
    %412 = vector.broadcast %410 : vector<8x1xf32> to vector<8x32xf32>
    %413 = arith.mulf %412, %394 : vector<8x32xf32>
    %414 = arith.addf %411, %413 : vector<8x32xf32>
    %415 = vector.shape_cast %388 : vector<8x1xi1> to vector<8x1xi1>
    %416 = vector.broadcast %415 : vector<8x1xi1> to vector<8x32xi1>
    %417 = arith.select %416, %414, %382 : vector<8x32xi1>, vector<8x32xf32>
    %418 = arith.select %388, %405, %383 : vector<8x1xi1>, vector<8x1xf32>
    %cst_93 = arith.constant 1.000000e+00 : f32
    %419 = vector.broadcast %cst_93 : f32 to vector<8x1xf32>
    %420 = arith.addf %386, %419 : vector<8x1xf32>
    %421 = arith.select %388, %420, %386 : vector<8x1xi1>, vector<8x1xf32>
    %422 = vector.broadcast %421 : vector<8x1xf32> to vector<8x32xf32>
    %423 = arith.divf %417, %422 : vector<8x32xf32>
    %424 = arith.addf %15, %391 : vector<8x1xf32>
    %425 = vector.broadcast %5 : vector<1x32xf32> to vector<8x32xf32>
    %426 = arith.mulf %423, %425 : vector<8x32xf32>
    %cst_94 = arith.constant dense<0.000000e+00> : vector<8xf32>
    %427 = vector.multi_reduction <add>, %426, %cst_94 [1] : vector<8x32xf32> to vector<8xf32>
    %428 = vector.shape_cast %427 : vector<8xf32> to vector<8x1xf32>
    %429 = arith.addf %428, %9 : vector<8x1xf32>
    %430 = vector.extract_strided_slice %13 {offsets = [8, 0], sizes = [8, 32], strides = [1, 1]} : vector<32x32xf32> to vector<8x32xf32>
    %431 = vector.broadcast %3 : vector<1x32xf32> to vector<8x32xf32>
    %432 = arith.addf %430, %431 : vector<8x32xf32>
    %cst_95 = arith.constant dense<0.000000e+00> : vector<8x32xf32>
    %433 = tpu.matmul %423, %1, %cst_95 {dimension_numbers = #tpu.dot_dimension_numbers<[1], [0], [0], [1], [0, 0, 1, 1], [], []>} : vector<8x32xf32>, vector<32x32xf32>, vector<8x32xf32> -> vector<8x32xf32>
    %434 = arith.addf %430, %433 : vector<8x32xf32>
    %435 = math.tanh %434 : vector<8x32xf32>
    %436 = vector.broadcast %4 : vector<1x32xf32> to vector<8x32xf32>
    %437 = arith.mulf %435, %436 : vector<8x32xf32>
    %cst_96 = arith.constant dense<0.000000e+00> : vector<8xf32>
    %438 = vector.multi_reduction <add>, %437, %cst_96 [1] : vector<8x32xf32> to vector<8xf32>
    %439 = vector.shape_cast %438 : vector<8xf32> to vector<8x1xf32>
    %440 = arith.addf %439, %7 : vector<8x1xf32>
    %441 = arith.negf %440 : vector<8x1xf32>
    %442 = math.exp %441 : vector<8x1xf32>
    %cst_97 = arith.constant 1.000000e+00 : f32
    %443 = vector.broadcast %cst_97 : f32 to vector<8x1xf32>
    %444 = arith.addf %443, %442 : vector<8x1xf32>
    %445 = arith.divf %443, %444 : vector<8x1xf32>
    %446 = vector.broadcast %445 : vector<8x1xf32> to vector<8x32xf32>
    %447 = arith.mulf %446, %435 : vector<8x32xf32>
    %448 = arith.addf %435, %447 : vector<8x32xf32>
    %cst_98 = arith.constant 1.000000e+00 : f32
    %449 = vector.broadcast %cst_98 : f32 to vector<8x1xf32>
    %cst_99 = arith.constant 0.000000e+00 : f32
    %450 = vector.broadcast %cst_99 : f32 to vector<8x1xf32>
    %cst_100 = arith.constant 9.900000e-01 : f32
    %c0_i32_101 = arith.constant 0 : i32
    %451 = vector.broadcast %cst_100 : f32 to vector<8x1xf32>
    %452 = arith.cmpf olt, %445, %451 : vector<8x1xf32>
    %cst_102 = arith.constant 0.000000e+00 : f32
    %453 = vector.broadcast %cst_102 : f32 to vector<8x1xf32>
    %454 = arith.subf %453, %445 : vector<8x1xf32>
    %455 = arith.select %452, %454, %450 : vector<8x1xi1>, vector<8x1xf32>
    %cst_103 = arith.constant dense<0.000000e+00> : vector<8x32xf32>
    %456 = tpu.matmul %435, %1, %cst_103 {dimension_numbers = #tpu.dot_dimension_numbers<[1], [0], [0], [1], [0, 0, 1, 1], [], []>} : vector<8x32xf32>, vector<32x32xf32>, vector<8x32xf32> -> vector<8x32xf32>
    %457 = arith.addf %432, %456 : vector<8x32xf32>
    %458 = math.tanh %457 : vector<8x32xf32>
    %459 = vector.broadcast %4 : vector<1x32xf32> to vector<8x32xf32>
    %460 = arith.mulf %458, %459 : vector<8x32xf32>
    %cst_104 = arith.constant dense<0.000000e+00> : vector<8xf32>
    %461 = vector.multi_reduction <add>, %460, %cst_104 [1] : vector<8x32xf32> to vector<8xf32>
    %462 = vector.shape_cast %461 : vector<8xf32> to vector<8x1xf32>
    %463 = arith.addf %462, %7 : vector<8x1xf32>
    %464 = arith.negf %463 : vector<8x1xf32>
    %465 = math.exp %464 : vector<8x1xf32>
    %cst_105 = arith.constant 1.000000e+00 : f32
    %466 = vector.broadcast %cst_105 : f32 to vector<8x1xf32>
    %467 = arith.addf %466, %465 : vector<8x1xf32>
    %468 = arith.divf %466, %467 : vector<8x1xf32>
    %469 = arith.addf %445, %468 : vector<8x1xf32>
    %cst_106 = arith.constant 1.000000e+00 : f32
    %470 = vector.broadcast %cst_106 : f32 to vector<8x1xf32>
    %471 = arith.subf %469, %470 : vector<8x1xf32>
    %cst_107 = arith.constant 0.000000e+00 : f32
    %472 = vector.broadcast %cst_107 : f32 to vector<8x1xf32>
    %473 = arith.maximumf %471, %472 : vector<8x1xf32>
    %474 = arith.subf %468, %473 : vector<8x1xf32>
    %475 = arith.addf %448, %458 : vector<8x32xf32>
    %476 = vector.broadcast %474 : vector<8x1xf32> to vector<8x32xf32>
    %477 = arith.mulf %476, %458 : vector<8x32xf32>
    %478 = arith.addf %475, %477 : vector<8x32xf32>
    %479 = vector.shape_cast %452 : vector<8x1xi1> to vector<8x1xi1>
    %480 = vector.broadcast %479 : vector<8x1xi1> to vector<8x32xi1>
    %481 = arith.select %480, %478, %448 : vector<8x32xi1>, vector<8x32xf32>
    %482 = arith.select %452, %469, %445 : vector<8x1xi1>, vector<8x1xf32>
    %cst_108 = arith.constant 1.000000e+00 : f32
    %483 = vector.broadcast %cst_108 : f32 to vector<8x1xf32>
    %484 = arith.addf %449, %483 : vector<8x1xf32>
    %485 = arith.select %452, %484, %449 : vector<8x1xi1>, vector<8x1xf32>
    %c1_i32_109 = arith.constant 1 : i32
    %486 = vector.broadcast %cst_100 : f32 to vector<8x1xf32>
    %487 = arith.cmpf olt, %482, %486 : vector<8x1xf32>
    %cst_110 = arith.constant 0.000000e+00 : f32
    %488 = vector.broadcast %cst_110 : f32 to vector<8x1xf32>
    %489 = arith.subf %488, %482 : vector<8x1xf32>
    %490 = arith.select %487, %489, %455 : vector<8x1xi1>, vector<8x1xf32>
    %cst_111 = arith.constant dense<0.000000e+00> : vector<8x32xf32>
    %491 = tpu.matmul %458, %1, %cst_111 {dimension_numbers = #tpu.dot_dimension_numbers<[1], [0], [0], [1], [0, 0, 1, 1], [], []>} : vector<8x32xf32>, vector<32x32xf32>, vector<8x32xf32> -> vector<8x32xf32>
    %492 = arith.addf %432, %491 : vector<8x32xf32>
    %493 = math.tanh %492 : vector<8x32xf32>
    %494 = vector.broadcast %4 : vector<1x32xf32> to vector<8x32xf32>
    %495 = arith.mulf %493, %494 : vector<8x32xf32>
    %cst_112 = arith.constant dense<0.000000e+00> : vector<8xf32>
    %496 = vector.multi_reduction <add>, %495, %cst_112 [1] : vector<8x32xf32> to vector<8xf32>
    %497 = vector.shape_cast %496 : vector<8xf32> to vector<8x1xf32>
    %498 = arith.addf %497, %7 : vector<8x1xf32>
    %499 = arith.negf %498 : vector<8x1xf32>
    %500 = math.exp %499 : vector<8x1xf32>
    %cst_113 = arith.constant 1.000000e+00 : f32
    %501 = vector.broadcast %cst_113 : f32 to vector<8x1xf32>
    %502 = arith.addf %501, %500 : vector<8x1xf32>
    %503 = arith.divf %501, %502 : vector<8x1xf32>
    %504 = arith.addf %482, %503 : vector<8x1xf32>
    %cst_114 = arith.constant 1.000000e+00 : f32
    %505 = vector.broadcast %cst_114 : f32 to vector<8x1xf32>
    %506 = arith.subf %504, %505 : vector<8x1xf32>
    %cst_115 = arith.constant 0.000000e+00 : f32
    %507 = vector.broadcast %cst_115 : f32 to vector<8x1xf32>
    %508 = arith.maximumf %506, %507 : vector<8x1xf32>
    %509 = arith.subf %503, %508 : vector<8x1xf32>
    %510 = arith.addf %481, %493 : vector<8x32xf32>
    %511 = vector.broadcast %509 : vector<8x1xf32> to vector<8x32xf32>
    %512 = arith.mulf %511, %493 : vector<8x32xf32>
    %513 = arith.addf %510, %512 : vector<8x32xf32>
    %514 = vector.shape_cast %487 : vector<8x1xi1> to vector<8x1xi1>
    %515 = vector.broadcast %514 : vector<8x1xi1> to vector<8x32xi1>
    %516 = arith.select %515, %513, %481 : vector<8x32xi1>, vector<8x32xf32>
    %517 = arith.select %487, %504, %482 : vector<8x1xi1>, vector<8x1xf32>
    %cst_116 = arith.constant 1.000000e+00 : f32
    %518 = vector.broadcast %cst_116 : f32 to vector<8x1xf32>
    %519 = arith.addf %485, %518 : vector<8x1xf32>
    %520 = arith.select %487, %519, %485 : vector<8x1xi1>, vector<8x1xf32>
    %c2_i32_117 = arith.constant 2 : i32
    %521 = vector.broadcast %cst_100 : f32 to vector<8x1xf32>
    %522 = arith.cmpf olt, %517, %521 : vector<8x1xf32>
    %cst_118 = arith.constant 0.000000e+00 : f32
    %523 = vector.broadcast %cst_118 : f32 to vector<8x1xf32>
    %524 = arith.subf %523, %517 : vector<8x1xf32>
    %525 = arith.select %522, %524, %490 : vector<8x1xi1>, vector<8x1xf32>
    %cst_119 = arith.constant dense<0.000000e+00> : vector<8x32xf32>
    %526 = tpu.matmul %493, %1, %cst_119 {dimension_numbers = #tpu.dot_dimension_numbers<[1], [0], [0], [1], [0, 0, 1, 1], [], []>} : vector<8x32xf32>, vector<32x32xf32>, vector<8x32xf32> -> vector<8x32xf32>
    %527 = arith.addf %432, %526 : vector<8x32xf32>
    %528 = math.tanh %527 : vector<8x32xf32>
    %529 = vector.broadcast %4 : vector<1x32xf32> to vector<8x32xf32>
    %530 = arith.mulf %528, %529 : vector<8x32xf32>
    %cst_120 = arith.constant dense<0.000000e+00> : vector<8xf32>
    %531 = vector.multi_reduction <add>, %530, %cst_120 [1] : vector<8x32xf32> to vector<8xf32>
    %532 = vector.shape_cast %531 : vector<8xf32> to vector<8x1xf32>
    %533 = arith.addf %532, %7 : vector<8x1xf32>
    %534 = arith.negf %533 : vector<8x1xf32>
    %535 = math.exp %534 : vector<8x1xf32>
    %cst_121 = arith.constant 1.000000e+00 : f32
    %536 = vector.broadcast %cst_121 : f32 to vector<8x1xf32>
    %537 = arith.addf %536, %535 : vector<8x1xf32>
    %538 = arith.divf %536, %537 : vector<8x1xf32>
    %539 = arith.addf %517, %538 : vector<8x1xf32>
    %cst_122 = arith.constant 1.000000e+00 : f32
    %540 = vector.broadcast %cst_122 : f32 to vector<8x1xf32>
    %541 = arith.subf %539, %540 : vector<8x1xf32>
    %cst_123 = arith.constant 0.000000e+00 : f32
    %542 = vector.broadcast %cst_123 : f32 to vector<8x1xf32>
    %543 = arith.maximumf %541, %542 : vector<8x1xf32>
    %544 = arith.subf %538, %543 : vector<8x1xf32>
    %545 = arith.addf %516, %528 : vector<8x32xf32>
    %546 = vector.broadcast %544 : vector<8x1xf32> to vector<8x32xf32>
    %547 = arith.mulf %546, %528 : vector<8x32xf32>
    %548 = arith.addf %545, %547 : vector<8x32xf32>
    %549 = vector.shape_cast %522 : vector<8x1xi1> to vector<8x1xi1>
    %550 = vector.broadcast %549 : vector<8x1xi1> to vector<8x32xi1>
    %551 = arith.select %550, %548, %516 : vector<8x32xi1>, vector<8x32xf32>
    %552 = arith.select %522, %539, %517 : vector<8x1xi1>, vector<8x1xf32>
    %cst_124 = arith.constant 1.000000e+00 : f32
    %553 = vector.broadcast %cst_124 : f32 to vector<8x1xf32>
    %554 = arith.addf %520, %553 : vector<8x1xf32>
    %555 = arith.select %522, %554, %520 : vector<8x1xi1>, vector<8x1xf32>
    %c3_i32_125 = arith.constant 3 : i32
    %556 = vector.broadcast %cst_100 : f32 to vector<8x1xf32>
    %557 = arith.cmpf olt, %552, %556 : vector<8x1xf32>
    %cst_126 = arith.constant 0.000000e+00 : f32
    %558 = vector.broadcast %cst_126 : f32 to vector<8x1xf32>
    %559 = arith.subf %558, %552 : vector<8x1xf32>
    %560 = arith.select %557, %559, %525 : vector<8x1xi1>, vector<8x1xf32>
    %cst_127 = arith.constant dense<0.000000e+00> : vector<8x32xf32>
    %561 = tpu.matmul %528, %1, %cst_127 {dimension_numbers = #tpu.dot_dimension_numbers<[1], [0], [0], [1], [0, 0, 1, 1], [], []>} : vector<8x32xf32>, vector<32x32xf32>, vector<8x32xf32> -> vector<8x32xf32>
    %562 = arith.addf %432, %561 : vector<8x32xf32>
    %563 = math.tanh %562 : vector<8x32xf32>
    %564 = vector.broadcast %4 : vector<1x32xf32> to vector<8x32xf32>
    %565 = arith.mulf %563, %564 : vector<8x32xf32>
    %cst_128 = arith.constant dense<0.000000e+00> : vector<8xf32>
    %566 = vector.multi_reduction <add>, %565, %cst_128 [1] : vector<8x32xf32> to vector<8xf32>
    %567 = vector.shape_cast %566 : vector<8xf32> to vector<8x1xf32>
    %568 = arith.addf %567, %7 : vector<8x1xf32>
    %569 = arith.negf %568 : vector<8x1xf32>
    %570 = math.exp %569 : vector<8x1xf32>
    %cst_129 = arith.constant 1.000000e+00 : f32
    %571 = vector.broadcast %cst_129 : f32 to vector<8x1xf32>
    %572 = arith.addf %571, %570 : vector<8x1xf32>
    %573 = arith.divf %571, %572 : vector<8x1xf32>
    %574 = arith.addf %552, %573 : vector<8x1xf32>
    %cst_130 = arith.constant 1.000000e+00 : f32
    %575 = vector.broadcast %cst_130 : f32 to vector<8x1xf32>
    %576 = arith.subf %574, %575 : vector<8x1xf32>
    %cst_131 = arith.constant 0.000000e+00 : f32
    %577 = vector.broadcast %cst_131 : f32 to vector<8x1xf32>
    %578 = arith.maximumf %576, %577 : vector<8x1xf32>
    %579 = arith.subf %573, %578 : vector<8x1xf32>
    %580 = arith.addf %551, %563 : vector<8x32xf32>
    %581 = vector.broadcast %579 : vector<8x1xf32> to vector<8x32xf32>
    %582 = arith.mulf %581, %563 : vector<8x32xf32>
    %583 = arith.addf %580, %582 : vector<8x32xf32>
    %584 = vector.shape_cast %557 : vector<8x1xi1> to vector<8x1xi1>
    %585 = vector.broadcast %584 : vector<8x1xi1> to vector<8x32xi1>
    %586 = arith.select %585, %583, %551 : vector<8x32xi1>, vector<8x32xf32>
    %587 = arith.select %557, %574, %552 : vector<8x1xi1>, vector<8x1xf32>
    %cst_132 = arith.constant 1.000000e+00 : f32
    %588 = vector.broadcast %cst_132 : f32 to vector<8x1xf32>
    %589 = arith.addf %555, %588 : vector<8x1xf32>
    %590 = arith.select %557, %589, %555 : vector<8x1xi1>, vector<8x1xf32>
    %c4_i32_133 = arith.constant 4 : i32
    %591 = vector.broadcast %cst_100 : f32 to vector<8x1xf32>
    %592 = arith.cmpf olt, %587, %591 : vector<8x1xf32>
    %cst_134 = arith.constant 0.000000e+00 : f32
    %593 = vector.broadcast %cst_134 : f32 to vector<8x1xf32>
    %594 = arith.subf %593, %587 : vector<8x1xf32>
    %595 = arith.select %592, %594, %560 : vector<8x1xi1>, vector<8x1xf32>
    %cst_135 = arith.constant dense<0.000000e+00> : vector<8x32xf32>
    %596 = tpu.matmul %563, %1, %cst_135 {dimension_numbers = #tpu.dot_dimension_numbers<[1], [0], [0], [1], [0, 0, 1, 1], [], []>} : vector<8x32xf32>, vector<32x32xf32>, vector<8x32xf32> -> vector<8x32xf32>
    %597 = arith.addf %432, %596 : vector<8x32xf32>
    %598 = math.tanh %597 : vector<8x32xf32>
    %599 = vector.broadcast %4 : vector<1x32xf32> to vector<8x32xf32>
    %600 = arith.mulf %598, %599 : vector<8x32xf32>
    %cst_136 = arith.constant dense<0.000000e+00> : vector<8xf32>
    %601 = vector.multi_reduction <add>, %600, %cst_136 [1] : vector<8x32xf32> to vector<8xf32>
    %602 = vector.shape_cast %601 : vector<8xf32> to vector<8x1xf32>
    %603 = arith.addf %602, %7 : vector<8x1xf32>
    %604 = arith.negf %603 : vector<8x1xf32>
    %605 = math.exp %604 : vector<8x1xf32>
    %cst_137 = arith.constant 1.000000e+00 : f32
    %606 = vector.broadcast %cst_137 : f32 to vector<8x1xf32>
    %607 = arith.addf %606, %605 : vector<8x1xf32>
    %608 = arith.divf %606, %607 : vector<8x1xf32>
    %609 = arith.addf %587, %608 : vector<8x1xf32>
    %cst_138 = arith.constant 1.000000e+00 : f32
    %610 = vector.broadcast %cst_138 : f32 to vector<8x1xf32>
    %611 = arith.subf %609, %610 : vector<8x1xf32>
    %cst_139 = arith.constant 0.000000e+00 : f32
    %612 = vector.broadcast %cst_139 : f32 to vector<8x1xf32>
    %613 = arith.maximumf %611, %612 : vector<8x1xf32>
    %614 = arith.subf %608, %613 : vector<8x1xf32>
    %615 = arith.addf %586, %598 : vector<8x32xf32>
    %616 = vector.broadcast %614 : vector<8x1xf32> to vector<8x32xf32>
    %617 = arith.mulf %616, %598 : vector<8x32xf32>
    %618 = arith.addf %615, %617 : vector<8x32xf32>
    %619 = vector.shape_cast %592 : vector<8x1xi1> to vector<8x1xi1>
    %620 = vector.broadcast %619 : vector<8x1xi1> to vector<8x32xi1>
    %621 = arith.select %620, %618, %586 : vector<8x32xi1>, vector<8x32xf32>
    %622 = arith.select %592, %609, %587 : vector<8x1xi1>, vector<8x1xf32>
    %cst_140 = arith.constant 1.000000e+00 : f32
    %623 = vector.broadcast %cst_140 : f32 to vector<8x1xf32>
    %624 = arith.addf %590, %623 : vector<8x1xf32>
    %625 = arith.select %592, %624, %590 : vector<8x1xi1>, vector<8x1xf32>
    %c5_i32_141 = arith.constant 5 : i32
    %626 = vector.broadcast %cst_100 : f32 to vector<8x1xf32>
    %627 = arith.cmpf olt, %622, %626 : vector<8x1xf32>
    %cst_142 = arith.constant 0.000000e+00 : f32
    %628 = vector.broadcast %cst_142 : f32 to vector<8x1xf32>
    %629 = arith.subf %628, %622 : vector<8x1xf32>
    %630 = arith.select %627, %629, %595 : vector<8x1xi1>, vector<8x1xf32>
    %cst_143 = arith.constant dense<0.000000e+00> : vector<8x32xf32>
    %631 = tpu.matmul %598, %1, %cst_143 {dimension_numbers = #tpu.dot_dimension_numbers<[1], [0], [0], [1], [0, 0, 1, 1], [], []>} : vector<8x32xf32>, vector<32x32xf32>, vector<8x32xf32> -> vector<8x32xf32>
    %632 = arith.addf %432, %631 : vector<8x32xf32>
    %633 = math.tanh %632 : vector<8x32xf32>
    %634 = vector.broadcast %4 : vector<1x32xf32> to vector<8x32xf32>
    %635 = arith.mulf %633, %634 : vector<8x32xf32>
    %cst_144 = arith.constant dense<0.000000e+00> : vector<8xf32>
    %636 = vector.multi_reduction <add>, %635, %cst_144 [1] : vector<8x32xf32> to vector<8xf32>
    %637 = vector.shape_cast %636 : vector<8xf32> to vector<8x1xf32>
    %638 = arith.addf %637, %7 : vector<8x1xf32>
    %639 = arith.negf %638 : vector<8x1xf32>
    %640 = math.exp %639 : vector<8x1xf32>
    %cst_145 = arith.constant 1.000000e+00 : f32
    %641 = vector.broadcast %cst_145 : f32 to vector<8x1xf32>
    %642 = arith.addf %641, %640 : vector<8x1xf32>
    %643 = arith.divf %641, %642 : vector<8x1xf32>
    %644 = arith.addf %622, %643 : vector<8x1xf32>
    %cst_146 = arith.constant 1.000000e+00 : f32
    %645 = vector.broadcast %cst_146 : f32 to vector<8x1xf32>
    %646 = arith.subf %644, %645 : vector<8x1xf32>
    %cst_147 = arith.constant 0.000000e+00 : f32
    %647 = vector.broadcast %cst_147 : f32 to vector<8x1xf32>
    %648 = arith.maximumf %646, %647 : vector<8x1xf32>
    %649 = arith.subf %643, %648 : vector<8x1xf32>
    %650 = arith.addf %621, %633 : vector<8x32xf32>
    %651 = vector.broadcast %649 : vector<8x1xf32> to vector<8x32xf32>
    %652 = arith.mulf %651, %633 : vector<8x32xf32>
    %653 = arith.addf %650, %652 : vector<8x32xf32>
    %654 = vector.shape_cast %627 : vector<8x1xi1> to vector<8x1xi1>
    %655 = vector.broadcast %654 : vector<8x1xi1> to vector<8x32xi1>
    %656 = arith.select %655, %653, %621 : vector<8x32xi1>, vector<8x32xf32>
    %657 = arith.select %627, %644, %622 : vector<8x1xi1>, vector<8x1xf32>
    %cst_148 = arith.constant 1.000000e+00 : f32
    %658 = vector.broadcast %cst_148 : f32 to vector<8x1xf32>
    %659 = arith.addf %625, %658 : vector<8x1xf32>
    %660 = arith.select %627, %659, %625 : vector<8x1xi1>, vector<8x1xf32>
    %c6_i32_149 = arith.constant 6 : i32
    %661 = vector.broadcast %cst_100 : f32 to vector<8x1xf32>
    %662 = arith.cmpf olt, %657, %661 : vector<8x1xf32>
    %cst_150 = arith.constant 0.000000e+00 : f32
    %663 = vector.broadcast %cst_150 : f32 to vector<8x1xf32>
    %664 = arith.subf %663, %657 : vector<8x1xf32>
    %665 = arith.select %662, %664, %630 : vector<8x1xi1>, vector<8x1xf32>
    %cst_151 = arith.constant dense<0.000000e+00> : vector<8x32xf32>
    %666 = tpu.matmul %633, %1, %cst_151 {dimension_numbers = #tpu.dot_dimension_numbers<[1], [0], [0], [1], [0, 0, 1, 1], [], []>} : vector<8x32xf32>, vector<32x32xf32>, vector<8x32xf32> -> vector<8x32xf32>
    %667 = arith.addf %432, %666 : vector<8x32xf32>
    %668 = math.tanh %667 : vector<8x32xf32>
    %669 = vector.broadcast %4 : vector<1x32xf32> to vector<8x32xf32>
    %670 = arith.mulf %668, %669 : vector<8x32xf32>
    %cst_152 = arith.constant dense<0.000000e+00> : vector<8xf32>
    %671 = vector.multi_reduction <add>, %670, %cst_152 [1] : vector<8x32xf32> to vector<8xf32>
    %672 = vector.shape_cast %671 : vector<8xf32> to vector<8x1xf32>
    %673 = arith.addf %672, %7 : vector<8x1xf32>
    %674 = arith.negf %673 : vector<8x1xf32>
    %675 = math.exp %674 : vector<8x1xf32>
    %cst_153 = arith.constant 1.000000e+00 : f32
    %676 = vector.broadcast %cst_153 : f32 to vector<8x1xf32>
    %677 = arith.addf %676, %675 : vector<8x1xf32>
    %678 = arith.divf %676, %677 : vector<8x1xf32>
    %679 = arith.addf %657, %678 : vector<8x1xf32>
    %cst_154 = arith.constant 1.000000e+00 : f32
    %680 = vector.broadcast %cst_154 : f32 to vector<8x1xf32>
    %681 = arith.subf %679, %680 : vector<8x1xf32>
    %cst_155 = arith.constant 0.000000e+00 : f32
    %682 = vector.broadcast %cst_155 : f32 to vector<8x1xf32>
    %683 = arith.maximumf %681, %682 : vector<8x1xf32>
    %684 = arith.subf %678, %683 : vector<8x1xf32>
    %685 = arith.addf %656, %668 : vector<8x32xf32>
    %686 = vector.broadcast %684 : vector<8x1xf32> to vector<8x32xf32>
    %687 = arith.mulf %686, %668 : vector<8x32xf32>
    %688 = arith.addf %685, %687 : vector<8x32xf32>
    %689 = vector.shape_cast %662 : vector<8x1xi1> to vector<8x1xi1>
    %690 = vector.broadcast %689 : vector<8x1xi1> to vector<8x32xi1>
    %691 = arith.select %690, %688, %656 : vector<8x32xi1>, vector<8x32xf32>
    %692 = arith.select %662, %679, %657 : vector<8x1xi1>, vector<8x1xf32>
    %cst_156 = arith.constant 1.000000e+00 : f32
    %693 = vector.broadcast %cst_156 : f32 to vector<8x1xf32>
    %694 = arith.addf %660, %693 : vector<8x1xf32>
    %695 = arith.select %662, %694, %660 : vector<8x1xi1>, vector<8x1xf32>
    %c7_i32_157 = arith.constant 7 : i32
    %696 = vector.broadcast %cst_100 : f32 to vector<8x1xf32>
    %697 = arith.cmpf olt, %692, %696 : vector<8x1xf32>
    %cst_158 = arith.constant 0.000000e+00 : f32
    %698 = vector.broadcast %cst_158 : f32 to vector<8x1xf32>
    %699 = arith.subf %698, %692 : vector<8x1xf32>
    %700 = arith.select %697, %699, %665 : vector<8x1xi1>, vector<8x1xf32>
    %cst_159 = arith.constant dense<0.000000e+00> : vector<8x32xf32>
    %701 = tpu.matmul %668, %1, %cst_159 {dimension_numbers = #tpu.dot_dimension_numbers<[1], [0], [0], [1], [0, 0, 1, 1], [], []>} : vector<8x32xf32>, vector<32x32xf32>, vector<8x32xf32> -> vector<8x32xf32>
    %702 = arith.addf %432, %701 : vector<8x32xf32>
    %703 = math.tanh %702 : vector<8x32xf32>
    %704 = vector.broadcast %4 : vector<1x32xf32> to vector<8x32xf32>
    %705 = arith.mulf %703, %704 : vector<8x32xf32>
    %cst_160 = arith.constant dense<0.000000e+00> : vector<8xf32>
    %706 = vector.multi_reduction <add>, %705, %cst_160 [1] : vector<8x32xf32> to vector<8xf32>
    %707 = vector.shape_cast %706 : vector<8xf32> to vector<8x1xf32>
    %708 = arith.addf %707, %7 : vector<8x1xf32>
    %709 = arith.negf %708 : vector<8x1xf32>
    %710 = math.exp %709 : vector<8x1xf32>
    %cst_161 = arith.constant 1.000000e+00 : f32
    %711 = vector.broadcast %cst_161 : f32 to vector<8x1xf32>
    %712 = arith.addf %711, %710 : vector<8x1xf32>
    %713 = arith.divf %711, %712 : vector<8x1xf32>
    %714 = arith.addf %692, %713 : vector<8x1xf32>
    %cst_162 = arith.constant 1.000000e+00 : f32
    %715 = vector.broadcast %cst_162 : f32 to vector<8x1xf32>
    %716 = arith.subf %714, %715 : vector<8x1xf32>
    %cst_163 = arith.constant 0.000000e+00 : f32
    %717 = vector.broadcast %cst_163 : f32 to vector<8x1xf32>
    %718 = arith.maximumf %716, %717 : vector<8x1xf32>
    %719 = arith.subf %713, %718 : vector<8x1xf32>
    %720 = arith.addf %691, %703 : vector<8x32xf32>
    %721 = vector.broadcast %719 : vector<8x1xf32> to vector<8x32xf32>
    %722 = arith.mulf %721, %703 : vector<8x32xf32>
    %723 = arith.addf %720, %722 : vector<8x32xf32>
    %724 = vector.shape_cast %697 : vector<8x1xi1> to vector<8x1xi1>
    %725 = vector.broadcast %724 : vector<8x1xi1> to vector<8x32xi1>
    %726 = arith.select %725, %723, %691 : vector<8x32xi1>, vector<8x32xf32>
    %727 = arith.select %697, %714, %692 : vector<8x1xi1>, vector<8x1xf32>
    %cst_164 = arith.constant 1.000000e+00 : f32
    %728 = vector.broadcast %cst_164 : f32 to vector<8x1xf32>
    %729 = arith.addf %695, %728 : vector<8x1xf32>
    %730 = arith.select %697, %729, %695 : vector<8x1xi1>, vector<8x1xf32>
    %c8_i32_165 = arith.constant 8 : i32
    %731 = vector.broadcast %cst_100 : f32 to vector<8x1xf32>
    %732 = arith.cmpf olt, %727, %731 : vector<8x1xf32>
    %cst_166 = arith.constant 0.000000e+00 : f32
    %733 = vector.broadcast %cst_166 : f32 to vector<8x1xf32>
    %734 = arith.subf %733, %727 : vector<8x1xf32>
    %735 = arith.select %732, %734, %700 : vector<8x1xi1>, vector<8x1xf32>
    %cst_167 = arith.constant dense<0.000000e+00> : vector<8x32xf32>
    %736 = tpu.matmul %703, %1, %cst_167 {dimension_numbers = #tpu.dot_dimension_numbers<[1], [0], [0], [1], [0, 0, 1, 1], [], []>} : vector<8x32xf32>, vector<32x32xf32>, vector<8x32xf32> -> vector<8x32xf32>
    %737 = arith.addf %432, %736 : vector<8x32xf32>
    %738 = math.tanh %737 : vector<8x32xf32>
    %739 = vector.broadcast %4 : vector<1x32xf32> to vector<8x32xf32>
    %740 = arith.mulf %738, %739 : vector<8x32xf32>
    %cst_168 = arith.constant dense<0.000000e+00> : vector<8xf32>
    %741 = vector.multi_reduction <add>, %740, %cst_168 [1] : vector<8x32xf32> to vector<8xf32>
    %742 = vector.shape_cast %741 : vector<8xf32> to vector<8x1xf32>
    %743 = arith.addf %742, %7 : vector<8x1xf32>
    %744 = arith.negf %743 : vector<8x1xf32>
    %745 = math.exp %744 : vector<8x1xf32>
    %cst_169 = arith.constant 1.000000e+00 : f32
    %746 = vector.broadcast %cst_169 : f32 to vector<8x1xf32>
    %747 = arith.addf %746, %745 : vector<8x1xf32>
    %748 = arith.divf %746, %747 : vector<8x1xf32>
    %749 = arith.addf %727, %748 : vector<8x1xf32>
    %cst_170 = arith.constant 1.000000e+00 : f32
    %750 = vector.broadcast %cst_170 : f32 to vector<8x1xf32>
    %751 = arith.subf %749, %750 : vector<8x1xf32>
    %cst_171 = arith.constant 0.000000e+00 : f32
    %752 = vector.broadcast %cst_171 : f32 to vector<8x1xf32>
    %753 = arith.maximumf %751, %752 : vector<8x1xf32>
    %754 = arith.subf %748, %753 : vector<8x1xf32>
    %755 = arith.addf %726, %738 : vector<8x32xf32>
    %756 = vector.broadcast %754 : vector<8x1xf32> to vector<8x32xf32>
    %757 = arith.mulf %756, %738 : vector<8x32xf32>
    %758 = arith.addf %755, %757 : vector<8x32xf32>
    %759 = vector.shape_cast %732 : vector<8x1xi1> to vector<8x1xi1>
    %760 = vector.broadcast %759 : vector<8x1xi1> to vector<8x32xi1>
    %761 = arith.select %760, %758, %726 : vector<8x32xi1>, vector<8x32xf32>
    %762 = arith.select %732, %749, %727 : vector<8x1xi1>, vector<8x1xf32>
    %cst_172 = arith.constant 1.000000e+00 : f32
    %763 = vector.broadcast %cst_172 : f32 to vector<8x1xf32>
    %764 = arith.addf %730, %763 : vector<8x1xf32>
    %765 = arith.select %732, %764, %730 : vector<8x1xi1>, vector<8x1xf32>
    %c9_i32_173 = arith.constant 9 : i32
    %766 = vector.broadcast %cst_100 : f32 to vector<8x1xf32>
    %767 = arith.cmpf olt, %762, %766 : vector<8x1xf32>
    %cst_174 = arith.constant 0.000000e+00 : f32
    %768 = vector.broadcast %cst_174 : f32 to vector<8x1xf32>
    %769 = arith.subf %768, %762 : vector<8x1xf32>
    %770 = arith.select %767, %769, %735 : vector<8x1xi1>, vector<8x1xf32>
    %cst_175 = arith.constant dense<0.000000e+00> : vector<8x32xf32>
    %771 = tpu.matmul %738, %1, %cst_175 {dimension_numbers = #tpu.dot_dimension_numbers<[1], [0], [0], [1], [0, 0, 1, 1], [], []>} : vector<8x32xf32>, vector<32x32xf32>, vector<8x32xf32> -> vector<8x32xf32>
    %772 = arith.addf %432, %771 : vector<8x32xf32>
    %773 = math.tanh %772 : vector<8x32xf32>
    %774 = vector.broadcast %4 : vector<1x32xf32> to vector<8x32xf32>
    %775 = arith.mulf %773, %774 : vector<8x32xf32>
    %cst_176 = arith.constant dense<0.000000e+00> : vector<8xf32>
    %776 = vector.multi_reduction <add>, %775, %cst_176 [1] : vector<8x32xf32> to vector<8xf32>
    %777 = vector.shape_cast %776 : vector<8xf32> to vector<8x1xf32>
    %778 = arith.addf %777, %7 : vector<8x1xf32>
    %779 = arith.negf %778 : vector<8x1xf32>
    %780 = math.exp %779 : vector<8x1xf32>
    %cst_177 = arith.constant 1.000000e+00 : f32
    %781 = vector.broadcast %cst_177 : f32 to vector<8x1xf32>
    %782 = arith.addf %781, %780 : vector<8x1xf32>
    %783 = arith.divf %781, %782 : vector<8x1xf32>
    %784 = arith.addf %762, %783 : vector<8x1xf32>
    %cst_178 = arith.constant 1.000000e+00 : f32
    %785 = vector.broadcast %cst_178 : f32 to vector<8x1xf32>
    %786 = arith.subf %784, %785 : vector<8x1xf32>
    %cst_179 = arith.constant 0.000000e+00 : f32
    %787 = vector.broadcast %cst_179 : f32 to vector<8x1xf32>
    %788 = arith.maximumf %786, %787 : vector<8x1xf32>
    %789 = arith.subf %783, %788 : vector<8x1xf32>
    %790 = arith.addf %761, %773 : vector<8x32xf32>
    %791 = vector.broadcast %789 : vector<8x1xf32> to vector<8x32xf32>
    %792 = arith.mulf %791, %773 : vector<8x32xf32>
    %793 = arith.addf %790, %792 : vector<8x32xf32>
    %794 = vector.shape_cast %767 : vector<8x1xi1> to vector<8x1xi1>
    %795 = vector.broadcast %794 : vector<8x1xi1> to vector<8x32xi1>
    %796 = arith.select %795, %793, %761 : vector<8x32xi1>, vector<8x32xf32>
    %797 = arith.select %767, %784, %762 : vector<8x1xi1>, vector<8x1xf32>
    %cst_180 = arith.constant 1.000000e+00 : f32
    %798 = vector.broadcast %cst_180 : f32 to vector<8x1xf32>
    %799 = arith.addf %765, %798 : vector<8x1xf32>
    %800 = arith.select %767, %799, %765 : vector<8x1xi1>, vector<8x1xf32>
    %c10_i32_181 = arith.constant 10 : i32
    %801 = vector.broadcast %cst_100 : f32 to vector<8x1xf32>
    %802 = arith.cmpf olt, %797, %801 : vector<8x1xf32>
    %cst_182 = arith.constant 0.000000e+00 : f32
    %803 = vector.broadcast %cst_182 : f32 to vector<8x1xf32>
    %804 = arith.subf %803, %797 : vector<8x1xf32>
    %805 = arith.select %802, %804, %770 : vector<8x1xi1>, vector<8x1xf32>
    %cst_183 = arith.constant dense<0.000000e+00> : vector<8x32xf32>
    %806 = tpu.matmul %773, %1, %cst_183 {dimension_numbers = #tpu.dot_dimension_numbers<[1], [0], [0], [1], [0, 0, 1, 1], [], []>} : vector<8x32xf32>, vector<32x32xf32>, vector<8x32xf32> -> vector<8x32xf32>
    %807 = arith.addf %432, %806 : vector<8x32xf32>
    %808 = math.tanh %807 : vector<8x32xf32>
    %809 = vector.broadcast %4 : vector<1x32xf32> to vector<8x32xf32>
    %810 = arith.mulf %808, %809 : vector<8x32xf32>
    %cst_184 = arith.constant dense<0.000000e+00> : vector<8xf32>
    %811 = vector.multi_reduction <add>, %810, %cst_184 [1] : vector<8x32xf32> to vector<8xf32>
    %812 = vector.shape_cast %811 : vector<8xf32> to vector<8x1xf32>
    %813 = arith.addf %812, %7 : vector<8x1xf32>
    %814 = arith.negf %813 : vector<8x1xf32>
    %815 = math.exp %814 : vector<8x1xf32>
    %cst_185 = arith.constant 1.000000e+00 : f32
    %816 = vector.broadcast %cst_185 : f32 to vector<8x1xf32>
    %817 = arith.addf %816, %815 : vector<8x1xf32>
    %818 = arith.divf %816, %817 : vector<8x1xf32>
    %819 = arith.addf %797, %818 : vector<8x1xf32>
    %cst_186 = arith.constant 1.000000e+00 : f32
    %820 = vector.broadcast %cst_186 : f32 to vector<8x1xf32>
    %821 = arith.subf %819, %820 : vector<8x1xf32>
    %cst_187 = arith.constant 0.000000e+00 : f32
    %822 = vector.broadcast %cst_187 : f32 to vector<8x1xf32>
    %823 = arith.maximumf %821, %822 : vector<8x1xf32>
    %824 = arith.subf %818, %823 : vector<8x1xf32>
    %825 = arith.addf %796, %808 : vector<8x32xf32>
    %826 = vector.broadcast %824 : vector<8x1xf32> to vector<8x32xf32>
    %827 = arith.mulf %826, %808 : vector<8x32xf32>
    %828 = arith.addf %825, %827 : vector<8x32xf32>
    %829 = vector.shape_cast %802 : vector<8x1xi1> to vector<8x1xi1>
    %830 = vector.broadcast %829 : vector<8x1xi1> to vector<8x32xi1>
    %831 = arith.select %830, %828, %796 : vector<8x32xi1>, vector<8x32xf32>
    %832 = arith.select %802, %819, %797 : vector<8x1xi1>, vector<8x1xf32>
    %cst_188 = arith.constant 1.000000e+00 : f32
    %833 = vector.broadcast %cst_188 : f32 to vector<8x1xf32>
    %834 = arith.addf %800, %833 : vector<8x1xf32>
    %835 = arith.select %802, %834, %800 : vector<8x1xi1>, vector<8x1xf32>
    %836 = vector.broadcast %835 : vector<8x1xf32> to vector<8x32xf32>
    %837 = arith.divf %831, %836 : vector<8x32xf32>
    %838 = arith.addf %424, %805 : vector<8x1xf32>
    %839 = vector.broadcast %5 : vector<1x32xf32> to vector<8x32xf32>
    %840 = arith.mulf %837, %839 : vector<8x32xf32>
    %cst_189 = arith.constant dense<0.000000e+00> : vector<8xf32>
    %841 = vector.multi_reduction <add>, %840, %cst_189 [1] : vector<8x32xf32> to vector<8xf32>
    %842 = vector.shape_cast %841 : vector<8xf32> to vector<8x1xf32>
    %843 = arith.addf %842, %9 : vector<8x1xf32>
    %844 = vector.extract_strided_slice %13 {offsets = [16, 0], sizes = [8, 32], strides = [1, 1]} : vector<32x32xf32> to vector<8x32xf32>
    %845 = vector.broadcast %3 : vector<1x32xf32> to vector<8x32xf32>
    %846 = arith.addf %844, %845 : vector<8x32xf32>
    %cst_190 = arith.constant dense<0.000000e+00> : vector<8x32xf32>
    %847 = tpu.matmul %837, %1, %cst_190 {dimension_numbers = #tpu.dot_dimension_numbers<[1], [0], [0], [1], [0, 0, 1, 1], [], []>} : vector<8x32xf32>, vector<32x32xf32>, vector<8x32xf32> -> vector<8x32xf32>
    %848 = arith.addf %844, %847 : vector<8x32xf32>
    %849 = math.tanh %848 : vector<8x32xf32>
    %850 = vector.broadcast %4 : vector<1x32xf32> to vector<8x32xf32>
    %851 = arith.mulf %849, %850 : vector<8x32xf32>
    %cst_191 = arith.constant dense<0.000000e+00> : vector<8xf32>
    %852 = vector.multi_reduction <add>, %851, %cst_191 [1] : vector<8x32xf32> to vector<8xf32>
    %853 = vector.shape_cast %852 : vector<8xf32> to vector<8x1xf32>
    %854 = arith.addf %853, %7 : vector<8x1xf32>
    %855 = arith.negf %854 : vector<8x1xf32>
    %856 = math.exp %855 : vector<8x1xf32>
    %cst_192 = arith.constant 1.000000e+00 : f32
    %857 = vector.broadcast %cst_192 : f32 to vector<8x1xf32>
    %858 = arith.addf %857, %856 : vector<8x1xf32>
    %859 = arith.divf %857, %858 : vector<8x1xf32>
    %860 = vector.broadcast %859 : vector<8x1xf32> to vector<8x32xf32>
    %861 = arith.mulf %860, %849 : vector<8x32xf32>
    %862 = arith.addf %849, %861 : vector<8x32xf32>
    %cst_193 = arith.constant 1.000000e+00 : f32
    %863 = vector.broadcast %cst_193 : f32 to vector<8x1xf32>
    %cst_194 = arith.constant 0.000000e+00 : f32
    %864 = vector.broadcast %cst_194 : f32 to vector<8x1xf32>
    %cst_195 = arith.constant 9.900000e-01 : f32
    %c0_i32_196 = arith.constant 0 : i32
    %865 = vector.broadcast %cst_195 : f32 to vector<8x1xf32>
    %866 = arith.cmpf olt, %859, %865 : vector<8x1xf32>
    %cst_197 = arith.constant 0.000000e+00 : f32
    %867 = vector.broadcast %cst_197 : f32 to vector<8x1xf32>
    %868 = arith.subf %867, %859 : vector<8x1xf32>
    %869 = arith.select %866, %868, %864 : vector<8x1xi1>, vector<8x1xf32>
    %cst_198 = arith.constant dense<0.000000e+00> : vector<8x32xf32>
    %870 = tpu.matmul %849, %1, %cst_198 {dimension_numbers = #tpu.dot_dimension_numbers<[1], [0], [0], [1], [0, 0, 1, 1], [], []>} : vector<8x32xf32>, vector<32x32xf32>, vector<8x32xf32> -> vector<8x32xf32>
    %871 = arith.addf %846, %870 : vector<8x32xf32>
    %872 = math.tanh %871 : vector<8x32xf32>
    %873 = vector.broadcast %4 : vector<1x32xf32> to vector<8x32xf32>
    %874 = arith.mulf %872, %873 : vector<8x32xf32>
    %cst_199 = arith.constant dense<0.000000e+00> : vector<8xf32>
    %875 = vector.multi_reduction <add>, %874, %cst_199 [1] : vector<8x32xf32> to vector<8xf32>
    %876 = vector.shape_cast %875 : vector<8xf32> to vector<8x1xf32>
    %877 = arith.addf %876, %7 : vector<8x1xf32>
    %878 = arith.negf %877 : vector<8x1xf32>
    %879 = math.exp %878 : vector<8x1xf32>
    %cst_200 = arith.constant 1.000000e+00 : f32
    %880 = vector.broadcast %cst_200 : f32 to vector<8x1xf32>
    %881 = arith.addf %880, %879 : vector<8x1xf32>
    %882 = arith.divf %880, %881 : vector<8x1xf32>
    %883 = arith.addf %859, %882 : vector<8x1xf32>
    %cst_201 = arith.constant 1.000000e+00 : f32
    %884 = vector.broadcast %cst_201 : f32 to vector<8x1xf32>
    %885 = arith.subf %883, %884 : vector<8x1xf32>
    %cst_202 = arith.constant 0.000000e+00 : f32
    %886 = vector.broadcast %cst_202 : f32 to vector<8x1xf32>
    %887 = arith.maximumf %885, %886 : vector<8x1xf32>
    %888 = arith.subf %882, %887 : vector<8x1xf32>
    %889 = arith.addf %862, %872 : vector<8x32xf32>
    %890 = vector.broadcast %888 : vector<8x1xf32> to vector<8x32xf32>
    %891 = arith.mulf %890, %872 : vector<8x32xf32>
    %892 = arith.addf %889, %891 : vector<8x32xf32>
    %893 = vector.shape_cast %866 : vector<8x1xi1> to vector<8x1xi1>
    %894 = vector.broadcast %893 : vector<8x1xi1> to vector<8x32xi1>
    %895 = arith.select %894, %892, %862 : vector<8x32xi1>, vector<8x32xf32>
    %896 = arith.select %866, %883, %859 : vector<8x1xi1>, vector<8x1xf32>
    %cst_203 = arith.constant 1.000000e+00 : f32
    %897 = vector.broadcast %cst_203 : f32 to vector<8x1xf32>
    %898 = arith.addf %863, %897 : vector<8x1xf32>
    %899 = arith.select %866, %898, %863 : vector<8x1xi1>, vector<8x1xf32>
    %c1_i32_204 = arith.constant 1 : i32
    %900 = vector.broadcast %cst_195 : f32 to vector<8x1xf32>
    %901 = arith.cmpf olt, %896, %900 : vector<8x1xf32>
    %cst_205 = arith.constant 0.000000e+00 : f32
    %902 = vector.broadcast %cst_205 : f32 to vector<8x1xf32>
    %903 = arith.subf %902, %896 : vector<8x1xf32>
    %904 = arith.select %901, %903, %869 : vector<8x1xi1>, vector<8x1xf32>
    %cst_206 = arith.constant dense<0.000000e+00> : vector<8x32xf32>
    %905 = tpu.matmul %872, %1, %cst_206 {dimension_numbers = #tpu.dot_dimension_numbers<[1], [0], [0], [1], [0, 0, 1, 1], [], []>} : vector<8x32xf32>, vector<32x32xf32>, vector<8x32xf32> -> vector<8x32xf32>
    %906 = arith.addf %846, %905 : vector<8x32xf32>
    %907 = math.tanh %906 : vector<8x32xf32>
    %908 = vector.broadcast %4 : vector<1x32xf32> to vector<8x32xf32>
    %909 = arith.mulf %907, %908 : vector<8x32xf32>
    %cst_207 = arith.constant dense<0.000000e+00> : vector<8xf32>
    %910 = vector.multi_reduction <add>, %909, %cst_207 [1] : vector<8x32xf32> to vector<8xf32>
    %911 = vector.shape_cast %910 : vector<8xf32> to vector<8x1xf32>
    %912 = arith.addf %911, %7 : vector<8x1xf32>
    %913 = arith.negf %912 : vector<8x1xf32>
    %914 = math.exp %913 : vector<8x1xf32>
    %cst_208 = arith.constant 1.000000e+00 : f32
    %915 = vector.broadcast %cst_208 : f32 to vector<8x1xf32>
    %916 = arith.addf %915, %914 : vector<8x1xf32>
    %917 = arith.divf %915, %916 : vector<8x1xf32>
    %918 = arith.addf %896, %917 : vector<8x1xf32>
    %cst_209 = arith.constant 1.000000e+00 : f32
    %919 = vector.broadcast %cst_209 : f32 to vector<8x1xf32>
    %920 = arith.subf %918, %919 : vector<8x1xf32>
    %cst_210 = arith.constant 0.000000e+00 : f32
    %921 = vector.broadcast %cst_210 : f32 to vector<8x1xf32>
    %922 = arith.maximumf %920, %921 : vector<8x1xf32>
    %923 = arith.subf %917, %922 : vector<8x1xf32>
    %924 = arith.addf %895, %907 : vector<8x32xf32>
    %925 = vector.broadcast %923 : vector<8x1xf32> to vector<8x32xf32>
    %926 = arith.mulf %925, %907 : vector<8x32xf32>
    %927 = arith.addf %924, %926 : vector<8x32xf32>
    %928 = vector.shape_cast %901 : vector<8x1xi1> to vector<8x1xi1>
    %929 = vector.broadcast %928 : vector<8x1xi1> to vector<8x32xi1>
    %930 = arith.select %929, %927, %895 : vector<8x32xi1>, vector<8x32xf32>
    %931 = arith.select %901, %918, %896 : vector<8x1xi1>, vector<8x1xf32>
    %cst_211 = arith.constant 1.000000e+00 : f32
    %932 = vector.broadcast %cst_211 : f32 to vector<8x1xf32>
    %933 = arith.addf %899, %932 : vector<8x1xf32>
    %934 = arith.select %901, %933, %899 : vector<8x1xi1>, vector<8x1xf32>
    %c2_i32_212 = arith.constant 2 : i32
    %935 = vector.broadcast %cst_195 : f32 to vector<8x1xf32>
    %936 = arith.cmpf olt, %931, %935 : vector<8x1xf32>
    %cst_213 = arith.constant 0.000000e+00 : f32
    %937 = vector.broadcast %cst_213 : f32 to vector<8x1xf32>
    %938 = arith.subf %937, %931 : vector<8x1xf32>
    %939 = arith.select %936, %938, %904 : vector<8x1xi1>, vector<8x1xf32>
    %cst_214 = arith.constant dense<0.000000e+00> : vector<8x32xf32>
    %940 = tpu.matmul %907, %1, %cst_214 {dimension_numbers = #tpu.dot_dimension_numbers<[1], [0], [0], [1], [0, 0, 1, 1], [], []>} : vector<8x32xf32>, vector<32x32xf32>, vector<8x32xf32> -> vector<8x32xf32>
    %941 = arith.addf %846, %940 : vector<8x32xf32>
    %942 = math.tanh %941 : vector<8x32xf32>
    %943 = vector.broadcast %4 : vector<1x32xf32> to vector<8x32xf32>
    %944 = arith.mulf %942, %943 : vector<8x32xf32>
    %cst_215 = arith.constant dense<0.000000e+00> : vector<8xf32>
    %945 = vector.multi_reduction <add>, %944, %cst_215 [1] : vector<8x32xf32> to vector<8xf32>
    %946 = vector.shape_cast %945 : vector<8xf32> to vector<8x1xf32>
    %947 = arith.addf %946, %7 : vector<8x1xf32>
    %948 = arith.negf %947 : vector<8x1xf32>
    %949 = math.exp %948 : vector<8x1xf32>
    %cst_216 = arith.constant 1.000000e+00 : f32
    %950 = vector.broadcast %cst_216 : f32 to vector<8x1xf32>
    %951 = arith.addf %950, %949 : vector<8x1xf32>
    %952 = arith.divf %950, %951 : vector<8x1xf32>
    %953 = arith.addf %931, %952 : vector<8x1xf32>
    %cst_217 = arith.constant 1.000000e+00 : f32
    %954 = vector.broadcast %cst_217 : f32 to vector<8x1xf32>
    %955 = arith.subf %953, %954 : vector<8x1xf32>
    %cst_218 = arith.constant 0.000000e+00 : f32
    %956 = vector.broadcast %cst_218 : f32 to vector<8x1xf32>
    %957 = arith.maximumf %955, %956 : vector<8x1xf32>
    %958 = arith.subf %952, %957 : vector<8x1xf32>
    %959 = arith.addf %930, %942 : vector<8x32xf32>
    %960 = vector.broadcast %958 : vector<8x1xf32> to vector<8x32xf32>
    %961 = arith.mulf %960, %942 : vector<8x32xf32>
    %962 = arith.addf %959, %961 : vector<8x32xf32>
    %963 = vector.shape_cast %936 : vector<8x1xi1> to vector<8x1xi1>
    %964 = vector.broadcast %963 : vector<8x1xi1> to vector<8x32xi1>
    %965 = arith.select %964, %962, %930 : vector<8x32xi1>, vector<8x32xf32>
    %966 = arith.select %936, %953, %931 : vector<8x1xi1>, vector<8x1xf32>
    %cst_219 = arith.constant 1.000000e+00 : f32
    %967 = vector.broadcast %cst_219 : f32 to vector<8x1xf32>
    %968 = arith.addf %934, %967 : vector<8x1xf32>
    %969 = arith.select %936, %968, %934 : vector<8x1xi1>, vector<8x1xf32>
    %c3_i32_220 = arith.constant 3 : i32
    %970 = vector.broadcast %cst_195 : f32 to vector<8x1xf32>
    %971 = arith.cmpf olt, %966, %970 : vector<8x1xf32>
    %cst_221 = arith.constant 0.000000e+00 : f32
    %972 = vector.broadcast %cst_221 : f32 to vector<8x1xf32>
    %973 = arith.subf %972, %966 : vector<8x1xf32>
    %974 = arith.select %971, %973, %939 : vector<8x1xi1>, vector<8x1xf32>
    %cst_222 = arith.constant dense<0.000000e+00> : vector<8x32xf32>
    %975 = tpu.matmul %942, %1, %cst_222 {dimension_numbers = #tpu.dot_dimension_numbers<[1], [0], [0], [1], [0, 0, 1, 1], [], []>} : vector<8x32xf32>, vector<32x32xf32>, vector<8x32xf32> -> vector<8x32xf32>
    %976 = arith.addf %846, %975 : vector<8x32xf32>
    %977 = math.tanh %976 : vector<8x32xf32>
    %978 = vector.broadcast %4 : vector<1x32xf32> to vector<8x32xf32>
    %979 = arith.mulf %977, %978 : vector<8x32xf32>
    %cst_223 = arith.constant dense<0.000000e+00> : vector<8xf32>
    %980 = vector.multi_reduction <add>, %979, %cst_223 [1] : vector<8x32xf32> to vector<8xf32>
    %981 = vector.shape_cast %980 : vector<8xf32> to vector<8x1xf32>
    %982 = arith.addf %981, %7 : vector<8x1xf32>
    %983 = arith.negf %982 : vector<8x1xf32>
    %984 = math.exp %983 : vector<8x1xf32>
    %cst_224 = arith.constant 1.000000e+00 : f32
    %985 = vector.broadcast %cst_224 : f32 to vector<8x1xf32>
    %986 = arith.addf %985, %984 : vector<8x1xf32>
    %987 = arith.divf %985, %986 : vector<8x1xf32>
    %988 = arith.addf %966, %987 : vector<8x1xf32>
    %cst_225 = arith.constant 1.000000e+00 : f32
    %989 = vector.broadcast %cst_225 : f32 to vector<8x1xf32>
    %990 = arith.subf %988, %989 : vector<8x1xf32>
    %cst_226 = arith.constant 0.000000e+00 : f32
    %991 = vector.broadcast %cst_226 : f32 to vector<8x1xf32>
    %992 = arith.maximumf %990, %991 : vector<8x1xf32>
    %993 = arith.subf %987, %992 : vector<8x1xf32>
    %994 = arith.addf %965, %977 : vector<8x32xf32>
    %995 = vector.broadcast %993 : vector<8x1xf32> to vector<8x32xf32>
    %996 = arith.mulf %995, %977 : vector<8x32xf32>
    %997 = arith.addf %994, %996 : vector<8x32xf32>
    %998 = vector.shape_cast %971 : vector<8x1xi1> to vector<8x1xi1>
    %999 = vector.broadcast %998 : vector<8x1xi1> to vector<8x32xi1>
    %1000 = arith.select %999, %997, %965 : vector<8x32xi1>, vector<8x32xf32>
    %1001 = arith.select %971, %988, %966 : vector<8x1xi1>, vector<8x1xf32>
    %cst_227 = arith.constant 1.000000e+00 : f32
    %1002 = vector.broadcast %cst_227 : f32 to vector<8x1xf32>
    %1003 = arith.addf %969, %1002 : vector<8x1xf32>
    %1004 = arith.select %971, %1003, %969 : vector<8x1xi1>, vector<8x1xf32>
    %c4_i32_228 = arith.constant 4 : i32
    %1005 = vector.broadcast %cst_195 : f32 to vector<8x1xf32>
    %1006 = arith.cmpf olt, %1001, %1005 : vector<8x1xf32>
    %cst_229 = arith.constant 0.000000e+00 : f32
    %1007 = vector.broadcast %cst_229 : f32 to vector<8x1xf32>
    %1008 = arith.subf %1007, %1001 : vector<8x1xf32>
    %1009 = arith.select %1006, %1008, %974 : vector<8x1xi1>, vector<8x1xf32>
    %cst_230 = arith.constant dense<0.000000e+00> : vector<8x32xf32>
    %1010 = tpu.matmul %977, %1, %cst_230 {dimension_numbers = #tpu.dot_dimension_numbers<[1], [0], [0], [1], [0, 0, 1, 1], [], []>} : vector<8x32xf32>, vector<32x32xf32>, vector<8x32xf32> -> vector<8x32xf32>
    %1011 = arith.addf %846, %1010 : vector<8x32xf32>
    %1012 = math.tanh %1011 : vector<8x32xf32>
    %1013 = vector.broadcast %4 : vector<1x32xf32> to vector<8x32xf32>
    %1014 = arith.mulf %1012, %1013 : vector<8x32xf32>
    %cst_231 = arith.constant dense<0.000000e+00> : vector<8xf32>
    %1015 = vector.multi_reduction <add>, %1014, %cst_231 [1] : vector<8x32xf32> to vector<8xf32>
    %1016 = vector.shape_cast %1015 : vector<8xf32> to vector<8x1xf32>
    %1017 = arith.addf %1016, %7 : vector<8x1xf32>
    %1018 = arith.negf %1017 : vector<8x1xf32>
    %1019 = math.exp %1018 : vector<8x1xf32>
    %cst_232 = arith.constant 1.000000e+00 : f32
    %1020 = vector.broadcast %cst_232 : f32 to vector<8x1xf32>
    %1021 = arith.addf %1020, %1019 : vector<8x1xf32>
    %1022 = arith.divf %1020, %1021 : vector<8x1xf32>
    %1023 = arith.addf %1001, %1022 : vector<8x1xf32>
    %cst_233 = arith.constant 1.000000e+00 : f32
    %1024 = vector.broadcast %cst_233 : f32 to vector<8x1xf32>
    %1025 = arith.subf %1023, %1024 : vector<8x1xf32>
    %cst_234 = arith.constant 0.000000e+00 : f32
    %1026 = vector.broadcast %cst_234 : f32 to vector<8x1xf32>
    %1027 = arith.maximumf %1025, %1026 : vector<8x1xf32>
    %1028 = arith.subf %1022, %1027 : vector<8x1xf32>
    %1029 = arith.addf %1000, %1012 : vector<8x32xf32>
    %1030 = vector.broadcast %1028 : vector<8x1xf32> to vector<8x32xf32>
    %1031 = arith.mulf %1030, %1012 : vector<8x32xf32>
    %1032 = arith.addf %1029, %1031 : vector<8x32xf32>
    %1033 = vector.shape_cast %1006 : vector<8x1xi1> to vector<8x1xi1>
    %1034 = vector.broadcast %1033 : vector<8x1xi1> to vector<8x32xi1>
    %1035 = arith.select %1034, %1032, %1000 : vector<8x32xi1>, vector<8x32xf32>
    %1036 = arith.select %1006, %1023, %1001 : vector<8x1xi1>, vector<8x1xf32>
    %cst_235 = arith.constant 1.000000e+00 : f32
    %1037 = vector.broadcast %cst_235 : f32 to vector<8x1xf32>
    %1038 = arith.addf %1004, %1037 : vector<8x1xf32>
    %1039 = arith.select %1006, %1038, %1004 : vector<8x1xi1>, vector<8x1xf32>
    %c5_i32_236 = arith.constant 5 : i32
    %1040 = vector.broadcast %cst_195 : f32 to vector<8x1xf32>
    %1041 = arith.cmpf olt, %1036, %1040 : vector<8x1xf32>
    %cst_237 = arith.constant 0.000000e+00 : f32
    %1042 = vector.broadcast %cst_237 : f32 to vector<8x1xf32>
    %1043 = arith.subf %1042, %1036 : vector<8x1xf32>
    %1044 = arith.select %1041, %1043, %1009 : vector<8x1xi1>, vector<8x1xf32>
    %cst_238 = arith.constant dense<0.000000e+00> : vector<8x32xf32>
    %1045 = tpu.matmul %1012, %1, %cst_238 {dimension_numbers = #tpu.dot_dimension_numbers<[1], [0], [0], [1], [0, 0, 1, 1], [], []>} : vector<8x32xf32>, vector<32x32xf32>, vector<8x32xf32> -> vector<8x32xf32>
    %1046 = arith.addf %846, %1045 : vector<8x32xf32>
    %1047 = math.tanh %1046 : vector<8x32xf32>
    %1048 = vector.broadcast %4 : vector<1x32xf32> to vector<8x32xf32>
    %1049 = arith.mulf %1047, %1048 : vector<8x32xf32>
    %cst_239 = arith.constant dense<0.000000e+00> : vector<8xf32>
    %1050 = vector.multi_reduction <add>, %1049, %cst_239 [1] : vector<8x32xf32> to vector<8xf32>
    %1051 = vector.shape_cast %1050 : vector<8xf32> to vector<8x1xf32>
    %1052 = arith.addf %1051, %7 : vector<8x1xf32>
    %1053 = arith.negf %1052 : vector<8x1xf32>
    %1054 = math.exp %1053 : vector<8x1xf32>
    %cst_240 = arith.constant 1.000000e+00 : f32
    %1055 = vector.broadcast %cst_240 : f32 to vector<8x1xf32>
    %1056 = arith.addf %1055, %1054 : vector<8x1xf32>
    %1057 = arith.divf %1055, %1056 : vector<8x1xf32>
    %1058 = arith.addf %1036, %1057 : vector<8x1xf32>
    %cst_241 = arith.constant 1.000000e+00 : f32
    %1059 = vector.broadcast %cst_241 : f32 to vector<8x1xf32>
    %1060 = arith.subf %1058, %1059 : vector<8x1xf32>
    %cst_242 = arith.constant 0.000000e+00 : f32
    %1061 = vector.broadcast %cst_242 : f32 to vector<8x1xf32>
    %1062 = arith.maximumf %1060, %1061 : vector<8x1xf32>
    %1063 = arith.subf %1057, %1062 : vector<8x1xf32>
    %1064 = arith.addf %1035, %1047 : vector<8x32xf32>
    %1065 = vector.broadcast %1063 : vector<8x1xf32> to vector<8x32xf32>
    %1066 = arith.mulf %1065, %1047 : vector<8x32xf32>
    %1067 = arith.addf %1064, %1066 : vector<8x32xf32>
    %1068 = vector.shape_cast %1041 : vector<8x1xi1> to vector<8x1xi1>
    %1069 = vector.broadcast %1068 : vector<8x1xi1> to vector<8x32xi1>
    %1070 = arith.select %1069, %1067, %1035 : vector<8x32xi1>, vector<8x32xf32>
    %1071 = arith.select %1041, %1058, %1036 : vector<8x1xi1>, vector<8x1xf32>
    %cst_243 = arith.constant 1.000000e+00 : f32
    %1072 = vector.broadcast %cst_243 : f32 to vector<8x1xf32>
    %1073 = arith.addf %1039, %1072 : vector<8x1xf32>
    %1074 = arith.select %1041, %1073, %1039 : vector<8x1xi1>, vector<8x1xf32>
    %c6_i32_244 = arith.constant 6 : i32
    %1075 = vector.broadcast %cst_195 : f32 to vector<8x1xf32>
    %1076 = arith.cmpf olt, %1071, %1075 : vector<8x1xf32>
    %cst_245 = arith.constant 0.000000e+00 : f32
    %1077 = vector.broadcast %cst_245 : f32 to vector<8x1xf32>
    %1078 = arith.subf %1077, %1071 : vector<8x1xf32>
    %1079 = arith.select %1076, %1078, %1044 : vector<8x1xi1>, vector<8x1xf32>
    %cst_246 = arith.constant dense<0.000000e+00> : vector<8x32xf32>
    %1080 = tpu.matmul %1047, %1, %cst_246 {dimension_numbers = #tpu.dot_dimension_numbers<[1], [0], [0], [1], [0, 0, 1, 1], [], []>} : vector<8x32xf32>, vector<32x32xf32>, vector<8x32xf32> -> vector<8x32xf32>
    %1081 = arith.addf %846, %1080 : vector<8x32xf32>
    %1082 = math.tanh %1081 : vector<8x32xf32>
    %1083 = vector.broadcast %4 : vector<1x32xf32> to vector<8x32xf32>
    %1084 = arith.mulf %1082, %1083 : vector<8x32xf32>
    %cst_247 = arith.constant dense<0.000000e+00> : vector<8xf32>
    %1085 = vector.multi_reduction <add>, %1084, %cst_247 [1] : vector<8x32xf32> to vector<8xf32>
    %1086 = vector.shape_cast %1085 : vector<8xf32> to vector<8x1xf32>
    %1087 = arith.addf %1086, %7 : vector<8x1xf32>
    %1088 = arith.negf %1087 : vector<8x1xf32>
    %1089 = math.exp %1088 : vector<8x1xf32>
    %cst_248 = arith.constant 1.000000e+00 : f32
    %1090 = vector.broadcast %cst_248 : f32 to vector<8x1xf32>
    %1091 = arith.addf %1090, %1089 : vector<8x1xf32>
    %1092 = arith.divf %1090, %1091 : vector<8x1xf32>
    %1093 = arith.addf %1071, %1092 : vector<8x1xf32>
    %cst_249 = arith.constant 1.000000e+00 : f32
    %1094 = vector.broadcast %cst_249 : f32 to vector<8x1xf32>
    %1095 = arith.subf %1093, %1094 : vector<8x1xf32>
    %cst_250 = arith.constant 0.000000e+00 : f32
    %1096 = vector.broadcast %cst_250 : f32 to vector<8x1xf32>
    %1097 = arith.maximumf %1095, %1096 : vector<8x1xf32>
    %1098 = arith.subf %1092, %1097 : vector<8x1xf32>
    %1099 = arith.addf %1070, %1082 : vector<8x32xf32>
    %1100 = vector.broadcast %1098 : vector<8x1xf32> to vector<8x32xf32>
    %1101 = arith.mulf %1100, %1082 : vector<8x32xf32>
    %1102 = arith.addf %1099, %1101 : vector<8x32xf32>
    %1103 = vector.shape_cast %1076 : vector<8x1xi1> to vector<8x1xi1>
    %1104 = vector.broadcast %1103 : vector<8x1xi1> to vector<8x32xi1>
    %1105 = arith.select %1104, %1102, %1070 : vector<8x32xi1>, vector<8x32xf32>
    %1106 = arith.select %1076, %1093, %1071 : vector<8x1xi1>, vector<8x1xf32>
    %cst_251 = arith.constant 1.000000e+00 : f32
    %1107 = vector.broadcast %cst_251 : f32 to vector<8x1xf32>
    %1108 = arith.addf %1074, %1107 : vector<8x1xf32>
    %1109 = arith.select %1076, %1108, %1074 : vector<8x1xi1>, vector<8x1xf32>
    %c7_i32_252 = arith.constant 7 : i32
    %1110 = vector.broadcast %cst_195 : f32 to vector<8x1xf32>
    %1111 = arith.cmpf olt, %1106, %1110 : vector<8x1xf32>
    %cst_253 = arith.constant 0.000000e+00 : f32
    %1112 = vector.broadcast %cst_253 : f32 to vector<8x1xf32>
    %1113 = arith.subf %1112, %1106 : vector<8x1xf32>
    %1114 = arith.select %1111, %1113, %1079 : vector<8x1xi1>, vector<8x1xf32>
    %cst_254 = arith.constant dense<0.000000e+00> : vector<8x32xf32>
    %1115 = tpu.matmul %1082, %1, %cst_254 {dimension_numbers = #tpu.dot_dimension_numbers<[1], [0], [0], [1], [0, 0, 1, 1], [], []>} : vector<8x32xf32>, vector<32x32xf32>, vector<8x32xf32> -> vector<8x32xf32>
    %1116 = arith.addf %846, %1115 : vector<8x32xf32>
    %1117 = math.tanh %1116 : vector<8x32xf32>
    %1118 = vector.broadcast %4 : vector<1x32xf32> to vector<8x32xf32>
    %1119 = arith.mulf %1117, %1118 : vector<8x32xf32>
    %cst_255 = arith.constant dense<0.000000e+00> : vector<8xf32>
    %1120 = vector.multi_reduction <add>, %1119, %cst_255 [1] : vector<8x32xf32> to vector<8xf32>
    %1121 = vector.shape_cast %1120 : vector<8xf32> to vector<8x1xf32>
    %1122 = arith.addf %1121, %7 : vector<8x1xf32>
    %1123 = arith.negf %1122 : vector<8x1xf32>
    %1124 = math.exp %1123 : vector<8x1xf32>
    %cst_256 = arith.constant 1.000000e+00 : f32
    %1125 = vector.broadcast %cst_256 : f32 to vector<8x1xf32>
    %1126 = arith.addf %1125, %1124 : vector<8x1xf32>
    %1127 = arith.divf %1125, %1126 : vector<8x1xf32>
    %1128 = arith.addf %1106, %1127 : vector<8x1xf32>
    %cst_257 = arith.constant 1.000000e+00 : f32
    %1129 = vector.broadcast %cst_257 : f32 to vector<8x1xf32>
    %1130 = arith.subf %1128, %1129 : vector<8x1xf32>
    %cst_258 = arith.constant 0.000000e+00 : f32
    %1131 = vector.broadcast %cst_258 : f32 to vector<8x1xf32>
    %1132 = arith.maximumf %1130, %1131 : vector<8x1xf32>
    %1133 = arith.subf %1127, %1132 : vector<8x1xf32>
    %1134 = arith.addf %1105, %1117 : vector<8x32xf32>
    %1135 = vector.broadcast %1133 : vector<8x1xf32> to vector<8x32xf32>
    %1136 = arith.mulf %1135, %1117 : vector<8x32xf32>
    %1137 = arith.addf %1134, %1136 : vector<8x32xf32>
    %1138 = vector.shape_cast %1111 : vector<8x1xi1> to vector<8x1xi1>
    %1139 = vector.broadcast %1138 : vector<8x1xi1> to vector<8x32xi1>
    %1140 = arith.select %1139, %1137, %1105 : vector<8x32xi1>, vector<8x32xf32>
    %1141 = arith.select %1111, %1128, %1106 : vector<8x1xi1>, vector<8x1xf32>
    %cst_259 = arith.constant 1.000000e+00 : f32
    %1142 = vector.broadcast %cst_259 : f32 to vector<8x1xf32>
    %1143 = arith.addf %1109, %1142 : vector<8x1xf32>
    %1144 = arith.select %1111, %1143, %1109 : vector<8x1xi1>, vector<8x1xf32>
    %c8_i32_260 = arith.constant 8 : i32
    %1145 = vector.broadcast %cst_195 : f32 to vector<8x1xf32>
    %1146 = arith.cmpf olt, %1141, %1145 : vector<8x1xf32>
    %cst_261 = arith.constant 0.000000e+00 : f32
    %1147 = vector.broadcast %cst_261 : f32 to vector<8x1xf32>
    %1148 = arith.subf %1147, %1141 : vector<8x1xf32>
    %1149 = arith.select %1146, %1148, %1114 : vector<8x1xi1>, vector<8x1xf32>
    %cst_262 = arith.constant dense<0.000000e+00> : vector<8x32xf32>
    %1150 = tpu.matmul %1117, %1, %cst_262 {dimension_numbers = #tpu.dot_dimension_numbers<[1], [0], [0], [1], [0, 0, 1, 1], [], []>} : vector<8x32xf32>, vector<32x32xf32>, vector<8x32xf32> -> vector<8x32xf32>
    %1151 = arith.addf %846, %1150 : vector<8x32xf32>
    %1152 = math.tanh %1151 : vector<8x32xf32>
    %1153 = vector.broadcast %4 : vector<1x32xf32> to vector<8x32xf32>
    %1154 = arith.mulf %1152, %1153 : vector<8x32xf32>
    %cst_263 = arith.constant dense<0.000000e+00> : vector<8xf32>
    %1155 = vector.multi_reduction <add>, %1154, %cst_263 [1] : vector<8x32xf32> to vector<8xf32>
    %1156 = vector.shape_cast %1155 : vector<8xf32> to vector<8x1xf32>
    %1157 = arith.addf %1156, %7 : vector<8x1xf32>
    %1158 = arith.negf %1157 : vector<8x1xf32>
    %1159 = math.exp %1158 : vector<8x1xf32>
    %cst_264 = arith.constant 1.000000e+00 : f32
    %1160 = vector.broadcast %cst_264 : f32 to vector<8x1xf32>
    %1161 = arith.addf %1160, %1159 : vector<8x1xf32>
    %1162 = arith.divf %1160, %1161 : vector<8x1xf32>
    %1163 = arith.addf %1141, %1162 : vector<8x1xf32>
    %cst_265 = arith.constant 1.000000e+00 : f32
    %1164 = vector.broadcast %cst_265 : f32 to vector<8x1xf32>
    %1165 = arith.subf %1163, %1164 : vector<8x1xf32>
    %cst_266 = arith.constant 0.000000e+00 : f32
    %1166 = vector.broadcast %cst_266 : f32 to vector<8x1xf32>
    %1167 = arith.maximumf %1165, %1166 : vector<8x1xf32>
    %1168 = arith.subf %1162, %1167 : vector<8x1xf32>
    %1169 = arith.addf %1140, %1152 : vector<8x32xf32>
    %1170 = vector.broadcast %1168 : vector<8x1xf32> to vector<8x32xf32>
    %1171 = arith.mulf %1170, %1152 : vector<8x32xf32>
    %1172 = arith.addf %1169, %1171 : vector<8x32xf32>
    %1173 = vector.shape_cast %1146 : vector<8x1xi1> to vector<8x1xi1>
    %1174 = vector.broadcast %1173 : vector<8x1xi1> to vector<8x32xi1>
    %1175 = arith.select %1174, %1172, %1140 : vector<8x32xi1>, vector<8x32xf32>
    %1176 = arith.select %1146, %1163, %1141 : vector<8x1xi1>, vector<8x1xf32>
    %cst_267 = arith.constant 1.000000e+00 : f32
    %1177 = vector.broadcast %cst_267 : f32 to vector<8x1xf32>
    %1178 = arith.addf %1144, %1177 : vector<8x1xf32>
    %1179 = arith.select %1146, %1178, %1144 : vector<8x1xi1>, vector<8x1xf32>
    %c9_i32_268 = arith.constant 9 : i32
    %1180 = vector.broadcast %cst_195 : f32 to vector<8x1xf32>
    %1181 = arith.cmpf olt, %1176, %1180 : vector<8x1xf32>
    %cst_269 = arith.constant 0.000000e+00 : f32
    %1182 = vector.broadcast %cst_269 : f32 to vector<8x1xf32>
    %1183 = arith.subf %1182, %1176 : vector<8x1xf32>
    %1184 = arith.select %1181, %1183, %1149 : vector<8x1xi1>, vector<8x1xf32>
    %cst_270 = arith.constant dense<0.000000e+00> : vector<8x32xf32>
    %1185 = tpu.matmul %1152, %1, %cst_270 {dimension_numbers = #tpu.dot_dimension_numbers<[1], [0], [0], [1], [0, 0, 1, 1], [], []>} : vector<8x32xf32>, vector<32x32xf32>, vector<8x32xf32> -> vector<8x32xf32>
    %1186 = arith.addf %846, %1185 : vector<8x32xf32>
    %1187 = math.tanh %1186 : vector<8x32xf32>
    %1188 = vector.broadcast %4 : vector<1x32xf32> to vector<8x32xf32>
    %1189 = arith.mulf %1187, %1188 : vector<8x32xf32>
    %cst_271 = arith.constant dense<0.000000e+00> : vector<8xf32>
    %1190 = vector.multi_reduction <add>, %1189, %cst_271 [1] : vector<8x32xf32> to vector<8xf32>
    %1191 = vector.shape_cast %1190 : vector<8xf32> to vector<8x1xf32>
    %1192 = arith.addf %1191, %7 : vector<8x1xf32>
    %1193 = arith.negf %1192 : vector<8x1xf32>
    %1194 = math.exp %1193 : vector<8x1xf32>
    %cst_272 = arith.constant 1.000000e+00 : f32
    %1195 = vector.broadcast %cst_272 : f32 to vector<8x1xf32>
    %1196 = arith.addf %1195, %1194 : vector<8x1xf32>
    %1197 = arith.divf %1195, %1196 : vector<8x1xf32>
    %1198 = arith.addf %1176, %1197 : vector<8x1xf32>
    %cst_273 = arith.constant 1.000000e+00 : f32
    %1199 = vector.broadcast %cst_273 : f32 to vector<8x1xf32>
    %1200 = arith.subf %1198, %1199 : vector<8x1xf32>
    %cst_274 = arith.constant 0.000000e+00 : f32
    %1201 = vector.broadcast %cst_274 : f32 to vector<8x1xf32>
    %1202 = arith.maximumf %1200, %1201 : vector<8x1xf32>
    %1203 = arith.subf %1197, %1202 : vector<8x1xf32>
    %1204 = arith.addf %1175, %1187 : vector<8x32xf32>
    %1205 = vector.broadcast %1203 : vector<8x1xf32> to vector<8x32xf32>
    %1206 = arith.mulf %1205, %1187 : vector<8x32xf32>
    %1207 = arith.addf %1204, %1206 : vector<8x32xf32>
    %1208 = vector.shape_cast %1181 : vector<8x1xi1> to vector<8x1xi1>
    %1209 = vector.broadcast %1208 : vector<8x1xi1> to vector<8x32xi1>
    %1210 = arith.select %1209, %1207, %1175 : vector<8x32xi1>, vector<8x32xf32>
    %1211 = arith.select %1181, %1198, %1176 : vector<8x1xi1>, vector<8x1xf32>
    %cst_275 = arith.constant 1.000000e+00 : f32
    %1212 = vector.broadcast %cst_275 : f32 to vector<8x1xf32>
    %1213 = arith.addf %1179, %1212 : vector<8x1xf32>
    %1214 = arith.select %1181, %1213, %1179 : vector<8x1xi1>, vector<8x1xf32>
    %c10_i32_276 = arith.constant 10 : i32
    %1215 = vector.broadcast %cst_195 : f32 to vector<8x1xf32>
    %1216 = arith.cmpf olt, %1211, %1215 : vector<8x1xf32>
    %cst_277 = arith.constant 0.000000e+00 : f32
    %1217 = vector.broadcast %cst_277 : f32 to vector<8x1xf32>
    %1218 = arith.subf %1217, %1211 : vector<8x1xf32>
    %1219 = arith.select %1216, %1218, %1184 : vector<8x1xi1>, vector<8x1xf32>
    %cst_278 = arith.constant dense<0.000000e+00> : vector<8x32xf32>
    %1220 = tpu.matmul %1187, %1, %cst_278 {dimension_numbers = #tpu.dot_dimension_numbers<[1], [0], [0], [1], [0, 0, 1, 1], [], []>} : vector<8x32xf32>, vector<32x32xf32>, vector<8x32xf32> -> vector<8x32xf32>
    %1221 = arith.addf %846, %1220 : vector<8x32xf32>
    %1222 = math.tanh %1221 : vector<8x32xf32>
    %1223 = vector.broadcast %4 : vector<1x32xf32> to vector<8x32xf32>
    %1224 = arith.mulf %1222, %1223 : vector<8x32xf32>
    %cst_279 = arith.constant dense<0.000000e+00> : vector<8xf32>
    %1225 = vector.multi_reduction <add>, %1224, %cst_279 [1] : vector<8x32xf32> to vector<8xf32>
    %1226 = vector.shape_cast %1225 : vector<8xf32> to vector<8x1xf32>
    %1227 = arith.addf %1226, %7 : vector<8x1xf32>
    %1228 = arith.negf %1227 : vector<8x1xf32>
    %1229 = math.exp %1228 : vector<8x1xf32>
    %cst_280 = arith.constant 1.000000e+00 : f32
    %1230 = vector.broadcast %cst_280 : f32 to vector<8x1xf32>
    %1231 = arith.addf %1230, %1229 : vector<8x1xf32>
    %1232 = arith.divf %1230, %1231 : vector<8x1xf32>
    %1233 = arith.addf %1211, %1232 : vector<8x1xf32>
    %cst_281 = arith.constant 1.000000e+00 : f32
    %1234 = vector.broadcast %cst_281 : f32 to vector<8x1xf32>
    %1235 = arith.subf %1233, %1234 : vector<8x1xf32>
    %cst_282 = arith.constant 0.000000e+00 : f32
    %1236 = vector.broadcast %cst_282 : f32 to vector<8x1xf32>
    %1237 = arith.maximumf %1235, %1236 : vector<8x1xf32>
    %1238 = arith.subf %1232, %1237 : vector<8x1xf32>
    %1239 = arith.addf %1210, %1222 : vector<8x32xf32>
    %1240 = vector.broadcast %1238 : vector<8x1xf32> to vector<8x32xf32>
    %1241 = arith.mulf %1240, %1222 : vector<8x32xf32>
    %1242 = arith.addf %1239, %1241 : vector<8x32xf32>
    %1243 = vector.shape_cast %1216 : vector<8x1xi1> to vector<8x1xi1>
    %1244 = vector.broadcast %1243 : vector<8x1xi1> to vector<8x32xi1>
    %1245 = arith.select %1244, %1242, %1210 : vector<8x32xi1>, vector<8x32xf32>
    %1246 = arith.select %1216, %1233, %1211 : vector<8x1xi1>, vector<8x1xf32>
    %cst_283 = arith.constant 1.000000e+00 : f32
    %1247 = vector.broadcast %cst_283 : f32 to vector<8x1xf32>
    %1248 = arith.addf %1214, %1247 : vector<8x1xf32>
    %1249 = arith.select %1216, %1248, %1214 : vector<8x1xi1>, vector<8x1xf32>
    %1250 = vector.broadcast %1249 : vector<8x1xf32> to vector<8x32xf32>
    %1251 = arith.divf %1245, %1250 : vector<8x32xf32>
    %1252 = arith.addf %838, %1219 : vector<8x1xf32>
    %1253 = vector.broadcast %5 : vector<1x32xf32> to vector<8x32xf32>
    %1254 = arith.mulf %1251, %1253 : vector<8x32xf32>
    %cst_284 = arith.constant dense<0.000000e+00> : vector<8xf32>
    %1255 = vector.multi_reduction <add>, %1254, %cst_284 [1] : vector<8x32xf32> to vector<8xf32>
    %1256 = vector.shape_cast %1255 : vector<8xf32> to vector<8x1xf32>
    %1257 = arith.addf %1256, %9 : vector<8x1xf32>
    %1258 = vector.extract_strided_slice %13 {offsets = [24, 0], sizes = [8, 32], strides = [1, 1]} : vector<32x32xf32> to vector<8x32xf32>
    %1259 = vector.broadcast %3 : vector<1x32xf32> to vector<8x32xf32>
    %1260 = arith.addf %1258, %1259 : vector<8x32xf32>
    %cst_285 = arith.constant dense<0.000000e+00> : vector<8x32xf32>
    %1261 = tpu.matmul %1251, %1, %cst_285 {dimension_numbers = #tpu.dot_dimension_numbers<[1], [0], [0], [1], [0, 0, 1, 1], [], []>} : vector<8x32xf32>, vector<32x32xf32>, vector<8x32xf32> -> vector<8x32xf32>
    %1262 = arith.addf %1258, %1261 : vector<8x32xf32>
    %1263 = math.tanh %1262 : vector<8x32xf32>
    %1264 = vector.broadcast %4 : vector<1x32xf32> to vector<8x32xf32>
    %1265 = arith.mulf %1263, %1264 : vector<8x32xf32>
    %cst_286 = arith.constant dense<0.000000e+00> : vector<8xf32>
    %1266 = vector.multi_reduction <add>, %1265, %cst_286 [1] : vector<8x32xf32> to vector<8xf32>
    %1267 = vector.shape_cast %1266 : vector<8xf32> to vector<8x1xf32>
    %1268 = arith.addf %1267, %7 : vector<8x1xf32>
    %1269 = arith.negf %1268 : vector<8x1xf32>
    %1270 = math.exp %1269 : vector<8x1xf32>
    %cst_287 = arith.constant 1.000000e+00 : f32
    %1271 = vector.broadcast %cst_287 : f32 to vector<8x1xf32>
    %1272 = arith.addf %1271, %1270 : vector<8x1xf32>
    %1273 = arith.divf %1271, %1272 : vector<8x1xf32>
    %1274 = vector.broadcast %1273 : vector<8x1xf32> to vector<8x32xf32>
    %1275 = arith.mulf %1274, %1263 : vector<8x32xf32>
    %1276 = arith.addf %1263, %1275 : vector<8x32xf32>
    %cst_288 = arith.constant 1.000000e+00 : f32
    %1277 = vector.broadcast %cst_288 : f32 to vector<8x1xf32>
    %cst_289 = arith.constant 0.000000e+00 : f32
    %1278 = vector.broadcast %cst_289 : f32 to vector<8x1xf32>
    %cst_290 = arith.constant 9.900000e-01 : f32
    %c0_i32_291 = arith.constant 0 : i32
    %1279 = vector.broadcast %cst_290 : f32 to vector<8x1xf32>
    %1280 = arith.cmpf olt, %1273, %1279 : vector<8x1xf32>
    %cst_292 = arith.constant 0.000000e+00 : f32
    %1281 = vector.broadcast %cst_292 : f32 to vector<8x1xf32>
    %1282 = arith.subf %1281, %1273 : vector<8x1xf32>
    %1283 = arith.select %1280, %1282, %1278 : vector<8x1xi1>, vector<8x1xf32>
    %cst_293 = arith.constant dense<0.000000e+00> : vector<8x32xf32>
    %1284 = tpu.matmul %1263, %1, %cst_293 {dimension_numbers = #tpu.dot_dimension_numbers<[1], [0], [0], [1], [0, 0, 1, 1], [], []>} : vector<8x32xf32>, vector<32x32xf32>, vector<8x32xf32> -> vector<8x32xf32>
    %1285 = arith.addf %1260, %1284 : vector<8x32xf32>
    %1286 = math.tanh %1285 : vector<8x32xf32>
    %1287 = vector.broadcast %4 : vector<1x32xf32> to vector<8x32xf32>
    %1288 = arith.mulf %1286, %1287 : vector<8x32xf32>
    %cst_294 = arith.constant dense<0.000000e+00> : vector<8xf32>
    %1289 = vector.multi_reduction <add>, %1288, %cst_294 [1] : vector<8x32xf32> to vector<8xf32>
    %1290 = vector.shape_cast %1289 : vector<8xf32> to vector<8x1xf32>
    %1291 = arith.addf %1290, %7 : vector<8x1xf32>
    %1292 = arith.negf %1291 : vector<8x1xf32>
    %1293 = math.exp %1292 : vector<8x1xf32>
    %cst_295 = arith.constant 1.000000e+00 : f32
    %1294 = vector.broadcast %cst_295 : f32 to vector<8x1xf32>
    %1295 = arith.addf %1294, %1293 : vector<8x1xf32>
    %1296 = arith.divf %1294, %1295 : vector<8x1xf32>
    %1297 = arith.addf %1273, %1296 : vector<8x1xf32>
    %cst_296 = arith.constant 1.000000e+00 : f32
    %1298 = vector.broadcast %cst_296 : f32 to vector<8x1xf32>
    %1299 = arith.subf %1297, %1298 : vector<8x1xf32>
    %cst_297 = arith.constant 0.000000e+00 : f32
    %1300 = vector.broadcast %cst_297 : f32 to vector<8x1xf32>
    %1301 = arith.maximumf %1299, %1300 : vector<8x1xf32>
    %1302 = arith.subf %1296, %1301 : vector<8x1xf32>
    %1303 = arith.addf %1276, %1286 : vector<8x32xf32>
    %1304 = vector.broadcast %1302 : vector<8x1xf32> to vector<8x32xf32>
    %1305 = arith.mulf %1304, %1286 : vector<8x32xf32>
    %1306 = arith.addf %1303, %1305 : vector<8x32xf32>
    %1307 = vector.shape_cast %1280 : vector<8x1xi1> to vector<8x1xi1>
    %1308 = vector.broadcast %1307 : vector<8x1xi1> to vector<8x32xi1>
    %1309 = arith.select %1308, %1306, %1276 : vector<8x32xi1>, vector<8x32xf32>
    %1310 = arith.select %1280, %1297, %1273 : vector<8x1xi1>, vector<8x1xf32>
    %cst_298 = arith.constant 1.000000e+00 : f32
    %1311 = vector.broadcast %cst_298 : f32 to vector<8x1xf32>
    %1312 = arith.addf %1277, %1311 : vector<8x1xf32>
    %1313 = arith.select %1280, %1312, %1277 : vector<8x1xi1>, vector<8x1xf32>
    %c1_i32_299 = arith.constant 1 : i32
    %1314 = vector.broadcast %cst_290 : f32 to vector<8x1xf32>
    %1315 = arith.cmpf olt, %1310, %1314 : vector<8x1xf32>
    %cst_300 = arith.constant 0.000000e+00 : f32
    %1316 = vector.broadcast %cst_300 : f32 to vector<8x1xf32>
    %1317 = arith.subf %1316, %1310 : vector<8x1xf32>
    %1318 = arith.select %1315, %1317, %1283 : vector<8x1xi1>, vector<8x1xf32>
    %cst_301 = arith.constant dense<0.000000e+00> : vector<8x32xf32>
    %1319 = tpu.matmul %1286, %1, %cst_301 {dimension_numbers = #tpu.dot_dimension_numbers<[1], [0], [0], [1], [0, 0, 1, 1], [], []>} : vector<8x32xf32>, vector<32x32xf32>, vector<8x32xf32> -> vector<8x32xf32>
    %1320 = arith.addf %1260, %1319 : vector<8x32xf32>
    %1321 = math.tanh %1320 : vector<8x32xf32>
    %1322 = vector.broadcast %4 : vector<1x32xf32> to vector<8x32xf32>
    %1323 = arith.mulf %1321, %1322 : vector<8x32xf32>
    %cst_302 = arith.constant dense<0.000000e+00> : vector<8xf32>
    %1324 = vector.multi_reduction <add>, %1323, %cst_302 [1] : vector<8x32xf32> to vector<8xf32>
    %1325 = vector.shape_cast %1324 : vector<8xf32> to vector<8x1xf32>
    %1326 = arith.addf %1325, %7 : vector<8x1xf32>
    %1327 = arith.negf %1326 : vector<8x1xf32>
    %1328 = math.exp %1327 : vector<8x1xf32>
    %cst_303 = arith.constant 1.000000e+00 : f32
    %1329 = vector.broadcast %cst_303 : f32 to vector<8x1xf32>
    %1330 = arith.addf %1329, %1328 : vector<8x1xf32>
    %1331 = arith.divf %1329, %1330 : vector<8x1xf32>
    %1332 = arith.addf %1310, %1331 : vector<8x1xf32>
    %cst_304 = arith.constant 1.000000e+00 : f32
    %1333 = vector.broadcast %cst_304 : f32 to vector<8x1xf32>
    %1334 = arith.subf %1332, %1333 : vector<8x1xf32>
    %cst_305 = arith.constant 0.000000e+00 : f32
    %1335 = vector.broadcast %cst_305 : f32 to vector<8x1xf32>
    %1336 = arith.maximumf %1334, %1335 : vector<8x1xf32>
    %1337 = arith.subf %1331, %1336 : vector<8x1xf32>
    %1338 = arith.addf %1309, %1321 : vector<8x32xf32>
    %1339 = vector.broadcast %1337 : vector<8x1xf32> to vector<8x32xf32>
    %1340 = arith.mulf %1339, %1321 : vector<8x32xf32>
    %1341 = arith.addf %1338, %1340 : vector<8x32xf32>
    %1342 = vector.shape_cast %1315 : vector<8x1xi1> to vector<8x1xi1>
    %1343 = vector.broadcast %1342 : vector<8x1xi1> to vector<8x32xi1>
    %1344 = arith.select %1343, %1341, %1309 : vector<8x32xi1>, vector<8x32xf32>
    %1345 = arith.select %1315, %1332, %1310 : vector<8x1xi1>, vector<8x1xf32>
    %cst_306 = arith.constant 1.000000e+00 : f32
    %1346 = vector.broadcast %cst_306 : f32 to vector<8x1xf32>
    %1347 = arith.addf %1313, %1346 : vector<8x1xf32>
    %1348 = arith.select %1315, %1347, %1313 : vector<8x1xi1>, vector<8x1xf32>
    %c2_i32_307 = arith.constant 2 : i32
    %1349 = vector.broadcast %cst_290 : f32 to vector<8x1xf32>
    %1350 = arith.cmpf olt, %1345, %1349 : vector<8x1xf32>
    %cst_308 = arith.constant 0.000000e+00 : f32
    %1351 = vector.broadcast %cst_308 : f32 to vector<8x1xf32>
    %1352 = arith.subf %1351, %1345 : vector<8x1xf32>
    %1353 = arith.select %1350, %1352, %1318 : vector<8x1xi1>, vector<8x1xf32>
    %cst_309 = arith.constant dense<0.000000e+00> : vector<8x32xf32>
    %1354 = tpu.matmul %1321, %1, %cst_309 {dimension_numbers = #tpu.dot_dimension_numbers<[1], [0], [0], [1], [0, 0, 1, 1], [], []>} : vector<8x32xf32>, vector<32x32xf32>, vector<8x32xf32> -> vector<8x32xf32>
    %1355 = arith.addf %1260, %1354 : vector<8x32xf32>
    %1356 = math.tanh %1355 : vector<8x32xf32>
    %1357 = vector.broadcast %4 : vector<1x32xf32> to vector<8x32xf32>
    %1358 = arith.mulf %1356, %1357 : vector<8x32xf32>
    %cst_310 = arith.constant dense<0.000000e+00> : vector<8xf32>
    %1359 = vector.multi_reduction <add>, %1358, %cst_310 [1] : vector<8x32xf32> to vector<8xf32>
    %1360 = vector.shape_cast %1359 : vector<8xf32> to vector<8x1xf32>
    %1361 = arith.addf %1360, %7 : vector<8x1xf32>
    %1362 = arith.negf %1361 : vector<8x1xf32>
    %1363 = math.exp %1362 : vector<8x1xf32>
    %cst_311 = arith.constant 1.000000e+00 : f32
    %1364 = vector.broadcast %cst_311 : f32 to vector<8x1xf32>
    %1365 = arith.addf %1364, %1363 : vector<8x1xf32>
    %1366 = arith.divf %1364, %1365 : vector<8x1xf32>
    %1367 = arith.addf %1345, %1366 : vector<8x1xf32>
    %cst_312 = arith.constant 1.000000e+00 : f32
    %1368 = vector.broadcast %cst_312 : f32 to vector<8x1xf32>
    %1369 = arith.subf %1367, %1368 : vector<8x1xf32>
    %cst_313 = arith.constant 0.000000e+00 : f32
    %1370 = vector.broadcast %cst_313 : f32 to vector<8x1xf32>
    %1371 = arith.maximumf %1369, %1370 : vector<8x1xf32>
    %1372 = arith.subf %1366, %1371 : vector<8x1xf32>
    %1373 = arith.addf %1344, %1356 : vector<8x32xf32>
    %1374 = vector.broadcast %1372 : vector<8x1xf32> to vector<8x32xf32>
    %1375 = arith.mulf %1374, %1356 : vector<8x32xf32>
    %1376 = arith.addf %1373, %1375 : vector<8x32xf32>
    %1377 = vector.shape_cast %1350 : vector<8x1xi1> to vector<8x1xi1>
    %1378 = vector.broadcast %1377 : vector<8x1xi1> to vector<8x32xi1>
    %1379 = arith.select %1378, %1376, %1344 : vector<8x32xi1>, vector<8x32xf32>
    %1380 = arith.select %1350, %1367, %1345 : vector<8x1xi1>, vector<8x1xf32>
    %cst_314 = arith.constant 1.000000e+00 : f32
    %1381 = vector.broadcast %cst_314 : f32 to vector<8x1xf32>
    %1382 = arith.addf %1348, %1381 : vector<8x1xf32>
    %1383 = arith.select %1350, %1382, %1348 : vector<8x1xi1>, vector<8x1xf32>
    %c3_i32_315 = arith.constant 3 : i32
    %1384 = vector.broadcast %cst_290 : f32 to vector<8x1xf32>
    %1385 = arith.cmpf olt, %1380, %1384 : vector<8x1xf32>
    %cst_316 = arith.constant 0.000000e+00 : f32
    %1386 = vector.broadcast %cst_316 : f32 to vector<8x1xf32>
    %1387 = arith.subf %1386, %1380 : vector<8x1xf32>
    %1388 = arith.select %1385, %1387, %1353 : vector<8x1xi1>, vector<8x1xf32>
    %cst_317 = arith.constant dense<0.000000e+00> : vector<8x32xf32>
    %1389 = tpu.matmul %1356, %1, %cst_317 {dimension_numbers = #tpu.dot_dimension_numbers<[1], [0], [0], [1], [0, 0, 1, 1], [], []>} : vector<8x32xf32>, vector<32x32xf32>, vector<8x32xf32> -> vector<8x32xf32>
    %1390 = arith.addf %1260, %1389 : vector<8x32xf32>
    %1391 = math.tanh %1390 : vector<8x32xf32>
    %1392 = vector.broadcast %4 : vector<1x32xf32> to vector<8x32xf32>
    %1393 = arith.mulf %1391, %1392 : vector<8x32xf32>
    %cst_318 = arith.constant dense<0.000000e+00> : vector<8xf32>
    %1394 = vector.multi_reduction <add>, %1393, %cst_318 [1] : vector<8x32xf32> to vector<8xf32>
    %1395 = vector.shape_cast %1394 : vector<8xf32> to vector<8x1xf32>
    %1396 = arith.addf %1395, %7 : vector<8x1xf32>
    %1397 = arith.negf %1396 : vector<8x1xf32>
    %1398 = math.exp %1397 : vector<8x1xf32>
    %cst_319 = arith.constant 1.000000e+00 : f32
    %1399 = vector.broadcast %cst_319 : f32 to vector<8x1xf32>
    %1400 = arith.addf %1399, %1398 : vector<8x1xf32>
    %1401 = arith.divf %1399, %1400 : vector<8x1xf32>
    %1402 = arith.addf %1380, %1401 : vector<8x1xf32>
    %cst_320 = arith.constant 1.000000e+00 : f32
    %1403 = vector.broadcast %cst_320 : f32 to vector<8x1xf32>
    %1404 = arith.subf %1402, %1403 : vector<8x1xf32>
    %cst_321 = arith.constant 0.000000e+00 : f32
    %1405 = vector.broadcast %cst_321 : f32 to vector<8x1xf32>
    %1406 = arith.maximumf %1404, %1405 : vector<8x1xf32>
    %1407 = arith.subf %1401, %1406 : vector<8x1xf32>
    %1408 = arith.addf %1379, %1391 : vector<8x32xf32>
    %1409 = vector.broadcast %1407 : vector<8x1xf32> to vector<8x32xf32>
    %1410 = arith.mulf %1409, %1391 : vector<8x32xf32>
    %1411 = arith.addf %1408, %1410 : vector<8x32xf32>
    %1412 = vector.shape_cast %1385 : vector<8x1xi1> to vector<8x1xi1>
    %1413 = vector.broadcast %1412 : vector<8x1xi1> to vector<8x32xi1>
    %1414 = arith.select %1413, %1411, %1379 : vector<8x32xi1>, vector<8x32xf32>
    %1415 = arith.select %1385, %1402, %1380 : vector<8x1xi1>, vector<8x1xf32>
    %cst_322 = arith.constant 1.000000e+00 : f32
    %1416 = vector.broadcast %cst_322 : f32 to vector<8x1xf32>
    %1417 = arith.addf %1383, %1416 : vector<8x1xf32>
    %1418 = arith.select %1385, %1417, %1383 : vector<8x1xi1>, vector<8x1xf32>
    %c4_i32_323 = arith.constant 4 : i32
    %1419 = vector.broadcast %cst_290 : f32 to vector<8x1xf32>
    %1420 = arith.cmpf olt, %1415, %1419 : vector<8x1xf32>
    %cst_324 = arith.constant 0.000000e+00 : f32
    %1421 = vector.broadcast %cst_324 : f32 to vector<8x1xf32>
    %1422 = arith.subf %1421, %1415 : vector<8x1xf32>
    %1423 = arith.select %1420, %1422, %1388 : vector<8x1xi1>, vector<8x1xf32>
    %cst_325 = arith.constant dense<0.000000e+00> : vector<8x32xf32>
    %1424 = tpu.matmul %1391, %1, %cst_325 {dimension_numbers = #tpu.dot_dimension_numbers<[1], [0], [0], [1], [0, 0, 1, 1], [], []>} : vector<8x32xf32>, vector<32x32xf32>, vector<8x32xf32> -> vector<8x32xf32>
    %1425 = arith.addf %1260, %1424 : vector<8x32xf32>
    %1426 = math.tanh %1425 : vector<8x32xf32>
    %1427 = vector.broadcast %4 : vector<1x32xf32> to vector<8x32xf32>
    %1428 = arith.mulf %1426, %1427 : vector<8x32xf32>
    %cst_326 = arith.constant dense<0.000000e+00> : vector<8xf32>
    %1429 = vector.multi_reduction <add>, %1428, %cst_326 [1] : vector<8x32xf32> to vector<8xf32>
    %1430 = vector.shape_cast %1429 : vector<8xf32> to vector<8x1xf32>
    %1431 = arith.addf %1430, %7 : vector<8x1xf32>
    %1432 = arith.negf %1431 : vector<8x1xf32>
    %1433 = math.exp %1432 : vector<8x1xf32>
    %cst_327 = arith.constant 1.000000e+00 : f32
    %1434 = vector.broadcast %cst_327 : f32 to vector<8x1xf32>
    %1435 = arith.addf %1434, %1433 : vector<8x1xf32>
    %1436 = arith.divf %1434, %1435 : vector<8x1xf32>
    %1437 = arith.addf %1415, %1436 : vector<8x1xf32>
    %cst_328 = arith.constant 1.000000e+00 : f32
    %1438 = vector.broadcast %cst_328 : f32 to vector<8x1xf32>
    %1439 = arith.subf %1437, %1438 : vector<8x1xf32>
    %cst_329 = arith.constant 0.000000e+00 : f32
    %1440 = vector.broadcast %cst_329 : f32 to vector<8x1xf32>
    %1441 = arith.maximumf %1439, %1440 : vector<8x1xf32>
    %1442 = arith.subf %1436, %1441 : vector<8x1xf32>
    %1443 = arith.addf %1414, %1426 : vector<8x32xf32>
    %1444 = vector.broadcast %1442 : vector<8x1xf32> to vector<8x32xf32>
    %1445 = arith.mulf %1444, %1426 : vector<8x32xf32>
    %1446 = arith.addf %1443, %1445 : vector<8x32xf32>
    %1447 = vector.shape_cast %1420 : vector<8x1xi1> to vector<8x1xi1>
    %1448 = vector.broadcast %1447 : vector<8x1xi1> to vector<8x32xi1>
    %1449 = arith.select %1448, %1446, %1414 : vector<8x32xi1>, vector<8x32xf32>
    %1450 = arith.select %1420, %1437, %1415 : vector<8x1xi1>, vector<8x1xf32>
    %cst_330 = arith.constant 1.000000e+00 : f32
    %1451 = vector.broadcast %cst_330 : f32 to vector<8x1xf32>
    %1452 = arith.addf %1418, %1451 : vector<8x1xf32>
    %1453 = arith.select %1420, %1452, %1418 : vector<8x1xi1>, vector<8x1xf32>
    %c5_i32_331 = arith.constant 5 : i32
    %1454 = vector.broadcast %cst_290 : f32 to vector<8x1xf32>
    %1455 = arith.cmpf olt, %1450, %1454 : vector<8x1xf32>
    %cst_332 = arith.constant 0.000000e+00 : f32
    %1456 = vector.broadcast %cst_332 : f32 to vector<8x1xf32>
    %1457 = arith.subf %1456, %1450 : vector<8x1xf32>
    %1458 = arith.select %1455, %1457, %1423 : vector<8x1xi1>, vector<8x1xf32>
    %cst_333 = arith.constant dense<0.000000e+00> : vector<8x32xf32>
    %1459 = tpu.matmul %1426, %1, %cst_333 {dimension_numbers = #tpu.dot_dimension_numbers<[1], [0], [0], [1], [0, 0, 1, 1], [], []>} : vector<8x32xf32>, vector<32x32xf32>, vector<8x32xf32> -> vector<8x32xf32>
    %1460 = arith.addf %1260, %1459 : vector<8x32xf32>
    %1461 = math.tanh %1460 : vector<8x32xf32>
    %1462 = vector.broadcast %4 : vector<1x32xf32> to vector<8x32xf32>
    %1463 = arith.mulf %1461, %1462 : vector<8x32xf32>
    %cst_334 = arith.constant dense<0.000000e+00> : vector<8xf32>
    %1464 = vector.multi_reduction <add>, %1463, %cst_334 [1] : vector<8x32xf32> to vector<8xf32>
    %1465 = vector.shape_cast %1464 : vector<8xf32> to vector<8x1xf32>
    %1466 = arith.addf %1465, %7 : vector<8x1xf32>
    %1467 = arith.negf %1466 : vector<8x1xf32>
    %1468 = math.exp %1467 : vector<8x1xf32>
    %cst_335 = arith.constant 1.000000e+00 : f32
    %1469 = vector.broadcast %cst_335 : f32 to vector<8x1xf32>
    %1470 = arith.addf %1469, %1468 : vector<8x1xf32>
    %1471 = arith.divf %1469, %1470 : vector<8x1xf32>
    %1472 = arith.addf %1450, %1471 : vector<8x1xf32>
    %cst_336 = arith.constant 1.000000e+00 : f32
    %1473 = vector.broadcast %cst_336 : f32 to vector<8x1xf32>
    %1474 = arith.subf %1472, %1473 : vector<8x1xf32>
    %cst_337 = arith.constant 0.000000e+00 : f32
    %1475 = vector.broadcast %cst_337 : f32 to vector<8x1xf32>
    %1476 = arith.maximumf %1474, %1475 : vector<8x1xf32>
    %1477 = arith.subf %1471, %1476 : vector<8x1xf32>
    %1478 = arith.addf %1449, %1461 : vector<8x32xf32>
    %1479 = vector.broadcast %1477 : vector<8x1xf32> to vector<8x32xf32>
    %1480 = arith.mulf %1479, %1461 : vector<8x32xf32>
    %1481 = arith.addf %1478, %1480 : vector<8x32xf32>
    %1482 = vector.shape_cast %1455 : vector<8x1xi1> to vector<8x1xi1>
    %1483 = vector.broadcast %1482 : vector<8x1xi1> to vector<8x32xi1>
    %1484 = arith.select %1483, %1481, %1449 : vector<8x32xi1>, vector<8x32xf32>
    %1485 = arith.select %1455, %1472, %1450 : vector<8x1xi1>, vector<8x1xf32>
    %cst_338 = arith.constant 1.000000e+00 : f32
    %1486 = vector.broadcast %cst_338 : f32 to vector<8x1xf32>
    %1487 = arith.addf %1453, %1486 : vector<8x1xf32>
    %1488 = arith.select %1455, %1487, %1453 : vector<8x1xi1>, vector<8x1xf32>
    %c6_i32_339 = arith.constant 6 : i32
    %1489 = vector.broadcast %cst_290 : f32 to vector<8x1xf32>
    %1490 = arith.cmpf olt, %1485, %1489 : vector<8x1xf32>
    %cst_340 = arith.constant 0.000000e+00 : f32
    %1491 = vector.broadcast %cst_340 : f32 to vector<8x1xf32>
    %1492 = arith.subf %1491, %1485 : vector<8x1xf32>
    %1493 = arith.select %1490, %1492, %1458 : vector<8x1xi1>, vector<8x1xf32>
    %cst_341 = arith.constant dense<0.000000e+00> : vector<8x32xf32>
    %1494 = tpu.matmul %1461, %1, %cst_341 {dimension_numbers = #tpu.dot_dimension_numbers<[1], [0], [0], [1], [0, 0, 1, 1], [], []>} : vector<8x32xf32>, vector<32x32xf32>, vector<8x32xf32> -> vector<8x32xf32>
    %1495 = arith.addf %1260, %1494 : vector<8x32xf32>
    %1496 = math.tanh %1495 : vector<8x32xf32>
    %1497 = vector.broadcast %4 : vector<1x32xf32> to vector<8x32xf32>
    %1498 = arith.mulf %1496, %1497 : vector<8x32xf32>
    %cst_342 = arith.constant dense<0.000000e+00> : vector<8xf32>
    %1499 = vector.multi_reduction <add>, %1498, %cst_342 [1] : vector<8x32xf32> to vector<8xf32>
    %1500 = vector.shape_cast %1499 : vector<8xf32> to vector<8x1xf32>
    %1501 = arith.addf %1500, %7 : vector<8x1xf32>
    %1502 = arith.negf %1501 : vector<8x1xf32>
    %1503 = math.exp %1502 : vector<8x1xf32>
    %cst_343 = arith.constant 1.000000e+00 : f32
    %1504 = vector.broadcast %cst_343 : f32 to vector<8x1xf32>
    %1505 = arith.addf %1504, %1503 : vector<8x1xf32>
    %1506 = arith.divf %1504, %1505 : vector<8x1xf32>
    %1507 = arith.addf %1485, %1506 : vector<8x1xf32>
    %cst_344 = arith.constant 1.000000e+00 : f32
    %1508 = vector.broadcast %cst_344 : f32 to vector<8x1xf32>
    %1509 = arith.subf %1507, %1508 : vector<8x1xf32>
    %cst_345 = arith.constant 0.000000e+00 : f32
    %1510 = vector.broadcast %cst_345 : f32 to vector<8x1xf32>
    %1511 = arith.maximumf %1509, %1510 : vector<8x1xf32>
    %1512 = arith.subf %1506, %1511 : vector<8x1xf32>
    %1513 = arith.addf %1484, %1496 : vector<8x32xf32>
    %1514 = vector.broadcast %1512 : vector<8x1xf32> to vector<8x32xf32>
    %1515 = arith.mulf %1514, %1496 : vector<8x32xf32>
    %1516 = arith.addf %1513, %1515 : vector<8x32xf32>
    %1517 = vector.shape_cast %1490 : vector<8x1xi1> to vector<8x1xi1>
    %1518 = vector.broadcast %1517 : vector<8x1xi1> to vector<8x32xi1>
    %1519 = arith.select %1518, %1516, %1484 : vector<8x32xi1>, vector<8x32xf32>
    %1520 = arith.select %1490, %1507, %1485 : vector<8x1xi1>, vector<8x1xf32>
    %cst_346 = arith.constant 1.000000e+00 : f32
    %1521 = vector.broadcast %cst_346 : f32 to vector<8x1xf32>
    %1522 = arith.addf %1488, %1521 : vector<8x1xf32>
    %1523 = arith.select %1490, %1522, %1488 : vector<8x1xi1>, vector<8x1xf32>
    %c7_i32_347 = arith.constant 7 : i32
    %1524 = vector.broadcast %cst_290 : f32 to vector<8x1xf32>
    %1525 = arith.cmpf olt, %1520, %1524 : vector<8x1xf32>
    %cst_348 = arith.constant 0.000000e+00 : f32
    %1526 = vector.broadcast %cst_348 : f32 to vector<8x1xf32>
    %1527 = arith.subf %1526, %1520 : vector<8x1xf32>
    %1528 = arith.select %1525, %1527, %1493 : vector<8x1xi1>, vector<8x1xf32>
    %cst_349 = arith.constant dense<0.000000e+00> : vector<8x32xf32>
    %1529 = tpu.matmul %1496, %1, %cst_349 {dimension_numbers = #tpu.dot_dimension_numbers<[1], [0], [0], [1], [0, 0, 1, 1], [], []>} : vector<8x32xf32>, vector<32x32xf32>, vector<8x32xf32> -> vector<8x32xf32>
    %1530 = arith.addf %1260, %1529 : vector<8x32xf32>
    %1531 = math.tanh %1530 : vector<8x32xf32>
    %1532 = vector.broadcast %4 : vector<1x32xf32> to vector<8x32xf32>
    %1533 = arith.mulf %1531, %1532 : vector<8x32xf32>
    %cst_350 = arith.constant dense<0.000000e+00> : vector<8xf32>
    %1534 = vector.multi_reduction <add>, %1533, %cst_350 [1] : vector<8x32xf32> to vector<8xf32>
    %1535 = vector.shape_cast %1534 : vector<8xf32> to vector<8x1xf32>
    %1536 = arith.addf %1535, %7 : vector<8x1xf32>
    %1537 = arith.negf %1536 : vector<8x1xf32>
    %1538 = math.exp %1537 : vector<8x1xf32>
    %cst_351 = arith.constant 1.000000e+00 : f32
    %1539 = vector.broadcast %cst_351 : f32 to vector<8x1xf32>
    %1540 = arith.addf %1539, %1538 : vector<8x1xf32>
    %1541 = arith.divf %1539, %1540 : vector<8x1xf32>
    %1542 = arith.addf %1520, %1541 : vector<8x1xf32>
    %cst_352 = arith.constant 1.000000e+00 : f32
    %1543 = vector.broadcast %cst_352 : f32 to vector<8x1xf32>
    %1544 = arith.subf %1542, %1543 : vector<8x1xf32>
    %cst_353 = arith.constant 0.000000e+00 : f32
    %1545 = vector.broadcast %cst_353 : f32 to vector<8x1xf32>
    %1546 = arith.maximumf %1544, %1545 : vector<8x1xf32>
    %1547 = arith.subf %1541, %1546 : vector<8x1xf32>
    %1548 = arith.addf %1519, %1531 : vector<8x32xf32>
    %1549 = vector.broadcast %1547 : vector<8x1xf32> to vector<8x32xf32>
    %1550 = arith.mulf %1549, %1531 : vector<8x32xf32>
    %1551 = arith.addf %1548, %1550 : vector<8x32xf32>
    %1552 = vector.shape_cast %1525 : vector<8x1xi1> to vector<8x1xi1>
    %1553 = vector.broadcast %1552 : vector<8x1xi1> to vector<8x32xi1>
    %1554 = arith.select %1553, %1551, %1519 : vector<8x32xi1>, vector<8x32xf32>
    %1555 = arith.select %1525, %1542, %1520 : vector<8x1xi1>, vector<8x1xf32>
    %cst_354 = arith.constant 1.000000e+00 : f32
    %1556 = vector.broadcast %cst_354 : f32 to vector<8x1xf32>
    %1557 = arith.addf %1523, %1556 : vector<8x1xf32>
    %1558 = arith.select %1525, %1557, %1523 : vector<8x1xi1>, vector<8x1xf32>
    %c8_i32_355 = arith.constant 8 : i32
    %1559 = vector.broadcast %cst_290 : f32 to vector<8x1xf32>
    %1560 = arith.cmpf olt, %1555, %1559 : vector<8x1xf32>
    %cst_356 = arith.constant 0.000000e+00 : f32
    %1561 = vector.broadcast %cst_356 : f32 to vector<8x1xf32>
    %1562 = arith.subf %1561, %1555 : vector<8x1xf32>
    %1563 = arith.select %1560, %1562, %1528 : vector<8x1xi1>, vector<8x1xf32>
    %cst_357 = arith.constant dense<0.000000e+00> : vector<8x32xf32>
    %1564 = tpu.matmul %1531, %1, %cst_357 {dimension_numbers = #tpu.dot_dimension_numbers<[1], [0], [0], [1], [0, 0, 1, 1], [], []>} : vector<8x32xf32>, vector<32x32xf32>, vector<8x32xf32> -> vector<8x32xf32>
    %1565 = arith.addf %1260, %1564 : vector<8x32xf32>
    %1566 = math.tanh %1565 : vector<8x32xf32>
    %1567 = vector.broadcast %4 : vector<1x32xf32> to vector<8x32xf32>
    %1568 = arith.mulf %1566, %1567 : vector<8x32xf32>
    %cst_358 = arith.constant dense<0.000000e+00> : vector<8xf32>
    %1569 = vector.multi_reduction <add>, %1568, %cst_358 [1] : vector<8x32xf32> to vector<8xf32>
    %1570 = vector.shape_cast %1569 : vector<8xf32> to vector<8x1xf32>
    %1571 = arith.addf %1570, %7 : vector<8x1xf32>
    %1572 = arith.negf %1571 : vector<8x1xf32>
    %1573 = math.exp %1572 : vector<8x1xf32>
    %cst_359 = arith.constant 1.000000e+00 : f32
    %1574 = vector.broadcast %cst_359 : f32 to vector<8x1xf32>
    %1575 = arith.addf %1574, %1573 : vector<8x1xf32>
    %1576 = arith.divf %1574, %1575 : vector<8x1xf32>
    %1577 = arith.addf %1555, %1576 : vector<8x1xf32>
    %cst_360 = arith.constant 1.000000e+00 : f32
    %1578 = vector.broadcast %cst_360 : f32 to vector<8x1xf32>
    %1579 = arith.subf %1577, %1578 : vector<8x1xf32>
    %cst_361 = arith.constant 0.000000e+00 : f32
    %1580 = vector.broadcast %cst_361 : f32 to vector<8x1xf32>
    %1581 = arith.maximumf %1579, %1580 : vector<8x1xf32>
    %1582 = arith.subf %1576, %1581 : vector<8x1xf32>
    %1583 = arith.addf %1554, %1566 : vector<8x32xf32>
    %1584 = vector.broadcast %1582 : vector<8x1xf32> to vector<8x32xf32>
    %1585 = arith.mulf %1584, %1566 : vector<8x32xf32>
    %1586 = arith.addf %1583, %1585 : vector<8x32xf32>
    %1587 = vector.shape_cast %1560 : vector<8x1xi1> to vector<8x1xi1>
    %1588 = vector.broadcast %1587 : vector<8x1xi1> to vector<8x32xi1>
    %1589 = arith.select %1588, %1586, %1554 : vector<8x32xi1>, vector<8x32xf32>
    %1590 = arith.select %1560, %1577, %1555 : vector<8x1xi1>, vector<8x1xf32>
    %cst_362 = arith.constant 1.000000e+00 : f32
    %1591 = vector.broadcast %cst_362 : f32 to vector<8x1xf32>
    %1592 = arith.addf %1558, %1591 : vector<8x1xf32>
    %1593 = arith.select %1560, %1592, %1558 : vector<8x1xi1>, vector<8x1xf32>
    %c9_i32_363 = arith.constant 9 : i32
    %1594 = vector.broadcast %cst_290 : f32 to vector<8x1xf32>
    %1595 = arith.cmpf olt, %1590, %1594 : vector<8x1xf32>
    %cst_364 = arith.constant 0.000000e+00 : f32
    %1596 = vector.broadcast %cst_364 : f32 to vector<8x1xf32>
    %1597 = arith.subf %1596, %1590 : vector<8x1xf32>
    %1598 = arith.select %1595, %1597, %1563 : vector<8x1xi1>, vector<8x1xf32>
    %cst_365 = arith.constant dense<0.000000e+00> : vector<8x32xf32>
    %1599 = tpu.matmul %1566, %1, %cst_365 {dimension_numbers = #tpu.dot_dimension_numbers<[1], [0], [0], [1], [0, 0, 1, 1], [], []>} : vector<8x32xf32>, vector<32x32xf32>, vector<8x32xf32> -> vector<8x32xf32>
    %1600 = arith.addf %1260, %1599 : vector<8x32xf32>
    %1601 = math.tanh %1600 : vector<8x32xf32>
    %1602 = vector.broadcast %4 : vector<1x32xf32> to vector<8x32xf32>
    %1603 = arith.mulf %1601, %1602 : vector<8x32xf32>
    %cst_366 = arith.constant dense<0.000000e+00> : vector<8xf32>
    %1604 = vector.multi_reduction <add>, %1603, %cst_366 [1] : vector<8x32xf32> to vector<8xf32>
    %1605 = vector.shape_cast %1604 : vector<8xf32> to vector<8x1xf32>
    %1606 = arith.addf %1605, %7 : vector<8x1xf32>
    %1607 = arith.negf %1606 : vector<8x1xf32>
    %1608 = math.exp %1607 : vector<8x1xf32>
    %cst_367 = arith.constant 1.000000e+00 : f32
    %1609 = vector.broadcast %cst_367 : f32 to vector<8x1xf32>
    %1610 = arith.addf %1609, %1608 : vector<8x1xf32>
    %1611 = arith.divf %1609, %1610 : vector<8x1xf32>
    %1612 = arith.addf %1590, %1611 : vector<8x1xf32>
    %cst_368 = arith.constant 1.000000e+00 : f32
    %1613 = vector.broadcast %cst_368 : f32 to vector<8x1xf32>
    %1614 = arith.subf %1612, %1613 : vector<8x1xf32>
    %cst_369 = arith.constant 0.000000e+00 : f32
    %1615 = vector.broadcast %cst_369 : f32 to vector<8x1xf32>
    %1616 = arith.maximumf %1614, %1615 : vector<8x1xf32>
    %1617 = arith.subf %1611, %1616 : vector<8x1xf32>
    %1618 = arith.addf %1589, %1601 : vector<8x32xf32>
    %1619 = vector.broadcast %1617 : vector<8x1xf32> to vector<8x32xf32>
    %1620 = arith.mulf %1619, %1601 : vector<8x32xf32>
    %1621 = arith.addf %1618, %1620 : vector<8x32xf32>
    %1622 = vector.shape_cast %1595 : vector<8x1xi1> to vector<8x1xi1>
    %1623 = vector.broadcast %1622 : vector<8x1xi1> to vector<8x32xi1>
    %1624 = arith.select %1623, %1621, %1589 : vector<8x32xi1>, vector<8x32xf32>
    %1625 = arith.select %1595, %1612, %1590 : vector<8x1xi1>, vector<8x1xf32>
    %cst_370 = arith.constant 1.000000e+00 : f32
    %1626 = vector.broadcast %cst_370 : f32 to vector<8x1xf32>
    %1627 = arith.addf %1593, %1626 : vector<8x1xf32>
    %1628 = arith.select %1595, %1627, %1593 : vector<8x1xi1>, vector<8x1xf32>
    %c10_i32_371 = arith.constant 10 : i32
    %1629 = vector.broadcast %cst_290 : f32 to vector<8x1xf32>
    %1630 = arith.cmpf olt, %1625, %1629 : vector<8x1xf32>
    %cst_372 = arith.constant 0.000000e+00 : f32
    %1631 = vector.broadcast %cst_372 : f32 to vector<8x1xf32>
    %1632 = arith.subf %1631, %1625 : vector<8x1xf32>
    %1633 = arith.select %1630, %1632, %1598 : vector<8x1xi1>, vector<8x1xf32>
    %cst_373 = arith.constant dense<0.000000e+00> : vector<8x32xf32>
    %1634 = tpu.matmul %1601, %1, %cst_373 {dimension_numbers = #tpu.dot_dimension_numbers<[1], [0], [0], [1], [0, 0, 1, 1], [], []>} : vector<8x32xf32>, vector<32x32xf32>, vector<8x32xf32> -> vector<8x32xf32>
    %1635 = arith.addf %1260, %1634 : vector<8x32xf32>
    %1636 = math.tanh %1635 : vector<8x32xf32>
    %1637 = vector.broadcast %4 : vector<1x32xf32> to vector<8x32xf32>
    %1638 = arith.mulf %1636, %1637 : vector<8x32xf32>
    %cst_374 = arith.constant dense<0.000000e+00> : vector<8xf32>
    %1639 = vector.multi_reduction <add>, %1638, %cst_374 [1] : vector<8x32xf32> to vector<8xf32>
    %1640 = vector.shape_cast %1639 : vector<8xf32> to vector<8x1xf32>
    %1641 = arith.addf %1640, %7 : vector<8x1xf32>
    %1642 = arith.negf %1641 : vector<8x1xf32>
    %1643 = math.exp %1642 : vector<8x1xf32>
    %cst_375 = arith.constant 1.000000e+00 : f32
    %1644 = vector.broadcast %cst_375 : f32 to vector<8x1xf32>
    %1645 = arith.addf %1644, %1643 : vector<8x1xf32>
    %1646 = arith.divf %1644, %1645 : vector<8x1xf32>
    %1647 = arith.addf %1625, %1646 : vector<8x1xf32>
    %cst_376 = arith.constant 1.000000e+00 : f32
    %1648 = vector.broadcast %cst_376 : f32 to vector<8x1xf32>
    %1649 = arith.subf %1647, %1648 : vector<8x1xf32>
    %cst_377 = arith.constant 0.000000e+00 : f32
    %1650 = vector.broadcast %cst_377 : f32 to vector<8x1xf32>
    %1651 = arith.maximumf %1649, %1650 : vector<8x1xf32>
    %1652 = arith.subf %1646, %1651 : vector<8x1xf32>
    %1653 = arith.addf %1624, %1636 : vector<8x32xf32>
    %1654 = vector.broadcast %1652 : vector<8x1xf32> to vector<8x32xf32>
    %1655 = arith.mulf %1654, %1636 : vector<8x32xf32>
    %1656 = arith.addf %1653, %1655 : vector<8x32xf32>
    %1657 = vector.shape_cast %1630 : vector<8x1xi1> to vector<8x1xi1>
    %1658 = vector.broadcast %1657 : vector<8x1xi1> to vector<8x32xi1>
    %1659 = arith.select %1658, %1656, %1624 : vector<8x32xi1>, vector<8x32xf32>
    %1660 = arith.select %1630, %1647, %1625 : vector<8x1xi1>, vector<8x1xf32>
    %cst_378 = arith.constant 1.000000e+00 : f32
    %1661 = vector.broadcast %cst_378 : f32 to vector<8x1xf32>
    %1662 = arith.addf %1628, %1661 : vector<8x1xf32>
    %1663 = arith.select %1630, %1662, %1628 : vector<8x1xi1>, vector<8x1xf32>
    %1664 = vector.broadcast %1663 : vector<8x1xf32> to vector<8x32xf32>
    %1665 = arith.divf %1659, %1664 : vector<8x32xf32>
    %1666 = arith.addf %1252, %1633 : vector<8x1xf32>
    %1667 = vector.broadcast %5 : vector<1x32xf32> to vector<8x32xf32>
    %1668 = arith.mulf %1665, %1667 : vector<8x32xf32>
    %cst_379 = arith.constant dense<0.000000e+00> : vector<8xf32>
    %1669 = vector.multi_reduction <add>, %1668, %cst_379 [1] : vector<8x32xf32> to vector<8xf32>
    %1670 = vector.shape_cast %1669 : vector<8xf32> to vector<8x1xf32>
    %1671 = arith.addf %1670, %9 : vector<8x1xf32>
    %cst_380 = arith.constant 0.000000e+00 : f32
    %1672 = vector.broadcast %cst_380 : f32 to vector<8x119xf32>
    %1673 = tpu.concatenate %429, %843, %1257, %1671, %421, %835, %1249, %1663, %1666, %1672 in 1 : vector<8x1xf32>, vector<8x1xf32>, vector<8x1xf32>, vector<8x1xf32>, vector<8x1xf32>, vector<8x1xf32>, vector<8x1xf32>, vector<8x1xf32>, vector<8x1xf32>, vector<8x119xf32> -> vector<8x128xf32>
    %c0_381 = arith.constant 0 : index
    %c0_382 = arith.constant 0 : index
    %1674 = vector.load %arg3[%c0_381, %c0_382] : memref<8x128xf32, #tpu.memory_space<vmem>>, vector<8x128xf32>
    tpu.vector_store %arg3[%c0_381, %c0_382], %1673 {strides = array<i32>} : memref<8x128xf32, #tpu.memory_space<vmem>>, vector<8x128xf32>,
    return
  }
}

</mosaic_0001>

<llo_original>
// kernel: logic_act_forward.1
$region0: #{logic_act_forward.1}
  #allocation0 [shape = 'u32[]', space=smem, size = 0x4, offset = 0x4, fixed_abs, tag = 'smem constant byte address 0x4 - core index']
  #allocation1 [shape = 'u32[144,128]{1,0:T(1,128)}', space=vmem, size = 0x12000, scoped, tag = 'internal scratch']
  %s0 = inlined_call_operand.vmem [shape: f32[32,16], index: 0, kind: input, shape index: {}]
  %s1 = inlined_call_operand.vmem [shape: f32[52,32], index: 1, kind: input, shape index: {}]
  %s2 = inlined_call_operand.vmem [shape: f32[2], index: 2, kind: input, shape index: {}]
  %s3 = inlined_call_operand.vmem [shape: f32[8,128], index: 3, kind: output, shape index: {}]
  %s4 = sld [smem:[#allocation0]]
  $region26: #{logic_act_forward.1} parent=0
    _
  %s6 = ssub.s32 1, %s4
  %s7 = scalar_select 0, %s6, %s4
  $region1: #{logic_act_forward.1} parent=0
    #allocation2 [shape = 'u8[512]{0}', space=smem, size = 0x200, scoped, tag = 'input window, operand 2, single buffered']
    #allocation3 [shape = 's32[1]{0}', space=sflag, size = 0x4, scoped, tag = 'scoped memory for logic_act_forward.1']
    %8 = vsyncpa [#allocation3], 0
    // Predicated region
    $region2: #{logic_act_forward.1} parent=1 // pred_check
      _
    $region3: #{logic_act_forward.1} parent=1 // pred_check_branch
      %10 = sbr.rel (0) target = $region5
    $region4: #{logic_act_forward.1} parent=1 // pred_region
      _
    $region5: #{logic_act_forward.1} parent=1 // pred_fallthru
      _
    // Predicated region
    $region6: #{logic_act_forward.1} parent=1 // pred_check
      _
    $region7: #{logic_act_forward.1} parent=1 // pred_check_branch
      %12 = sbr.rel (0) target = $region9
    $region8: #{logic_act_forward.1} parent=1 // pred_region
      _
    $region9: #{logic_act_forward.1} parent=1 // pred_fallthru
      _
    // Predicated region
    $region10: #{logic_act_forward.1} parent=1 // pred_check
      _
    $region11: #{logic_act_forward.1} parent=1 // pred_check_branch
      %14 = sbr.rel (0) target = $region13
    $region12: #{logic_act_forward.1} parent=1 // pred_region
      %s16 = ssub.s32 16, 16
      %17 = vsyncadd [#allocation3], %s16
      %s19 = sshll.u32 %s2, 4
      %s20 = int_to_ptr.vmem [resolvable:$true] %s19
      %22 = dma.vmem_to_smem %s20, 16, [#allocation2], [#allocation3]
    $region13: #{logic_act_forward.1} parent=1 // pred_fallthru
      _
    // Predicated region
    $region14: #{logic_act_forward.1} parent=1 // pred_check
      _
    $region15: #{logic_act_forward.1} parent=1 // pred_check_branch
      %24 = sbr.rel (0) target = $region17
    $region16: #{logic_act_forward.1} parent=1 // pred_region
      %25 = dma.done [#allocation3], 16
    $region17: #{logic_act_forward.1} parent=1 // pred_fallthru
      _
    %26 = sfence
    %v27 = vld [vmem:[%s1] sm:$0xff]
    %v28 = vld [vmem:[%s1 + $0x8] sm:$0xff]
    %v29 = vld [vmem:[%s1 + $0x10] sm:$0xff]
    %v30 = vld [vmem:[%s1 + $0x18] sm:$0xff]
    %v31 = vld [vmem:[%s1 + $0x20] sm:$0xff]
    %v32 = vld [vmem:[%s1 + $0x28] sm:$0xff]
    %v33 = vld [vmem:[%s1 + $0x30] sm:$0x1]
    %v34 = vld [vmem:[%s1 + $0x31] sm:$0x1]
    %v35 = vld [vmem:[%s1 + $0x32] sm:$0x1]
    %v36 = vld [vmem:[%s1 + $0x33] sm:$0x1]
    %s37 = sld [smem:[#allocation2]]
    %v38 = vstv %s37
    %s39 = sld [smem:[#allocation2 + $0x1]]
    %v40 = vstv %s39
    %v41 = vld [vmem:[%s0] sm:$0xff]
    %v42 = vld [vmem:[%s0 + $0x8] sm:$0xff]
    %v43 = vld [vmem:[%s0 + $0x10] sm:$0xff]
    %v44 = vld [vmem:[%s0 + $0x18] sm:$0xff]
    %v45 = vlaneseq
    %v46 = vshrl.u32 %v45, 7
    %v47 = vsub.s32 0, %v46
    %v48 = vrot.slane %v33, %v47
    %vm49 = vcmask 130048
    %v51 = vsel %vm49, %v41, 0
    %v54 = vsel %vm49, %v42, 0
    %v57 = vsel %vm49, %v43, 0
    %v60 = vsel %vm49, %v44, 0
    %62 = vmatprep.subr.mxu0 0.0
    %63 = vmatpush1.msra.mxu0 0.0
    %64 = vmatprep.subr.mxu0 0.0
    %65 = vmatpush1.msra.mxu0 0.0
    %66 = vmatprep.subr.mxu0 0.0
    %67 = vmatpush1.msra.mxu0 0.0
    %68 = vmatprep.subr.mxu0 0.0
    %69 = vmatpush1.msra.mxu0 0.0
    %70 = vmatprep.subr.mxu0 0.0
    %71 = vmatpush1.msra.mxu0 0.0
    %72 = vmatprep.subr.mxu0 0.0
    %73 = vmatpush1.msra.mxu0 0.0
    %74 = vmatprep.subr.mxu0 0.0
    %75 = vmatpush1.msra.mxu0 0.0
    %76 = vmatprep.subr.mxu0 0.0
    %77 = vmatpush1.msra.mxu0 0.0
    %78 = vmatprep.subr.mxu0 0.0
    %79 = vmatpush1.msra.mxu0 0.0
    %80 = vmatprep.subr.mxu0 0.0
    %81 = vmatpush1.msra.mxu0 0.0
    %82 = vmatprep.subr.mxu0 0.0
    %83 = vmatpush1.msra.mxu0 0.0
    %84 = vmatprep.subr.mxu0 0.0
    %85 = vmatpush1.msra.mxu0 0.0
    %86 = vmatprep.subr.mxu0 0.0
    %87 = vmatpush1.msra.mxu0 0.0
    %88 = vmatprep.subr.mxu0 0.0
    %89 = vmatpush1.msra.mxu0 0.0
    %90 = vmatprep.subr.mxu0 0.0
    %91 = vmatpush1.msra.mxu0 %v28
    %92 = vmatprep.subr.mxu0 0.0
    %93 = vmatpush1.msra.mxu0 %v27
    %94 = vmatprep.subr.mxu0 0.0
    %95 = vmatpush2.msra.mxu0 0.0
    %96 = vmatprep.subr.mxu0 0.0
    %97 = vmatpush2.msra.mxu0 0.0
    %98 = vmatprep.subr.mxu0 0.0
    %99 = vmatpush2.msra.mxu0 0.0
    %100 = vmatprep.subr.mxu0 0.0
    %101 = vmatpush2.msra.mxu0 0.0
    %102 = vmatprep.subr.mxu0 0.0
    %103 = vmatpush2.msra.mxu0 0.0
    %104 = vmatprep.subr.mxu0 0.0
    %105 = vmatpush2.msra.mxu0 0.0
    %106 = vmatprep.subr.mxu0 0.0
    %107 = vmatpush2.msra.mxu0 0.0
    %108 = vmatprep.subr.mxu0 0.0
    %109 = vmatpush2.msra.mxu0 0.0
    %110 = vmatprep.subr.mxu0 0.0
    %111 = vmatpush2.msra.mxu0 0.0
    %112 = vmatprep.subr.mxu0 0.0
    %113 = vmatpush2.msra.mxu0 0.0
    %114 = vmatprep.subr.mxu0 0.0
    %115 = vmatpush2.msra.mxu0 0.0
    %116 = vmatprep.subr.mxu0 0.0
    %117 = vmatpush2.msra.mxu0 0.0
    %118 = vmatprep.subr.mxu0 0.0
    %119 = vmatpush2.msra.mxu0 0.0
    %120 = vmatprep.subr.mxu0 0.0
    %121 = vmatpush2.msra.mxu0 0.0
    %122 = vmatprep.subr.mxu0 0.0
    %123 = vmatpush2.msra.mxu0 0.0
    %124 = vmatprep.subr.mxu0 0.0
    %125 = vmatpush2.msra.mxu0 0.0
    %126 = vmatprep.mubr.f32.mxu0 0.0
    %127 = vmatmul.mubr.f32.gmra.mxu0 %v51
    %v128 = vpop.f32.mrf.mxu0
    %v129 = vadd.f32 %v48, %v128
    %v130 = vpop.f32.mrf.mxu0
    %131 = vmatprep.mubr.f32.mxu0 0.0
    %132 = vmatmul.mubr.f32.gmra.mxu0 %v54
    %v133 = vpop.f32.mrf.mxu0
    %v134 = vadd.f32 %v48, %v133
    %v135 = vpop.f32.mrf.mxu0
    %136 = vmatprep.mubr.f32.mxu0 0.0
    %137 = vmatmul.mubr.f32.gmra.mxu0 %v57
    %v138 = vpop.f32.mrf.mxu0
    %v139 = vadd.f32 %v48, %v138
    %v140 = vpop.f32.mrf.mxu0
    %141 = vmatprep.mubr.f32.mxu0 0.0
    %142 = vmatmul.mubr.f32.gmra.mxu0 %v60
    %v143 = vpop.f32.mrf.mxu0
    %v144 = vadd.f32 %v48, %v143
    %v145 = vpop.f32.mrf.mxu0
    %146 = vdwg.mxu0
    %v147 = vlaneseq
    %v148 = vshrl.u32 %v147, 7
    %v149 = vsub.s32 0, %v148
    %v150 = vrot.slane %v34, %v149
    %v151 = vadd.f32 %v129, %v150
    %vm152 = vcmask 261120
    %v154 = vsel %vm152, 0.0, 0
    %156 = vmatprep.subr.mxu0 0.0
    %157 = vmatpush1.msra.mxu0 0.0
    %158 = vmatprep.subr.mxu0 0.0
    %159 = vmatpush1.msra.mxu0 0.0
    %160 = vmatprep.subr.mxu0 0.0
    %161 = vmatpush1.msra.mxu0 0.0
    %162 = vmatprep.subr.mxu0 0.0
    %163 = vmatpush1.msra.mxu0 0.0
    %164 = vmatprep.subr.mxu0 0.0
    %165 = vmatpush1.msra.mxu0 0.0
    %166 = vmatprep.subr.mxu0 0.0
    %167 = vmatpush1.msra.mxu0 0.0
    %168 = vmatprep.subr.mxu0 0.0
    %169 = vmatpush1.msra.mxu0 0.0
    %170 = vmatprep.subr.mxu0 0.0
    %171 = vmatpush1.msra.mxu0 0.0
    %172 = vmatprep.subr.mxu0 0.0
    %173 = vmatpush1.msra.mxu0 0.0
    %174 = vmatprep.subr.mxu0 0.0
    %175 = vmatpush1.msra.mxu0 0.0
    %176 = vmatprep.subr.mxu0 0.0
    %177 = vmatpush1.msra.mxu0 0.0
    %178 = vmatprep.subr.mxu0 0.0
    %179 = vmatpush1.msra.mxu0 0.0
    %180 = vmatprep.subr.mxu0 0.0
    %181 = vmatpush1.msra.mxu0 %v32
    %182 = vmatprep.subr.mxu0 0.0
    %183 = vmatpush1.msra.mxu0 %v31
    %184 = vmatprep.subr.mxu0 0.0
    %185 = vmatpush1.msra.mxu0 %v30
    %186 = vmatprep.subr.mxu0 0.0
    %187 = vmatpush1.msra.mxu0 %v29
    %188 = vmatprep.subr.mxu0 0.0
    %189 = vmatpush2.msra.mxu0 0.0
    %190 = vmatprep.subr.mxu0 0.0
    %191 = vmatpush2.msra.mxu0 0.0
    %192 = vmatprep.subr.mxu0 0.0
    %193 = vmatpush2.msra.mxu0 0.0
    %194 = vmatprep.subr.mxu0 0.0
    %195 = vmatpush2.msra.mxu0 0.0
    %196 = vmatprep.subr.mxu0 0.0
    %197 = vmatpush2.msra.mxu0 0.0
    %198 = vmatprep.subr.mxu0 0.0
    %199 = vmatpush2.msra.mxu0 0.0
    %200 = vmatprep.subr.mxu0 0.0
    %201 = vmatpush2.msra.mxu0 0.0
    %202 = vmatprep.subr.mxu0 0.0
    %203 = vmatpush2.msra.mxu0 0.0
    %204 = vmatprep.subr.mxu0 0.0
    %205 = vmatpush2.msra.mxu0 0.0
    %206 = vmatprep.subr.mxu0 0.0
    %207 = vmatpush2.msra.mxu0 0.0
    %208 = vmatprep.subr.mxu0 0.0
    %209 = vmatpush2.msra.mxu0 0.0
    %210 = vmatprep.subr.mxu0 0.0
    %211 = vmatpush2.msra.mxu0 0.0
    %212 = vmatprep.subr.mxu0 0.0
    %213 = vmatpush2.msra.mxu0 0.0
    %214 = vmatprep.subr.mxu0 0.0
    %215 = vmatpush2.msra.mxu0 0.0
    %216 = vmatprep.subr.mxu0 0.0
    %217 = vmatpush2.msra.mxu0 0.0
    %218 = vmatprep.subr.mxu0 0.0
    %219 = vmatpush2.msra.mxu0 0.0
    %220 = vmatprep.mubr.f32.mxu0 0.0
    %221 = vmatmul.mubr.f32.gmra.mxu0 %v154
    %v222 = vpop.f32.mrf.mxu0
    %v223 = vadd.f32 0.0, %v222
    %v224 = vpop.f32.mrf.mxu0
    %225 = vdwg.mxu0
    %v226 = vadd.f32 %v129, %v223
    %v227 = vtanh.pop %v226
    %v228 = vlaneseq
    %v229 = vshrl.u32 %v228, 7
    %v230 = vsub.s32 0, %v229
    %v231 = vrot.slane %v35, %v230
    %v232 = vmul.f32 %v227, %v231
    %v233 = vsel %vm152, %v232, 0.0
    %234 = vadd.xlane.f32.xlu0 %v233
    %v235 = vpop.xlane.xlu0 %234
    %v236 = vadd.f32 %v235, %v38
    %v237 = vxor.u32 %v236, 2147483648
    %v238 = vmul.f32 %v237, 1.442695
    %v239 = vpow.pop %v238
    %v240 = vadd.f32 %v239, 1.0
    %v241 = vrcp.pop %v240
    %v242 = vmul.f32 1.0, %v241
    %v243 = vmul.f32 %v242, %v227
    %v244 = vadd.f32 %v227, %v243
    %vm245 = vcmp.lt.f32.partialorder %v242, 0.99
    %v246 = vsub.f32 0.0, %v242
    %v247 = vsel %vm245, %v246, 0.0
    %v249 = vsel %vm152, %v227, 0
    %251 = vmatprep.subr.mxu0 0.0
    %252 = vmatpush1.msra.mxu0 0.0
    %253 = vmatprep.subr.mxu0 0.0
    %254 = vmatpush1.msra.mxu0 0.0
    %255 = vmatprep.subr.mxu0 0.0
    %256 = vmatpush1.msra.mxu0 0.0
    %257 = vmatprep.subr.mxu0 0.0
    %258 = vmatpush1.msra.mxu0 0.0
    %259 = vmatprep.subr.mxu0 0.0
    %260 = vmatpush1.msra.mxu0 0.0
    %261 = vmatprep.subr.mxu0 0.0
    %262 = vmatpush1.msra.mxu0 0.0
    %263 = vmatprep.subr.mxu0 0.0
    %264 = vmatpush1.msra.mxu0 0.0
    %265 = vmatprep.subr.mxu0 0.0
    %266 = vmatpush1.msra.mxu0 0.0
    %267 = vmatprep.subr.mxu0 0.0
    %268 = vmatpush1.msra.mxu0 0.0
    %269 = vmatprep.subr.mxu0 0.0
    %270 = vmatpush1.msra.mxu0 0.0
    %271 = vmatprep.subr.mxu0 0.0
    %272 = vmatpush1.msra.mxu0 0.0
    %273 = vmatprep.subr.mxu0 0.0
    %274 = vmatpush1.msra.mxu0 0.0
    %275 = vmatprep.subr.mxu0 0.0
    %276 = vmatpush1.msra.mxu0 %v32
    %277 = vmatprep.subr.mxu0 0.0
    %278 = vmatpush1.msra.mxu0 %v31
    %279 = vmatprep.subr.mxu0 0.0
    %280 = vmatpush1.msra.mxu0 %v30
    %281 = vmatprep.subr.mxu0 0.0
    %282 = vmatpush1.msra.mxu0 %v29
    %283 = vmatprep.subr.mxu0 0.0
    %284 = vmatpush2.msra.mxu0 0.0
    %285 = vmatprep.subr.mxu0 0.0
    %286 = vmatpush2.msra.mxu0 0.0
    %287 = vmatprep.subr.mxu0 0.0
    %288 = vmatpush2.msra.mxu0 0.0
    %289 = vmatprep.subr.mxu0 0.0
    %290 = vmatpush2.msra.mxu0 0.0
    %291 = vmatprep.subr.mxu0 0.0
    %292 = vmatpush2.msra.mxu0 0.0
    %293 = vmatprep.subr.mxu0 0.0
    %294 = vmatpush2.msra.mxu0 0.0
    %295 = vmatprep.subr.mxu0 0.0
    %296 = vmatpush2.msra.mxu0 0.0
    %297 = vmatprep.subr.mxu0 0.0
    %298 = vmatpush2.msra.mxu0 0.0
    %299 = vmatprep.subr.mxu0 0.0
    %300 = vmatpush2.msra.mxu0 0.0
    %301 = vmatprep.subr.mxu0 0.0
    %302 = vmatpush2.msra.mxu0 0.0
    %303 = vmatprep.subr.mxu0 0.0
    %304 = vmatpush2.msra.mxu0 0.0
    %305 = vmatprep.subr.mxu0 0.0
    %306 = vmatpush2.msra.mxu0 0.0
    %307 = vmatprep.subr.mxu0 0.0
    %308 = vmatpush2.msra.mxu0 0.0
    %309 = vmatprep.subr.mxu0 0.0
    %310 = vmatpush2.msra.mxu0 0.0
    %311 = vmatprep.subr.mxu0 0.0
    %312 = vmatpush2.msra.mxu0 0.0
    %313 = vmatprep.subr.mxu0 0.0
    %314 = vmatpush2.msra.mxu0 0.0
    %315 = vmatprep.mubr.f32.mxu0 0.0
    %316 = vmatmul.mubr.f32.gmra.mxu0 %v249
    %v317 = vpop.f32.mrf.mxu0
    %v318 = vadd.f32 0.0, %v317
    %v319 = vpop.f32.mrf.mxu0
    %320 = vdwg.mxu0
    %v321 = vadd.f32 %v151, %v318
    %v322 = vtanh.pop %v321
    %v323 = vmul.f32 %v322, %v231
    %v324 = vsel %vm152, %v323, 0.0
    %325 = vadd.xlane.f32.xlu0 %v324
    %v326 = vpop.xlane.xlu0 %325
    %v327 = vadd.f32 %v326, %v38
    %v328 = vxor.u32 %v327, 2147483648
    %v329 = vmul.f32 %v328, 1.442695
    %v330 = vpow.pop %v329
    %v331 = vadd.f32 %v330, 1.0
    %v332 = vrcp.pop %v331
    %v333 = vmul.f32 1.0, %v332
    %v334 = vadd.f32 %v242, %v333
    %v335 = vsub.f32 %v334, 1.0
    %v336 = vmax.f32 %v335, 0.0
    %v337 = vsub.f32 %v333, %v336
    %v338 = vadd.f32 %v244, %v322
    %v339 = vmul.f32 %v337, %v322
    %v340 = vadd.f32 %v338, %v339
    %v341 = vsel %vm245, 1, 0
    %vm342 = vcmp.eq.s32.totalorder %v341, 1
    %v343 = vsel %vm342, %v340, %v244
    %v344 = vsel %vm245, %v334, %v242
    %v345 = vsel %vm245, 2.0, 1.0
    %vm346 = vcmp.lt.f32.partialorder %v344, 0.99
    %v347 = vsub.f32 0.0, %v344
    %v348 = vsel %vm346, %v347, %v247
    %v350 = vsel %vm152, %v322, 0
    %352 = vmatprep.subr.mxu0 0.0
    %353 = vmatpush1.msra.mxu0 0.0
    %354 = vmatprep.subr.mxu0 0.0
    %355 = vmatpush1.msra.mxu0 0.0
    %356 = vmatprep.subr.mxu0 0.0
    %357 = vmatpush1.msra.mxu0 0.0
    %358 = vmatprep.subr.mxu0 0.0
    %359 = vmatpush1.msra.mxu0 0.0
    %360 = vmatprep.subr.mxu0 0.0
    %361 = vmatpush1.msra.mxu0 0.0
    %362 = vmatprep.subr.mxu0 0.0
    %363 = vmatpush1.msra.mxu0 0.0
    %364 = vmatprep.subr.mxu0 0.0
    %365 = vmatpush1.msra.mxu0 0.0
    %366 = vmatprep.subr.mxu0 0.0
    %367 = vmatpush1.msra.mxu0 0.0
    %368 = vmatprep.subr.mxu0 0.0
    %369 = vmatpush1.msra.mxu0 0.0
    %370 = vmatprep.subr.mxu0 0.0
    %371 = vmatpush1.msra.mxu0 0.0
    %372 = vmatprep.subr.mxu0 0.0
    %373 = vmatpush1.msra.mxu0 0.0
    %374 = vmatprep.subr.mxu0 0.0
    %375 = vmatpush1.msra.mxu0 0.0
    %376 = vmatprep.subr.mxu0 0.0
    %377 = vmatpush1.msra.mxu0 %v32
    %378 = vmatprep.subr.mxu0 0.0
    %379 = vmatpush1.msra.mxu0 %v31
    %380 = vmatprep.subr.mxu0 0.0
    %381 = vmatpush1.msra.mxu0 %v30
    %382 = vmatprep.subr.mxu0 0.0
    %383 = vmatpush1.msra.mxu0 %v29
    %384 = vmatprep.subr.mxu0 0.0
    %385 = vmatpush2.msra.mxu0 0.0
    %386 = vmatprep.subr.mxu0 0.0
    %387 = vmatpush2.msra.mxu0 0.0
    %388 = vmatprep.subr.mxu0 0.0
    %389 = vmatpush2.msra.mxu0 0.0
    %390 = vmatprep.subr.mxu0 0.0
    %391 = vmatpush2.msra.mxu0 0.0
    %392 = vmatprep.subr.mxu0 0.0
    %393 = vmatpush2.msra.mxu0 0.0
    %394 = vmatprep.subr.mxu0 0.0
    %395 = vmatpush2.msra.mxu0 0.0
    %396 = vmatprep.subr.mxu0 0.0
    %397 = vmatpush2.msra.mxu0 0.0
    %398 = vmatprep.subr.mxu0 0.0
    %399 = vmatpush2.msra.mxu0 0.0
    %400 = vmatprep.subr.mxu0 0.0
    %401 = vmatpush2.msra.mxu0 0.0
    %402 = vmatprep.subr.mxu0 0.0
    %403 = vmatpush2.msra.mxu0 0.0
    %404 = vmatprep.subr.mxu0 0.0
    %405 = vmatpush2.msra.mxu0 0.0
    %406 = vmatprep.subr.mxu0 0.0
    %407 = vmatpush2.msra.mxu0 0.0
    %408 = vmatprep.subr.mxu0 0.0
    %409 = vmatpush2.msra.mxu0 0.0
    %410 = vmatprep.subr.mxu0 0.0
    %411 = vmatpush2.msra.mxu0 0.0
    %412 = vmatprep.subr.mxu0 0.0
    %413 = vmatpush2.msra.mxu0 0.0
    %414 = vmatprep.subr.mxu0 0.0
    %415 = vmatpush2.msra.mxu0 0.0
    %416 = vmatprep.mubr.f32.mxu0 0.0
    %417 = vmatmul.mubr.f32.gmra.mxu0 %v350
    %v418 = vpop.f32.mrf.mxu0
    %v419 = vadd.f32 0.0, %v418
    %v420 = vpop.f32.mrf.mxu0
    %421 = vdwg.mxu0
    %v422 = vadd.f32 %v151, %v419
    %v423 = vtanh.pop %v422
    %v424 = vmul.f32 %v423, %v231
    %v425 = vsel %vm152, %v424, 0.0
    %426 = vadd.xlane.f32.xlu0 %v425
    %v427 = vpop.xlane.xlu0 %426
    %v428 = vadd.f32 %v427, %v38
    %v429 = vxor.u32 %v428, 2147483648
    %v430 = vmul.f32 %v429, 1.442695
    %v431 = vpow.pop %v430
    %v432 = vadd.f32 %v431, 1.0
    %v433 = vrcp.pop %v432
    %v434 = vmul.f32 1.0, %v433
    %v435 = vadd.f32 %v344, %v434
    %v436 = vsub.f32 %v435, 1.0
    %v437 = vmax.f32 %v436, 0.0
    %v438 = vsub.f32 %v434, %v437
    %v439 = vadd.f32 %v343, %v423
    %v440 = vmul.f32 %v438, %v423
    %v441 = vadd.f32 %v439, %v440
    %v442 = vsel %vm346, 1, 0
    %vm443 = vcmp.eq.s32.totalorder %v442, 1
    %v444 = vsel %vm443, %v441, %v343
    %v445 = vsel %vm346, %v435, %v344
    %v446 = vadd.f32 %v345, 1.0
    %v447 = vsel %vm346, %v446, %v345
    %vm448 = vcmp.lt.f32.partialorder %v445, 0.99
    %v449 = vsub.f32 0.0, %v445
    %v450 = vsel %vm448, %v449, %v348
    %v452 = vsel %vm152, %v423, 0
    %454 = vmatprep.subr.mxu0 0.0
    %455 = vmatpush1.msra.mxu0 0.0
    %456 = vmatprep.subr.mxu0 0.0
    %457 = vmatpush1.msra.mxu0 0.0
    %458 = vmatprep.subr.mxu0 0.0
    %459 = vmatpush1.msra.mxu0 0.0
    %460 = vmatprep.subr.mxu0 0.0
    %461 = vmatpush1.msra.mxu0 0.0
    %462 = vmatprep.subr.mxu0 0.0
    %463 = vmatpush1.msra.mxu0 0.0
    %464 = vmatprep.subr.mxu0 0.0
    %465 = vmatpush1.msra.mxu0 0.0
    %466 = vmatprep.subr.mxu0 0.0
    %467 = vmatpush1.msra.mxu0 0.0
    %468 = vmatprep.subr.mxu0 0.0
    %469 = vmatpush1.msra.mxu0 0.0
    %470 = vmatprep.subr.mxu0 0.0
    %471 = vmatpush1.msra.mxu0 0.0
    %472 = vmatprep.subr.mxu0 0.0
    %473 = vmatpush1.msra.mxu0 0.0
    %474 = vmatprep.subr.mxu0 0.0
    %475 = vmatpush1.msra.mxu0 0.0
    %476 = vmatprep.subr.mxu0 0.0
    %477 = vmatpush1.msra.mxu0 0.0
    %478 = vmatprep.subr.mxu0 0.0
    %479 = vmatpush1.msra.mxu0 %v32
    %480 = vmatprep.subr.mxu0 0.0
    %481 = vmatpush1.msra.mxu0 %v31
    %482 = vmatprep.subr.mxu0 0.0
    %483 = vmatpush1.msra.mxu0 %v30
    %484 = vmatprep.subr.mxu0 0.0
    %485 = vmatpush1.msra.mxu0 %v29
    %486 = vmatprep.subr.mxu0 0.0
    %487 = vmatpush2.msra.mxu0 0.0
    %488 = vmatprep.subr.mxu0 0.0
    %489 = vmatpush2.msra.mxu0 0.0
    %490 = vmatprep.subr.mxu0 0.0
    %491 = vmatpush2.msra.mxu0 0.0
    %492 = vmatprep.subr.mxu0 0.0
    %493 = vmatpush2.msra.mxu0 0.0
    %494 = vmatprep.subr.mxu0 0.0
    %495 = vmatpush2.msra.mxu0 0.0
    %496 = vmatprep.subr.mxu0 0.0
    %497 = vmatpush2.msra.mxu0 0.0
    %498 = vmatprep.subr.mxu0 0.0
    %499 = vmatpush2.msra.mxu0 0.0
    %500 = vmatprep.subr.mxu0 0.0
    %501 = vmatpush2.msra.mxu0 0.0
    %502 = vmatprep.subr.mxu0 0.0
    %503 = vmatpush2.msra.mxu0 0.0
    %504 = vmatprep.subr.mxu0 0.0
    %505 = vmatpush2.msra.mxu0 0.0
    %506 = vmatprep.subr.mxu0 0.0
    %507 = vmatpush2.msra.mxu0 0.0
    %508 = vmatprep.subr.mxu0 0.0
    %509 = vmatpush2.msra.mxu0 0.0
    %510 = vmatprep.subr.mxu0 0.0
    %511 = vmatpush2.msra.mxu0 0.0
    %512 = vmatprep.subr.mxu0 0.0
    %513 = vmatpush2.msra.mxu0 0.0
    %514 = vmatprep.subr.mxu0 0.0
    %515 = vmatpush2.msra.mxu0 0.0
    %516 = vmatprep.subr.mxu0 0.0
    %517 = vmatpush2.msra.mxu0 0.0
    %518 = vmatprep.mubr.f32.mxu0 0.0
    %519 = vmatmul.mubr.f32.gmra.mxu0 %v452
    %v520 = vpop.f32.mrf.mxu0
    %v521 = vadd.f32 0.0, %v520
    %v522 = vpop.f32.mrf.mxu0
    %523 = vdwg.mxu0
    %v524 = vadd.f32 %v151, %v521
    %v525 = vtanh.pop %v524
    %v526 = vmul.f32 %v525, %v231
    %v527 = vsel %vm152, %v526, 0.0
    %528 = vadd.xlane.f32.xlu0 %v527
    %v529 = vpop.xlane.xlu0 %528
    %v530 = vadd.f32 %v529, %v38
    %v531 = vxor.u32 %v530, 2147483648
    %v532 = vmul.f32 %v531, 1.442695
    %v533 = vpow.pop %v532
    %v534 = vadd.f32 %v533, 1.0
    %v535 = vrcp.pop %v534
    %v536 = vmul.f32 1.0, %v535
    %v537 = vadd.f32 %v445, %v536
    %v538 = vsub.f32 %v537, 1.0
    %v539 = vmax.f32 %v538, 0.0
    %v540 = vsub.f32 %v536, %v539
    %v541 = vadd.f32 %v444, %v525
    %v542 = vmul.f32 %v540, %v525
    %v543 = vadd.f32 %v541, %v542
    %v544 = vsel %vm448, 1, 0
    %vm545 = vcmp.eq.s32.totalorder %v544, 1
    %v546 = vsel %vm545, %v543, %v444
    %v547 = vsel %vm448, %v537, %v445
    %v548 = vadd.f32 %v447, 1.0
    %v549 = vsel %vm448, %v548, %v447
    %vm550 = vcmp.lt.f32.partialorder %v547, 0.99
    %v551 = vsub.f32 0.0, %v547
    %v552 = vsel %vm550, %v551, %v450
    %v554 = vsel %vm152, %v525, 0
    %556 = vmatprep.subr.mxu0 0.0
    %557 = vmatpush1.msra.mxu0 0.0
    %558 = vmatprep.subr.mxu0 0.0
    %559 = vmatpush1.msra.mxu0 0.0
    %560 = vmatprep.subr.mxu0 0.0
    %561 = vmatpush1.msra.mxu0 0.0
    %562 = vmatprep.subr.mxu0 0.0
    %563 = vmatpush1.msra.mxu0 0.0
    %564 = vmatprep.subr.mxu0 0.0
    %565 = vmatpush1.msra.mxu0 0.0
    %566 = vmatprep.subr.mxu0 0.0
    %567 = vmatpush1.msra.mxu0 0.0
    %568 = vmatprep.subr.mxu0 0.0
    %569 = vmatpush1.msra.mxu0 0.0
    %570 = vmatprep.subr.mxu0 0.0
    %571 = vmatpush1.msra.mxu0 0.0
    %572 = vmatprep.subr.mxu0 0.0
    %573 = vmatpush1.msra.mxu0 0.0
    %574 = vmatprep.subr.mxu0 0.0
    %575 = vmatpush1.msra.mxu0 0.0
    %576 = vmatprep.subr.mxu0 0.0
    %577 = vmatpush1.msra.mxu0 0.0
    %578 = vmatprep.subr.mxu0 0.0
    %579 = vmatpush1.msra.mxu0 0.0
    %580 = vmatprep.subr.mxu0 0.0
    %581 = vmatpush1.msra.mxu0 %v32
    %582 = vmatprep.subr.mxu0 0.0
    %583 = vmatpush1.msra.mxu0 %v31
    %584 = vmatprep.subr.mxu0 0.0
    %585 = vmatpush1.msra.mxu0 %v30
    %586 = vmatprep.subr.mxu0 0.0
    %587 = vmatpush1.msra.mxu0 %v29
    %588 = vmatprep.subr.mxu0 0.0
    %589 = vmatpush2.msra.mxu0 0.0
    %590 = vmatprep.subr.mxu0 0.0
    %591 = vmatpush2.msra.mxu0 0.0
    %592 = vmatprep.subr.mxu0 0.0
    %593 = vmatpush2.msra.mxu0 0.0
    %594 = vmatprep.subr.mxu0 0.0
    %595 = vmatpush2.msra.mxu0 0.0
    %596 = vmatprep.subr.mxu0 0.0
    %597 = vmatpush2.msra.mxu0 0.0
    %598 = vmatprep.subr.mxu0 0.0
    %599 = vmatpush2.msra.mxu0 0.0
    %600 = vmatprep.subr.mxu0 0.0
    %601 = vmatpush2.msra.mxu0 0.0
    %602 = vmatprep.subr.mxu0 0.0
    %603 = vmatpush2.msra.mxu0 0.0
    %604 = vmatprep.subr.mxu0 0.0
    %605 = vmatpush2.msra.mxu0 0.0
    %606 = vmatprep.subr.mxu0 0.0
    %607 = vmatpush2.msra.mxu0 0.0
    %608 = vmatprep.subr.mxu0 0.0
    %609 = vmatpush2.msra.mxu0 0.0
    %610 = vmatprep.subr.mxu0 0.0
    %611 = vmatpush2.msra.mxu0 0.0
    %612 = vmatprep.subr.mxu0 0.0
    %613 = vmatpush2.msra.mxu0 0.0
    %614 = vmatprep.subr.mxu0 0.0
    %615 = vmatpush2.msra.mxu0 0.0
    %616 = vmatprep.subr.mxu0 0.0
    %617 = vmatpush2.msra.mxu0 0.0
    %618 = vmatprep.subr.mxu0 0.0
    %619 = vmatpush2.msra.mxu0 0.0
    %620 = vmatprep.mubr.f32.mxu0 0.0
    %621 = vmatmul.mubr.f32.gmra.mxu0 %v554
    %v622 = vpop.f32.mrf.mxu0
    %v623 = vadd.f32 0.0, %v622
    %v624 = vpop.f32.mrf.mxu0
    %625 = vdwg.mxu0
    %v626 = vadd.f32 %v151, %v623
    %v627 = vtanh.pop %v626
    %v628 = vmul.f32 %v627, %v231
    %v629 = vsel %vm152, %v628, 0.0
    %630 = vadd.xlane.f32.xlu0 %v629
    %v631 = vpop.xlane.xlu0 %630
    %v632 = vadd.f32 %v631, %v38
    %v633 = vxor.u32 %v632, 2147483648
    %v634 = vmul.f32 %v633, 1.442695
    %v635 = vpow.pop %v634
    %v636 = vadd.f32 %v635, 1.0
    %v637 = vrcp.pop %v636
    %v638 = vmul.f32 1.0, %v637
    %v639 = vadd.f32 %v547, %v638
    %v640 = vsub.f32 %v639, 1.0
    %v641 = vmax.f32 %v640, 0.0
    %v642 = vsub.f32 %v638, %v641
    %v643 = vadd.f32 %v546, %v627
    %v644 = vmul.f32 %v642, %v627
    %v645 = vadd.f32 %v643, %v644
    %v646 = vsel %vm550, 1, 0
    %vm647 = vcmp.eq.s32.totalorder %v646, 1
    %v648 = vsel %vm647, %v645, %v546
    %v649 = vsel %vm550, %v639, %v547
    %v650 = vadd.f32 %v549, 1.0
    %v651 = vsel %vm550, %v650, %v549
    %vm652 = vcmp.lt.f32.partialorder %v649, 0.99
    %v653 = vsub.f32 0.0, %v649
    %v654 = vsel %vm652, %v653, %v552
    %v656 = vsel %vm152, %v627, 0
    %658 = vmatprep.subr.mxu0 0.0
    %659 = vmatpush1.msra.mxu0 0.0
    %660 = vmatprep.subr.mxu0 0.0
    %661 = vmatpush1.msra.mxu0 0.0
    %662 = vmatprep.subr.mxu0 0.0
    %663 = vmatpush1.msra.mxu0 0.0
    %664 = vmatprep.subr.mxu0 0.0
    %665 = vmatpush1.msra.mxu0 0.0
    %666 = vmatprep.subr.mxu0 0.0
    %667 = vmatpush1.msra.mxu0 0.0
    %668 = vmatprep.subr.mxu0 0.0
    %669 = vmatpush1.msra.mxu0 0.0
    %670 = vmatprep.subr.mxu0 0.0
    %671 = vmatpush1.msra.mxu0 0.0
    %672 = vmatprep.subr.mxu0 0.0
    %673 = vmatpush1.msra.mxu0 0.0
    %674 = vmatprep.subr.mxu0 0.0
    %675 = vmatpush1.msra.mxu0 0.0
    %676 = vmatprep.subr.mxu0 0.0
    %677 = vmatpush1.msra.mxu0 0.0
    %678 = vmatprep.subr.mxu0 0.0
    %679 = vmatpush1.msra.mxu0 0.0
    %680 = vmatprep.subr.mxu0 0.0
    %681 = vmatpush1.msra.mxu0 0.0
    %682 = vmatprep.subr.mxu0 0.0
    %683 = vmatpush1.msra.mxu0 %v32
    %684 = vmatprep.subr.mxu0 0.0
    %685 = vmatpush1.msra.mxu0 %v31
    %686 = vmatprep.subr.mxu0 0.0
    %687 = vmatpush1.msra.mxu0 %v30
    %688 = vmatprep.subr.mxu0 0.0
    %689 = vmatpush1.msra.mxu0 %v29
    %690 = vmatprep.subr.mxu0 0.0
    %691 = vmatpush2.msra.mxu0 0.0
    %692 = vmatprep.subr.mxu0 0.0
    %693 = vmatpush2.msra.mxu0 0.0
    %694 = vmatprep.subr.mxu0 0.0
    %695 = vmatpush2.msra.mxu0 0.0
    %696 = vmatprep.subr.mxu0 0.0
    %697 = vmatpush2.msra.mxu0 0.0
    %698 = vmatprep.subr.mxu0 0.0
    %699 = vmatpush2.msra.mxu0 0.0
    %700 = vmatprep.subr.mxu0 0.0
    %701 = vmatpush2.msra.mxu0 0.0
    %702 = vmatprep.subr.mxu0 0.0
    %703 = vmatpush2.msra.mxu0 0.0
    %704 = vmatprep.subr.mxu0 0.0
    %705 = vmatpush2.msra.mxu0 0.0
    %706 = vmatprep.subr.mxu0 0.0
    %707 = vmatpush2.msra.mxu0 0.0
    %708 = vmatprep.subr.mxu0 0.0
    %709 = vmatpush2.msra.mxu0 0.0
    %710 = vmatprep.subr.mxu0 0.0
    %711 = vmatpush2.msra.mxu0 0.0
    %712 = vmatprep.subr.mxu0 0.0
    %713 = vmatpush2.msra.mxu0 0.0
    %714 = vmatprep.subr.mxu0 0.0
    %715 = vmatpush2.msra.mxu0 0.0
    %716 = vmatprep.subr.mxu0 0.0
    %717 = vmatpush2.msra.mxu0 0.0
    %718 = vmatprep.subr.mxu0 0.0
    %719 = vmatpush2.msra.mxu0 0.0
    %720 = vmatprep.subr.mxu0 0.0
    %721 = vmatpush2.msra.mxu0 0.0
    %722 = vmatprep.mubr.f32.mxu0 0.0
    %723 = vmatmul.mubr.f32.gmra.mxu0 %v656
    %v724 = vpop.f32.mrf.mxu0
    %v725 = vadd.f32 0.0, %v724
    %v726 = vpop.f32.mrf.mxu0
    %727 = vdwg.mxu0
    %v728 = vadd.f32 %v151, %v725
    %v729 = vtanh.pop %v728
    %v730 = vmul.f32 %v729, %v231
    %v731 = vsel %vm152, %v730, 0.0
    %732 = vadd.xlane.f32.xlu0 %v731
    %v733 = vpop.xlane.xlu0 %732
    %v734 = vadd.f32 %v733, %v38
    %v735 = vxor.u32 %v734, 2147483648
    %v736 = vmul.f32 %v735, 1.442695
    %v737 = vpow.pop %v736
    %v738 = vadd.f32 %v737, 1.0
    %v739 = vrcp.pop %v738
    %v740 = vmul.f32 1.0, %v739
    %v741 = vadd.f32 %v649, %v740
    %v742 = vsub.f32 %v741, 1.0
    %v743 = vmax.f32 %v742, 0.0
    %v744 = vsub.f32 %v740, %v743
    %v745 = vadd.f32 %v648, %v729
    %v746 = vmul.f32 %v744, %v729
    %v747 = vadd.f32 %v745, %v746
    %v748 = vsel %vm652, 1, 0
    %vm749 = vcmp.eq.s32.totalorder %v748, 1
    %v750 = vsel %vm749, %v747, %v648
    %v751 = vsel %vm652, %v741, %v649
    %v752 = vadd.f32 %v651, 1.0
    %v753 = vsel %vm652, %v752, %v651
    %vm754 = vcmp.lt.f32.partialorder %v751, 0.99
    %v755 = vsub.f32 0.0, %v751
    %v756 = vsel %vm754, %v755, %v654
    %v758 = vsel %vm152, %v729, 0
    %760 = vmatprep.subr.mxu0 0.0
    %761 = vmatpush1.msra.mxu0 0.0
    %762 = vmatprep.subr.mxu0 0.0
    %763 = vmatpush1.msra.mxu0 0.0
    %764 = vmatprep.subr.mxu0 0.0
    %765 = vmatpush1.msra.mxu0 0.0
    %766 = vmatprep.subr.mxu0 0.0
    %767 = vmatpush1.msra.mxu0 0.0
    %768 = vmatprep.subr.mxu0 0.0
    %769 = vmatpush1.msra.mxu0 0.0
    %770 = vmatprep.subr.mxu0 0.0
    %771 = vmatpush1.msra.mxu0 0.0
    %772 = vmatprep.subr.mxu0 0.0
    %773 = vmatpush1.msra.mxu0 0.0
    %774 = vmatprep.subr.mxu0 0.0
    %775 = vmatpush1.msra.mxu0 0.0
    %776 = vmatprep.subr.mxu0 0.0
    %777 = vmatpush1.msra.mxu0 0.0
    %778 = vmatprep.subr.mxu0 0.0
    %779 = vmatpush1.msra.mxu0 0.0
    %780 = vmatprep.subr.mxu0 0.0
    %781 = vmatpush1.msra.mxu0 0.0
    %782 = vmatprep.subr.mxu0 0.0
    %783 = vmatpush1.msra.mxu0 0.0
    %784 = vmatprep.subr.mxu0 0.0
    %785 = vmatpush1.msra.mxu0 %v32
    %786 = vmatprep.subr.mxu0 0.0
    %787 = vmatpush1.msra.mxu0 %v31
    %788 = vmatprep.subr.mxu0 0.0
    %789 = vmatpush1.msra.mxu0 %v30
    %790 = vmatprep.subr.mxu0 0.0
    %791 = vmatpush1.msra.mxu0 %v29
    %792 = vmatprep.subr.mxu0 0.0
    %793 = vmatpush2.msra.mxu0 0.0
    %794 = vmatprep.subr.mxu0 0.0
    %795 = vmatpush2.msra.mxu0 0.0
    %796 = vmatprep.subr.mxu0 0.0
    %797 = vmatpush2.msra.mxu0 0.0
    %798 = vmatprep.subr.mxu0 0.0
    %799 = vmatpush2.msra.mxu0 0.0
    %800 = vmatprep.subr.mxu0 0.0
    %801 = vmatpush2.msra.mxu0 0.0
    %802 = vmatprep.subr.mxu0 0.0
    %803 = vmatpush2.msra.mxu0 0.0
    %804 = vmatprep.subr.mxu0 0.0
    %805 = vmatpush2.msra.mxu0 0.0
    %806 = vmatprep.subr.mxu0 0.0
    %807 = vmatpush2.msra.mxu0 0.0
    %808 = vmatprep.subr.mxu0 0.0
    %809 = vmatpush2.msra.mxu0 0.0
    %810 = vmatprep.subr.mxu0 0.0
    %811 = vmatpush2.msra.mxu0 0.0
    %812 = vmatprep.subr.mxu0 0.0
    %813 = vmatpush2.msra.mxu0 0.0
    %814 = vmatprep.subr.mxu0 0.0
    %815 = vmatpush2.msra.mxu0 0.0
    %816 = vmatprep.subr.mxu0 0.0
    %817 = vmatpush2.msra.mxu0 0.0
    %818 = vmatprep.subr.mxu0 0.0
    %819 = vmatpush2.msra.mxu0 0.0
    %820 = vmatprep.subr.mxu0 0.0
    %821 = vmatpush2.msra.mxu0 0.0
    %822 = vmatprep.subr.mxu0 0.0
    %823 = vmatpush2.msra.mxu0 0.0
    %824 = vmatprep.mubr.f32.mxu0 0.0
    %825 = vmatmul.mubr.f32.gmra.mxu0 %v758
    %v826 = vpop.f32.mrf.mxu0
    %v827 = vadd.f32 0.0, %v826
    %v828 = vpop.f32.mrf.mxu0
    %829 = vdwg.mxu0
    %v830 = vadd.f32 %v151, %v827
    %v831 = vtanh.pop %v830
    %v832 = vmul.f32 %v831, %v231
    %v833 = vsel %vm152, %v832, 0.0
    %834 = vadd.xlane.f32.xlu0 %v833
    %v835 = vpop.xlane.xlu0 %834
    %v836 = vadd.f32 %v835, %v38
    %v837 = vxor.u32 %v836, 2147483648
    %v838 = vmul.f32 %v837, 1.442695
    %v839 = vpow.pop %v838
    %v840 = vadd.f32 %v839, 1.0
    %v841 = vrcp.pop %v840
    %v842 = vmul.f32 1.0, %v841
    %v843 = vadd.f32 %v751, %v842
    %v844 = vsub.f32 %v843, 1.0
    %v845 = vmax.f32 %v844, 0.0
    %v846 = vsub.f32 %v842, %v845
    %v847 = vadd.f32 %v750, %v831
    %v848 = vmul.f32 %v846, %v831
    %v849 = vadd.f32 %v847, %v848
    %v850 = vsel %vm754, 1, 0
    %vm851 = vcmp.eq.s32.totalorder %v850, 1
    %v852 = vsel %vm851, %v849, %v750
    %v853 = vsel %vm754, %v843, %v751
    %v854 = vadd.f32 %v753, 1.0
    %v855 = vsel %vm754, %v854, %v753
    %vm856 = vcmp.lt.f32.partialorder %v853, 0.99
    %v857 = vsub.f32 0.0, %v853
    %v858 = vsel %vm856, %v857, %v756
    %v860 = vsel %vm152, %v831, 0
    %862 = vmatprep.subr.mxu0 0.0
    %863 = vmatpush1.msra.mxu0 0.0
    %864 = vmatprep.subr.mxu0 0.0
    %865 = vmatpush1.msra.mxu0 0.0
    %866 = vmatprep.subr.mxu0 0.0
    %867 = vmatpush1.msra.mxu0 0.0
    %868 = vmatprep.subr.mxu0 0.0
    %869 = vmatpush1.msra.mxu0 0.0
    %870 = vmatprep.subr.mxu0 0.0
    %871 = vmatpush1.msra.mxu0 0.0
    %872 = vmatprep.subr.mxu0 0.0
    %873 = vmatpush1.msra.mxu0 0.0
    %874 = vmatprep.subr.mxu0 0.0
    %875 = vmatpush1.msra.mxu0 0.0
    %876 = vmatprep.subr.mxu0 0.0
    %877 = vmatpush1.msra.mxu0 0.0
    %878 = vmatprep.subr.mxu0 0.0
    %879 = vmatpush1.msra.mxu0 0.0
    %880 = vmatprep.subr.mxu0 0.0
    %881 = vmatpush1.msra.mxu0 0.0
    %882 = vmatprep.subr.mxu0 0.0
    %883 = vmatpush1.msra.mxu0 0.0
    %884 = vmatprep.subr.mxu0 0.0
    %885 = vmatpush1.msra.mxu0 0.0
    %886 = vmatprep.subr.mxu0 0.0
    %887 = vmatpush1.msra.mxu0 %v32
    %888 = vmatprep.subr.mxu0 0.0
    %889 = vmatpush1.msra.mxu0 %v31
    %890 = vmatprep.subr.mxu0 0.0
    %891 = vmatpush1.msra.mxu0 %v30
    %892 = vmatprep.subr.mxu0 0.0
    %893 = vmatpush1.msra.mxu0 %v29
    %894 = vmatprep.subr.mxu0 0.0
    %895 = vmatpush2.msra.mxu0 0.0
    %896 = vmatprep.subr.mxu0 0.0
    %897 = vmatpush2.msra.mxu0 0.0
    %898 = vmatprep.subr.mxu0 0.0
    %899 = vmatpush2.msra.mxu0 0.0
    %900 = vmatprep.subr.mxu0 0.0
    %901 = vmatpush2.msra.mxu0 0.0
    %902 = vmatprep.subr.mxu0 0.0
    %903 = vmatpush2.msra.mxu0 0.0
    %904 = vmatprep.subr.mxu0 0.0
    %905 = vmatpush2.msra.mxu0 0.0
    %906 = vmatprep.subr.mxu0 0.0
    %907 = vmatpush2.msra.mxu0 0.0
    %908 = vmatprep.subr.mxu0 0.0
    %909 = vmatpush2.msra.mxu0 0.0
    %910 = vmatprep.subr.mxu0 0.0
    %911 = vmatpush2.msra.mxu0 0.0
    %912 = vmatprep.subr.mxu0 0.0
    %913 = vmatpush2.msra.mxu0 0.0
    %914 = vmatprep.subr.mxu0 0.0
    %915 = vmatpush2.msra.mxu0 0.0
    %916 = vmatprep.subr.mxu0 0.0
    %917 = vmatpush2.msra.mxu0 0.0
    %918 = vmatprep.subr.mxu0 0.0
    %919 = vmatpush2.msra.mxu0 0.0
    %920 = vmatprep.subr.mxu0 0.0
    %921 = vmatpush2.msra.mxu0 0.0
    %922 = vmatprep.subr.mxu0 0.0
    %923 = vmatpush2.msra.mxu0 0.0
    %924 = vmatprep.subr.mxu0 0.0
    %925 = vmatpush2.msra.mxu0 0.0
    %926 = vmatprep.mubr.f32.mxu0 0.0
    %927 = vmatmul.mubr.f32.gmra.mxu0 %v860
    %v928 = vpop.f32.mrf.mxu0
    %v929 = vadd.f32 0.0, %v928
    %v930 = vpop.f32.mrf.mxu0
    %931 = vdwg.mxu0
    %v932 = vadd.f32 %v151, %v929
    %v933 = vtanh.pop %v932
    %v934 = vmul.f32 %v933, %v231
    %v935 = vsel %vm152, %v934, 0.0
    %936 = vadd.xlane.f32.xlu0 %v935
    %v937 = vpop.xlane.xlu0 %936
    %v938 = vadd.f32 %v937, %v38
    %v939 = vxor.u32 %v938, 2147483648
    %v940 = vmul.f32 %v939, 1.442695
    %v941 = vpow.pop %v940
    %v942 = vadd.f32 %v941, 1.0
    %v943 = vrcp.pop %v942
    %v944 = vmul.f32 1.0, %v943
    %v945 = vadd.f32 %v853, %v944
    %v946 = vsub.f32 %v945, 1.0
    %v947 = vmax.f32 %v946, 0.0
    %v948 = vsub.f32 %v944, %v947
    %v949 = vadd.f32 %v852, %v933
    %v950 = vmul.f32 %v948, %v933
    %v951 = vadd.f32 %v949, %v950
    %v952 = vsel %vm856, 1, 0
    %vm953 = vcmp.eq.s32.totalorder %v952, 1
    %v954 = vsel %vm953, %v951, %v852
    %v955 = vsel %vm856, %v945, %v853
    %v956 = vadd.f32 %v855, 1.0
    %v957 = vsel %vm856, %v956, %v855
    %vm958 = vcmp.lt.f32.partialorder %v955, 0.99
    %v959 = vsub.f32 0.0, %v955
    %v960 = vsel %vm958, %v959, %v858
    %v962 = vsel %vm152, %v933, 0
    %964 = vmatprep.subr.mxu0 0.0
    %965 = vmatpush1.msra.mxu0 0.0
    %966 = vmatprep.subr.mxu0 0.0
    %967 = vmatpush1.msra.mxu0 0.0
    %968 = vmatprep.subr.mxu0 0.0
    %969 = vmatpush1.msra.mxu0 0.0
    %970 = vmatprep.subr.mxu0 0.0
    %971 = vmatpush1.msra.mxu0 0.0
    %972 = vmatprep.subr.mxu0 0.0
    %973 = vmatpush1.msra.mxu0 0.0
    %974 = vmatprep.subr.mxu0 0.0
    %975 = vmatpush1.msra.mxu0 0.0
    %976 = vmatprep.subr.mxu0 0.0
    %977 = vmatpush1.msra.mxu0 0.0
    %978 = vmatprep.subr.mxu0 0.0
    %979 = vmatpush1.msra.mxu0 0.0
    %980 = vmatprep.subr.mxu0 0.0
    %981 = vmatpush1.msra.mxu0 0.0
    %982 = vmatprep.subr.mxu0 0.0
    %983 = vmatpush1.msra.mxu0 0.0
    %984 = vmatprep.subr.mxu0 0.0
    %985 = vmatpush1.msra.mxu0 0.0
    %986 = vmatprep.subr.mxu0 0.0
    %987 = vmatpush1.msra.mxu0 0.0
    %988 = vmatprep.subr.mxu0 0.0
    %989 = vmatpush1.msra.mxu0 %v32
    %990 = vmatprep.subr.mxu0 0.0
    %991 = vmatpush1.msra.mxu0 %v31
    %992 = vmatprep.subr.mxu0 0.0
    %993 = vmatpush1.msra.mxu0 %v30
    %994 = vmatprep.subr.mxu0 0.0
    %995 = vmatpush1.msra.mxu0 %v29
    %996 = vmatprep.subr.mxu0 0.0
    %997 = vmatpush2.msra.mxu0 0.0
    %998 = vmatprep.subr.mxu0 0.0
    %999 = vmatpush2.msra.mxu0 0.0
    %1000 = vmatprep.subr.mxu0 0.0
    %1001 = vmatpush2.msra.mxu0 0.0
    %1002 = vmatprep.subr.mxu0 0.0
    %1003 = vmatpush2.msra.mxu0 0.0
    %1004 = vmatprep.subr.mxu0 0.0
    %1005 = vmatpush2.msra.mxu0 0.0
    %1006 = vmatprep.subr.mxu0 0.0
    %1007 = vmatpush2.msra.mxu0 0.0
    %1008 = vmatprep.subr.mxu0 0.0
    %1009 = vmatpush2.msra.mxu0 0.0
    %1010 = vmatprep.subr.mxu0 0.0
    %1011 = vmatpush2.msra.mxu0 0.0
    %1012 = vmatprep.subr.mxu0 0.0
    %1013 = vmatpush2.msra.mxu0 0.0
    %1014 = vmatprep.subr.mxu0 0.0
    %1015 = vmatpush2.msra.mxu0 0.0
    %1016 = vmatprep.subr.mxu0 0.0
    %1017 = vmatpush2.msra.mxu0 0.0
    %1018 = vmatprep.subr.mxu0 0.0
    %1019 = vmatpush2.msra.mxu0 0.0
    %1020 = vmatprep.subr.mxu0 0.0
    %1021 = vmatpush2.msra.mxu0 0.0
    %1022 = vmatprep.subr.mxu0 0.0
    %1023 = vmatpush2.msra.mxu0 0.0
    %1024 = vmatprep.subr.mxu0 0.0
    %1025 = vmatpush2.msra.mxu0 0.0
    %1026 = vmatprep.subr.mxu0 0.0
    %1027 = vmatpush2.msra.mxu0 0.0
    %1028 = vmatprep.mubr.f32.mxu0 0.0
    %1029 = vmatmul.mubr.f32.gmra.mxu0 %v962
    %v1030 = vpop.f32.mrf.mxu0
    %v1031 = vadd.f32 0.0, %v1030
    %v1032 = vpop.f32.mrf.mxu0
    %1033 = vdwg.mxu0
    %v1034 = vadd.f32 %v151, %v1031
    %v1035 = vtanh.pop %v1034
    %v1036 = vmul.f32 %v1035, %v231
    %v1037 = vsel %vm152, %v1036, 0.0
    %1038 = vadd.xlane.f32.xlu0 %v1037
    %v1039 = vpop.xlane.xlu0 %1038
    %v1040 = vadd.f32 %v1039, %v38
    %v1041 = vxor.u32 %v1040, 2147483648
    %v1042 = vmul.f32 %v1041, 1.442695
    %v1043 = vpow.pop %v1042
    %v1044 = vadd.f32 %v1043, 1.0
    %v1045 = vrcp.pop %v1044
    %v1046 = vmul.f32 1.0, %v1045
    %v1047 = vadd.f32 %v955, %v1046
    %v1048 = vsub.f32 %v1047, 1.0
    %v1049 = vmax.f32 %v1048, 0.0
    %v1050 = vsub.f32 %v1046, %v1049
    %v1051 = vadd.f32 %v954, %v1035
    %v1052 = vmul.f32 %v1050, %v1035
    %v1053 = vadd.f32 %v1051, %v1052
    %v1054 = vsel %vm958, 1, 0
    %vm1055 = vcmp.eq.s32.totalorder %v1054, 1
    %v1056 = vsel %vm1055, %v1053, %v954
    %v1057 = vsel %vm958, %v1047, %v955
    %v1058 = vadd.f32 %v957, 1.0
    %v1059 = vsel %vm958, %v1058, %v957
    %vm1060 = vcmp.lt.f32.partialorder %v1057, 0.99
    %v1061 = vsub.f32 0.0, %v1057
    %v1062 = vsel %vm1060, %v1061, %v960
    %v1064 = vsel %vm152, %v1035, 0
    %1066 = vmatprep.subr.mxu0 0.0
    %1067 = vmatpush1.msra.mxu0 0.0
    %1068 = vmatprep.subr.mxu0 0.0
    %1069 = vmatpush1.msra.mxu0 0.0
    %1070 = vmatprep.subr.mxu0 0.0
    %1071 = vmatpush1.msra.mxu0 0.0
    %1072 = vmatprep.subr.mxu0 0.0
    %1073 = vmatpush1.msra.mxu0 0.0
    %1074 = vmatprep.subr.mxu0 0.0
    %1075 = vmatpush1.msra.mxu0 0.0
    %1076 = vmatprep.subr.mxu0 0.0
    %1077 = vmatpush1.msra.mxu0 0.0
    %1078 = vmatprep.subr.mxu0 0.0
    %1079 = vmatpush1.msra.mxu0 0.0
    %1080 = vmatprep.subr.mxu0 0.0
    %1081 = vmatpush1.msra.mxu0 0.0
    %1082 = vmatprep.subr.mxu0 0.0
    %1083 = vmatpush1.msra.mxu0 0.0
    %1084 = vmatprep.subr.mxu0 0.0
    %1085 = vmatpush1.msra.mxu0 0.0
    %1086 = vmatprep.subr.mxu0 0.0
    %1087 = vmatpush1.msra.mxu0 0.0
    %1088 = vmatprep.subr.mxu0 0.0
    %1089 = vmatpush1.msra.mxu0 0.0
    %1090 = vmatprep.subr.mxu0 0.0
    %1091 = vmatpush1.msra.mxu0 %v32
    %1092 = vmatprep.subr.mxu0 0.0
    %1093 = vmatpush1.msra.mxu0 %v31
    %1094 = vmatprep.subr.mxu0 0.0
    %1095 = vmatpush1.msra.mxu0 %v30
    %1096 = vmatprep.subr.mxu0 0.0
    %1097 = vmatpush1.msra.mxu0 %v29
    %1098 = vmatprep.subr.mxu0 0.0
    %1099 = vmatpush2.msra.mxu0 0.0
    %1100 = vmatprep.subr.mxu0 0.0
    %1101 = vmatpush2.msra.mxu0 0.0
    %1102 = vmatprep.subr.mxu0 0.0
    %1103 = vmatpush2.msra.mxu0 0.0
    %1104 = vmatprep.subr.mxu0 0.0
    %1105 = vmatpush2.msra.mxu0 0.0
    %1106 = vmatprep.subr.mxu0 0.0
    %1107 = vmatpush2.msra.mxu0 0.0
    %1108 = vmatprep.subr.mxu0 0.0
    %1109 = vmatpush2.msra.mxu0 0.0
    %1110 = vmatprep.subr.mxu0 0.0
    %1111 = vmatpush2.msra.mxu0 0.0
    %1112 = vmatprep.subr.mxu0 0.0
    %1113 = vmatpush2.msra.mxu0 0.0
    %1114 = vmatprep.subr.mxu0 0.0
    %1115 = vmatpush2.msra.mxu0 0.0
    %1116 = vmatprep.subr.mxu0 0.0
    %1117 = vmatpush2.msra.mxu0 0.0
    %1118 = vmatprep.subr.mxu0 0.0
    %1119 = vmatpush2.msra.mxu0 0.0
    %1120 = vmatprep.subr.mxu0 0.0
    %1121 = vmatpush2.msra.mxu0 0.0
    %1122 = vmatprep.subr.mxu0 0.0
    %1123 = vmatpush2.msra.mxu0 0.0
    %1124 = vmatprep.subr.mxu0 0.0
    %1125 = vmatpush2.msra.mxu0 0.0
    %1126 = vmatprep.subr.mxu0 0.0
    %1127 = vmatpush2.msra.mxu0 0.0
    %1128 = vmatprep.subr.mxu0 0.0
    %1129 = vmatpush2.msra.mxu0 0.0
    %1130 = vmatprep.mubr.f32.mxu0 0.0
    %1131 = vmatmul.mubr.f32.gmra.mxu0 %v1064
    %v1132 = vpop.f32.mrf.mxu0
    %v1133 = vadd.f32 0.0, %v1132
    %v1134 = vpop.f32.mrf.mxu0
    %1135 = vdwg.mxu0
    %v1136 = vadd.f32 %v151, %v1133
    %v1137 = vtanh.pop %v1136
    %v1138 = vmul.f32 %v1137, %v231
    %v1139 = vsel %vm152, %v1138, 0.0
    %1140 = vadd.xlane.f32.xlu0 %v1139
    %v1141 = vpop.xlane.xlu0 %1140
    %v1142 = vadd.f32 %v1141, %v38
    %v1143 = vxor.u32 %v1142, 2147483648
    %v1144 = vmul.f32 %v1143, 1.442695
    %v1145 = vpow.pop %v1144
    %v1146 = vadd.f32 %v1145, 1.0
    %v1147 = vrcp.pop %v1146
    %v1148 = vmul.f32 1.0, %v1147
    %v1149 = vadd.f32 %v1057, %v1148
    %v1150 = vsub.f32 %v1149, 1.0
    %v1151 = vmax.f32 %v1150, 0.0
    %v1152 = vsub.f32 %v1148, %v1151
    %v1153 = vadd.f32 %v1056, %v1137
    %v1154 = vmul.f32 %v1152, %v1137
    %v1155 = vadd.f32 %v1153, %v1154
    %v1156 = vsel %vm1060, 1, 0
    %vm1157 = vcmp.eq.s32.totalorder %v1156, 1
    %v1158 = vsel %vm1157, %v1155, %v1056
    %v1159 = vsel %vm1060, %v1149, %v1057
    %v1160 = vadd.f32 %v1059, 1.0
    %v1161 = vsel %vm1060, %v1160, %v1059
    %vm1162 = vcmp.lt.f32.partialorder %v1159, 0.99
    %v1163 = vsub.f32 0.0, %v1159
    %v1164 = vsel %vm1162, %v1163, %v1062
    %v1166 = vsel %vm152, %v1137, 0
    %1168 = vmatprep.subr.mxu0 0.0
    %1169 = vmatpush1.msra.mxu0 0.0
    %1170 = vmatprep.subr.mxu0 0.0
    %1171 = vmatpush1.msra.mxu0 0.0
    %1172 = vmatprep.subr.mxu0 0.0
    %1173 = vmatpush1.msra.mxu0 0.0
    %1174 = vmatprep.subr.mxu0 0.0
    %1175 = vmatpush1.msra.mxu0 0.0
    %1176 = vmatprep.subr.mxu0 0.0
    %1177 = vmatpush1.msra.mxu0 0.0
    %1178 = vmatprep.subr.mxu0 0.0
    %1179 = vmatpush1.msra.mxu0 0.0
    %1180 = vmatprep.subr.mxu0 0.0
    %1181 = vmatpush1.msra.mxu0 0.0
    %1182 = vmatprep.subr.mxu0 0.0
    %1183 = vmatpush1.msra.mxu0 0.0
    %1184 = vmatprep.subr.mxu0 0.0
    %1185 = vmatpush1.msra.mxu0 0.0
    %1186 = vmatprep.subr.mxu0 0.0
    %1187 = vmatpush1.msra.mxu0 0.0
    %1188 = vmatprep.subr.mxu0 0.0
    %1189 = vmatpush1.msra.mxu0 0.0
    %1190 = vmatprep.subr.mxu0 0.0
    %1191 = vmatpush1.msra.mxu0 0.0
    %1192 = vmatprep.subr.mxu0 0.0
    %1193 = vmatpush1.msra.mxu0 %v32
    %1194 = vmatprep.subr.mxu0 0.0
    %1195 = vmatpush1.msra.mxu0 %v31
    %1196 = vmatprep.subr.mxu0 0.0
    %1197 = vmatpush1.msra.mxu0 %v30
    %1198 = vmatprep.subr.mxu0 0.0
    %1199 = vmatpush1.msra.mxu0 %v29
    %1200 = vmatprep.subr.mxu0 0.0
    %1201 = vmatpush2.msra.mxu0 0.0
    %1202 = vmatprep.subr.mxu0 0.0
    %1203 = vmatpush2.msra.mxu0 0.0
    %1204 = vmatprep.subr.mxu0 0.0
    %1205 = vmatpush2.msra.mxu0 0.0
    %1206 = vmatprep.subr.mxu0 0.0
    %1207 = vmatpush2.msra.mxu0 0.0
    %1208 = vmatprep.subr.mxu0 0.0
    %1209 = vmatpush2.msra.mxu0 0.0
    %1210 = vmatprep.subr.mxu0 0.0
    %1211 = vmatpush2.msra.mxu0 0.0
    %1212 = vmatprep.subr.mxu0 0.0
    %1213 = vmatpush2.msra.mxu0 0.0
    %1214 = vmatprep.subr.mxu0 0.0
    %1215 = vmatpush2.msra.mxu0 0.0
    %1216 = vmatprep.subr.mxu0 0.0
    %1217 = vmatpush2.msra.mxu0 0.0
    %1218 = vmatprep.subr.mxu0 0.0
    %1219 = vmatpush2.msra.mxu0 0.0
    %1220 = vmatprep.subr.mxu0 0.0
    %1221 = vmatpush2.msra.mxu0 0.0
    %1222 = vmatprep.subr.mxu0 0.0
    %1223 = vmatpush2.msra.mxu0 0.0
    %1224 = vmatprep.subr.mxu0 0.0
    %1225 = vmatpush2.msra.mxu0 0.0
    %1226 = vmatprep.subr.mxu0 0.0
    %1227 = vmatpush2.msra.mxu0 0.0
    %1228 = vmatprep.subr.mxu0 0.0
    %1229 = vmatpush2.msra.mxu0 0.0
    %1230 = vmatprep.subr.mxu0 0.0
    %1231 = vmatpush2.msra.mxu0 0.0
    %1232 = vmatprep.mubr.f32.mxu0 0.0
    %1233 = vmatmul.mubr.f32.gmra.mxu0 %v1166
    %v1234 = vpop.f32.mrf.mxu0
    %v1235 = vadd.f32 0.0, %v1234
    %v1236 = vpop.f32.mrf.mxu0
    %1237 = vdwg.mxu0
    %v1238 = vadd.f32 %v151, %v1235
    %v1239 = vtanh.pop %v1238
    %v1240 = vmul.f32 %v1239, %v231
    %v1241 = vsel %vm152, %v1240, 0.0
    %1242 = vadd.xlane.f32.xlu0 %v1241
    %v1243 = vpop.xlane.xlu0 %1242
    %v1244 = vadd.f32 %v1243, %v38
    %v1245 = vxor.u32 %v1244, 2147483648
    %v1246 = vmul.f32 %v1245, 1.442695
    %v1247 = vpow.pop %v1246
    %v1248 = vadd.f32 %v1247, 1.0
    %v1249 = vrcp.pop %v1248
    %v1250 = vmul.f32 1.0, %v1249
    %v1251 = vadd.f32 %v1159, %v1250
    %v1252 = vsub.f32 %v1251, 1.0
    %v1253 = vmax.f32 %v1252, 0.0
    %v1254 = vsub.f32 %v1250, %v1253
    %v1255 = vadd.f32 %v1158, %v1239
    %v1256 = vmul.f32 %v1254, %v1239
    %v1257 = vadd.f32 %v1255, %v1256
    %v1258 = vsel %vm1162, 1, 0
    %vm1259 = vcmp.eq.s32.totalorder %v1258, 1
    %v1260 = vsel %vm1259, %v1257, %v1158
    %v1261 = vsel %vm1162, %v1251, %v1159
    %v1262 = vadd.f32 %v1161, 1.0
    %v1263 = vsel %vm1162, %v1262, %v1161
    %vm1264 = vcmp.lt.f32.partialorder %v1261, 0.99
    %v1265 = vsub.f32 0.0, %v1261
    %v1266 = vsel %vm1264, %v1265, %v1164
    %v1268 = vsel %vm152, %v1239, 0
    %1270 = vmatprep.subr.mxu0 0.0
    %1271 = vmatpush1.msra.mxu0 0.0
    %1272 = vmatprep.subr.mxu0 0.0
    %1273 = vmatpush1.msra.mxu0 0.0
    %1274 = vmatprep.subr.mxu0 0.0
    %1275 = vmatpush1.msra.mxu0 0.0
    %1276 = vmatprep.subr.mxu0 0.0
    %1277 = vmatpush1.msra.mxu0 0.0
    %1278 = vmatprep.subr.mxu0 0.0
    %1279 = vmatpush1.msra.mxu0 0.0
    %1280 = vmatprep.subr.mxu0 0.0
    %1281 = vmatpush1.msra.mxu0 0.0
    %1282 = vmatprep.subr.mxu0 0.0
    %1283 = vmatpush1.msra.mxu0 0.0
    %1284 = vmatprep.subr.mxu0 0.0
    %1285 = vmatpush1.msra.mxu0 0.0
    %1286 = vmatprep.subr.mxu0 0.0
    %1287 = vmatpush1.msra.mxu0 0.0
    %1288 = vmatprep.subr.mxu0 0.0
    %1289 = vmatpush1.msra.mxu0 0.0
    %1290 = vmatprep.subr.mxu0 0.0
    %1291 = vmatpush1.msra.mxu0 0.0
    %1292 = vmatprep.subr.mxu0 0.0
    %1293 = vmatpush1.msra.mxu0 0.0
    %1294 = vmatprep.subr.mxu0 0.0
    %1295 = vmatpush1.msra.mxu0 %v32
    %1296 = vmatprep.subr.mxu0 0.0
    %1297 = vmatpush1.msra.mxu0 %v31
    %1298 = vmatprep.subr.mxu0 0.0
    %1299 = vmatpush1.msra.mxu0 %v30
    %1300 = vmatprep.subr.mxu0 0.0
    %1301 = vmatpush1.msra.mxu0 %v29
    %1302 = vmatprep.subr.mxu0 0.0
    %1303 = vmatpush2.msra.mxu0 0.0
    %1304 = vmatprep.subr.mxu0 0.0
    %1305 = vmatpush2.msra.mxu0 0.0
    %1306 = vmatprep.subr.mxu0 0.0
    %1307 = vmatpush2.msra.mxu0 0.0
    %1308 = vmatprep.subr.mxu0 0.0
    %1309 = vmatpush2.msra.mxu0 0.0
    %1310 = vmatprep.subr.mxu0 0.0
    %1311 = vmatpush2.msra.mxu0 0.0
    %1312 = vmatprep.subr.mxu0 0.0
    %1313 = vmatpush2.msra.mxu0 0.0
    %1314 = vmatprep.subr.mxu0 0.0
    %1315 = vmatpush2.msra.mxu0 0.0
    %1316 = vmatprep.subr.mxu0 0.0
    %1317 = vmatpush2.msra.mxu0 0.0
    %1318 = vmatprep.subr.mxu0 0.0
    %1319 = vmatpush2.msra.mxu0 0.0
    %1320 = vmatprep.subr.mxu0 0.0
    %1321 = vmatpush2.msra.mxu0 0.0
    %1322 = vmatprep.subr.mxu0 0.0
    %1323 = vmatpush2.msra.mxu0 0.0
    %1324 = vmatprep.subr.mxu0 0.0
    %1325 = vmatpush2.msra.mxu0 0.0
    %1326 = vmatprep.subr.mxu0 0.0
    %1327 = vmatpush2.msra.mxu0 0.0
    %1328 = vmatprep.subr.mxu0 0.0
    %1329 = vmatpush2.msra.mxu0 0.0
    %1330 = vmatprep.subr.mxu0 0.0
    %1331 = vmatpush2.msra.mxu0 0.0
    %1332 = vmatprep.subr.mxu0 0.0
    %1333 = vmatpush2.msra.mxu0 0.0
    %1334 = vmatprep.mubr.f32.mxu0 0.0
    %1335 = vmatmul.mubr.f32.gmra.mxu0 %v1268
    %v1336 = vpop.f32.mrf.mxu0
    %v1337 = vadd.f32 0.0, %v1336
    %v1338 = vpop.f32.mrf.mxu0
    %1339 = vdwg.mxu0
    %v1340 = vadd.f32 %v151, %v1337
    %v1341 = vtanh.pop %v1340
    %v1342 = vmul.f32 %v1341, %v231
    %v1343 = vsel %vm152, %v1342, 0.0
    %1344 = vadd.xlane.f32.xlu0 %v1343
    %v1345 = vpop.xlane.xlu0 %1344
    %v1346 = vadd.f32 %v1345, %v38
    %v1347 = vxor.u32 %v1346, 2147483648
    %v1348 = vmul.f32 %v1347, 1.442695
    %v1349 = vpow.pop %v1348
    %v1350 = vadd.f32 %v1349, 1.0
    %v1351 = vrcp.pop %v1350
    %v1352 = vmul.f32 1.0, %v1351
    %v1353 = vadd.f32 %v1261, %v1352
    %v1354 = vsub.f32 %v1353, 1.0
    %v1355 = vmax.f32 %v1354, 0.0
    %v1356 = vsub.f32 %v1352, %v1355
    %v1357 = vadd.f32 %v1260, %v1341
    %v1358 = vmul.f32 %v1356, %v1341
    %v1359 = vadd.f32 %v1357, %v1358
    %v1360 = vsel %vm1264, 1, 0
    %vm1361 = vcmp.eq.s32.totalorder %v1360, 1
    %v1362 = vsel %vm1361, %v1359, %v1260
    %v1363 = vadd.f32 %v1263, 1.0
    %v1364 = vsel %vm1264, %v1363, %v1263
    %v1365 = vrcp.pop %v1364
    %v1366 = vmul.f32 %v1362, %v1365
    %v1367 = vadd.f32 %v1266, 0.0
    %v1368 = vlaneseq
    %v1369 = vshrl.u32 %v1368, 7
    %v1370 = vsub.s32 0, %v1369
    %v1371 = vrot.slane %v36, %v1370
    %v1372 = vmul.f32 %v1366, %v1371
    %v1373 = vsel %vm152, %v1372, 0.0
    %1374 = vadd.xlane.f32.xlu0 %v1373
    %v1375 = vpop.xlane.xlu0 %1374
    %v1376 = vadd.f32 %v1375, %v40
    %v1377 = vadd.f32 %v134, %v150
    %v1379 = vsel %vm152, %v1366, 0
    %1381 = vmatprep.subr.mxu0 0.0
    %1382 = vmatpush1.msra.mxu0 0.0
    %1383 = vmatprep.subr.mxu0 0.0
    %1384 = vmatpush1.msra.mxu0 0.0
    %1385 = vmatprep.subr.mxu0 0.0
    %1386 = vmatpush1.msra.mxu0 0.0
    %1387 = vmatprep.subr.mxu0 0.0
    %1388 = vmatpush1.msra.mxu0 0.0
    %1389 = vmatprep.subr.mxu0 0.0
    %1390 = vmatpush1.msra.mxu0 0.0
    %1391 = vmatprep.subr.mxu0 0.0
    %1392 = vmatpush1.msra.mxu0 0.0
    %1393 = vmatprep.subr.mxu0 0.0
    %1394 = vmatpush1.msra.mxu0 0.0
    %1395 = vmatprep.subr.mxu0 0.0
    %1396 = vmatpush1.msra.mxu0 0.0
    %1397 = vmatprep.subr.mxu0 0.0
    %1398 = vmatpush1.msra.mxu0 0.0
    %1399 = vmatprep.subr.mxu0 0.0
    %1400 = vmatpush1.msra.mxu0 0.0
    %1401 = vmatprep.subr.mxu0 0.0
    %1402 = vmatpush1.msra.mxu0 0.0
    %1403 = vmatprep.subr.mxu0 0.0
    %1404 = vmatpush1.msra.mxu0 0.0
    %1405 = vmatprep.subr.mxu0 0.0
    %1406 = vmatpush1.msra.mxu0 %v32
    %1407 = vmatprep.subr.mxu0 0.0
    %1408 = vmatpush1.msra.mxu0 %v31
    %1409 = vmatprep.subr.mxu0 0.0
    %1410 = vmatpush1.msra.mxu0 %v30
    %1411 = vmatprep.subr.mxu0 0.0
    %1412 = vmatpush1.msra.mxu0 %v29
    %1413 = vmatprep.subr.mxu0 0.0
    %1414 = vmatpush2.msra.mxu0 0.0
    %1415 = vmatprep.subr.mxu0 0.0
    %1416 = vmatpush2.msra.mxu0 0.0
    %1417 = vmatprep.subr.mxu0 0.0
    %1418 = vmatpush2.msra.mxu0 0.0
    %1419 = vmatprep.subr.mxu0 0.0
    %1420 = vmatpush2.msra.mxu0 0.0
    %1421 = vmatprep.subr.mxu0 0.0
    %1422 = vmatpush2.msra.mxu0 0.0
    %1423 = vmatprep.subr.mxu0 0.0
    %1424 = vmatpush2.msra.mxu0 0.0
    %1425 = vmatprep.subr.mxu0 0.0
    %1426 = vmatpush2.msra.mxu0 0.0
    %1427 = vmatprep.subr.mxu0 0.0
    %1428 = vmatpush2.msra.mxu0 0.0
    %1429 = vmatprep.subr.mxu0 0.0
    %1430 = vmatpush2.msra.mxu0 0.0
    %1431 = vmatprep.subr.mxu0 0.0
    %1432 = vmatpush2.msra.mxu0 0.0
    %1433 = vmatprep.subr.mxu0 0.0
    %1434 = vmatpush2.msra.mxu0 0.0
    %1435 = vmatprep.subr.mxu0 0.0
    %1436 = vmatpush2.msra.mxu0 0.0
    %1437 = vmatprep.subr.mxu0 0.0
    %1438 = vmatpush2.msra.mxu0 0.0
    %1439 = vmatprep.subr.mxu0 0.0
    %1440 = vmatpush2.msra.mxu0 0.0
    %1441 = vmatprep.subr.mxu0 0.0
    %1442 = vmatpush2.msra.mxu0 0.0
    %1443 = vmatprep.subr.mxu0 0.0
    %1444 = vmatpush2.msra.mxu0 0.0
    %1445 = vmatprep.mubr.f32.mxu0 0.0
    %1446 = vmatmul.mubr.f32.gmra.mxu0 %v1379
    %v1447 = vpop.f32.mrf.mxu0
    %v1448 = vadd.f32 0.0, %v1447
    %v1449 = vpop.f32.mrf.mxu0
    %1450 = vdwg.mxu0
    %v1451 = vadd.f32 %v134, %v1448
    %v1452 = vtanh.pop %v1451
    %v1453 = vmul.f32 %v1452, %v231
    %v1454 = vsel %vm152, %v1453, 0.0
    %1455 = vadd.xlane.f32.xlu0 %v1454
    %v1456 = vpop.xlane.xlu0 %1455
    %v1457 = vadd.f32 %v1456, %v38
    %v1458 = vxor.u32 %v1457, 2147483648
    %v1459 = vmul.f32 %v1458, 1.442695
    %v1460 = vpow.pop %v1459
    %v1461 = vadd.f32 %v1460, 1.0
    %v1462 = vrcp.pop %v1461
    %v1463 = vmul.f32 1.0, %v1462
    %v1464 = vmul.f32 %v1463, %v1452
    %v1465 = vadd.f32 %v1452, %v1464
    %vm1466 = vcmp.lt.f32.partialorder %v1463, 0.99
    %v1467 = vsub.f32 0.0, %v1463
    %v1468 = vsel %vm1466, %v1467, 0.0
    %v1470 = vsel %vm152, %v1452, 0
    %1472 = vmatprep.subr.mxu0 0.0
    %1473 = vmatpush1.msra.mxu0 0.0
    %1474 = vmatprep.subr.mxu0 0.0
    %1475 = vmatpush1.msra.mxu0 0.0
    %1476 = vmatprep.subr.mxu0 0.0
    %1477 = vmatpush1.msra.mxu0 0.0
    %1478 = vmatprep.subr.mxu0 0.0
    %1479 = vmatpush1.msra.mxu0 0.0
    %1480 = vmatprep.subr.mxu0 0.0
    %1481 = vmatpush1.msra.mxu0 0.0
    %1482 = vmatprep.subr.mxu0 0.0
    %1483 = vmatpush1.msra.mxu0 0.0
    %1484 = vmatprep.subr.mxu0 0.0
    %1485 = vmatpush1.msra.mxu0 0.0
    %1486 = vmatprep.subr.mxu0 0.0
    %1487 = vmatpush1.msra.mxu0 0.0
    %1488 = vmatprep.subr.mxu0 0.0
    %1489 = vmatpush1.msra.mxu0 0.0
    %1490 = vmatprep.subr.mxu0 0.0
    %1491 = vmatpush1.msra.mxu0 0.0
    %1492 = vmatprep.subr.mxu0 0.0
    %1493 = vmatpush1.msra.mxu0 0.0
    %1494 = vmatprep.subr.mxu0 0.0
    %1495 = vmatpush1.msra.mxu0 0.0
    %1496 = vmatprep.subr.mxu0 0.0
    %1497 = vmatpush1.msra.mxu0 %v32
    %1498 = vmatprep.subr.mxu0 0.0
    %1499 = vmatpush1.msra.mxu0 %v31
    %1500 = vmatprep.subr.mxu0 0.0
    %1501 = vmatpush1.msra.mxu0 %v30
    %1502 = vmatprep.subr.mxu0 0.0
    %1503 = vmatpush1.msra.mxu0 %v29
    %1504 = vmatprep.subr.mxu0 0.0
    %1505 = vmatpush2.msra.mxu0 0.0
    %1506 = vmatprep.subr.mxu0 0.0
    %1507 = vmatpush2.msra.mxu0 0.0
    %1508 = vmatprep.subr.mxu0 0.0
    %1509 = vmatpush2.msra.mxu0 0.0
    %1510 = vmatprep.subr.mxu0 0.0
    %1511 = vmatpush2.msra.mxu0 0.0
    %1512 = vmatprep.subr.mxu0 0.0
    %1513 = vmatpush2.msra.mxu0 0.0
    %1514 = vmatprep.subr.mxu0 0.0
    %1515 = vmatpush2.msra.mxu0 0.0
    %1516 = vmatprep.subr.mxu0 0.0
    %1517 = vmatpush2.msra.mxu0 0.0
    %1518 = vmatprep.subr.mxu0 0.0
    %1519 = vmatpush2.msra.mxu0 0.0
    %1520 = vmatprep.subr.mxu0 0.0
    %1521 = vmatpush2.msra.mxu0 0.0
    %1522 = vmatprep.subr.mxu0 0.0
    %1523 = vmatpush2.msra.mxu0 0.0
    %1524 = vmatprep.subr.mxu0 0.0
    %1525 = vmatpush2.msra.mxu0 0.0
    %1526 = vmatprep.subr.mxu0 0.0
    %1527 = vmatpush2.msra.mxu0 0.0
    %1528 = vmatprep.subr.mxu0 0.0
    %1529 = vmatpush2.msra.mxu0 0.0
    %1530 = vmatprep.subr.mxu0 0.0
    %1531 = vmatpush2.msra.mxu0 0.0
    %1532 = vmatprep.subr.mxu0 0.0
    %1533 = vmatpush2.msra.mxu0 0.0
    %1534 = vmatprep.subr.mxu0 0.0
    %1535 = vmatpush2.msra.mxu0 0.0
    %1536 = vmatprep.mubr.f32.mxu0 0.0
    %1537 = vmatmul.mubr.f32.gmra.mxu0 %v1470
    %v1538 = vpop.f32.mrf.mxu0
    %v1539 = vadd.f32 0.0, %v1538
    %v1540 = vpop.f32.mrf.mxu0
    %1541 = vdwg.mxu0
    %v1542 = vadd.f32 %v1377, %v1539
    %v1543 = vtanh.pop %v1542
    %v1544 = vmul.f32 %v1543, %v231
    %v1545 = vsel %vm152, %v1544, 0.0
    %1546 = vadd.xlane.f32.xlu0 %v1545
    %v1547 = vpop.xlane.xlu0 %1546
    %v1548 = vadd.f32 %v1547, %v38
    %v1549 = vxor.u32 %v1548, 2147483648
    %v1550 = vmul.f32 %v1549, 1.442695
    %v1551 = vpow.pop %v1550
    %v1552 = vadd.f32 %v1551, 1.0
    %v1553 = vrcp.pop %v1552
    %v1554 = vmul.f32 1.0, %v1553
    %v1555 = vadd.f32 %v1463, %v1554
    %v1556 = vsub.f32 %v1555, 1.0
    %v1557 = vmax.f32 %v1556, 0.0
    %v1558 = vsub.f32 %v1554, %v1557
    %v1559 = vadd.f32 %v1465, %v1543
    %v1560 = vmul.f32 %v1558, %v1543
    %v1561 = vadd.f32 %v1559, %v1560
    %v1562 = vsel %vm1466, 1, 0
    %vm1563 = vcmp.eq.s32.totalorder %v1562, 1
    %v1564 = vsel %vm1563, %v1561, %v1465
    %v1565 = vsel %vm1466, %v1555, %v1463
    %v1566 = vsel %vm1466, 2.0, 1.0
    %vm1567 = vcmp.lt.f32.partialorder %v1565, 0.99
    %v1568 = vsub.f32 0.0, %v1565
    %v1569 = vsel %vm1567, %v1568, %v1468
    %v1571 = vsel %vm152, %v1543, 0
    %1573 = vmatprep.subr.mxu0 0.0
    %1574 = vmatpush1.msra.mxu0 0.0
    %1575 = vmatprep.subr.mxu0 0.0
    %1576 = vmatpush1.msra.mxu0 0.0
    %1577 = vmatprep.subr.mxu0 0.0
    %1578 = vmatpush1.msra.mxu0 0.0
    %1579 = vmatprep.subr.mxu0 0.0
    %1580 = vmatpush1.msra.mxu0 0.0
    %1581 = vmatprep.subr.mxu0 0.0
    %1582 = vmatpush1.msra.mxu0 0.0
    %1583 = vmatprep.subr.mxu0 0.0
    %1584 = vmatpush1.msra.mxu0 0.0
    %1585 = vmatprep.subr.mxu0 0.0
    %1586 = vmatpush1.msra.mxu0 0.0
    %1587 = vmatprep.subr.mxu0 0.0
    %1588 = vmatpush1.msra.mxu0 0.0
    %1589 = vmatprep.subr.mxu0 0.0
    %1590 = vmatpush1.msra.mxu0 0.0
    %1591 = vmatprep.subr.mxu0 0.0
    %1592 = vmatpush1.msra.mxu0 0.0
    %1593 = vmatprep.subr.mxu0 0.0
    %1594 = vmatpush1.msra.mxu0 0.0
    %1595 = vmatprep.subr.mxu0 0.0
    %1596 = vmatpush1.msra.mxu0 0.0
    %1597 = vmatprep.subr.mxu0 0.0
    %1598 = vmatpush1.msra.mxu0 %v32
    %1599 = vmatprep.subr.mxu0 0.0
    %1600 = vmatpush1.msra.mxu0 %v31
    %1601 = vmatprep.subr.mxu0 0.0
    %1602 = vmatpush1.msra.mxu0 %v30
    %1603 = vmatprep.subr.mxu0 0.0
    %1604 = vmatpush1.msra.mxu0 %v29
    %1605 = vmatprep.subr.mxu0 0.0
    %1606 = vmatpush2.msra.mxu0 0.0
    %1607 = vmatprep.subr.mxu0 0.0
    %1608 = vmatpush2.msra.mxu0 0.0
    %1609 = vmatprep.subr.mxu0 0.0
    %1610 = vmatpush2.msra.mxu0 0.0
    %1611 = vmatprep.subr.mxu0 0.0
    %1612 = vmatpush2.msra.mxu0 0.0
    %1613 = vmatprep.subr.mxu0 0.0
    %1614 = vmatpush2.msra.mxu0 0.0
    %1615 = vmatprep.subr.mxu0 0.0
    %1616 = vmatpush2.msra.mxu0 0.0
    %1617 = vmatprep.subr.mxu0 0.0
    %1618 = vmatpush2.msra.mxu0 0.0
    %1619 = vmatprep.subr.mxu0 0.0
    %1620 = vmatpush2.msra.mxu0 0.0
    %1621 = vmatprep.subr.mxu0 0.0
    %1622 = vmatpush2.msra.mxu0 0.0
    %1623 = vmatprep.subr.mxu0 0.0
    %1624 = vmatpush2.msra.mxu0 0.0
    %1625 = vmatprep.subr.mxu0 0.0
    %1626 = vmatpush2.msra.mxu0 0.0
    %1627 = vmatprep.subr.mxu0 0.0
    %1628 = vmatpush2.msra.mxu0 0.0
    %1629 = vmatprep.subr.mxu0 0.0
    %1630 = vmatpush2.msra.mxu0 0.0
    %1631 = vmatprep.subr.mxu0 0.0
    %1632 = vmatpush2.msra.mxu0 0.0
    %1633 = vmatprep.subr.mxu0 0.0
    %1634 = vmatpush2.msra.mxu0 0.0
    %1635 = vmatprep.subr.mxu0 0.0
    %1636 = vmatpush2.msra.mxu0 0.0
    %1637 = vmatprep.mubr.f32.mxu0 0.0
    %1638 = vmatmul.mubr.f32.gmra.mxu0 %v1571
    %v1639 = vpop.f32.mrf.mxu0
    %v1640 = vadd.f32 0.0, %v1639
    %v1641 = vpop.f32.mrf.mxu0
    %1642 = vdwg.mxu0
    %v1643 = vadd.f32 %v1377, %v1640
    %v1644 = vtanh.pop %v1643
    %v1645 = vmul.f32 %v1644, %v231
    %v1646 = vsel %vm152, %v1645, 0.0
    %1647 = vadd.xlane.f32.xlu0 %v1646
    %v1648 = vpop.xlane.xlu0 %1647
    %v1649 = vadd.f32 %v1648, %v38
    %v1650 = vxor.u32 %v1649, 2147483648
    %v1651 = vmul.f32 %v1650, 1.442695
    %v1652 = vpow.pop %v1651
    %v1653 = vadd.f32 %v1652, 1.0
    %v1654 = vrcp.pop %v1653
    %v1655 = vmul.f32 1.0, %v1654
    %v1656 = vadd.f32 %v1565, %v1655
    %v1657 = vsub.f32 %v1656, 1.0
    %v1658 = vmax.f32 %v1657, 0.0
    %v1659 = vsub.f32 %v1655, %v1658
    %v1660 = vadd.f32 %v1564, %v1644
    %v1661 = vmul.f32 %v1659, %v1644
    %v1662 = vadd.f32 %v1660, %v1661
    %v1663 = vsel %vm1567, 1, 0
    %vm1664 = vcmp.eq.s32.totalorder %v1663, 1
    %v1665 = vsel %vm1664, %v1662, %v1564
    %v1666 = vsel %vm1567, %v1656, %v1565
    %v1667 = vadd.f32 %v1566, 1.0
    %v1668 = vsel %vm1567, %v1667, %v1566
    %vm1669 = vcmp.lt.f32.partialorder %v1666, 0.99
    %v1670 = vsub.f32 0.0, %v1666
    %v1671 = vsel %vm1669, %v1670, %v1569
    %v1673 = vsel %vm152, %v1644, 0
    %1675 = vmatprep.subr.mxu0 0.0
    %1676 = vmatpush1.msra.mxu0 0.0
    %1677 = vmatprep.subr.mxu0 0.0
    %1678 = vmatpush1.msra.mxu0 0.0
    %1679 = vmatprep.subr.mxu0 0.0
    %1680 = vmatpush1.msra.mxu0 0.0
    %1681 = vmatprep.subr.mxu0 0.0
    %1682 = vmatpush1.msra.mxu0 0.0
    %1683 = vmatprep.subr.mxu0 0.0
    %1684 = vmatpush1.msra.mxu0 0.0
    %1685 = vmatprep.subr.mxu0 0.0
    %1686 = vmatpush1.msra.mxu0 0.0
    %1687 = vmatprep.subr.mxu0 0.0
    %1688 = vmatpush1.msra.mxu0 0.0
    %1689 = vmatprep.subr.mxu0 0.0
    %1690 = vmatpush1.msra.mxu0 0.0
    %1691 = vmatprep.subr.mxu0 0.0
    %1692 = vmatpush1.msra.mxu0 0.0
    %1693 = vmatprep.subr.mxu0 0.0
    %1694 = vmatpush1.msra.mxu0 0.0
    %1695 = vmatprep.subr.mxu0 0.0
    %1696 = vmatpush1.msra.mxu0 0.0
    %1697 = vmatprep.subr.mxu0 0.0
    %1698 = vmatpush1.msra.mxu0 0.0
    %1699 = vmatprep.subr.mxu0 0.0
    %1700 = vmatpush1.msra.mxu0 %v32
    %1701 = vmatprep.subr.mxu0 0.0
    %1702 = vmatpush1.msra.mxu0 %v31
    %1703 = vmatprep.subr.mxu0 0.0
    %1704 = vmatpush1.msra.mxu0 %v30
    %1705 = vmatprep.subr.mxu0 0.0
    %1706 = vmatpush1.msra.mxu0 %v29
    %1707 = vmatprep.subr.mxu0 0.0
    %1708 = vmatpush2.msra.mxu0 0.0
    %1709 = vmatprep.subr.mxu0 0.0
    %1710 = vmatpush2.msra.mxu0 0.0
    %1711 = vmatprep.subr.mxu0 0.0
    %1712 = vmatpush2.msra.mxu0 0.0
    %1713 = vmatprep.subr.mxu0 0.0
    %1714 = vmatpush2.msra.mxu0 0.0
    %1715 = vmatprep.subr.mxu0 0.0
    %1716 = vmatpush2.msra.mxu0 0.0
    %1717 = vmatprep.subr.mxu0 0.0
    %1718 = vmatpush2.msra.mxu0 0.0
    %1719 = vmatprep.subr.mxu0 0.0
    %1720 = vmatpush2.msra.mxu0 0.0
    %1721 = vmatprep.subr.mxu0 0.0
    %1722 = vmatpush2.msra.mxu0 0.0
    %1723 = vmatprep.subr.mxu0 0.0
    %1724 = vmatpush2.msra.mxu0 0.0
    %1725 = vmatprep.subr.mxu0 0.0
    %1726 = vmatpush2.msra.mxu0 0.0
    %1727 = vmatprep.subr.mxu0 0.0
    %1728 = vmatpush2.msra.mxu0 0.0
    %1729 = vmatprep.subr.mxu0 0.0
    %1730 = vmatpush2.msra.mxu0 0.0
    %1731 = vmatprep.subr.mxu0 0.0
    %1732 = vmatpush2.msra.mxu0 0.0
    %1733 = vmatprep.subr.mxu0 0.0
    %1734 = vmatpush2.msra.mxu0 0.0
    %1735 = vmatprep.subr.mxu0 0.0
    %1736 = vmatpush2.msra.mxu0 0.0
    %1737 = vmatprep.subr.mxu0 0.0
    %1738 = vmatpush2.msra.mxu0 0.0
    %1739 = vmatprep.mubr.f32.mxu0 0.0
    %1740 = vmatmul.mubr.f32.gmra.mxu0 %v1673
    %v1741 = vpop.f32.mrf.mxu0
    %v1742 = vadd.f32 0.0, %v1741
    %v1743 = vpop.f32.mrf.mxu0
    %1744 = vdwg.mxu0
    %v1745 = vadd.f32 %v1377, %v1742
    %v1746 = vtanh.pop %v1745
    %v1747 = vmul.f32 %v1746, %v231
    %v1748 = vsel %vm152, %v1747, 0.0
    %1749 = vadd.xlane.f32.xlu0 %v1748
    %v1750 = vpop.xlane.xlu0 %1749
    %v1751 = vadd.f32 %v1750, %v38
    %v1752 = vxor.u32 %v1751, 2147483648
    %v1753 = vmul.f32 %v1752, 1.442695
    %v1754 = vpow.pop %v1753
    %v1755 = vadd.f32 %v1754, 1.0
    %v1756 = vrcp.pop %v1755
    %v1757 = vmul.f32 1.0, %v1756
    %v1758 = vadd.f32 %v1666, %v1757
    %v1759 = vsub.f32 %v1758, 1.0
    %v1760 = vmax.f32 %v1759, 0.0
    %v1761 = vsub.f32 %v1757, %v1760
    %v1762 = vadd.f32 %v1665, %v1746
    %v1763 = vmul.f32 %v1761, %v1746
    %v1764 = vadd.f32 %v1762, %v1763
    %v1765 = vsel %vm1669, 1, 0
    %vm1766 = vcmp.eq.s32.totalorder %v1765, 1
    %v1767 = vsel %vm1766, %v1764, %v1665
    %v1768 = vsel %vm1669, %v1758, %v1666
    %v1769 = vadd.f32 %v1668, 1.0
    %v1770 = vsel %vm1669, %v1769, %v1668
    %vm1771 = vcmp.lt.f32.partialorder %v1768, 0.99
    %v1772 = vsub.f32 0.0, %v1768
    %v1773 = vsel %vm1771, %v1772, %v1671
    %v1775 = vsel %vm152, %v1746, 0
    %1777 = vmatprep.subr.mxu0 0.0
    %1778 = vmatpush1.msra.mxu0 0.0
    %1779 = vmatprep.subr.mxu0 0.0
    %1780 = vmatpush1.msra.mxu0 0.0
    %1781 = vmatprep.subr.mxu0 0.0
    %1782 = vmatpush1.msra.mxu0 0.0
    %1783 = vmatprep.subr.mxu0 0.0
    %1784 = vmatpush1.msra.mxu0 0.0
    %1785 = vmatprep.subr.mxu0 0.0
    %1786 = vmatpush1.msra.mxu0 0.0
    %1787 = vmatprep.subr.mxu0 0.0
    %1788 = vmatpush1.msra.mxu0 0.0
    %1789 = vmatprep.subr.mxu0 0.0
    %1790 = vmatpush1.msra.mxu0 0.0
    %1791 = vmatprep.subr.mxu0 0.0
    %1792 = vmatpush1.msra.mxu0 0.0
    %1793 = vmatprep.subr.mxu0 0.0
    %1794 = vmatpush1.msra.mxu0 0.0
    %1795 = vmatprep.subr.mxu0 0.0
    %1796 = vmatpush1.msra.mxu0 0.0
    %1797 = vmatprep.subr.mxu0 0.0
    %1798 = vmatpush1.msra.mxu0 0.0
    %1799 = vmatprep.subr.mxu0 0.0
    %1800 = vmatpush1.msra.mxu0 0.0
    %1801 = vmatprep.subr.mxu0 0.0
    %1802 = vmatpush1.msra.mxu0 %v32
    %1803 = vmatprep.subr.mxu0 0.0
    %1804 = vmatpush1.msra.mxu0 %v31
    %1805 = vmatprep.subr.mxu0 0.0
    %1806 = vmatpush1.msra.mxu0 %v30
    %1807 = vmatprep.subr.mxu0 0.0
    %1808 = vmatpush1.msra.mxu0 %v29
    %1809 = vmatprep.subr.mxu0 0.0
    %1810 = vmatpush2.msra.mxu0 0.0
    %1811 = vmatprep.subr.mxu0 0.0
    %1812 = vmatpush2.msra.mxu0 0.0
    %1813 = vmatprep.subr.mxu0 0.0
    %1814 = vmatpush2.msra.mxu0 0.0
    %1815 = vmatprep.subr.mxu0 0.0
    %1816 = vmatpush2.msra.mxu0 0.0
    %1817 = vmatprep.subr.mxu0 0.0
    %1818 = vmatpush2.msra.mxu0 0.0
    %1819 = vmatprep.subr.mxu0 0.0
    %1820 = vmatpush2.msra.mxu0 0.0
    %1821 = vmatprep.subr.mxu0 0.0
    %1822 = vmatpush2.msra.mxu0 0.0
    %1823 = vmatprep.subr.mxu0 0.0
    %1824 = vmatpush2.msra.mxu0 0.0
    %1825 = vmatprep.subr.mxu0 0.0
    %1826 = vmatpush2.msra.mxu0 0.0
    %1827 = vmatprep.subr.mxu0 0.0
    %1828 = vmatpush2.msra.mxu0 0.0
    %1829 = vmatprep.subr.mxu0 0.0
    %1830 = vmatpush2.msra.mxu0 0.0
    %1831 = vmatprep.subr.mxu0 0.0
    %1832 = vmatpush2.msra.mxu0 0.0
    %1833 = vmatprep.subr.mxu0 0.0
    %1834 = vmatpush2.msra.mxu0 0.0
    %1835 = vmatprep.subr.mxu0 0.0
    %1836 = vmatpush2.msra.mxu0 0.0
    %1837 = vmatprep.subr.mxu0 0.0
    %1838 = vmatpush2.msra.mxu0 0.0
    %1839 = vmatprep.subr.mxu0 0.0
    %1840 = vmatpush2.msra.mxu0 0.0
    %1841 = vmatprep.mubr.f32.mxu0 0.0
    %1842 = vmatmul.mubr.f32.gmra.mxu0 %v1775
    %v1843 = vpop.f32.mrf.mxu0
    %v1844 = vadd.f32 0.0, %v1843
    %v1845 = vpop.f32.mrf.mxu0
    %1846 = vdwg.mxu0
    %v1847 = vadd.f32 %v1377, %v1844
    %v1848 = vtanh.pop %v1847
    %v1849 = vmul.f32 %v1848, %v231
    %v1850 = vsel %vm152, %v1849, 0.0
    %1851 = vadd.xlane.f32.xlu0 %v1850
    %v1852 = vpop.xlane.xlu0 %1851
    %v1853 = vadd.f32 %v1852, %v38
    %v1854 = vxor.u32 %v1853, 2147483648
    %v1855 = vmul.f32 %v1854, 1.442695
    %v1856 = vpow.pop %v1855
    %v1857 = vadd.f32 %v1856, 1.0
    %v1858 = vrcp.pop %v1857
    %v1859 = vmul.f32 1.0, %v1858
    %v1860 = vadd.f32 %v1768, %v1859
    %v1861 = vsub.f32 %v1860, 1.0
    %v1862 = vmax.f32 %v1861, 0.0
    %v1863 = vsub.f32 %v1859, %v1862
    %v1864 = vadd.f32 %v1767, %v1848
    %v1865 = vmul.f32 %v1863, %v1848
    %v1866 = vadd.f32 %v1864, %v1865
    %v1867 = vsel %vm1771, 1, 0
    %vm1868 = vcmp.eq.s32.totalorder %v1867, 1
    %v1869 = vsel %vm1868, %v1866, %v1767
    %v1870 = vsel %vm1771, %v1860, %v1768
    %v1871 = vadd.f32 %v1770, 1.0
    %v1872 = vsel %vm1771, %v1871, %v1770
    %vm1873 = vcmp.lt.f32.partialorder %v1870, 0.99
    %v1874 = vsub.f32 0.0, %v1870
    %v1875 = vsel %vm1873, %v1874, %v1773
    %v1877 = vsel %vm152, %v1848, 0
    %1879 = vmatprep.subr.mxu0 0.0
    %1880 = vmatpush1.msra.mxu0 0.0
    %1881 = vmatprep.subr.mxu0 0.0
    %1882 = vmatpush1.msra.mxu0 0.0
    %1883 = vmatprep.subr.mxu0 0.0
    %1884 = vmatpush1.msra.mxu0 0.0
    %1885 = vmatprep.subr.mxu0 0.0
    %1886 = vmatpush1.msra.mxu0 0.0
    %1887 = vmatprep.subr.mxu0 0.0
    %1888 = vmatpush1.msra.mxu0 0.0
    %1889 = vmatprep.subr.mxu0 0.0
    %1890 = vmatpush1.msra.mxu0 0.0
    %1891 = vmatprep.subr.mxu0 0.0
    %1892 = vmatpush1.msra.mxu0 0.0
    %1893 = vmatprep.subr.mxu0 0.0
    %1894 = vmatpush1.msra.mxu0 0.0
    %1895 = vmatprep.subr.mxu0 0.0
    %1896 = vmatpush1.msra.mxu0 0.0
    %1897 = vmatprep.subr.mxu0 0.0
    %1898 = vmatpush1.msra.mxu0 0.0
    %1899 = vmatprep.subr.mxu0 0.0
    %1900 = vmatpush1.msra.mxu0 0.0
    %1901 = vmatprep.subr.mxu0 0.0
    %1902 = vmatpush1.msra.mxu0 0.0
    %1903 = vmatprep.subr.mxu0 0.0
    %1904 = vmatpush1.msra.mxu0 %v32
    %1905 = vmatprep.subr.mxu0 0.0
    %1906 = vmatpush1.msra.mxu0 %v31
    %1907 = vmatprep.subr.mxu0 0.0
    %1908 = vmatpush1.msra.mxu0 %v30
    %1909 = vmatprep.subr.mxu0 0.0
    %1910 = vmatpush1.msra.mxu0 %v29
    %1911 = vmatprep.subr.mxu0 0.0
    %1912 = vmatpush2.msra.mxu0 0.0
    %1913 = vmatprep.subr.mxu0 0.0
    %1914 = vmatpush2.msra.mxu0 0.0
    %1915 = vmatprep.subr.mxu0 0.0
    %1916 = vmatpush2.msra.mxu0 0.0
    %1917 = vmatprep.subr.mxu0 0.0
    %1918 = vmatpush2.msra.mxu0 0.0
    %1919 = vmatprep.subr.mxu0 0.0
    %1920 = vmatpush2.msra.mxu0 0.0
    %1921 = vmatprep.subr.mxu0 0.0
    %1922 = vmatpush2.msra.mxu0 0.0
    %1923 = vmatprep.subr.mxu0 0.0
    %1924 = vmatpush2.msra.mxu0 0.0
    %1925 = vmatprep.subr.mxu0 0.0
    %1926 = vmatpush2.msra.mxu0 0.0
    %1927 = vmatprep.subr.mxu0 0.0
    %1928 = vmatpush2.msra.mxu0 0.0
    %1929 = vmatprep.subr.mxu0 0.0
    %1930 = vmatpush2.msra.mxu0 0.0
    %1931 = vmatprep.subr.mxu0 0.0
    %1932 = vmatpush2.msra.mxu0 0.0
    %1933 = vmatprep.subr.mxu0 0.0
    %1934 = vmatpush2.msra.mxu0 0.0
    %1935 = vmatprep.subr.mxu0 0.0
    %1936 = vmatpush2.msra.mxu0 0.0
    %1937 = vmatprep.subr.mxu0 0.0
    %1938 = vmatpush2.msra.mxu0 0.0
    %1939 = vmatprep.subr.mxu0 0.0
    %1940 = vmatpush2.msra.mxu0 0.0
    %1941 = vmatprep.subr.mxu0 0.0
    %1942 = vmatpush2.msra.mxu0 0.0
    %1943 = vmatprep.mubr.f32.mxu0 0.0
    %1944 = vmatmul.mubr.f32.gmra.mxu0 %v1877
    %v1945 = vpop.f32.mrf.mxu0
    %v1946 = vadd.f32 0.0, %v1945
    %v1947 = vpop.f32.mrf.mxu0
    %1948 = vdwg.mxu0
    %v1949 = vadd.f32 %v1377, %v1946
    %v1950 = vtanh.pop %v1949
    %v1951 = vmul.f32 %v1950, %v231
    %v1952 = vsel %vm152, %v1951, 0.0
    %1953 = vadd.xlane.f32.xlu0 %v1952
    %v1954 = vpop.xlane.xlu0 %1953
    %v1955 = vadd.f32 %v1954, %v38
    %v1956 = vxor.u32 %v1955, 2147483648
    %v1957 = vmul.f32 %v1956, 1.442695
    %v1958 = vpow.pop %v1957
    %v1959 = vadd.f32 %v1958, 1.0
    %v1960 = vrcp.pop %v1959
    %v1961 = vmul.f32 1.0, %v1960
    %v1962 = vadd.f32 %v1870, %v1961
    %v1963 = vsub.f32 %v1962, 1.0
    %v1964 = vmax.f32 %v1963, 0.0
    %v1965 = vsub.f32 %v1961, %v1964
    %v1966 = vadd.f32 %v1869, %v1950
    %v1967 = vmul.f32 %v1965, %v1950
    %v1968 = vadd.f32 %v1966, %v1967
    %v1969 = vsel %vm1873, 1, 0
    %vm1970 = vcmp.eq.s32.totalorder %v1969, 1
    %v1971 = vsel %vm1970, %v1968, %v1869
    %v1972 = vsel %vm1873, %v1962, %v1870
    %v1973 = vadd.f32 %v1872, 1.0
    %v1974 = vsel %vm1873, %v1973, %v1872
    %vm1975 = vcmp.lt.f32.partialorder %v1972, 0.99
    %v1976 = vsub.f32 0.0, %v1972
    %v1977 = vsel %vm1975, %v1976, %v1875
    %v1979 = vsel %vm152, %v1950, 0
    %1981 = vmatprep.subr.mxu0 0.0
    %1982 = vmatpush1.msra.mxu0 0.0
    %1983 = vmatprep.subr.mxu0 0.0
    %1984 = vmatpush1.msra.mxu0 0.0
    %1985 = vmatprep.subr.mxu0 0.0
    %1986 = vmatpush1.msra.mxu0 0.0
    %1987 = vmatprep.subr.mxu0 0.0
    %1988 = vmatpush1.msra.mxu0 0.0
    %1989 = vmatprep.subr.mxu0 0.0
    %1990 = vmatpush1.msra.mxu0 0.0
    %1991 = vmatprep.subr.mxu0 0.0
    %1992 = vmatpush1.msra.mxu0 0.0
    %1993 = vmatprep.subr.mxu0 0.0
    %1994 = vmatpush1.msra.mxu0 0.0
    %1995 = vmatprep.subr.mxu0 0.0
    %1996 = vmatpush1.msra.mxu0 0.0
    %1997 = vmatprep.subr.mxu0 0.0
    %1998 = vmatpush1.msra.mxu0 0.0
    %1999 = vmatprep.subr.mxu0 0.0
    %2000 = vmatpush1.msra.mxu0 0.0
    %2001 = vmatprep.subr.mxu0 0.0
    %2002 = vmatpush1.msra.mxu0 0.0
    %2003 = vmatprep.subr.mxu0 0.0
    %2004 = vmatpush1.msra.mxu0 0.0
    %2005 = vmatprep.subr.mxu0 0.0
    %2006 = vmatpush1.msra.mxu0 %v32
    %2007 = vmatprep.subr.mxu0 0.0
    %2008 = vmatpush1.msra.mxu0 %v31
    %2009 = vmatprep.subr.mxu0 0.0
    %2010 = vmatpush1.msra.mxu0 %v30
    %2011 = vmatprep.subr.mxu0 0.0
    %2012 = vmatpush1.msra.mxu0 %v29
    %2013 = vmatprep.subr.mxu0 0.0
    %2014 = vmatpush2.msra.mxu0 0.0
    %2015 = vmatprep.subr.mxu0 0.0
    %2016 = vmatpush2.msra.mxu0 0.0
    %2017 = vmatprep.subr.mxu0 0.0
    %2018 = vmatpush2.msra.mxu0 0.0
    %2019 = vmatprep.subr.mxu0 0.0
    %2020 = vmatpush2.msra.mxu0 0.0
    %2021 = vmatprep.subr.mxu0 0.0
    %2022 = vmatpush2.msra.mxu0 0.0
    %2023 = vmatprep.subr.mxu0 0.0
    %2024 = vmatpush2.msra.mxu0 0.0
    %2025 = vmatprep.subr.mxu0 0.0
    %2026 = vmatpush2.msra.mxu0 0.0
    %2027 = vmatprep.subr.mxu0 0.0
    %2028 = vmatpush2.msra.mxu0 0.0
    %2029 = vmatprep.subr.mxu0 0.0
    %2030 = vmatpush2.msra.mxu0 0.0
    %2031 = vmatprep.subr.mxu0 0.0
    %2032 = vmatpush2.msra.mxu0 0.0
    %2033 = vmatprep.subr.mxu0 0.0
    %2034 = vmatpush2.msra.mxu0 0.0
    %2035 = vmatprep.subr.mxu0 0.0
    %2036 = vmatpush2.msra.mxu0 0.0
    %2037 = vmatprep.subr.mxu0 0.0
    %2038 = vmatpush2.msra.mxu0 0.0
    %2039 = vmatprep.subr.mxu0 0.0
    %2040 = vmatpush2.msra.mxu0 0.0
    %2041 = vmatprep.subr.mxu0 0.0
    %2042 = vmatpush2.msra.mxu0 0.0
    %2043 = vmatprep.subr.mxu0 0.0
    %2044 = vmatpush2.msra.mxu0 0.0
    %2045 = vmatprep.mubr.f32.mxu0 0.0
    %2046 = vmatmul.mubr.f32.gmra.mxu0 %v1979
    %v2047 = vpop.f32.mrf.mxu0
    %v2048 = vadd.f32 0.0, %v2047
    %v2049 = vpop.f32.mrf.mxu0
    %2050 = vdwg.mxu0
    %v2051 = vadd.f32 %v1377, %v2048
    %v2052 = vtanh.pop %v2051
    %v2053 = vmul.f32 %v2052, %v231
    %v2054 = vsel %vm152, %v2053, 0.0
    %2055 = vadd.xlane.f32.xlu0 %v2054
    %v2056 = vpop.xlane.xlu0 %2055
    %v2057 = vadd.f32 %v2056, %v38
    %v2058 = vxor.u32 %v2057, 2147483648
    %v2059 = vmul.f32 %v2058, 1.442695
    %v2060 = vpow.pop %v2059
    %v2061 = vadd.f32 %v2060, 1.0
    %v2062 = vrcp.pop %v2061
    %v2063 = vmul.f32 1.0, %v2062
    %v2064 = vadd.f32 %v1972, %v2063
    %v2065 = vsub.f32 %v2064, 1.0
    %v2066 = vmax.f32 %v2065, 0.0
    %v2067 = vsub.f32 %v2063, %v2066
    %v2068 = vadd.f32 %v1971, %v2052
    %v2069 = vmul.f32 %v2067, %v2052
    %v2070 = vadd.f32 %v2068, %v2069
    %v2071 = vsel %vm1975, 1, 0
    %vm2072 = vcmp.eq.s32.totalorder %v2071, 1
    %v2073 = vsel %vm2072, %v2070, %v1971
    %v2074 = vsel %vm1975, %v2064, %v1972
    %v2075 = vadd.f32 %v1974, 1.0
    %v2076 = vsel %vm1975, %v2075, %v1974
    %vm2077 = vcmp.lt.f32.partialorder %v2074, 0.99
    %v2078 = vsub.f32 0.0, %v2074
    %v2079 = vsel %vm2077, %v2078, %v1977
    %v2081 = vsel %vm152, %v2052, 0
    %2083 = vmatprep.subr.mxu0 0.0
    %2084 = vmatpush1.msra.mxu0 0.0
    %2085 = vmatprep.subr.mxu0 0.0
    %2086 = vmatpush1.msra.mxu0 0.0
    %2087 = vmatprep.subr.mxu0 0.0
    %2088 = vmatpush1.msra.mxu0 0.0
    %2089 = vmatprep.subr.mxu0 0.0
    %2090 = vmatpush1.msra.mxu0 0.0
    %2091 = vmatprep.subr.mxu0 0.0
    %2092 = vmatpush1.msra.mxu0 0.0
    %2093 = vmatprep.subr.mxu0 0.0
    %2094 = vmatpush1.msra.mxu0 0.0
    %2095 = vmatprep.subr.mxu0 0.0
    %2096 = vmatpush1.msra.mxu0 0.0
    %2097 = vmatprep.subr.mxu0 0.0
    %2098 = vmatpush1.msra.mxu0 0.0
    %2099 = vmatprep.subr.mxu0 0.0
    %2100 = vmatpush1.msra.mxu0 0.0
    %2101 = vmatprep.subr.mxu0 0.0
    %2102 = vmatpush1.msra.mxu0 0.0
    %2103 = vmatprep.subr.mxu0 0.0
    %2104 = vmatpush1.msra.mxu0 0.0
    %2105 = vmatprep.subr.mxu0 0.0
    %2106 = vmatpush1.msra.mxu0 0.0
    %2107 = vmatprep.subr.mxu0 0.0
    %2108 = vmatpush1.msra.mxu0 %v32
    %2109 = vmatprep.subr.mxu0 0.0
    %2110 = vmatpush1.msra.mxu0 %v31
    %2111 = vmatprep.subr.mxu0 0.0
    %2112 = vmatpush1.msra.mxu0 %v30
    %2113 = vmatprep.subr.mxu0 0.0
    %2114 = vmatpush1.msra.mxu0 %v29
    %2115 = vmatprep.subr.mxu0 0.0
    %2116 = vmatpush2.msra.mxu0 0.0
    %2117 = vmatprep.subr.mxu0 0.0
    %2118 = vmatpush2.msra.mxu0 0.0
    %2119 = vmatprep.subr.mxu0 0.0
    %2120 = vmatpush2.msra.mxu0 0.0
    %2121 = vmatprep.subr.mxu0 0.0
    %2122 = vmatpush2.msra.mxu0 0.0
    %2123 = vmatprep.subr.mxu0 0.0
    %2124 = vmatpush2.msra.mxu0 0.0
    %2125 = vmatprep.subr.mxu0 0.0
    %2126 = vmatpush2.msra.mxu0 0.0
    %2127 = vmatprep.subr.mxu0 0.0
    %2128 = vmatpush2.msra.mxu0 0.0
    %2129 = vmatprep.subr.mxu0 0.0
    %2130 = vmatpush2.msra.mxu0 0.0
    %2131 = vmatprep.subr.mxu0 0.0
    %2132 = vmatpush2.msra.mxu0 0.0
    %2133 = vmatprep.subr.mxu0 0.0
    %2134 = vmatpush2.msra.mxu0 0.0
    %2135 = vmatprep.subr.mxu0 0.0
    %2136 = vmatpush2.msra.mxu0 0.0
    %2137 = vmatprep.subr.mxu0 0.0
    %2138 = vmatpush2.msra.mxu0 0.0
    %2139 = vmatprep.subr.mxu0 0.0
    %2140 = vmatpush2.msra.mxu0 0.0
    %2141 = vmatprep.subr.mxu0 0.0
    %2142 = vmatpush2.msra.mxu0 0.0
    %2143 = vmatprep.subr.mxu0 0.0
    %2144 = vmatpush2.msra.mxu0 0.0
    %2145 = vmatprep.subr.mxu0 0.0
    %2146 = vmatpush2.msra.mxu0 0.0
    %2147 = vmatprep.mubr.f32.mxu0 0.0
    %2148 = vmatmul.mubr.f32.gmra.mxu0 %v2081
    %v2149 = vpop.f32.mrf.mxu0
    %v2150 = vadd.f32 0.0, %v2149
    %v2151 = vpop.f32.mrf.mxu0
    %2152 = vdwg.mxu0
    %v2153 = vadd.f32 %v1377, %v2150
    %v2154 = vtanh.pop %v2153
    %v2155 = vmul.f32 %v2154, %v231
    %v2156 = vsel %vm152, %v2155, 0.0
    %2157 = vadd.xlane.f32.xlu0 %v2156
    %v2158 = vpop.xlane.xlu0 %2157
    %v2159 = vadd.f32 %v2158, %v38
    %v2160 = vxor.u32 %v2159, 2147483648
    %v2161 = vmul.f32 %v2160, 1.442695
    %v2162 = vpow.pop %v2161
    %v2163 = vadd.f32 %v2162, 1.0
    %v2164 = vrcp.pop %v2163
    %v2165 = vmul.f32 1.0, %v2164
    %v2166 = vadd.f32 %v2074, %v2165
    %v2167 = vsub.f32 %v2166, 1.0
    %v2168 = vmax.f32 %v2167, 0.0
    %v2169 = vsub.f32 %v2165, %v2168
    %v2170 = vadd.f32 %v2073, %v2154
    %v2171 = vmul.f32 %v2169, %v2154
    %v2172 = vadd.f32 %v2170, %v2171
    %v2173 = vsel %vm2077, 1, 0
    %vm2174 = vcmp.eq.s32.totalorder %v2173, 1
    %v2175 = vsel %vm2174, %v2172, %v2073
    %v2176 = vsel %vm2077, %v2166, %v2074
    %v2177 = vadd.f32 %v2076, 1.0
    %v2178 = vsel %vm2077, %v2177, %v2076
    %vm2179 = vcmp.lt.f32.partialorder %v2176, 0.99
    %v2180 = vsub.f32 0.0, %v2176
    %v2181 = vsel %vm2179, %v2180, %v2079
    %v2183 = vsel %vm152, %v2154, 0
    %2185 = vmatprep.subr.mxu0 0.0
    %2186 = vmatpush1.msra.mxu0 0.0
    %2187 = vmatprep.subr.mxu0 0.0
    %2188 = vmatpush1.msra.mxu0 0.0
    %2189 = vmatprep.subr.mxu0 0.0
    %2190 = vmatpush1.msra.mxu0 0.0
    %2191 = vmatprep.subr.mxu0 0.0
    %2192 = vmatpush1.msra.mxu0 0.0
    %2193 = vmatprep.subr.mxu0 0.0
    %2194 = vmatpush1.msra.mxu0 0.0
    %2195 = vmatprep.subr.mxu0 0.0
    %2196 = vmatpush1.msra.mxu0 0.0
    %2197 = vmatprep.subr.mxu0 0.0
    %2198 = vmatpush1.msra.mxu0 0.0
    %2199 = vmatprep.subr.mxu0 0.0
    %2200 = vmatpush1.msra.mxu0 0.0
    %2201 = vmatprep.subr.mxu0 0.0
    %2202 = vmatpush1.msra.mxu0 0.0
    %2203 = vmatprep.subr.mxu0 0.0
    %2204 = vmatpush1.msra.mxu0 0.0
    %2205 = vmatprep.subr.mxu0 0.0
    %2206 = vmatpush1.msra.mxu0 0.0
    %2207 = vmatprep.subr.mxu0 0.0
    %2208 = vmatpush1.msra.mxu0 0.0
    %2209 = vmatprep.subr.mxu0 0.0
    %2210 = vmatpush1.msra.mxu0 %v32
    %2211 = vmatprep.subr.mxu0 0.0
    %2212 = vmatpush1.msra.mxu0 %v31
    %2213 = vmatprep.subr.mxu0 0.0
    %2214 = vmatpush1.msra.mxu0 %v30
    %2215 = vmatprep.subr.mxu0 0.0
    %2216 = vmatpush1.msra.mxu0 %v29
    %2217 = vmatprep.subr.mxu0 0.0
    %2218 = vmatpush2.msra.mxu0 0.0
    %2219 = vmatprep.subr.mxu0 0.0
    %2220 = vmatpush2.msra.mxu0 0.0
    %2221 = vmatprep.subr.mxu0 0.0
    %2222 = vmatpush2.msra.mxu0 0.0
    %2223 = vmatprep.subr.mxu0 0.0
    %2224 = vmatpush2.msra.mxu0 0.0
    %2225 = vmatprep.subr.mxu0 0.0
    %2226 = vmatpush2.msra.mxu0 0.0
    %2227 = vmatprep.subr.mxu0 0.0
    %2228 = vmatpush2.msra.mxu0 0.0
    %2229 = vmatprep.subr.mxu0 0.0
    %2230 = vmatpush2.msra.mxu0 0.0
    %2231 = vmatprep.subr.mxu0 0.0
    %2232 = vmatpush2.msra.mxu0 0.0
    %2233 = vmatprep.subr.mxu0 0.0
    %2234 = vmatpush2.msra.mxu0 0.0
    %2235 = vmatprep.subr.mxu0 0.0
    %2236 = vmatpush2.msra.mxu0 0.0
    %2237 = vmatprep.subr.mxu0 0.0
    %2238 = vmatpush2.msra.mxu0 0.0
    %2239 = vmatprep.subr.mxu0 0.0
    %2240 = vmatpush2.msra.mxu0 0.0
    %2241 = vmatprep.subr.mxu0 0.0
    %2242 = vmatpush2.msra.mxu0 0.0
    %2243 = vmatprep.subr.mxu0 0.0
    %2244 = vmatpush2.msra.mxu0 0.0
    %2245 = vmatprep.subr.mxu0 0.0
    %2246 = vmatpush2.msra.mxu0 0.0
    %2247 = vmatprep.subr.mxu0 0.0
    %2248 = vmatpush2.msra.mxu0 0.0
    %2249 = vmatprep.mubr.f32.mxu0 0.0
    %2250 = vmatmul.mubr.f32.gmra.mxu0 %v2183
    %v2251 = vpop.f32.mrf.mxu0
    %v2252 = vadd.f32 0.0, %v2251
    %v2253 = vpop.f32.mrf.mxu0
    %2254 = vdwg.mxu0
    %v2255 = vadd.f32 %v1377, %v2252
    %v2256 = vtanh.pop %v2255
    %v2257 = vmul.f32 %v2256, %v231
    %v2258 = vsel %vm152, %v2257, 0.0
    %2259 = vadd.xlane.f32.xlu0 %v2258
    %v2260 = vpop.xlane.xlu0 %2259
    %v2261 = vadd.f32 %v2260, %v38
    %v2262 = vxor.u32 %v2261, 2147483648
    %v2263 = vmul.f32 %v2262, 1.442695
    %v2264 = vpow.pop %v2263
    %v2265 = vadd.f32 %v2264, 1.0
    %v2266 = vrcp.pop %v2265
    %v2267 = vmul.f32 1.0, %v2266
    %v2268 = vadd.f32 %v2176, %v2267
    %v2269 = vsub.f32 %v2268, 1.0
    %v2270 = vmax.f32 %v2269, 0.0
    %v2271 = vsub.f32 %v2267, %v2270
    %v2272 = vadd.f32 %v2175, %v2256
    %v2273 = vmul.f32 %v2271, %v2256
    %v2274 = vadd.f32 %v2272, %v2273
    %v2275 = vsel %vm2179, 1, 0
    %vm2276 = vcmp.eq.s32.totalorder %v2275, 1
    %v2277 = vsel %vm2276, %v2274, %v2175
    %v2278 = vsel %vm2179, %v2268, %v2176
    %v2279 = vadd.f32 %v2178, 1.0
    %v2280 = vsel %vm2179, %v2279, %v2178
    %vm2281 = vcmp.lt.f32.partialorder %v2278, 0.99
    %v2282 = vsub.f32 0.0, %v2278
    %v2283 = vsel %vm2281, %v2282, %v2181
    %v2285 = vsel %vm152, %v2256, 0
    %2287 = vmatprep.subr.mxu0 0.0
    %2288 = vmatpush1.msra.mxu0 0.0
    %2289 = vmatprep.subr.mxu0 0.0
    %2290 = vmatpush1.msra.mxu0 0.0
    %2291 = vmatprep.subr.mxu0 0.0
    %2292 = vmatpush1.msra.mxu0 0.0
    %2293 = vmatprep.subr.mxu0 0.0
    %2294 = vmatpush1.msra.mxu0 0.0
    %2295 = vmatprep.subr.mxu0 0.0
    %2296 = vmatpush1.msra.mxu0 0.0
    %2297 = vmatprep.subr.mxu0 0.0
    %2298 = vmatpush1.msra.mxu0 0.0
    %2299 = vmatprep.subr.mxu0 0.0
    %2300 = vmatpush1.msra.mxu0 0.0
    %2301 = vmatprep.subr.mxu0 0.0
    %2302 = vmatpush1.msra.mxu0 0.0
    %2303 = vmatprep.subr.mxu0 0.0
    %2304 = vmatpush1.msra.mxu0 0.0
    %2305 = vmatprep.subr.mxu0 0.0
    %2306 = vmatpush1.msra.mxu0 0.0
    %2307 = vmatprep.subr.mxu0 0.0
    %2308 = vmatpush1.msra.mxu0 0.0
    %2309 = vmatprep.subr.mxu0 0.0
    %2310 = vmatpush1.msra.mxu0 0.0
    %2311 = vmatprep.subr.mxu0 0.0
    %2312 = vmatpush1.msra.mxu0 %v32
    %2313 = vmatprep.subr.mxu0 0.0
    %2314 = vmatpush1.msra.mxu0 %v31
    %2315 = vmatprep.subr.mxu0 0.0
    %2316 = vmatpush1.msra.mxu0 %v30
    %2317 = vmatprep.subr.mxu0 0.0
    %2318 = vmatpush1.msra.mxu0 %v29
    %2319 = vmatprep.subr.mxu0 0.0
    %2320 = vmatpush2.msra.mxu0 0.0
    %2321 = vmatprep.subr.mxu0 0.0
    %2322 = vmatpush2.msra.mxu0 0.0
    %2323 = vmatprep.subr.mxu0 0.0
    %2324 = vmatpush2.msra.mxu0 0.0
    %2325 = vmatprep.subr.mxu0 0.0
    %2326 = vmatpush2.msra.mxu0 0.0
    %2327 = vmatprep.subr.mxu0 0.0
    %2328 = vmatpush2.msra.mxu0 0.0
    %2329 = vmatprep.subr.mxu0 0.0
    %2330 = vmatpush2.msra.mxu0 0.0
    %2331 = vmatprep.subr.mxu0 0.0
    %2332 = vmatpush2.msra.mxu0 0.0
    %2333 = vmatprep.subr.mxu0 0.0
    %2334 = vmatpush2.msra.mxu0 0.0
    %2335 = vmatprep.subr.mxu0 0.0
    %2336 = vmatpush2.msra.mxu0 0.0
    %2337 = vmatprep.subr.mxu0 0.0
    %2338 = vmatpush2.msra.mxu0 0.0
    %2339 = vmatprep.subr.mxu0 0.0
    %2340 = vmatpush2.msra.mxu0 0.0
    %2341 = vmatprep.subr.mxu0 0.0
    %2342 = vmatpush2.msra.mxu0 0.0
    %2343 = vmatprep.subr.mxu0 0.0
    %2344 = vmatpush2.msra.mxu0 0.0
    %2345 = vmatprep.subr.mxu0 0.0
    %2346 = vmatpush2.msra.mxu0 0.0
    %2347 = vmatprep.subr.mxu0 0.0
    %2348 = vmatpush2.msra.mxu0 0.0
    %2349 = vmatprep.subr.mxu0 0.0
    %2350 = vmatpush2.msra.mxu0 0.0
    %2351 = vmatprep.mubr.f32.mxu0 0.0
    %2352 = vmatmul.mubr.f32.gmra.mxu0 %v2285
    %v2353 = vpop.f32.mrf.mxu0
    %v2354 = vadd.f32 0.0, %v2353
    %v2355 = vpop.f32.mrf.mxu0
    %2356 = vdwg.mxu0
    %v2357 = vadd.f32 %v1377, %v2354
    %v2358 = vtanh.pop %v2357
    %v2359 = vmul.f32 %v2358, %v231
    %v2360 = vsel %vm152, %v2359, 0.0
    %2361 = vadd.xlane.f32.xlu0 %v2360
    %v2362 = vpop.xlane.xlu0 %2361
    %v2363 = vadd.f32 %v2362, %v38
    %v2364 = vxor.u32 %v2363, 2147483648
    %v2365 = vmul.f32 %v2364, 1.442695
    %v2366 = vpow.pop %v2365
    %v2367 = vadd.f32 %v2366, 1.0
    %v2368 = vrcp.pop %v2367
    %v2369 = vmul.f32 1.0, %v2368
    %v2370 = vadd.f32 %v2278, %v2369
    %v2371 = vsub.f32 %v2370, 1.0
    %v2372 = vmax.f32 %v2371, 0.0
    %v2373 = vsub.f32 %v2369, %v2372
    %v2374 = vadd.f32 %v2277, %v2358
    %v2375 = vmul.f32 %v2373, %v2358
    %v2376 = vadd.f32 %v2374, %v2375
    %v2377 = vsel %vm2281, 1, 0
    %vm2378 = vcmp.eq.s32.totalorder %v2377, 1
    %v2379 = vsel %vm2378, %v2376, %v2277
    %v2380 = vsel %vm2281, %v2370, %v2278
    %v2381 = vadd.f32 %v2280, 1.0
    %v2382 = vsel %vm2281, %v2381, %v2280
    %vm2383 = vcmp.lt.f32.partialorder %v2380, 0.99
    %v2384 = vsub.f32 0.0, %v2380
    %v2385 = vsel %vm2383, %v2384, %v2283
    %v2387 = vsel %vm152, %v2358, 0
    %2389 = vmatprep.subr.mxu0 0.0
    %2390 = vmatpush1.msra.mxu0 0.0
    %2391 = vmatprep.subr.mxu0 0.0
    %2392 = vmatpush1.msra.mxu0 0.0
    %2393 = vmatprep.subr.mxu0 0.0
    %2394 = vmatpush1.msra.mxu0 0.0
    %2395 = vmatprep.subr.mxu0 0.0
    %2396 = vmatpush1.msra.mxu0 0.0
    %2397 = vmatprep.subr.mxu0 0.0
    %2398 = vmatpush1.msra.mxu0 0.0
    %2399 = vmatprep.subr.mxu0 0.0
    %2400 = vmatpush1.msra.mxu0 0.0
    %2401 = vmatprep.subr.mxu0 0.0
    %2402 = vmatpush1.msra.mxu0 0.0
    %2403 = vmatprep.subr.mxu0 0.0
    %2404 = vmatpush1.msra.mxu0 0.0
    %2405 = vmatprep.subr.mxu0 0.0
    %2406 = vmatpush1.msra.mxu0 0.0
    %2407 = vmatprep.subr.mxu0 0.0
    %2408 = vmatpush1.msra.mxu0 0.0
    %2409 = vmatprep.subr.mxu0 0.0
    %2410 = vmatpush1.msra.mxu0 0.0
    %2411 = vmatprep.subr.mxu0 0.0
    %2412 = vmatpush1.msra.mxu0 0.0
    %2413 = vmatprep.subr.mxu0 0.0
    %2414 = vmatpush1.msra.mxu0 %v32
    %2415 = vmatprep.subr.mxu0 0.0
    %2416 = vmatpush1.msra.mxu0 %v31
    %2417 = vmatprep.subr.mxu0 0.0
    %2418 = vmatpush1.msra.mxu0 %v30
    %2419 = vmatprep.subr.mxu0 0.0
    %2420 = vmatpush1.msra.mxu0 %v29
    %2421 = vmatprep.subr.mxu0 0.0
    %2422 = vmatpush2.msra.mxu0 0.0
    %2423 = vmatprep.subr.mxu0 0.0
    %2424 = vmatpush2.msra.mxu0 0.0
    %2425 = vmatprep.subr.mxu0 0.0
    %2426 = vmatpush2.msra.mxu0 0.0
    %2427 = vmatprep.subr.mxu0 0.0
    %2428 = vmatpush2.msra.mxu0 0.0
    %2429 = vmatprep.subr.mxu0 0.0
    %2430 = vmatpush2.msra.mxu0 0.0
    %2431 = vmatprep.subr.mxu0 0.0
    %2432 = vmatpush2.msra.mxu0 0.0
    %2433 = vmatprep.subr.mxu0 0.0
    %2434 = vmatpush2.msra.mxu0 0.0
    %2435 = vmatprep.subr.mxu0 0.0
    %2436 = vmatpush2.msra.mxu0 0.0
    %2437 = vmatprep.subr.mxu0 0.0
    %2438 = vmatpush2.msra.mxu0 0.0
    %2439 = vmatprep.subr.mxu0 0.0
    %2440 = vmatpush2.msra.mxu0 0.0
    %2441 = vmatprep.subr.mxu0 0.0
    %2442 = vmatpush2.msra.mxu0 0.0
    %2443 = vmatprep.subr.mxu0 0.0
    %2444 = vmatpush2.msra.mxu0 0.0
    %2445 = vmatprep.subr.mxu0 0.0
    %2446 = vmatpush2.msra.mxu0 0.0
    %2447 = vmatprep.subr.mxu0 0.0
    %2448 = vmatpush2.msra.mxu0 0.0
    %2449 = vmatprep.subr.mxu0 0.0
    %2450 = vmatpush2.msra.mxu0 0.0
    %2451 = vmatprep.subr.mxu0 0.0
    %2452 = vmatpush2.msra.mxu0 0.0
    %2453 = vmatprep.mubr.f32.mxu0 0.0
    %2454 = vmatmul.mubr.f32.gmra.mxu0 %v2387
    %v2455 = vpop.f32.mrf.mxu0
    %v2456 = vadd.f32 0.0, %v2455
    %v2457 = vpop.f32.mrf.mxu0
    %2458 = vdwg.mxu0
    %v2459 = vadd.f32 %v1377, %v2456
    %v2460 = vtanh.pop %v2459
    %v2461 = vmul.f32 %v2460, %v231
    %v2462 = vsel %vm152, %v2461, 0.0
    %2463 = vadd.xlane.f32.xlu0 %v2462
    %v2464 = vpop.xlane.xlu0 %2463
    %v2465 = vadd.f32 %v2464, %v38
    %v2466 = vxor.u32 %v2465, 2147483648
    %v2467 = vmul.f32 %v2466, 1.442695
    %v2468 = vpow.pop %v2467
    %v2469 = vadd.f32 %v2468, 1.0
    %v2470 = vrcp.pop %v2469
    %v2471 = vmul.f32 1.0, %v2470
    %v2472 = vadd.f32 %v2380, %v2471
    %v2473 = vsub.f32 %v2472, 1.0
    %v2474 = vmax.f32 %v2473, 0.0
    %v2475 = vsub.f32 %v2471, %v2474
    %v2476 = vadd.f32 %v2379, %v2460
    %v2477 = vmul.f32 %v2475, %v2460
    %v2478 = vadd.f32 %v2476, %v2477
    %v2479 = vsel %vm2383, 1, 0
    %vm2480 = vcmp.eq.s32.totalorder %v2479, 1
    %v2481 = vsel %vm2480, %v2478, %v2379
    %v2482 = vsel %vm2383, %v2472, %v2380
    %v2483 = vadd.f32 %v2382, 1.0
    %v2484 = vsel %vm2383, %v2483, %v2382
    %vm2485 = vcmp.lt.f32.partialorder %v2482, 0.99
    %v2486 = vsub.f32 0.0, %v2482
    %v2487 = vsel %vm2485, %v2486, %v2385
    %v2489 = vsel %vm152, %v2460, 0
    %2491 = vmatprep.subr.mxu0 0.0
    %2492 = vmatpush1.msra.mxu0 0.0
    %2493 = vmatprep.subr.mxu0 0.0
    %2494 = vmatpush1.msra.mxu0 0.0
    %2495 = vmatprep.subr.mxu0 0.0
    %2496 = vmatpush1.msra.mxu0 0.0
    %2497 = vmatprep.subr.mxu0 0.0
    %2498 = vmatpush1.msra.mxu0 0.0
    %2499 = vmatprep.subr.mxu0 0.0
    %2500 = vmatpush1.msra.mxu0 0.0
    %2501 = vmatprep.subr.mxu0 0.0
    %2502 = vmatpush1.msra.mxu0 0.0
    %2503 = vmatprep.subr.mxu0 0.0
    %2504 = vmatpush1.msra.mxu0 0.0
    %2505 = vmatprep.subr.mxu0 0.0
    %2506 = vmatpush1.msra.mxu0 0.0
    %2507 = vmatprep.subr.mxu0 0.0
    %2508 = vmatpush1.msra.mxu0 0.0
    %2509 = vmatprep.subr.mxu0 0.0
    %2510 = vmatpush1.msra.mxu0 0.0
    %2511 = vmatprep.subr.mxu0 0.0
    %2512 = vmatpush1.msra.mxu0 0.0
    %2513 = vmatprep.subr.mxu0 0.0
    %2514 = vmatpush1.msra.mxu0 0.0
    %2515 = vmatprep.subr.mxu0 0.0
    %2516 = vmatpush1.msra.mxu0 %v32
    %2517 = vmatprep.subr.mxu0 0.0
    %2518 = vmatpush1.msra.mxu0 %v31
    %2519 = vmatprep.subr.mxu0 0.0
    %2520 = vmatpush1.msra.mxu0 %v30
    %2521 = vmatprep.subr.mxu0 0.0
    %2522 = vmatpush1.msra.mxu0 %v29
    %2523 = vmatprep.subr.mxu0 0.0
    %2524 = vmatpush2.msra.mxu0 0.0
    %2525 = vmatprep.subr.mxu0 0.0
    %2526 = vmatpush2.msra.mxu0 0.0
    %2527 = vmatprep.subr.mxu0 0.0
    %2528 = vmatpush2.msra.mxu0 0.0
    %2529 = vmatprep.subr.mxu0 0.0
    %2530 = vmatpush2.msra.mxu0 0.0
    %2531 = vmatprep.subr.mxu0 0.0
    %2532 = vmatpush2.msra.mxu0 0.0
    %2533 = vmatprep.subr.mxu0 0.0
    %2534 = vmatpush2.msra.mxu0 0.0
    %2535 = vmatprep.subr.mxu0 0.0
    %2536 = vmatpush2.msra.mxu0 0.0
    %2537 = vmatprep.subr.mxu0 0.0
    %2538 = vmatpush2.msra.mxu0 0.0
    %2539 = vmatprep.subr.mxu0 0.0
    %2540 = vmatpush2.msra.mxu0 0.0
    %2541 = vmatprep.subr.mxu0 0.0
    %2542 = vmatpush2.msra.mxu0 0.0
    %2543 = vmatprep.subr.mxu0 0.0
    %2544 = vmatpush2.msra.mxu0 0.0
    %2545 = vmatprep.subr.mxu0 0.0
    %2546 = vmatpush2.msra.mxu0 0.0
    %2547 = vmatprep.subr.mxu0 0.0
    %2548 = vmatpush2.msra.mxu0 0.0
    %2549 = vmatprep.subr.mxu0 0.0
    %2550 = vmatpush2.msra.mxu0 0.0
    %2551 = vmatprep.subr.mxu0 0.0
    %2552 = vmatpush2.msra.mxu0 0.0
    %2553 = vmatprep.subr.mxu0 0.0
    %2554 = vmatpush2.msra.mxu0 0.0
    %2555 = vmatprep.mubr.f32.mxu0 0.0
    %2556 = vmatmul.mubr.f32.gmra.mxu0 %v2489
    %v2557 = vpop.f32.mrf.mxu0
    %v2558 = vadd.f32 0.0, %v2557
    %v2559 = vpop.f32.mrf.mxu0
    %2560 = vdwg.mxu0
    %v2561 = vadd.f32 %v1377, %v2558
    %v2562 = vtanh.pop %v2561
    %v2563 = vmul.f32 %v2562, %v231
    %v2564 = vsel %vm152, %v2563, 0.0
    %2565 = vadd.xlane.f32.xlu0 %v2564
    %v2566 = vpop.xlane.xlu0 %2565
    %v2567 = vadd.f32 %v2566, %v38
    %v2568 = vxor.u32 %v2567, 2147483648
    %v2569 = vmul.f32 %v2568, 1.442695
    %v2570 = vpow.pop %v2569
    %v2571 = vadd.f32 %v2570, 1.0
    %v2572 = vrcp.pop %v2571
    %v2573 = vmul.f32 1.0, %v2572
    %v2574 = vadd.f32 %v2482, %v2573
    %v2575 = vsub.f32 %v2574, 1.0
    %v2576 = vmax.f32 %v2575, 0.0
    %v2577 = vsub.f32 %v2573, %v2576
    %v2578 = vadd.f32 %v2481, %v2562
    %v2579 = vmul.f32 %v2577, %v2562
    %v2580 = vadd.f32 %v2578, %v2579
    %v2581 = vsel %vm2485, 1, 0
    %vm2582 = vcmp.eq.s32.totalorder %v2581, 1
    %v2583 = vsel %vm2582, %v2580, %v2481
    %v2584 = vadd.f32 %v2484, 1.0
    %v2585 = vsel %vm2485, %v2584, %v2484
    %v2586 = vrcp.pop %v2585
    %v2587 = vmul.f32 %v2583, %v2586
    %v2588 = vadd.f32 %v1367, %v2487
    %v2589 = vmul.f32 %v2587, %v1371
    %v2590 = vsel %vm152, %v2589, 0.0
    %2591 = vadd.xlane.f32.xlu0 %v2590
    %v2592 = vpop.xlane.xlu0 %2591
    %v2593 = vadd.f32 %v2592, %v40
    %v2594 = vadd.f32 %v139, %v150
    %v2596 = vsel %vm152, %v2587, 0
    %2598 = vmatprep.subr.mxu0 0.0
    %2599 = vmatpush1.msra.mxu0 0.0
    %2600 = vmatprep.subr.mxu0 0.0
    %2601 = vmatpush1.msra.mxu0 0.0
    %2602 = vmatprep.subr.mxu0 0.0
    %2603 = vmatpush1.msra.mxu0 0.0
    %2604 = vmatprep.subr.mxu0 0.0
    %2605 = vmatpush1.msra.mxu0 0.0
    %2606 = vmatprep.subr.mxu0 0.0
    %2607 = vmatpush1.msra.mxu0 0.0
    %2608 = vmatprep.subr.mxu0 0.0
    %2609 = vmatpush1.msra.mxu0 0.0
    %2610 = vmatprep.subr.mxu0 0.0
    %2611 = vmatpush1.msra.mxu0 0.0
    %2612 = vmatprep.subr.mxu0 0.0
    %2613 = vmatpush1.msra.mxu0 0.0
    %2614 = vmatprep.subr.mxu0 0.0
    %2615 = vmatpush1.msra.mxu0 0.0
    %2616 = vmatprep.subr.mxu0 0.0
    %2617 = vmatpush1.msra.mxu0 0.0
    %2618 = vmatprep.subr.mxu0 0.0
    %2619 = vmatpush1.msra.mxu0 0.0
    %2620 = vmatprep.subr.mxu0 0.0
    %2621 = vmatpush1.msra.mxu0 0.0
    %2622 = vmatprep.subr.mxu0 0.0
    %2623 = vmatpush1.msra.mxu0 %v32
    %2624 = vmatprep.subr.mxu0 0.0
    %2625 = vmatpush1.msra.mxu0 %v31
    %2626 = vmatprep.subr.mxu0 0.0
    %2627 = vmatpush1.msra.mxu0 %v30
    %2628 = vmatprep.subr.mxu0 0.0
    %2629 = vmatpush1.msra.mxu0 %v29
    %2630 = vmatprep.subr.mxu0 0.0
    %2631 = vmatpush2.msra.mxu0 0.0
    %2632 = vmatprep.subr.mxu0 0.0
    %2633 = vmatpush2.msra.mxu0 0.0
    %2634 = vmatprep.subr.mxu0 0.0
    %2635 = vmatpush2.msra.mxu0 0.0
    %2636 = vmatprep.subr.mxu0 0.0
    %2637 = vmatpush2.msra.mxu0 0.0
    %2638 = vmatprep.subr.mxu0 0.0
    %2639 = vmatpush2.msra.mxu0 0.0
    %2640 = vmatprep.subr.mxu0 0.0
    %2641 = vmatpush2.msra.mxu0 0.0
    %2642 = vmatprep.subr.mxu0 0.0
    %2643 = vmatpush2.msra.mxu0 0.0
    %2644 = vmatprep.subr.mxu0 0.0
    %2645 = vmatpush2.msra.mxu0 0.0
    %2646 = vmatprep.subr.mxu0 0.0
    %2647 = vmatpush2.msra.mxu0 0.0
    %2648 = vmatprep.subr.mxu0 0.0
    %2649 = vmatpush2.msra.mxu0 0.0
    %2650 = vmatprep.subr.mxu0 0.0
    %2651 = vmatpush2.msra.mxu0 0.0
    %2652 = vmatprep.subr.mxu0 0.0
    %2653 = vmatpush2.msra.mxu0 0.0
    %2654 = vmatprep.subr.mxu0 0.0
    %2655 = vmatpush2.msra.mxu0 0.0
    %2656 = vmatprep.subr.mxu0 0.0
    %2657 = vmatpush2.msra.mxu0 0.0
    %2658 = vmatprep.subr.mxu0 0.0
    %2659 = vmatpush2.msra.mxu0 0.0
    %2660 = vmatprep.subr.mxu0 0.0
    %2661 = vmatpush2.msra.mxu0 0.0
    %2662 = vmatprep.mubr.f32.mxu0 0.0
    %2663 = vmatmul.mubr.f32.gmra.mxu0 %v2596
    %v2664 = vpop.f32.mrf.mxu0
    %v2665 = vadd.f32 0.0, %v2664
    %v2666 = vpop.f32.mrf.mxu0
    %2667 = vdwg.mxu0
    %v2668 = vadd.f32 %v139, %v2665
    %v2669 = vtanh.pop %v2668
    %v2670 = vmul.f32 %v2669, %v231
    %v2671 = vsel %vm152, %v2670, 0.0
    %2672 = vadd.xlane.f32.xlu0 %v2671
    %v2673 = vpop.xlane.xlu0 %2672
    %v2674 = vadd.f32 %v2673, %v38
    %v2675 = vxor.u32 %v2674, 2147483648
    %v2676 = vmul.f32 %v2675, 1.442695
    %v2677 = vpow.pop %v2676
    %v2678 = vadd.f32 %v2677, 1.0
    %v2679 = vrcp.pop %v2678
    %v2680 = vmul.f32 1.0, %v2679
    %v2681 = vmul.f32 %v2680, %v2669
    %v2682 = vadd.f32 %v2669, %v2681
    %vm2683 = vcmp.lt.f32.partialorder %v2680, 0.99
    %v2684 = vsub.f32 0.0, %v2680
    %v2685 = vsel %vm2683, %v2684, 0.0
    %v2687 = vsel %vm152, %v2669, 0
    %2689 = vmatprep.subr.mxu0 0.0
    %2690 = vmatpush1.msra.mxu0 0.0
    %2691 = vmatprep.subr.mxu0 0.0
    %2692 = vmatpush1.msra.mxu0 0.0
    %2693 = vmatprep.subr.mxu0 0.0
    %2694 = vmatpush1.msra.mxu0 0.0
    %2695 = vmatprep.subr.mxu0 0.0
    %2696 = vmatpush1.msra.mxu0 0.0
    %2697 = vmatprep.subr.mxu0 0.0
    %2698 = vmatpush1.msra.mxu0 0.0
    %2699 = vmatprep.subr.mxu0 0.0
    %2700 = vmatpush1.msra.mxu0 0.0
    %2701 = vmatprep.subr.mxu0 0.0
    %2702 = vmatpush1.msra.mxu0 0.0
    %2703 = vmatprep.subr.mxu0 0.0
    %2704 = vmatpush1.msra.mxu0 0.0
    %2705 = vmatprep.subr.mxu0 0.0
    %2706 = vmatpush1.msra.mxu0 0.0
    %2707 = vmatprep.subr.mxu0 0.0
    %2708 = vmatpush1.msra.mxu0 0.0
    %2709 = vmatprep.subr.mxu0 0.0
    %2710 = vmatpush1.msra.mxu0 0.0
    %2711 = vmatprep.subr.mxu0 0.0
    %2712 = vmatpush1.msra.mxu0 0.0
    %2713 = vmatprep.subr.mxu0 0.0
    %2714 = vmatpush1.msra.mxu0 %v32
    %2715 = vmatprep.subr.mxu0 0.0
    %2716 = vmatpush1.msra.mxu0 %v31
    %2717 = vmatprep.subr.mxu0 0.0
    %2718 = vmatpush1.msra.mxu0 %v30
    %2719 = vmatprep.subr.mxu0 0.0
    %2720 = vmatpush1.msra.mxu0 %v29
    %2721 = vmatprep.subr.mxu0 0.0
    %2722 = vmatpush2.msra.mxu0 0.0
    %2723 = vmatprep.subr.mxu0 0.0
    %2724 = vmatpush2.msra.mxu0 0.0
    %2725 = vmatprep.subr.mxu0 0.0
    %2726 = vmatpush2.msra.mxu0 0.0
    %2727 = vmatprep.subr.mxu0 0.0
    %2728 = vmatpush2.msra.mxu0 0.0
    %2729 = vmatprep.subr.mxu0 0.0
    %2730 = vmatpush2.msra.mxu0 0.0
    %2731 = vmatprep.subr.mxu0 0.0
    %2732 = vmatpush2.msra.mxu0 0.0
    %2733 = vmatprep.subr.mxu0 0.0
    %2734 = vmatpush2.msra.mxu0 0.0
    %2735 = vmatprep.subr.mxu0 0.0
    %2736 = vmatpush2.msra.mxu0 0.0
    %2737 = vmatprep.subr.mxu0 0.0
    %2738 = vmatpush2.msra.mxu0 0.0
    %2739 = vmatprep.subr.mxu0 0.0
    %2740 = vmatpush2.msra.mxu0 0.0
    %2741 = vmatprep.subr.mxu0 0.0
    %2742 = vmatpush2.msra.mxu0 0.0
    %2743 = vmatprep.subr.mxu0 0.0
    %2744 = vmatpush2.msra.mxu0 0.0
    %2745 = vmatprep.subr.mxu0 0.0
    %2746 = vmatpush2.msra.mxu0 0.0
    %2747 = vmatprep.subr.mxu0 0.0
    %2748 = vmatpush2.msra.mxu0 0.0
    %2749 = vmatprep.subr.mxu0 0.0
    %2750 = vmatpush2.msra.mxu0 0.0
    %2751 = vmatprep.subr.mxu0 0.0
    %2752 = vmatpush2.msra.mxu0 0.0
    %2753 = vmatprep.mubr.f32.mxu0 0.0
    %2754 = vmatmul.mubr.f32.gmra.mxu0 %v2687
    %v2755 = vpop.f32.mrf.mxu0
    %v2756 = vadd.f32 0.0, %v2755
    %v2757 = vpop.f32.mrf.mxu0
    %2758 = vdwg.mxu0
    %v2759 = vadd.f32 %v2594, %v2756
    %v2760 = vtanh.pop %v2759
    %v2761 = vmul.f32 %v2760, %v231
    %v2762 = vsel %vm152, %v2761, 0.0
    %2763 = vadd.xlane.f32.xlu0 %v2762
    %v2764 = vpop.xlane.xlu0 %2763
    %v2765 = vadd.f32 %v2764, %v38
    %v2766 = vxor.u32 %v2765, 2147483648
    %v2767 = vmul.f32 %v2766, 1.442695
    %v2768 = vpow.pop %v2767
    %v2769 = vadd.f32 %v2768, 1.0
    %v2770 = vrcp.pop %v2769
    %v2771 = vmul.f32 1.0, %v2770
    %v2772 = vadd.f32 %v2680, %v2771
    %v2773 = vsub.f32 %v2772, 1.0
    %v2774 = vmax.f32 %v2773, 0.0
    %v2775 = vsub.f32 %v2771, %v2774
    %v2776 = vadd.f32 %v2682, %v2760
    %v2777 = vmul.f32 %v2775, %v2760
    %v2778 = vadd.f32 %v2776, %v2777
    %v2779 = vsel %vm2683, 1, 0
    %vm2780 = vcmp.eq.s32.totalorder %v2779, 1
    %v2781 = vsel %vm2780, %v2778, %v2682
    %v2782 = vsel %vm2683, %v2772, %v2680
    %v2783 = vsel %vm2683, 2.0, 1.0
    %vm2784 = vcmp.lt.f32.partialorder %v2782, 0.99
    %v2785 = vsub.f32 0.0, %v2782
    %v2786 = vsel %vm2784, %v2785, %v2685
    %v2788 = vsel %vm152, %v2760, 0
    %2790 = vmatprep.subr.mxu0 0.0
    %2791 = vmatpush1.msra.mxu0 0.0
    %2792 = vmatprep.subr.mxu0 0.0
    %2793 = vmatpush1.msra.mxu0 0.0
    %2794 = vmatprep.subr.mxu0 0.0
    %2795 = vmatpush1.msra.mxu0 0.0
    %2796 = vmatprep.subr.mxu0 0.0
    %2797 = vmatpush1.msra.mxu0 0.0
    %2798 = vmatprep.subr.mxu0 0.0
    %2799 = vmatpush1.msra.mxu0 0.0
    %2800 = vmatprep.subr.mxu0 0.0
    %2801 = vmatpush1.msra.mxu0 0.0
    %2802 = vmatprep.subr.mxu0 0.0
    %2803 = vmatpush1.msra.mxu0 0.0
    %2804 = vmatprep.subr.mxu0 0.0
    %2805 = vmatpush1.msra.mxu0 0.0
    %2806 = vmatprep.subr.mxu0 0.0
    %2807 = vmatpush1.msra.mxu0 0.0
    %2808 = vmatprep.subr.mxu0 0.0
    %2809 = vmatpush1.msra.mxu0 0.0
    %2810 = vmatprep.subr.mxu0 0.0
    %2811 = vmatpush1.msra.mxu0 0.0
    %2812 = vmatprep.subr.mxu0 0.0
    %2813 = vmatpush1.msra.mxu0 0.0
    %2814 = vmatprep.subr.mxu0 0.0
    %2815 = vmatpush1.msra.mxu0 %v32
    %2816 = vmatprep.subr.mxu0 0.0
    %2817 = vmatpush1.msra.mxu0 %v31
    %2818 = vmatprep.subr.mxu0 0.0
    %2819 = vmatpush1.msra.mxu0 %v30
    %2820 = vmatprep.subr.mxu0 0.0
    %2821 = vmatpush1.msra.mxu0 %v29
    %2822 = vmatprep.subr.mxu0 0.0
    %2823 = vmatpush2.msra.mxu0 0.0
    %2824 = vmatprep.subr.mxu0 0.0
    %2825 = vmatpush2.msra.mxu0 0.0
    %2826 = vmatprep.subr.mxu0 0.0
    %2827 = vmatpush2.msra.mxu0 0.0
    %2828 = vmatprep.subr.mxu0 0.0
    %2829 = vmatpush2.msra.mxu0 0.0
    %2830 = vmatprep.subr.mxu0 0.0
    %2831 = vmatpush2.msra.mxu0 0.0
    %2832 = vmatprep.subr.mxu0 0.0
    %2833 = vmatpush2.msra.mxu0 0.0
    %2834 = vmatprep.subr.mxu0 0.0
    %2835 = vmatpush2.msra.mxu0 0.0
    %2836 = vmatprep.subr.mxu0 0.0
    %2837 = vmatpush2.msra.mxu0 0.0
    %2838 = vmatprep.subr.mxu0 0.0
    %2839 = vmatpush2.msra.mxu0 0.0
    %2840 = vmatprep.subr.mxu0 0.0
    %2841 = vmatpush2.msra.mxu0 0.0
    %2842 = vmatprep.subr.mxu0 0.0
    %2843 = vmatpush2.msra.mxu0 0.0
    %2844 = vmatprep.subr.mxu0 0.0
    %2845 = vmatpush2.msra.mxu0 0.0
    %2846 = vmatprep.subr.mxu0 0.0
    %2847 = vmatpush2.msra.mxu0 0.0
    %2848 = vmatprep.subr.mxu0 0.0
    %2849 = vmatpush2.msra.mxu0 0.0
    %2850 = vmatprep.subr.mxu0 0.0
    %2851 = vmatpush2.msra.mxu0 0.0
    %2852 = vmatprep.subr.mxu0 0.0
    %2853 = vmatpush2.msra.mxu0 0.0
    %2854 = vmatprep.mubr.f32.mxu0 0.0
    %2855 = vmatmul.mubr.f32.gmra.mxu0 %v2788
    %v2856 = vpop.f32.mrf.mxu0
    %v2857 = vadd.f32 0.0, %v2856
    %v2858 = vpop.f32.mrf.mxu0
    %2859 = vdwg.mxu0
    %v2860 = vadd.f32 %v2594, %v2857
    %v2861 = vtanh.pop %v2860
    %v2862 = vmul.f32 %v2861, %v231
    %v2863 = vsel %vm152, %v2862, 0.0
    %2864 = vadd.xlane.f32.xlu0 %v2863
    %v2865 = vpop.xlane.xlu0 %2864
    %v2866 = vadd.f32 %v2865, %v38
    %v2867 = vxor.u32 %v2866, 2147483648
    %v2868 = vmul.f32 %v2867, 1.442695
    %v2869 = vpow.pop %v2868
    %v2870 = vadd.f32 %v2869, 1.0
    %v2871 = vrcp.pop %v2870
    %v2872 = vmul.f32 1.0, %v2871
    %v2873 = vadd.f32 %v2782, %v2872
    %v2874 = vsub.f32 %v2873, 1.0
    %v2875 = vmax.f32 %v2874, 0.0
    %v2876 = vsub.f32 %v2872, %v2875
    %v2877 = vadd.f32 %v2781, %v2861
    %v2878 = vmul.f32 %v2876, %v2861
    %v2879 = vadd.f32 %v2877, %v2878
    %v2880 = vsel %vm2784, 1, 0
    %vm2881 = vcmp.eq.s32.totalorder %v2880, 1
    %v2882 = vsel %vm2881, %v2879, %v2781
    %v2883 = vsel %vm2784, %v2873, %v2782
    %v2884 = vadd.f32 %v2783, 1.0
    %v2885 = vsel %vm2784, %v2884, %v2783
    %vm2886 = vcmp.lt.f32.partialorder %v2883, 0.99
    %v2887 = vsub.f32 0.0, %v2883
    %v2888 = vsel %vm2886, %v2887, %v2786
    %v2890 = vsel %vm152, %v2861, 0
    %2892 = vmatprep.subr.mxu0 0.0
    %2893 = vmatpush1.msra.mxu0 0.0
    %2894 = vmatprep.subr.mxu0 0.0
    %2895 = vmatpush1.msra.mxu0 0.0
    %2896 = vmatprep.subr.mxu0 0.0
    %2897 = vmatpush1.msra.mxu0 0.0
    %2898 = vmatprep.subr.mxu0 0.0
    %2899 = vmatpush1.msra.mxu0 0.0
    %2900 = vmatprep.subr.mxu0 0.0
    %2901 = vmatpush1.msra.mxu0 0.0
    %2902 = vmatprep.subr.mxu0 0.0
    %2903 = vmatpush1.msra.mxu0 0.0
    %2904 = vmatprep.subr.mxu0 0.0
    %2905 = vmatpush1.msra.mxu0 0.0
    %2906 = vmatprep.subr.mxu0 0.0
    %2907 = vmatpush1.msra.mxu0 0.0
    %2908 = vmatprep.subr.mxu0 0.0
    %2909 = vmatpush1.msra.mxu0 0.0
    %2910 = vmatprep.subr.mxu0 0.0
    %2911 = vmatpush1.msra.mxu0 0.0
    %2912 = vmatprep.subr.mxu0 0.0
    %2913 = vmatpush1.msra.mxu0 0.0
    %2914 = vmatprep.subr.mxu0 0.0
    %2915 = vmatpush1.msra.mxu0 0.0
    %2916 = vmatprep.subr.mxu0 0.0
    %2917 = vmatpush1.msra.mxu0 %v32
    %2918 = vmatprep.subr.mxu0 0.0
    %2919 = vmatpush1.msra.mxu0 %v31
    %2920 = vmatprep.subr.mxu0 0.0
    %2921 = vmatpush1.msra.mxu0 %v30
    %2922 = vmatprep.subr.mxu0 0.0
    %2923 = vmatpush1.msra.mxu0 %v29
    %2924 = vmatprep.subr.mxu0 0.0
    %2925 = vmatpush2.msra.mxu0 0.0
    %2926 = vmatprep.subr.mxu0 0.0
    %2927 = vmatpush2.msra.mxu0 0.0
    %2928 = vmatprep.subr.mxu0 0.0
    %2929 = vmatpush2.msra.mxu0 0.0
    %2930 = vmatprep.subr.mxu0 0.0
    %2931 = vmatpush2.msra.mxu0 0.0
    %2932 = vmatprep.subr.mxu0 0.0
    %2933 = vmatpush2.msra.mxu0 0.0
    %2934 = vmatprep.subr.mxu0 0.0
    %2935 = vmatpush2.msra.mxu0 0.0
    %2936 = vmatprep.subr.mxu0 0.0
    %2937 = vmatpush2.msra.mxu0 0.0
    %2938 = vmatprep.subr.mxu0 0.0
    %2939 = vmatpush2.msra.mxu0 0.0
    %2940 = vmatprep.subr.mxu0 0.0
    %2941 = vmatpush2.msra.mxu0 0.0
    %2942 = vmatprep.subr.mxu0 0.0
    %2943 = vmatpush2.msra.mxu0 0.0
    %2944 = vmatprep.subr.mxu0 0.0
    %2945 = vmatpush2.msra.mxu0 0.0
    %2946 = vmatprep.subr.mxu0 0.0
    %2947 = vmatpush2.msra.mxu0 0.0
    %2948 = vmatprep.subr.mxu0 0.0
    %2949 = vmatpush2.msra.mxu0 0.0
    %2950 = vmatprep.subr.mxu0 0.0
    %2951 = vmatpush2.msra.mxu0 0.0
    %2952 = vmatprep.subr.mxu0 0.0
    %2953 = vmatpush2.msra.mxu0 0.0
    %2954 = vmatprep.subr.mxu0 0.0
    %2955 = vmatpush2.msra.mxu0 0.0
    %2956 = vmatprep.mubr.f32.mxu0 0.0
    %2957 = vmatmul.mubr.f32.gmra.mxu0 %v2890
    %v2958 = vpop.f32.mrf.mxu0
    %v2959 = vadd.f32 0.0, %v2958
    %v2960 = vpop.f32.mrf.mxu0
    %2961 = vdwg.mxu0
    %v2962 = vadd.f32 %v2594, %v2959
    %v2963 = vtanh.pop %v2962
    %v2964 = vmul.f32 %v2963, %v231
    %v2965 = vsel %vm152, %v2964, 0.0
    %2966 = vadd.xlane.f32.xlu0 %v2965
    %v2967 = vpop.xlane.xlu0 %2966
    %v2968 = vadd.f32 %v2967, %v38
    %v2969 = vxor.u32 %v2968, 2147483648
    %v2970 = vmul.f32 %v2969, 1.442695
    %v2971 = vpow.pop %v2970
    %v2972 = vadd.f32 %v2971, 1.0
    %v2973 = vrcp.pop %v2972
    %v2974 = vmul.f32 1.0, %v2973
    %v2975 = vadd.f32 %v2883, %v2974
    %v2976 = vsub.f32 %v2975, 1.0
    %v2977 = vmax.f32 %v2976, 0.0
    %v2978 = vsub.f32 %v2974, %v2977
    %v2979 = vadd.f32 %v2882, %v2963
    %v2980 = vmul.f32 %v2978, %v2963
    %v2981 = vadd.f32 %v2979, %v2980
    %v2982 = vsel %vm2886, 1, 0
    %vm2983 = vcmp.eq.s32.totalorder %v2982, 1
    %v2984 = vsel %vm2983, %v2981, %v2882
    %v2985 = vsel %vm2886, %v2975, %v2883
    %v2986 = vadd.f32 %v2885, 1.0
    %v2987 = vsel %vm2886, %v2986, %v2885
    %vm2988 = vcmp.lt.f32.partialorder %v2985, 0.99
    %v2989 = vsub.f32 0.0, %v2985
    %v2990 = vsel %vm2988, %v2989, %v2888
    %v2992 = vsel %vm152, %v2963, 0
    %2994 = vmatprep.subr.mxu0 0.0
    %2995 = vmatpush1.msra.mxu0 0.0
    %2996 = vmatprep.subr.mxu0 0.0
    %2997 = vmatpush1.msra.mxu0 0.0
    %2998 = vmatprep.subr.mxu0 0.0
    %2999 = vmatpush1.msra.mxu0 0.0
    %3000 = vmatprep.subr.mxu0 0.0
    %3001 = vmatpush1.msra.mxu0 0.0
    %3002 = vmatprep.subr.mxu0 0.0
    %3003 = vmatpush1.msra.mxu0 0.0
    %3004 = vmatprep.subr.mxu0 0.0
    %3005 = vmatpush1.msra.mxu0 0.0
    %3006 = vmatprep.subr.mxu0 0.0
    %3007 = vmatpush1.msra.mxu0 0.0
    %3008 = vmatprep.subr.mxu0 0.0
    %3009 = vmatpush1.msra.mxu0 0.0
    %3010 = vmatprep.subr.mxu0 0.0
    %3011 = vmatpush1.msra.mxu0 0.0
    %3012 = vmatprep.subr.mxu0 0.0
    %3013 = vmatpush1.msra.mxu0 0.0
    %3014 = vmatprep.subr.mxu0 0.0
    %3015 = vmatpush1.msra.mxu0 0.0
    %3016 = vmatprep.subr.mxu0 0.0
    %3017 = vmatpush1.msra.mxu0 0.0
    %3018 = vmatprep.subr.mxu0 0.0
    %3019 = vmatpush1.msra.mxu0 %v32
    %3020 = vmatprep.subr.mxu0 0.0
    %3021 = vmatpush1.msra.mxu0 %v31
    %3022 = vmatprep.subr.mxu0 0.0
    %3023 = vmatpush1.msra.mxu0 %v30
    %3024 = vmatprep.subr.mxu0 0.0
    %3025 = vmatpush1.msra.mxu0 %v29
    %3026 = vmatprep.subr.mxu0 0.0
    %3027 = vmatpush2.msra.mxu0 0.0
    %3028 = vmatprep.subr.mxu0 0.0
    %3029 = vmatpush2.msra.mxu0 0.0
    %3030 = vmatprep.subr.mxu0 0.0
    %3031 = vmatpush2.msra.mxu0 0.0
    %3032 = vmatprep.subr.mxu0 0.0
    %3033 = vmatpush2.msra.mxu0 0.0
    %3034 = vmatprep.subr.mxu0 0.0
    %3035 = vmatpush2.msra.mxu0 0.0
    %3036 = vmatprep.subr.mxu0 0.0
    %3037 = vmatpush2.msra.mxu0 0.0
    %3038 = vmatprep.subr.mxu0 0.0
    %3039 = vmatpush2.msra.mxu0 0.0
    %3040 = vmatprep.subr.mxu0 0.0
    %3041 = vmatpush2.msra.mxu0 0.0
    %3042 = vmatprep.subr.mxu0 0.0
    %3043 = vmatpush2.msra.mxu0 0.0
    %3044 = vmatprep.subr.mxu0 0.0
    %3045 = vmatpush2.msra.mxu0 0.0
    %3046 = vmatprep.subr.mxu0 0.0
    %3047 = vmatpush2.msra.mxu0 0.0
    %3048 = vmatprep.subr.mxu0 0.0
    %3049 = vmatpush2.msra.mxu0 0.0
    %3050 = vmatprep.subr.mxu0 0.0
    %3051 = vmatpush2.msra.mxu0 0.0
    %3052 = vmatprep.subr.mxu0 0.0
    %3053 = vmatpush2.msra.mxu0 0.0
    %3054 = vmatprep.subr.mxu0 0.0
    %3055 = vmatpush2.msra.mxu0 0.0
    %3056 = vmatprep.subr.mxu0 0.0
    %3057 = vmatpush2.msra.mxu0 0.0
    %3058 = vmatprep.mubr.f32.mxu0 0.0
    %3059 = vmatmul.mubr.f32.gmra.mxu0 %v2992
    %v3060 = vpop.f32.mrf.mxu0
    %v3061 = vadd.f32 0.0, %v3060
    %v3062 = vpop.f32.mrf.mxu0
    %3063 = vdwg.mxu0
    %v3064 = vadd.f32 %v2594, %v3061
    %v3065 = vtanh.pop %v3064
    %v3066 = vmul.f32 %v3065, %v231
    %v3067 = vsel %vm152, %v3066, 0.0
    %3068 = vadd.xlane.f32.xlu0 %v3067
    %v3069 = vpop.xlane.xlu0 %3068
    %v3070 = vadd.f32 %v3069, %v38
    %v3071 = vxor.u32 %v3070, 2147483648
    %v3072 = vmul.f32 %v3071, 1.442695
    %v3073 = vpow.pop %v3072
    %v3074 = vadd.f32 %v3073, 1.0
    %v3075 = vrcp.pop %v3074
    %v3076 = vmul.f32 1.0, %v3075
    %v3077 = vadd.f32 %v2985, %v3076
    %v3078 = vsub.f32 %v3077, 1.0
    %v3079 = vmax.f32 %v3078, 0.0
    %v3080 = vsub.f32 %v3076, %v3079
    %v3081 = vadd.f32 %v2984, %v3065
    %v3082 = vmul.f32 %v3080, %v3065
    %v3083 = vadd.f32 %v3081, %v3082
    %v3084 = vsel %vm2988, 1, 0
    %vm3085 = vcmp.eq.s32.totalorder %v3084, 1
    %v3086 = vsel %vm3085, %v3083, %v2984
    %v3087 = vsel %vm2988, %v3077, %v2985
    %v3088 = vadd.f32 %v2987, 1.0
    %v3089 = vsel %vm2988, %v3088, %v2987
    %vm3090 = vcmp.lt.f32.partialorder %v3087, 0.99
    %v3091 = vsub.f32 0.0, %v3087
    %v3092 = vsel %vm3090, %v3091, %v2990
    %v3094 = vsel %vm152, %v3065, 0
    %3096 = vmatprep.subr.mxu0 0.0
    %3097 = vmatpush1.msra.mxu0 0.0
    %3098 = vmatprep.subr.mxu0 0.0
    %3099 = vmatpush1.msra.mxu0 0.0
    %3100 = vmatprep.subr.mxu0 0.0
    %3101 = vmatpush1.msra.mxu0 0.0
    %3102 = vmatprep.subr.mxu0 0.0
    %3103 = vmatpush1.msra.mxu0 0.0
    %3104 = vmatprep.subr.mxu0 0.0
    %3105 = vmatpush1.msra.mxu0 0.0
    %3106 = vmatprep.subr.mxu0 0.0
    %3107 = vmatpush1.msra.mxu0 0.0
    %3108 = vmatprep.subr.mxu0 0.0
    %3109 = vmatpush1.msra.mxu0 0.0
    %3110 = vmatprep.subr.mxu0 0.0
    %3111 = vmatpush1.msra.mxu0 0.0
    %3112 = vmatprep.subr.mxu0 0.0
    %3113 = vmatpush1.msra.mxu0 0.0
    %3114 = vmatprep.subr.mxu0 0.0
    %3115 = vmatpush1.msra.mxu0 0.0
    %3116 = vmatprep.subr.mxu0 0.0
    %3117 = vmatpush1.msra.mxu0 0.0
    %3118 = vmatprep.subr.mxu0 0.0
    %3119 = vmatpush1.msra.mxu0 0.0
    %3120 = vmatprep.subr.mxu0 0.0
    %3121 = vmatpush1.msra.mxu0 %v32
    %3122 = vmatprep.subr.mxu0 0.0
    %3123 = vmatpush1.msra.mxu0 %v31
    %3124 = vmatprep.subr.mxu0 0.0
    %3125 = vmatpush1.msra.mxu0 %v30
    %3126 = vmatprep.subr.mxu0 0.0
    %3127 = vmatpush1.msra.mxu0 %v29
    %3128 = vmatprep.subr.mxu0 0.0
    %3129 = vmatpush2.msra.mxu0 0.0
    %3130 = vmatprep.subr.mxu0 0.0
    %3131 = vmatpush2.msra.mxu0 0.0
    %3132 = vmatprep.subr.mxu0 0.0
    %3133 = vmatpush2.msra.mxu0 0.0
    %3134 = vmatprep.subr.mxu0 0.0
    %3135 = vmatpush2.msra.mxu0 0.0
    %3136 = vmatprep.subr.mxu0 0.0
    %3137 = vmatpush2.msra.mxu0 0.0
    %3138 = vmatprep.subr.mxu0 0.0
    %3139 = vmatpush2.msra.mxu0 0.0
    %3140 = vmatprep.subr.mxu0 0.0
    %3141 = vmatpush2.msra.mxu0 0.0
    %3142 = vmatprep.subr.mxu0 0.0
    %3143 = vmatpush2.msra.mxu0 0.0
    %3144 = vmatprep.subr.mxu0 0.0
    %3145 = vmatpush2.msra.mxu0 0.0
    %3146 = vmatprep.subr.mxu0 0.0
    %3147 = vmatpush2.msra.mxu0 0.0
    %3148 = vmatprep.subr.mxu0 0.0
    %3149 = vmatpush2.msra.mxu0 0.0
    %3150 = vmatprep.subr.mxu0 0.0
    %3151 = vmatpush2.msra.mxu0 0.0
    %3152 = vmatprep.subr.mxu0 0.0
    %3153 = vmatpush2.msra.mxu0 0.0
    %3154 = vmatprep.subr.mxu0 0.0
    %3155 = vmatpush2.msra.mxu0 0.0
    %3156 = vmatprep.subr.mxu0 0.0
    %3157 = vmatpush2.msra.mxu0 0.0
    %3158 = vmatprep.subr.mxu0 0.0
    %3159 = vmatpush2.msra.mxu0 0.0
    %3160 = vmatprep.mubr.f32.mxu0 0.0
    %3161 = vmatmul.mubr.f32.gmra.mxu0 %v3094
    %v3162 = vpop.f32.mrf.mxu0
    %v3163 = vadd.f32 0.0, %v3162
    %v3164 = vpop.f32.mrf.mxu0
    %3165 = vdwg.mxu0
    %v3166 = vadd.f32 %v2594, %v3163
    %v3167 = vtanh.pop %v3166
    %v3168 = vmul.f32 %v3167, %v231
    %v3169 = vsel %vm152, %v3168, 0.0
    %3170 = vadd.xlane.f32.xlu0 %v3169
    %v3171 = vpop.xlane.xlu0 %3170
    %v3172 = vadd.f32 %v3171, %v38
    %v3173 = vxor.u32 %v3172, 2147483648
    %v3174 = vmul.f32 %v3173, 1.442695
    %v3175 = vpow.pop %v3174
    %v3176 = vadd.f32 %v3175, 1.0
    %v3177 = vrcp.pop %v3176
    %v3178 = vmul.f32 1.0, %v3177
    %v3179 = vadd.f32 %v3087, %v3178
    %v3180 = vsub.f32 %v3179, 1.0
    %v3181 = vmax.f32 %v3180, 0.0
    %v3182 = vsub.f32 %v3178, %v3181
    %v3183 = vadd.f32 %v3086, %v3167
    %v3184 = vmul.f32 %v3182, %v3167
    %v3185 = vadd.f32 %v3183, %v3184
    %v3186 = vsel %vm3090, 1, 0
    %vm3187 = vcmp.eq.s32.totalorder %v3186, 1
    %v3188 = vsel %vm3187, %v3185, %v3086
    %v3189 = vsel %vm3090, %v3179, %v3087
    %v3190 = vadd.f32 %v3089, 1.0
    %v3191 = vsel %vm3090, %v3190, %v3089
    %vm3192 = vcmp.lt.f32.partialorder %v3189, 0.99
    %v3193 = vsub.f32 0.0, %v3189
    %v3194 = vsel %vm3192, %v3193, %v3092
    %v3196 = vsel %vm152, %v3167, 0
    %3198 = vmatprep.subr.mxu0 0.0
    %3199 = vmatpush1.msra.mxu0 0.0
    %3200 = vmatprep.subr.mxu0 0.0
    %3201 = vmatpush1.msra.mxu0 0.0
    %3202 = vmatprep.subr.mxu0 0.0
    %3203 = vmatpush1.msra.mxu0 0.0
    %3204 = vmatprep.subr.mxu0 0.0
    %3205 = vmatpush1.msra.mxu0 0.0
    %3206 = vmatprep.subr.mxu0 0.0
    %3207 = vmatpush1.msra.mxu0 0.0
    %3208 = vmatprep.subr.mxu0 0.0
    %3209 = vmatpush1.msra.mxu0 0.0
    %3210 = vmatprep.subr.mxu0 0.0
    %3211 = vmatpush1.msra.mxu0 0.0
    %3212 = vmatprep.subr.mxu0 0.0
    %3213 = vmatpush1.msra.mxu0 0.0
    %3214 = vmatprep.subr.mxu0 0.0
    %3215 = vmatpush1.msra.mxu0 0.0
    %3216 = vmatprep.subr.mxu0 0.0
    %3217 = vmatpush1.msra.mxu0 0.0
    %3218 = vmatprep.subr.mxu0 0.0
    %3219 = vmatpush1.msra.mxu0 0.0
    %3220 = vmatprep.subr.mxu0 0.0
    %3221 = vmatpush1.msra.mxu0 0.0
    %3222 = vmatprep.subr.mxu0 0.0
    %3223 = vmatpush1.msra.mxu0 %v32
    %3224 = vmatprep.subr.mxu0 0.0
    %3225 = vmatpush1.msra.mxu0 %v31
    %3226 = vmatprep.subr.mxu0 0.0
    %3227 = vmatpush1.msra.mxu0 %v30
    %3228 = vmatprep.subr.mxu0 0.0
    %3229 = vmatpush1.msra.mxu0 %v29
    %3230 = vmatprep.subr.mxu0 0.0
    %3231 = vmatpush2.msra.mxu0 0.0
    %3232 = vmatprep.subr.mxu0 0.0
    %3233 = vmatpush2.msra.mxu0 0.0
    %3234 = vmatprep.subr.mxu0 0.0
    %3235 = vmatpush2.msra.mxu0 0.0
    %3236 = vmatprep.subr.mxu0 0.0
    %3237 = vmatpush2.msra.mxu0 0.0
    %3238 = vmatprep.subr.mxu0 0.0
    %3239 = vmatpush2.msra.mxu0 0.0
    %3240 = vmatprep.subr.mxu0 0.0
    %3241 = vmatpush2.msra.mxu0 0.0
    %3242 = vmatprep.subr.mxu0 0.0
    %3243 = vmatpush2.msra.mxu0 0.0
    %3244 = vmatprep.subr.mxu0 0.0
    %3245 = vmatpush2.msra.mxu0 0.0
    %3246 = vmatprep.subr.mxu0 0.0
    %3247 = vmatpush2.msra.mxu0 0.0
    %3248 = vmatprep.subr.mxu0 0.0
    %3249 = vmatpush2.msra.mxu0 0.0
    %3250 = vmatprep.subr.mxu0 0.0
    %3251 = vmatpush2.msra.mxu0 0.0
    %3252 = vmatprep.subr.mxu0 0.0
    %3253 = vmatpush2.msra.mxu0 0.0
    %3254 = vmatprep.subr.mxu0 0.0
    %3255 = vmatpush2.msra.mxu0 0.0
    %3256 = vmatprep.subr.mxu0 0.0
    %3257 = vmatpush2.msra.mxu0 0.0
    %3258 = vmatprep.subr.mxu0 0.0
    %3259 = vmatpush2.msra.mxu0 0.0
    %3260 = vmatprep.subr.mxu0 0.0
    %3261 = vmatpush2.msra.mxu0 0.0
    %3262 = vmatprep.mubr.f32.mxu0 0.0
    %3263 = vmatmul.mubr.f32.gmra.mxu0 %v3196
    %v3264 = vpop.f32.mrf.mxu0
    %v3265 = vadd.f32 0.0, %v3264
    %v3266 = vpop.f32.mrf.mxu0
    %3267 = vdwg.mxu0
    %v3268 = vadd.f32 %v2594, %v3265
    %v3269 = vtanh.pop %v3268
    %v3270 = vmul.f32 %v3269, %v231
    %v3271 = vsel %vm152, %v3270, 0.0
    %3272 = vadd.xlane.f32.xlu0 %v3271
    %v3273 = vpop.xlane.xlu0 %3272
    %v3274 = vadd.f32 %v3273, %v38
    %v3275 = vxor.u32 %v3274, 2147483648
    %v3276 = vmul.f32 %v3275, 1.442695
    %v3277 = vpow.pop %v3276
    %v3278 = vadd.f32 %v3277, 1.0
    %v3279 = vrcp.pop %v3278
    %v3280 = vmul.f32 1.0, %v3279
    %v3281 = vadd.f32 %v3189, %v3280
    %v3282 = vsub.f32 %v3281, 1.0
    %v3283 = vmax.f32 %v3282, 0.0
    %v3284 = vsub.f32 %v3280, %v3283
    %v3285 = vadd.f32 %v3188, %v3269
    %v3286 = vmul.f32 %v3284, %v3269
    %v3287 = vadd.f32 %v3285, %v3286
    %v3288 = vsel %vm3192, 1, 0
    %vm3289 = vcmp.eq.s32.totalorder %v3288, 1
    %v3290 = vsel %vm3289, %v3287, %v3188
    %v3291 = vsel %vm3192, %v3281, %v3189
    %v3292 = vadd.f32 %v3191, 1.0
    %v3293 = vsel %vm3192, %v3292, %v3191
    %vm3294 = vcmp.lt.f32.partialorder %v3291, 0.99
    %v3295 = vsub.f32 0.0, %v3291
    %v3296 = vsel %vm3294, %v3295, %v3194
    %v3298 = vsel %vm152, %v3269, 0
    %3300 = vmatprep.subr.mxu0 0.0
    %3301 = vmatpush1.msra.mxu0 0.0
    %3302 = vmatprep.subr.mxu0 0.0
    %3303 = vmatpush1.msra.mxu0 0.0
    %3304 = vmatprep.subr.mxu0 0.0
    %3305 = vmatpush1.msra.mxu0 0.0
    %3306 = vmatprep.subr.mxu0 0.0
    %3307 = vmatpush1.msra.mxu0 0.0
    %3308 = vmatprep.subr.mxu0 0.0
    %3309 = vmatpush1.msra.mxu0 0.0
    %3310 = vmatprep.subr.mxu0 0.0
    %3311 = vmatpush1.msra.mxu0 0.0
    %3312 = vmatprep.subr.mxu0 0.0
    %3313 = vmatpush1.msra.mxu0 0.0
    %3314 = vmatprep.subr.mxu0 0.0
    %3315 = vmatpush1.msra.mxu0 0.0
    %3316 = vmatprep.subr.mxu0 0.0
    %3317 = vmatpush1.msra.mxu0 0.0
    %3318 = vmatprep.subr.mxu0 0.0
    %3319 = vmatpush1.msra.mxu0 0.0
    %3320 = vmatprep.subr.mxu0 0.0
    %3321 = vmatpush1.msra.mxu0 0.0
    %3322 = vmatprep.subr.mxu0 0.0
    %3323 = vmatpush1.msra.mxu0 0.0
    %3324 = vmatprep.subr.mxu0 0.0
    %3325 = vmatpush1.msra.mxu0 %v32
    %3326 = vmatprep.subr.mxu0 0.0
    %3327 = vmatpush1.msra.mxu0 %v31
    %3328 = vmatprep.subr.mxu0 0.0
    %3329 = vmatpush1.msra.mxu0 %v30
    %3330 = vmatprep.subr.mxu0 0.0
    %3331 = vmatpush1.msra.mxu0 %v29
    %3332 = vmatprep.subr.mxu0 0.0
    %3333 = vmatpush2.msra.mxu0 0.0
    %3334 = vmatprep.subr.mxu0 0.0
    %3335 = vmatpush2.msra.mxu0 0.0
    %3336 = vmatprep.subr.mxu0 0.0
    %3337 = vmatpush2.msra.mxu0 0.0
    %3338 = vmatprep.subr.mxu0 0.0
    %3339 = vmatpush2.msra.mxu0 0.0
    %3340 = vmatprep.subr.mxu0 0.0
    %3341 = vmatpush2.msra.mxu0 0.0
    %3342 = vmatprep.subr.mxu0 0.0
    %3343 = vmatpush2.msra.mxu0 0.0
    %3344 = vmatprep.subr.mxu0 0.0
    %3345 = vmatpush2.msra.mxu0 0.0
    %3346 = vmatprep.subr.mxu0 0.0
    %3347 = vmatpush2.msra.mxu0 0.0
    %3348 = vmatprep.subr.mxu0 0.0
    %3349 = vmatpush2.msra.mxu0 0.0
    %3350 = vmatprep.subr.mxu0 0.0
    %3351 = vmatpush2.msra.mxu0 0.0
    %3352 = vmatprep.subr.mxu0 0.0
    %3353 = vmatpush2.msra.mxu0 0.0
    %3354 = vmatprep.subr.mxu0 0.0
    %3355 = vmatpush2.msra.mxu0 0.0
    %3356 = vmatprep.subr.mxu0 0.0
    %3357 = vmatpush2.msra.mxu0 0.0
    %3358 = vmatprep.subr.mxu0 0.0
    %3359 = vmatpush2.msra.mxu0 0.0
    %3360 = vmatprep.subr.mxu0 0.0
    %3361 = vmatpush2.msra.mxu0 0.0
    %3362 = vmatprep.subr.mxu0 0.0
    %3363 = vmatpush2.msra.mxu0 0.0
    %3364 = vmatprep.mubr.f32.mxu0 0.0
    %3365 = vmatmul.mubr.f32.gmra.mxu0 %v3298
    %v3366 = vpop.f32.mrf.mxu0
    %v3367 = vadd.f32 0.0, %v3366
    %v3368 = vpop.f32.mrf.mxu0
    %3369 = vdwg.mxu0
    %v3370 = vadd.f32 %v2594, %v3367
    %v3371 = vtanh.pop %v3370
    %v3372 = vmul.f32 %v3371, %v231
    %v3373 = vsel %vm152, %v3372, 0.0
    %3374 = vadd.xlane.f32.xlu0 %v3373
    %v3375 = vpop.xlane.xlu0 %3374
    %v3376 = vadd.f32 %v3375, %v38
    %v3377 = vxor.u32 %v3376, 2147483648
    %v3378 = vmul.f32 %v3377, 1.442695
    %v3379 = vpow.pop %v3378
    %v3380 = vadd.f32 %v3379, 1.0
    %v3381 = vrcp.pop %v3380
    %v3382 = vmul.f32 1.0, %v3381
    %v3383 = vadd.f32 %v3291, %v3382
    %v3384 = vsub.f32 %v3383, 1.0
    %v3385 = vmax.f32 %v3384, 0.0
    %v3386 = vsub.f32 %v3382, %v3385
    %v3387 = vadd.f32 %v3290, %v3371
    %v3388 = vmul.f32 %v3386, %v3371
    %v3389 = vadd.f32 %v3387, %v3388
    %v3390 = vsel %vm3294, 1, 0
    %vm3391 = vcmp.eq.s32.totalorder %v3390, 1
    %v3392 = vsel %vm3391, %v3389, %v3290
    %v3393 = vsel %vm3294, %v3383, %v3291
    %v3394 = vadd.f32 %v3293, 1.0
    %v3395 = vsel %vm3294, %v3394, %v3293
    %vm3396 = vcmp.lt.f32.partialorder %v3393, 0.99
    %v3397 = vsub.f32 0.0, %v3393
    %v3398 = vsel %vm3396, %v3397, %v3296
    %v3400 = vsel %vm152, %v3371, 0
    %3402 = vmatprep.subr.mxu0 0.0
    %3403 = vmatpush1.msra.mxu0 0.0
    %3404 = vmatprep.subr.mxu0 0.0
    %3405 = vmatpush1.msra.mxu0 0.0
    %3406 = vmatprep.subr.mxu0 0.0
    %3407 = vmatpush1.msra.mxu0 0.0
    %3408 = vmatprep.subr.mxu0 0.0
    %3409 = vmatpush1.msra.mxu0 0.0
    %3410 = vmatprep.subr.mxu0 0.0
    %3411 = vmatpush1.msra.mxu0 0.0
    %3412 = vmatprep.subr.mxu0 0.0
    %3413 = vmatpush1.msra.mxu0 0.0
    %3414 = vmatprep.subr.mxu0 0.0
    %3415 = vmatpush1.msra.mxu0 0.0
    %3416 = vmatprep.subr.mxu0 0.0
    %3417 = vmatpush1.msra.mxu0 0.0
    %3418 = vmatprep.subr.mxu0 0.0
    %3419 = vmatpush1.msra.mxu0 0.0
    %3420 = vmatprep.subr.mxu0 0.0
    %3421 = vmatpush1.msra.mxu0 0.0
    %3422 = vmatprep.subr.mxu0 0.0
    %3423 = vmatpush1.msra.mxu0 0.0
    %3424 = vmatprep.subr.mxu0 0.0
    %3425 = vmatpush1.msra.mxu0 0.0
    %3426 = vmatprep.subr.mxu0 0.0
    %3427 = vmatpush1.msra.mxu0 %v32
    %3428 = vmatprep.subr.mxu0 0.0
    %3429 = vmatpush1.msra.mxu0 %v31
    %3430 = vmatprep.subr.mxu0 0.0
    %3431 = vmatpush1.msra.mxu0 %v30
    %3432 = vmatprep.subr.mxu0 0.0
    %3433 = vmatpush1.msra.mxu0 %v29
    %3434 = vmatprep.subr.mxu0 0.0
    %3435 = vmatpush2.msra.mxu0 0.0
    %3436 = vmatprep.subr.mxu0 0.0
    %3437 = vmatpush2.msra.mxu0 0.0
    %3438 = vmatprep.subr.mxu0 0.0
    %3439 = vmatpush2.msra.mxu0 0.0
    %3440 = vmatprep.subr.mxu0 0.0
    %3441 = vmatpush2.msra.mxu0 0.0
    %3442 = vmatprep.subr.mxu0 0.0
    %3443 = vmatpush2.msra.mxu0 0.0
    %3444 = vmatprep.subr.mxu0 0.0
    %3445 = vmatpush2.msra.mxu0 0.0
    %3446 = vmatprep.subr.mxu0 0.0
    %3447 = vmatpush2.msra.mxu0 0.0
    %3448 = vmatprep.subr.mxu0 0.0
    %3449 = vmatpush2.msra.mxu0 0.0
    %3450 = vmatprep.subr.mxu0 0.0
    %3451 = vmatpush2.msra.mxu0 0.0
    %3452 = vmatprep.subr.mxu0 0.0
    %3453 = vmatpush2.msra.mxu0 0.0
    %3454 = vmatprep.subr.mxu0 0.0
    %3455 = vmatpush2.msra.mxu0 0.0
    %3456 = vmatprep.subr.mxu0 0.0
    %3457 = vmatpush2.msra.mxu0 0.0
    %3458 = vmatprep.subr.mxu0 0.0
    %3459 = vmatpush2.msra.mxu0 0.0
    %3460 = vmatprep.subr.mxu0 0.0
    %3461 = vmatpush2.msra.mxu0 0.0
    %3462 = vmatprep.subr.mxu0 0.0
    %3463 = vmatpush2.msra.mxu0 0.0
    %3464 = vmatprep.subr.mxu0 0.0
    %3465 = vmatpush2.msra.mxu0 0.0
    %3466 = vmatprep.mubr.f32.mxu0 0.0
    %3467 = vmatmul.mubr.f32.gmra.mxu0 %v3400
    %v3468 = vpop.f32.mrf.mxu0
    %v3469 = vadd.f32 0.0, %v3468
    %v3470 = vpop.f32.mrf.mxu0
    %3471 = vdwg.mxu0
    %v3472 = vadd.f32 %v2594, %v3469
    %v3473 = vtanh.pop %v3472
    %v3474 = vmul.f32 %v3473, %v231
    %v3475 = vsel %vm152, %v3474, 0.0
    %3476 = vadd.xlane.f32.xlu0 %v3475
    %v3477 = vpop.xlane.xlu0 %3476
    %v3478 = vadd.f32 %v3477, %v38
    %v3479 = vxor.u32 %v3478, 2147483648
    %v3480 = vmul.f32 %v3479, 1.442695
    %v3481 = vpow.pop %v3480
    %v3482 = vadd.f32 %v3481, 1.0
    %v3483 = vrcp.pop %v3482
    %v3484 = vmul.f32 1.0, %v3483
    %v3485 = vadd.f32 %v3393, %v3484
    %v3486 = vsub.f32 %v3485, 1.0
    %v3487 = vmax.f32 %v3486, 0.0
    %v3488 = vsub.f32 %v3484, %v3487
    %v3489 = vadd.f32 %v3392, %v3473
    %v3490 = vmul.f32 %v3488, %v3473
    %v3491 = vadd.f32 %v3489, %v3490
    %v3492 = vsel %vm3396, 1, 0
    %vm3493 = vcmp.eq.s32.totalorder %v3492, 1
    %v3494 = vsel %vm3493, %v3491, %v3392
    %v3495 = vsel %vm3396, %v3485, %v3393
    %v3496 = vadd.f32 %v3395, 1.0
    %v3497 = vsel %vm3396, %v3496, %v3395
    %vm3498 = vcmp.lt.f32.partialorder %v3495, 0.99
    %v3499 = vsub.f32 0.0, %v3495
    %v3500 = vsel %vm3498, %v3499, %v3398
    %v3502 = vsel %vm152, %v3473, 0
    %3504 = vmatprep.subr.mxu0 0.0
    %3505 = vmatpush1.msra.mxu0 0.0
    %3506 = vmatprep.subr.mxu0 0.0
    %3507 = vmatpush1.msra.mxu0 0.0
    %3508 = vmatprep.subr.mxu0 0.0
    %3509 = vmatpush1.msra.mxu0 0.0
    %3510 = vmatprep.subr.mxu0 0.0
    %3511 = vmatpush1.msra.mxu0 0.0
    %3512 = vmatprep.subr.mxu0 0.0
    %3513 = vmatpush1.msra.mxu0 0.0
    %3514 = vmatprep.subr.mxu0 0.0
    %3515 = vmatpush1.msra.mxu0 0.0
    %3516 = vmatprep.subr.mxu0 0.0
    %3517 = vmatpush1.msra.mxu0 0.0
    %3518 = vmatprep.subr.mxu0 0.0
    %3519 = vmatpush1.msra.mxu0 0.0
    %3520 = vmatprep.subr.mxu0 0.0
    %3521 = vmatpush1.msra.mxu0 0.0
    %3522 = vmatprep.subr.mxu0 0.0
    %3523 = vmatpush1.msra.mxu0 0.0
    %3524 = vmatprep.subr.mxu0 0.0
    %3525 = vmatpush1.msra.mxu0 0.0
    %3526 = vmatprep.subr.mxu0 0.0
    %3527 = vmatpush1.msra.mxu0 0.0
    %3528 = vmatprep.subr.mxu0 0.0
    %3529 = vmatpush1.msra.mxu0 %v32
    %3530 = vmatprep.subr.mxu0 0.0
    %3531 = vmatpush1.msra.mxu0 %v31
    %3532 = vmatprep.subr.mxu0 0.0
    %3533 = vmatpush1.msra.mxu0 %v30
    %3534 = vmatprep.subr.mxu0 0.0
    %3535 = vmatpush1.msra.mxu0 %v29
    %3536 = vmatprep.subr.mxu0 0.0
    %3537 = vmatpush2.msra.mxu0 0.0
    %3538 = vmatprep.subr.mxu0 0.0
    %3539 = vmatpush2.msra.mxu0 0.0
    %3540 = vmatprep.subr.mxu0 0.0
    %3541 = vmatpush2.msra.mxu0 0.0
    %3542 = vmatprep.subr.mxu0 0.0
    %3543 = vmatpush2.msra.mxu0 0.0
    %3544 = vmatprep.subr.mxu0 0.0
    %3545 = vmatpush2.msra.mxu0 0.0
    %3546 = vmatprep.subr.mxu0 0.0
    %3547 = vmatpush2.msra.mxu0 0.0
    %3548 = vmatprep.subr.mxu0 0.0
    %3549 = vmatpush2.msra.mxu0 0.0
    %3550 = vmatprep.subr.mxu0 0.0
    %3551 = vmatpush2.msra.mxu0 0.0
    %3552 = vmatprep.subr.mxu0 0.0
    %3553 = vmatpush2.msra.mxu0 0.0
    %3554 = vmatprep.subr.mxu0 0.0
    %3555 = vmatpush2.msra.mxu0 0.0
    %3556 = vmatprep.subr.mxu0 0.0
    %3557 = vmatpush2.msra.mxu0 0.0
    %3558 = vmatprep.subr.mxu0 0.0
    %3559 = vmatpush2.msra.mxu0 0.0
    %3560 = vmatprep.subr.mxu0 0.0
    %3561 = vmatpush2.msra.mxu0 0.0
    %3562 = vmatprep.subr.mxu0 0.0
    %3563 = vmatpush2.msra.mxu0 0.0
    %3564 = vmatprep.subr.mxu0 0.0
    %3565 = vmatpush2.msra.mxu0 0.0
    %3566 = vmatprep.subr.mxu0 0.0
    %3567 = vmatpush2.msra.mxu0 0.0
    %3568 = vmatprep.mubr.f32.mxu0 0.0
    %3569 = vmatmul.mubr.f32.gmra.mxu0 %v3502
    %v3570 = vpop.f32.mrf.mxu0
    %v3571 = vadd.f32 0.0, %v3570
    %v3572 = vpop.f32.mrf.mxu0
    %3573 = vdwg.mxu0
    %v3574 = vadd.f32 %v2594, %v3571
    %v3575 = vtanh.pop %v3574
    %v3576 = vmul.f32 %v3575, %v231
    %v3577 = vsel %vm152, %v3576, 0.0
    %3578 = vadd.xlane.f32.xlu0 %v3577
    %v3579 = vpop.xlane.xlu0 %3578
    %v3580 = vadd.f32 %v3579, %v38
    %v3581 = vxor.u32 %v3580, 2147483648
    %v3582 = vmul.f32 %v3581, 1.442695
    %v3583 = vpow.pop %v3582
    %v3584 = vadd.f32 %v3583, 1.0
    %v3585 = vrcp.pop %v3584
    %v3586 = vmul.f32 1.0, %v3585
    %v3587 = vadd.f32 %v3495, %v3586
    %v3588 = vsub.f32 %v3587, 1.0
    %v3589 = vmax.f32 %v3588, 0.0
    %v3590 = vsub.f32 %v3586, %v3589
    %v3591 = vadd.f32 %v3494, %v3575
    %v3592 = vmul.f32 %v3590, %v3575
    %v3593 = vadd.f32 %v3591, %v3592
    %v3594 = vsel %vm3498, 1, 0
    %vm3595 = vcmp.eq.s32.totalorder %v3594, 1
    %v3596 = vsel %vm3595, %v3593, %v3494
    %v3597 = vsel %vm3498, %v3587, %v3495
    %v3598 = vadd.f32 %v3497, 1.0
    %v3599 = vsel %vm3498, %v3598, %v3497
    %vm3600 = vcmp.lt.f32.partialorder %v3597, 0.99
    %v3601 = vsub.f32 0.0, %v3597
    %v3602 = vsel %vm3600, %v3601, %v3500
    %v3604 = vsel %vm152, %v3575, 0
    %3606 = vmatprep.subr.mxu0 0.0
    %3607 = vmatpush1.msra.mxu0 0.0
    %3608 = vmatprep.subr.mxu0 0.0
    %3609 = vmatpush1.msra.mxu0 0.0
    %3610 = vmatprep.subr.mxu0 0.0
    %3611 = vmatpush1.msra.mxu0 0.0
    %3612 = vmatprep.subr.mxu0 0.0
    %3613 = vmatpush1.msra.mxu0 0.0
    %3614 = vmatprep.subr.mxu0 0.0
    %3615 = vmatpush1.msra.mxu0 0.0
    %3616 = vmatprep.subr.mxu0 0.0
    %3617 = vmatpush1.msra.mxu0 0.0
    %3618 = vmatprep.subr.mxu0 0.0
    %3619 = vmatpush1.msra.mxu0 0.0
    %3620 = vmatprep.subr.mxu0 0.0
    %3621 = vmatpush1.msra.mxu0 0.0
    %3622 = vmatprep.subr.mxu0 0.0
    %3623 = vmatpush1.msra.mxu0 0.0
    %3624 = vmatprep.subr.mxu0 0.0
    %3625 = vmatpush1.msra.mxu0 0.0
    %3626 = vmatprep.subr.mxu0 0.0
    %3627 = vmatpush1.msra.mxu0 0.0
    %3628 = vmatprep.subr.mxu0 0.0
    %3629 = vmatpush1.msra.mxu0 0.0
    %3630 = vmatprep.subr.mxu0 0.0
    %3631 = vmatpush1.msra.mxu0 %v32
    %3632 = vmatprep.subr.mxu0 0.0
    %3633 = vmatpush1.msra.mxu0 %v31
    %3634 = vmatprep.subr.mxu0 0.0
    %3635 = vmatpush1.msra.mxu0 %v30
    %3636 = vmatprep.subr.mxu0 0.0
    %3637 = vmatpush1.msra.mxu0 %v29
    %3638 = vmatprep.subr.mxu0 0.0
    %3639 = vmatpush2.msra.mxu0 0.0
    %3640 = vmatprep.subr.mxu0 0.0
    %3641 = vmatpush2.msra.mxu0 0.0
    %3642 = vmatprep.subr.mxu0 0.0
    %3643 = vmatpush2.msra.mxu0 0.0
    %3644 = vmatprep.subr.mxu0 0.0
    %3645 = vmatpush2.msra.mxu0 0.0
    %3646 = vmatprep.subr.mxu0 0.0
    %3647 = vmatpush2.msra.mxu0 0.0
    %3648 = vmatprep.subr.mxu0 0.0
    %3649 = vmatpush2.msra.mxu0 0.0
    %3650 = vmatprep.subr.mxu0 0.0
    %3651 = vmatpush2.msra.mxu0 0.0
    %3652 = vmatprep.subr.mxu0 0.0
    %3653 = vmatpush2.msra.mxu0 0.0
    %3654 = vmatprep.subr.mxu0 0.0
    %3655 = vmatpush2.msra.mxu0 0.0
    %3656 = vmatprep.subr.mxu0 0.0
    %3657 = vmatpush2.msra.mxu0 0.0
    %3658 = vmatprep.subr.mxu0 0.0
    %3659 = vmatpush2.msra.mxu0 0.0
    %3660 = vmatprep.subr.mxu0 0.0
    %3661 = vmatpush2.msra.mxu0 0.0
    %3662 = vmatprep.subr.mxu0 0.0
    %3663 = vmatpush2.msra.mxu0 0.0
    %3664 = vmatprep.subr.mxu0 0.0
    %3665 = vmatpush2.msra.mxu0 0.0
    %3666 = vmatprep.subr.mxu0 0.0
    %3667 = vmatpush2.msra.mxu0 0.0
    %3668 = vmatprep.subr.mxu0 0.0
    %3669 = vmatpush2.msra.mxu0 0.0
    %3670 = vmatprep.mubr.f32.mxu0 0.0
    %3671 = vmatmul.mubr.f32.gmra.mxu0 %v3604
    %v3672 = vpop.f32.mrf.mxu0
    %v3673 = vadd.f32 0.0, %v3672
    %v3674 = vpop.f32.mrf.mxu0
    %3675 = vdwg.mxu0
    %v3676 = vadd.f32 %v2594, %v3673
    %v3677 = vtanh.pop %v3676
    %v3678 = vmul.f32 %v3677, %v231
    %v3679 = vsel %vm152, %v3678, 0.0
    %3680 = vadd.xlane.f32.xlu0 %v3679
    %v3681 = vpop.xlane.xlu0 %3680
    %v3682 = vadd.f32 %v3681, %v38
    %v3683 = vxor.u32 %v3682, 2147483648
    %v3684 = vmul.f32 %v3683, 1.442695
    %v3685 = vpow.pop %v3684
    %v3686 = vadd.f32 %v3685, 1.0
    %v3687 = vrcp.pop %v3686
    %v3688 = vmul.f32 1.0, %v3687
    %v3689 = vadd.f32 %v3597, %v3688
    %v3690 = vsub.f32 %v3689, 1.0
    %v3691 = vmax.f32 %v3690, 0.0
    %v3692 = vsub.f32 %v3688, %v3691
    %v3693 = vadd.f32 %v3596, %v3677
    %v3694 = vmul.f32 %v3692, %v3677
    %v3695 = vadd.f32 %v3693, %v3694
    %v3696 = vsel %vm3600, 1, 0
    %vm3697 = vcmp.eq.s32.totalorder %v3696, 1
    %v3698 = vsel %vm3697, %v3695, %v3596
    %v3699 = vsel %vm3600, %v3689, %v3597
    %v3700 = vadd.f32 %v3599, 1.0
    %v3701 = vsel %vm3600, %v3700, %v3599
    %vm3702 = vcmp.lt.f32.partialorder %v3699, 0.99
    %v3703 = vsub.f32 0.0, %v3699
    %v3704 = vsel %vm3702, %v3703, %v3602
    %v3706 = vsel %vm152, %v3677, 0
    %3708 = vmatprep.subr.mxu0 0.0
    %3709 = vmatpush1.msra.mxu0 0.0
    %3710 = vmatprep.subr.mxu0 0.0
    %3711 = vmatpush1.msra.mxu0 0.0
    %3712 = vmatprep.subr.mxu0 0.0
    %3713 = vmatpush1.msra.mxu0 0.0
    %3714 = vmatprep.subr.mxu0 0.0
    %3715 = vmatpush1.msra.mxu0 0.0
    %3716 = vmatprep.subr.mxu0 0.0
    %3717 = vmatpush1.msra.mxu0 0.0
    %3718 = vmatprep.subr.mxu0 0.0
    %3719 = vmatpush1.msra.mxu0 0.0
    %3720 = vmatprep.subr.mxu0 0.0
    %3721 = vmatpush1.msra.mxu0 0.0
    %3722 = vmatprep.subr.mxu0 0.0
    %3723 = vmatpush1.msra.mxu0 0.0
    %3724 = vmatprep.subr.mxu0 0.0
    %3725 = vmatpush1.msra.mxu0 0.0
    %3726 = vmatprep.subr.mxu0 0.0
    %3727 = vmatpush1.msra.mxu0 0.0
    %3728 = vmatprep.subr.mxu0 0.0
    %3729 = vmatpush1.msra.mxu0 0.0
    %3730 = vmatprep.subr.mxu0 0.0
    %3731 = vmatpush1.msra.mxu0 0.0
    %3732 = vmatprep.subr.mxu0 0.0
    %3733 = vmatpush1.msra.mxu0 %v32
    %3734 = vmatprep.subr.mxu0 0.0
    %3735 = vmatpush1.msra.mxu0 %v31
    %3736 = vmatprep.subr.mxu0 0.0
    %3737 = vmatpush1.msra.mxu0 %v30
    %3738 = vmatprep.subr.mxu0 0.0
    %3739 = vmatpush1.msra.mxu0 %v29
    %3740 = vmatprep.subr.mxu0 0.0
    %3741 = vmatpush2.msra.mxu0 0.0
    %3742 = vmatprep.subr.mxu0 0.0
    %3743 = vmatpush2.msra.mxu0 0.0
    %3744 = vmatprep.subr.mxu0 0.0
    %3745 = vmatpush2.msra.mxu0 0.0
    %3746 = vmatprep.subr.mxu0 0.0
    %3747 = vmatpush2.msra.mxu0 0.0
    %3748 = vmatprep.subr.mxu0 0.0
    %3749 = vmatpush2.msra.mxu0 0.0
    %3750 = vmatprep.subr.mxu0 0.0
    %3751 = vmatpush2.msra.mxu0 0.0
    %3752 = vmatprep.subr.mxu0 0.0
    %3753 = vmatpush2.msra.mxu0 0.0
    %3754 = vmatprep.subr.mxu0 0.0
    %3755 = vmatpush2.msra.mxu0 0.0
    %3756 = vmatprep.subr.mxu0 0.0
    %3757 = vmatpush2.msra.mxu0 0.0
    %3758 = vmatprep.subr.mxu0 0.0
    %3759 = vmatpush2.msra.mxu0 0.0
    %3760 = vmatprep.subr.mxu0 0.0
    %3761 = vmatpush2.msra.mxu0 0.0
    %3762 = vmatprep.subr.mxu0 0.0
    %3763 = vmatpush2.msra.mxu0 0.0
    %3764 = vmatprep.subr.mxu0 0.0
    %3765 = vmatpush2.msra.mxu0 0.0
    %3766 = vmatprep.subr.mxu0 0.0
    %3767 = vmatpush2.msra.mxu0 0.0
    %3768 = vmatprep.subr.mxu0 0.0
    %3769 = vmatpush2.msra.mxu0 0.0
    %3770 = vmatprep.subr.mxu0 0.0
    %3771 = vmatpush2.msra.mxu0 0.0
    %3772 = vmatprep.mubr.f32.mxu0 0.0
    %3773 = vmatmul.mubr.f32.gmra.mxu0 %v3706
    %v3774 = vpop.f32.mrf.mxu0
    %v3775 = vadd.f32 0.0, %v3774
    %v3776 = vpop.f32.mrf.mxu0
    %3777 = vdwg.mxu0
    %v3778 = vadd.f32 %v2594, %v3775
    %v3779 = vtanh.pop %v3778
    %v3780 = vmul.f32 %v3779, %v231
    %v3781 = vsel %vm152, %v3780, 0.0
    %3782 = vadd.xlane.f32.xlu0 %v3781
    %v3783 = vpop.xlane.xlu0 %3782
    %v3784 = vadd.f32 %v3783, %v38
    %v3785 = vxor.u32 %v3784, 2147483648
    %v3786 = vmul.f32 %v3785, 1.442695
    %v3787 = vpow.pop %v3786
    %v3788 = vadd.f32 %v3787, 1.0
    %v3789 = vrcp.pop %v3788
    %v3790 = vmul.f32 1.0, %v3789
    %v3791 = vadd.f32 %v3699, %v3790
    %v3792 = vsub.f32 %v3791, 1.0
    %v3793 = vmax.f32 %v3792, 0.0
    %v3794 = vsub.f32 %v3790, %v3793
    %v3795 = vadd.f32 %v3698, %v3779
    %v3796 = vmul.f32 %v3794, %v3779
    %v3797 = vadd.f32 %v3795, %v3796
    %v3798 = vsel %vm3702, 1, 0
    %vm3799 = vcmp.eq.s32.totalorder %v3798, 1
    %v3800 = vsel %vm3799, %v3797, %v3698
    %v3801 = vadd.f32 %v3701, 1.0
    %v3802 = vsel %vm3702, %v3801, %v3701
    %v3803 = vrcp.pop %v3802
    %v3804 = vmul.f32 %v3800, %v3803
    %v3805 = vadd.f32 %v2588, %v3704
    %v3806 = vmul.f32 %v3804, %v1371
    %v3807 = vsel %vm152, %v3806, 0.0
    %3808 = vadd.xlane.f32.xlu0 %v3807
    %v3809 = vpop.xlane.xlu0 %3808
    %v3810 = vadd.f32 %v3809, %v40
    %v3811 = vadd.f32 %v144, %v150
    %v3813 = vsel %vm152, %v3804, 0
    %3815 = vmatprep.subr.mxu0 0.0
    %3816 = vmatpush1.msra.mxu0 0.0
    %3817 = vmatprep.subr.mxu0 0.0
    %3818 = vmatpush1.msra.mxu0 0.0
    %3819 = vmatprep.subr.mxu0 0.0
    %3820 = vmatpush1.msra.mxu0 0.0
    %3821 = vmatprep.subr.mxu0 0.0
    %3822 = vmatpush1.msra.mxu0 0.0
    %3823 = vmatprep.subr.mxu0 0.0
    %3824 = vmatpush1.msra.mxu0 0.0
    %3825 = vmatprep.subr.mxu0 0.0
    %3826 = vmatpush1.msra.mxu0 0.0
    %3827 = vmatprep.subr.mxu0 0.0
    %3828 = vmatpush1.msra.mxu0 0.0
    %3829 = vmatprep.subr.mxu0 0.0
    %3830 = vmatpush1.msra.mxu0 0.0
    %3831 = vmatprep.subr.mxu0 0.0
    %3832 = vmatpush1.msra.mxu0 0.0
    %3833 = vmatprep.subr.mxu0 0.0
    %3834 = vmatpush1.msra.mxu0 0.0
    %3835 = vmatprep.subr.mxu0 0.0
    %3836 = vmatpush1.msra.mxu0 0.0
    %3837 = vmatprep.subr.mxu0 0.0
    %3838 = vmatpush1.msra.mxu0 0.0
    %3839 = vmatprep.subr.mxu0 0.0
    %3840 = vmatpush1.msra.mxu0 %v32
    %3841 = vmatprep.subr.mxu0 0.0
    %3842 = vmatpush1.msra.mxu0 %v31
    %3843 = vmatprep.subr.mxu0 0.0
    %3844 = vmatpush1.msra.mxu0 %v30
    %3845 = vmatprep.subr.mxu0 0.0
    %3846 = vmatpush1.msra.mxu0 %v29
    %3847 = vmatprep.subr.mxu0 0.0
    %3848 = vmatpush2.msra.mxu0 0.0
    %3849 = vmatprep.subr.mxu0 0.0
    %3850 = vmatpush2.msra.mxu0 0.0
    %3851 = vmatprep.subr.mxu0 0.0
    %3852 = vmatpush2.msra.mxu0 0.0
    %3853 = vmatprep.subr.mxu0 0.0
    %3854 = vmatpush2.msra.mxu0 0.0
    %3855 = vmatprep.subr.mxu0 0.0
    %3856 = vmatpush2.msra.mxu0 0.0
    %3857 = vmatprep.subr.mxu0 0.0
    %3858 = vmatpush2.msra.mxu0 0.0
    %3859 = vmatprep.subr.mxu0 0.0
    %3860 = vmatpush2.msra.mxu0 0.0
    %3861 = vmatprep.subr.mxu0 0.0
    %3862 = vmatpush2.msra.mxu0 0.0
    %3863 = vmatprep.subr.mxu0 0.0
    %3864 = vmatpush2.msra.mxu0 0.0
    %3865 = vmatprep.subr.mxu0 0.0
    %3866 = vmatpush2.msra.mxu0 0.0
    %3867 = vmatprep.subr.mxu0 0.0
    %3868 = vmatpush2.msra.mxu0 0.0
    %3869 = vmatprep.subr.mxu0 0.0
    %3870 = vmatpush2.msra.mxu0 0.0
    %3871 = vmatprep.subr.mxu0 0.0
    %3872 = vmatpush2.msra.mxu0 0.0
    %3873 = vmatprep.subr.mxu0 0.0
    %3874 = vmatpush2.msra.mxu0 0.0
    %3875 = vmatprep.subr.mxu0 0.0
    %3876 = vmatpush2.msra.mxu0 0.0
    %3877 = vmatprep.subr.mxu0 0.0
    %3878 = vmatpush2.msra.mxu0 0.0
    %3879 = vmatprep.mubr.f32.mxu0 0.0
    %3880 = vmatmul.mubr.f32.gmra.mxu0 %v3813
    %v3881 = vpop.f32.mrf.mxu0
    %v3882 = vadd.f32 0.0, %v3881
    %v3883 = vpop.f32.mrf.mxu0
    %3884 = vdwg.mxu0
    %v3885 = vadd.f32 %v144, %v3882
    %v3886 = vtanh.pop %v3885
    %v3887 = vmul.f32 %v3886, %v231
    %v3888 = vsel %vm152, %v3887, 0.0
    %3889 = vadd.xlane.f32.xlu0 %v3888
    %v3890 = vpop.xlane.xlu0 %3889
    %v3891 = vadd.f32 %v3890, %v38
    %v3892 = vxor.u32 %v3891, 2147483648
    %v3893 = vmul.f32 %v3892, 1.442695
    %v3894 = vpow.pop %v3893
    %v3895 = vadd.f32 %v3894, 1.0
    %v3896 = vrcp.pop %v3895
    %v3897 = vmul.f32 1.0, %v3896
    %v3898 = vmul.f32 %v3897, %v3886
    %v3899 = vadd.f32 %v3886, %v3898
    %vm3900 = vcmp.lt.f32.partialorder %v3897, 0.99
    %v3901 = vsub.f32 0.0, %v3897
    %v3902 = vsel %vm3900, %v3901, 0.0
    %v3904 = vsel %vm152, %v3886, 0
    %3906 = vmatprep.subr.mxu0 0.0
    %3907 = vmatpush1.msra.mxu0 0.0
    %3908 = vmatprep.subr.mxu0 0.0
    %3909 = vmatpush1.msra.mxu0 0.0
    %3910 = vmatprep.subr.mxu0 0.0
    %3911 = vmatpush1.msra.mxu0 0.0
    %3912 = vmatprep.subr.mxu0 0.0
    %3913 = vmatpush1.msra.mxu0 0.0
    %3914 = vmatprep.subr.mxu0 0.0
    %3915 = vmatpush1.msra.mxu0 0.0
    %3916 = vmatprep.subr.mxu0 0.0
    %3917 = vmatpush1.msra.mxu0 0.0
    %3918 = vmatprep.subr.mxu0 0.0
    %3919 = vmatpush1.msra.mxu0 0.0
    %3920 = vmatprep.subr.mxu0 0.0
    %3921 = vmatpush1.msra.mxu0 0.0
    %3922 = vmatprep.subr.mxu0 0.0
    %3923 = vmatpush1.msra.mxu0 0.0
    %3924 = vmatprep.subr.mxu0 0.0
    %3925 = vmatpush1.msra.mxu0 0.0
    %3926 = vmatprep.subr.mxu0 0.0
    %3927 = vmatpush1.msra.mxu0 0.0
    %3928 = vmatprep.subr.mxu0 0.0
    %3929 = vmatpush1.msra.mxu0 0.0
    %3930 = vmatprep.subr.mxu0 0.0
    %3931 = vmatpush1.msra.mxu0 %v32
    %3932 = vmatprep.subr.mxu0 0.0
    %3933 = vmatpush1.msra.mxu0 %v31
    %3934 = vmatprep.subr.mxu0 0.0
    %3935 = vmatpush1.msra.mxu0 %v30
    %3936 = vmatprep.subr.mxu0 0.0
    %3937 = vmatpush1.msra.mxu0 %v29
    %3938 = vmatprep.subr.mxu0 0.0
    %3939 = vmatpush2.msra.mxu0 0.0
    %3940 = vmatprep.subr.mxu0 0.0
    %3941 = vmatpush2.msra.mxu0 0.0
    %3942 = vmatprep.subr.mxu0 0.0
    %3943 = vmatpush2.msra.mxu0 0.0
    %3944 = vmatprep.subr.mxu0 0.0
    %3945 = vmatpush2.msra.mxu0 0.0
    %3946 = vmatprep.subr.mxu0 0.0
    %3947 = vmatpush2.msra.mxu0 0.0
    %3948 = vmatprep.subr.mxu0 0.0
    %3949 = vmatpush2.msra.mxu0 0.0
    %3950 = vmatprep.subr.mxu0 0.0
    %3951 = vmatpush2.msra.mxu0 0.0
    %3952 = vmatprep.subr.mxu0 0.0
    %3953 = vmatpush2.msra.mxu0 0.0
    %3954 = vmatprep.subr.mxu0 0.0
    %3955 = vmatpush2.msra.mxu0 0.0
    %3956 = vmatprep.subr.mxu0 0.0
    %3957 = vmatpush2.msra.mxu0 0.0
    %3958 = vmatprep.subr.mxu0 0.0
    %3959 = vmatpush2.msra.mxu0 0.0
    %3960 = vmatprep.subr.mxu0 0.0
    %3961 = vmatpush2.msra.mxu0 0.0
    %3962 = vmatprep.subr.mxu0 0.0
    %3963 = vmatpush2.msra.mxu0 0.0
    %3964 = vmatprep.subr.mxu0 0.0
    %3965 = vmatpush2.msra.mxu0 0.0
    %3966 = vmatprep.subr.mxu0 0.0
    %3967 = vmatpush2.msra.mxu0 0.0
    %3968 = vmatprep.subr.mxu0 0.0
    %3969 = vmatpush2.msra.mxu0 0.0
    %3970 = vmatprep.mubr.f32.mxu0 0.0
    %3971 = vmatmul.mubr.f32.gmra.mxu0 %v3904
    %v3972 = vpop.f32.mrf.mxu0
    %v3973 = vadd.f32 0.0, %v3972
    %v3974 = vpop.f32.mrf.mxu0
    %3975 = vdwg.mxu0
    %v3976 = vadd.f32 %v3811, %v3973
    %v3977 = vtanh.pop %v3976
    %v3978 = vmul.f32 %v3977, %v231
    %v3979 = vsel %vm152, %v3978, 0.0
    %3980 = vadd.xlane.f32.xlu0 %v3979
    %v3981 = vpop.xlane.xlu0 %3980
    %v3982 = vadd.f32 %v3981, %v38
    %v3983 = vxor.u32 %v3982, 2147483648
    %v3984 = vmul.f32 %v3983, 1.442695
    %v3985 = vpow.pop %v3984
    %v3986 = vadd.f32 %v3985, 1.0
    %v3987 = vrcp.pop %v3986
    %v3988 = vmul.f32 1.0, %v3987
    %v3989 = vadd.f32 %v3897, %v3988
    %v3990 = vsub.f32 %v3989, 1.0
    %v3991 = vmax.f32 %v3990, 0.0
    %v3992 = vsub.f32 %v3988, %v3991
    %v3993 = vadd.f32 %v3899, %v3977
    %v3994 = vmul.f32 %v3992, %v3977
    %v3995 = vadd.f32 %v3993, %v3994
    %v3996 = vsel %vm3900, 1, 0
    %vm3997 = vcmp.eq.s32.totalorder %v3996, 1
    %v3998 = vsel %vm3997, %v3995, %v3899
    %v3999 = vsel %vm3900, %v3989, %v3897
    %v4000 = vsel %vm3900, 2.0, 1.0
    %vm4001 = vcmp.lt.f32.partialorder %v3999, 0.99
    %v4002 = vsub.f32 0.0, %v3999
    %v4003 = vsel %vm4001, %v4002, %v3902
    %v4005 = vsel %vm152, %v3977, 0
    %4007 = vmatprep.subr.mxu0 0.0
    %4008 = vmatpush1.msra.mxu0 0.0
    %4009 = vmatprep.subr.mxu0 0.0
    %4010 = vmatpush1.msra.mxu0 0.0
    %4011 = vmatprep.subr.mxu0 0.0
    %4012 = vmatpush1.msra.mxu0 0.0
    %4013 = vmatprep.subr.mxu0 0.0
    %4014 = vmatpush1.msra.mxu0 0.0
    %4015 = vmatprep.subr.mxu0 0.0
    %4016 = vmatpush1.msra.mxu0 0.0
    %4017 = vmatprep.subr.mxu0 0.0
    %4018 = vmatpush1.msra.mxu0 0.0
    %4019 = vmatprep.subr.mxu0 0.0
    %4020 = vmatpush1.msra.mxu0 0.0
    %4021 = vmatprep.subr.mxu0 0.0
    %4022 = vmatpush1.msra.mxu0 0.0
    %4023 = vmatprep.subr.mxu0 0.0
    %4024 = vmatpush1.msra.mxu0 0.0
    %4025 = vmatprep.subr.mxu0 0.0
    %4026 = vmatpush1.msra.mxu0 0.0
    %4027 = vmatprep.subr.mxu0 0.0
    %4028 = vmatpush1.msra.mxu0 0.0
    %4029 = vmatprep.subr.mxu0 0.0
    %4030 = vmatpush1.msra.mxu0 0.0
    %4031 = vmatprep.subr.mxu0 0.0
    %4032 = vmatpush1.msra.mxu0 %v32
    %4033 = vmatprep.subr.mxu0 0.0
    %4034 = vmatpush1.msra.mxu0 %v31
    %4035 = vmatprep.subr.mxu0 0.0
    %4036 = vmatpush1.msra.mxu0 %v30
    %4037 = vmatprep.subr.mxu0 0.0
    %4038 = vmatpush1.msra.mxu0 %v29
    %4039 = vmatprep.subr.mxu0 0.0
    %4040 = vmatpush2.msra.mxu0 0.0
    %4041 = vmatprep.subr.mxu0 0.0
    %4042 = vmatpush2.msra.mxu0 0.0
    %4043 = vmatprep.subr.mxu0 0.0
    %4044 = vmatpush2.msra.mxu0 0.0
    %4045 = vmatprep.subr.mxu0 0.0
    %4046 = vmatpush2.msra.mxu0 0.0
    %4047 = vmatprep.subr.mxu0 0.0
    %4048 = vmatpush2.msra.mxu0 0.0
    %4049 = vmatprep.subr.mxu0 0.0
    %4050 = vmatpush2.msra.mxu0 0.0
    %4051 = vmatprep.subr.mxu0 0.0
    %4052 = vmatpush2.msra.mxu0 0.0
    %4053 = vmatprep.subr.mxu0 0.0
    %4054 = vmatpush2.msra.mxu0 0.0
    %4055 = vmatprep.subr.mxu0 0.0
    %4056 = vmatpush2.msra.mxu0 0.0
    %4057 = vmatprep.subr.mxu0 0.0
    %4058 = vmatpush2.msra.mxu0 0.0
    %4059 = vmatprep.subr.mxu0 0.0
    %4060 = vmatpush2.msra.mxu0 0.0
    %4061 = vmatprep.subr.mxu0 0.0
    %4062 = vmatpush2.msra.mxu0 0.0
    %4063 = vmatprep.subr.mxu0 0.0
    %4064 = vmatpush2.msra.mxu0 0.0
    %4065 = vmatprep.subr.mxu0 0.0
    %4066 = vmatpush2.msra.mxu0 0.0
    %4067 = vmatprep.subr.mxu0 0.0
    %4068 = vmatpush2.msra.mxu0 0.0
    %4069 = vmatprep.subr.mxu0 0.0
    %4070 = vmatpush2.msra.mxu0 0.0
    %4071 = vmatprep.mubr.f32.mxu0 0.0
    %4072 = vmatmul.mubr.f32.gmra.mxu0 %v4005
    %v4073 = vpop.f32.mrf.mxu0
    %v4074 = vadd.f32 0.0, %v4073
    %v4075 = vpop.f32.mrf.mxu0
    %4076 = vdwg.mxu0
    %v4077 = vadd.f32 %v3811, %v4074
    %v4078 = vtanh.pop %v4077
    %v4079 = vmul.f32 %v4078, %v231
    %v4080 = vsel %vm152, %v4079, 0.0
    %4081 = vadd.xlane.f32.xlu0 %v4080
    %v4082 = vpop.xlane.xlu0 %4081
    %v4083 = vadd.f32 %v4082, %v38
    %v4084 = vxor.u32 %v4083, 2147483648
    %v4085 = vmul.f32 %v4084, 1.442695
    %v4086 = vpow.pop %v4085
    %v4087 = vadd.f32 %v4086, 1.0
    %v4088 = vrcp.pop %v4087
    %v4089 = vmul.f32 1.0, %v4088
    %v4090 = vadd.f32 %v3999, %v4089
    %v4091 = vsub.f32 %v4090, 1.0
    %v4092 = vmax.f32 %v4091, 0.0
    %v4093 = vsub.f32 %v4089, %v4092
    %v4094 = vadd.f32 %v3998, %v4078
    %v4095 = vmul.f32 %v4093, %v4078
    %v4096 = vadd.f32 %v4094, %v4095
    %v4097 = vsel %vm4001, 1, 0
    %vm4098 = vcmp.eq.s32.totalorder %v4097, 1
    %v4099 = vsel %vm4098, %v4096, %v3998
    %v4100 = vsel %vm4001, %v4090, %v3999
    %v4101 = vadd.f32 %v4000, 1.0
    %v4102 = vsel %vm4001, %v4101, %v4000
    %vm4103 = vcmp.lt.f32.partialorder %v4100, 0.99
    %v4104 = vsub.f32 0.0, %v4100
    %v4105 = vsel %vm4103, %v4104, %v4003
    %v4107 = vsel %vm152, %v4078, 0
    %4109 = vmatprep.subr.mxu0 0.0
    %4110 = vmatpush1.msra.mxu0 0.0
    %4111 = vmatprep.subr.mxu0 0.0
    %4112 = vmatpush1.msra.mxu0 0.0
    %4113 = vmatprep.subr.mxu0 0.0
    %4114 = vmatpush1.msra.mxu0 0.0
    %4115 = vmatprep.subr.mxu0 0.0
    %4116 = vmatpush1.msra.mxu0 0.0
    %4117 = vmatprep.subr.mxu0 0.0
    %4118 = vmatpush1.msra.mxu0 0.0
    %4119 = vmatprep.subr.mxu0 0.0
    %4120 = vmatpush1.msra.mxu0 0.0
    %4121 = vmatprep.subr.mxu0 0.0
    %4122 = vmatpush1.msra.mxu0 0.0
    %4123 = vmatprep.subr.mxu0 0.0
    %4124 = vmatpush1.msra.mxu0 0.0
    %4125 = vmatprep.subr.mxu0 0.0
    %4126 = vmatpush1.msra.mxu0 0.0
    %4127 = vmatprep.subr.mxu0 0.0
    %4128 = vmatpush1.msra.mxu0 0.0
    %4129 = vmatprep.subr.mxu0 0.0
    %4130 = vmatpush1.msra.mxu0 0.0
    %4131 = vmatprep.subr.mxu0 0.0
    %4132 = vmatpush1.msra.mxu0 0.0
    %4133 = vmatprep.subr.mxu0 0.0
    %4134 = vmatpush1.msra.mxu0 %v32
    %4135 = vmatprep.subr.mxu0 0.0
    %4136 = vmatpush1.msra.mxu0 %v31
    %4137 = vmatprep.subr.mxu0 0.0
    %4138 = vmatpush1.msra.mxu0 %v30
    %4139 = vmatprep.subr.mxu0 0.0
    %4140 = vmatpush1.msra.mxu0 %v29
    %4141 = vmatprep.subr.mxu0 0.0
    %4142 = vmatpush2.msra.mxu0 0.0
    %4143 = vmatprep.subr.mxu0 0.0
    %4144 = vmatpush2.msra.mxu0 0.0
    %4145 = vmatprep.subr.mxu0 0.0
    %4146 = vmatpush2.msra.mxu0 0.0
    %4147 = vmatprep.subr.mxu0 0.0
    %4148 = vmatpush2.msra.mxu0 0.0
    %4149 = vmatprep.subr.mxu0 0.0
    %4150 = vmatpush2.msra.mxu0 0.0
    %4151 = vmatprep.subr.mxu0 0.0
    %4152 = vmatpush2.msra.mxu0 0.0
    %4153 = vmatprep.subr.mxu0 0.0
    %4154 = vmatpush2.msra.mxu0 0.0
    %4155 = vmatprep.subr.mxu0 0.0
    %4156 = vmatpush2.msra.mxu0 0.0
    %4157 = vmatprep.subr.mxu0 0.0
    %4158 = vmatpush2.msra.mxu0 0.0
    %4159 = vmatprep.subr.mxu0 0.0
    %4160 = vmatpush2.msra.mxu0 0.0
    %4161 = vmatprep.subr.mxu0 0.0
    %4162 = vmatpush2.msra.mxu0 0.0
    %4163 = vmatprep.subr.mxu0 0.0
    %4164 = vmatpush2.msra.mxu0 0.0
    %4165 = vmatprep.subr.mxu0 0.0
    %4166 = vmatpush2.msra.mxu0 0.0
    %4167 = vmatprep.subr.mxu0 0.0
    %4168 = vmatpush2.msra.mxu0 0.0
    %4169 = vmatprep.subr.mxu0 0.0
    %4170 = vmatpush2.msra.mxu0 0.0
    %4171 = vmatprep.subr.mxu0 0.0
    %4172 = vmatpush2.msra.mxu0 0.0
    %4173 = vmatprep.mubr.f32.mxu0 0.0
    %4174 = vmatmul.mubr.f32.gmra.mxu0 %v4107
    %v4175 = vpop.f32.mrf.mxu0
    %v4176 = vadd.f32 0.0, %v4175
    %v4177 = vpop.f32.mrf.mxu0
    %4178 = vdwg.mxu0
    %v4179 = vadd.f32 %v3811, %v4176
    %v4180 = vtanh.pop %v4179
    %v4181 = vmul.f32 %v4180, %v231
    %v4182 = vsel %vm152, %v4181, 0.0
    %4183 = vadd.xlane.f32.xlu0 %v4182
    %v4184 = vpop.xlane.xlu0 %4183
    %v4185 = vadd.f32 %v4184, %v38
    %v4186 = vxor.u32 %v4185, 2147483648
    %v4187 = vmul.f32 %v4186, 1.442695
    %v4188 = vpow.pop %v4187
    %v4189 = vadd.f32 %v4188, 1.0
    %v4190 = vrcp.pop %v4189
    %v4191 = vmul.f32 1.0, %v4190
    %v4192 = vadd.f32 %v4100, %v4191
    %v4193 = vsub.f32 %v4192, 1.0
    %v4194 = vmax.f32 %v4193, 0.0
    %v4195 = vsub.f32 %v4191, %v4194
    %v4196 = vadd.f32 %v4099, %v4180
    %v4197 = vmul.f32 %v4195, %v4180
    %v4198 = vadd.f32 %v4196, %v4197
    %v4199 = vsel %vm4103, 1, 0
    %vm4200 = vcmp.eq.s32.totalorder %v4199, 1
    %v4201 = vsel %vm4200, %v4198, %v4099
    %v4202 = vsel %vm4103, %v4192, %v4100
    %v4203 = vadd.f32 %v4102, 1.0
    %v4204 = vsel %vm4103, %v4203, %v4102
    %vm4205 = vcmp.lt.f32.partialorder %v4202, 0.99
    %v4206 = vsub.f32 0.0, %v4202
    %v4207 = vsel %vm4205, %v4206, %v4105
    %v4209 = vsel %vm152, %v4180, 0
    %4211 = vmatprep.subr.mxu0 0.0
    %4212 = vmatpush1.msra.mxu0 0.0
    %4213 = vmatprep.subr.mxu0 0.0
    %4214 = vmatpush1.msra.mxu0 0.0
    %4215 = vmatprep.subr.mxu0 0.0
    %4216 = vmatpush1.msra.mxu0 0.0
    %4217 = vmatprep.subr.mxu0 0.0
    %4218 = vmatpush1.msra.mxu0 0.0
    %4219 = vmatprep.subr.mxu0 0.0
    %4220 = vmatpush1.msra.mxu0 0.0
    %4221 = vmatprep.subr.mxu0 0.0
    %4222 = vmatpush1.msra.mxu0 0.0
    %4223 = vmatprep.subr.mxu0 0.0
    %4224 = vmatpush1.msra.mxu0 0.0
    %4225 = vmatprep.subr.mxu0 0.0
    %4226 = vmatpush1.msra.mxu0 0.0
    %4227 = vmatprep.subr.mxu0 0.0
    %4228 = vmatpush1.msra.mxu0 0.0
    %4229 = vmatprep.subr.mxu0 0.0
    %4230 = vmatpush1.msra.mxu0 0.0
    %4231 = vmatprep.subr.mxu0 0.0
    %4232 = vmatpush1.msra.mxu0 0.0
    %4233 = vmatprep.subr.mxu0 0.0
    %4234 = vmatpush1.msra.mxu0 0.0
    %4235 = vmatprep.subr.mxu0 0.0
    %4236 = vmatpush1.msra.mxu0 %v32
    %4237 = vmatprep.subr.mxu0 0.0
    %4238 = vmatpush1.msra.mxu0 %v31
    %4239 = vmatprep.subr.mxu0 0.0
    %4240 = vmatpush1.msra.mxu0 %v30
    %4241 = vmatprep.subr.mxu0 0.0
    %4242 = vmatpush1.msra.mxu0 %v29
    %4243 = vmatprep.subr.mxu0 0.0
    %4244 = vmatpush2.msra.mxu0 0.0
    %4245 = vmatprep.subr.mxu0 0.0
    %4246 = vmatpush2.msra.mxu0 0.0
    %4247 = vmatprep.subr.mxu0 0.0
    %4248 = vmatpush2.msra.mxu0 0.0
    %4249 = vmatprep.subr.mxu0 0.0
    %4250 = vmatpush2.msra.mxu0 0.0
    %4251 = vmatprep.subr.mxu0 0.0
    %4252 = vmatpush2.msra.mxu0 0.0
    %4253 = vmatprep.subr.mxu0 0.0
    %4254 = vmatpush2.msra.mxu0 0.0
    %4255 = vmatprep.subr.mxu0 0.0
    %4256 = vmatpush2.msra.mxu0 0.0
    %4257 = vmatprep.subr.mxu0 0.0
    %4258 = vmatpush2.msra.mxu0 0.0
    %4259 = vmatprep.subr.mxu0 0.0
    %4260 = vmatpush2.msra.mxu0 0.0
    %4261 = vmatprep.subr.mxu0 0.0
    %4262 = vmatpush2.msra.mxu0 0.0
    %4263 = vmatprep.subr.mxu0 0.0
    %4264 = vmatpush2.msra.mxu0 0.0
    %4265 = vmatprep.subr.mxu0 0.0
    %4266 = vmatpush2.msra.mxu0 0.0
    %4267 = vmatprep.subr.mxu0 0.0
    %4268 = vmatpush2.msra.mxu0 0.0
    %4269 = vmatprep.subr.mxu0 0.0
    %4270 = vmatpush2.msra.mxu0 0.0
    %4271 = vmatprep.subr.mxu0 0.0
    %4272 = vmatpush2.msra.mxu0 0.0
    %4273 = vmatprep.subr.mxu0 0.0
    %4274 = vmatpush2.msra.mxu0 0.0
    %4275 = vmatprep.mubr.f32.mxu0 0.0
    %4276 = vmatmul.mubr.f32.gmra.mxu0 %v4209
    %v4277 = vpop.f32.mrf.mxu0
    %v4278 = vadd.f32 0.0, %v4277
    %v4279 = vpop.f32.mrf.mxu0
    %4280 = vdwg.mxu0
    %v4281 = vadd.f32 %v3811, %v4278
    %v4282 = vtanh.pop %v4281
    %v4283 = vmul.f32 %v4282, %v231
    %v4284 = vsel %vm152, %v4283, 0.0
    %4285 = vadd.xlane.f32.xlu0 %v4284
    %v4286 = vpop.xlane.xlu0 %4285
    %v4287 = vadd.f32 %v4286, %v38
    %v4288 = vxor.u32 %v4287, 2147483648
    %v4289 = vmul.f32 %v4288, 1.442695
    %v4290 = vpow.pop %v4289
    %v4291 = vadd.f32 %v4290, 1.0
    %v4292 = vrcp.pop %v4291
    %v4293 = vmul.f32 1.0, %v4292
    %v4294 = vadd.f32 %v4202, %v4293
    %v4295 = vsub.f32 %v4294, 1.0
    %v4296 = vmax.f32 %v4295, 0.0
    %v4297 = vsub.f32 %v4293, %v4296
    %v4298 = vadd.f32 %v4201, %v4282
    %v4299 = vmul.f32 %v4297, %v4282
    %v4300 = vadd.f32 %v4298, %v4299
    %v4301 = vsel %vm4205, 1, 0
    %vm4302 = vcmp.eq.s32.totalorder %v4301, 1
    %v4303 = vsel %vm4302, %v4300, %v4201
    %v4304 = vsel %vm4205, %v4294, %v4202
    %v4305 = vadd.f32 %v4204, 1.0
    %v4306 = vsel %vm4205, %v4305, %v4204
    %vm4307 = vcmp.lt.f32.partialorder %v4304, 0.99
    %v4308 = vsub.f32 0.0, %v4304
    %v4309 = vsel %vm4307, %v4308, %v4207
    %v4311 = vsel %vm152, %v4282, 0
    %4313 = vmatprep.subr.mxu0 0.0
    %4314 = vmatpush1.msra.mxu0 0.0
    %4315 = vmatprep.subr.mxu0 0.0
    %4316 = vmatpush1.msra.mxu0 0.0
    %4317 = vmatprep.subr.mxu0 0.0
    %4318 = vmatpush1.msra.mxu0 0.0
    %4319 = vmatprep.subr.mxu0 0.0
    %4320 = vmatpush1.msra.mxu0 0.0
    %4321 = vmatprep.subr.mxu0 0.0
    %4322 = vmatpush1.msra.mxu0 0.0
    %4323 = vmatprep.subr.mxu0 0.0
    %4324 = vmatpush1.msra.mxu0 0.0
    %4325 = vmatprep.subr.mxu0 0.0
    %4326 = vmatpush1.msra.mxu0 0.0
    %4327 = vmatprep.subr.mxu0 0.0
    %4328 = vmatpush1.msra.mxu0 0.0
    %4329 = vmatprep.subr.mxu0 0.0
    %4330 = vmatpush1.msra.mxu0 0.0
    %4331 = vmatprep.subr.mxu0 0.0
    %4332 = vmatpush1.msra.mxu0 0.0
    %4333 = vmatprep.subr.mxu0 0.0
    %4334 = vmatpush1.msra.mxu0 0.0
    %4335 = vmatprep.subr.mxu0 0.0
    %4336 = vmatpush1.msra.mxu0 0.0
    %4337 = vmatprep.subr.mxu0 0.0
    %4338 = vmatpush1.msra.mxu0 %v32
    %4339 = vmatprep.subr.mxu0 0.0
    %4340 = vmatpush1.msra.mxu0 %v31
    %4341 = vmatprep.subr.mxu0 0.0
    %4342 = vmatpush1.msra.mxu0 %v30
    %4343 = vmatprep.subr.mxu0 0.0
    %4344 = vmatpush1.msra.mxu0 %v29
    %4345 = vmatprep.subr.mxu0 0.0
    %4346 = vmatpush2.msra.mxu0 0.0
    %4347 = vmatprep.subr.mxu0 0.0
    %4348 = vmatpush2.msra.mxu0 0.0
    %4349 = vmatprep.subr.mxu0 0.0
    %4350 = vmatpush2.msra.mxu0 0.0
    %4351 = vmatprep.subr.mxu0 0.0
    %4352 = vmatpush2.msra.mxu0 0.0
    %4353 = vmatprep.subr.mxu0 0.0
    %4354 = vmatpush2.msra.mxu0 0.0
    %4355 = vmatprep.subr.mxu0 0.0
    %4356 = vmatpush2.msra.mxu0 0.0
    %4357 = vmatprep.subr.mxu0 0.0
    %4358 = vmatpush2.msra.mxu0 0.0
    %4359 = vmatprep.subr.mxu0 0.0
    %4360 = vmatpush2.msra.mxu0 0.0
    %4361 = vmatprep.subr.mxu0 0.0
    %4362 = vmatpush2.msra.mxu0 0.0
    %4363 = vmatprep.subr.mxu0 0.0
    %4364 = vmatpush2.msra.mxu0 0.0
    %4365 = vmatprep.subr.mxu0 0.0
    %4366 = vmatpush2.msra.mxu0 0.0
    %4367 = vmatprep.subr.mxu0 0.0
    %4368 = vmatpush2.msra.mxu0 0.0
    %4369 = vmatprep.subr.mxu0 0.0
    %4370 = vmatpush2.msra.mxu0 0.0
    %4371 = vmatprep.subr.mxu0 0.0
    %4372 = vmatpush2.msra.mxu0 0.0
    %4373 = vmatprep.subr.mxu0 0.0
    %4374 = vmatpush2.msra.mxu0 0.0
    %4375 = vmatprep.subr.mxu0 0.0
    %4376 = vmatpush2.msra.mxu0 0.0
    %4377 = vmatprep.mubr.f32.mxu0 0.0
    %4378 = vmatmul.mubr.f32.gmra.mxu0 %v4311
    %v4379 = vpop.f32.mrf.mxu0
    %v4380 = vadd.f32 0.0, %v4379
    %v4381 = vpop.f32.mrf.mxu0
    %4382 = vdwg.mxu0
    %v4383 = vadd.f32 %v3811, %v4380
    %v4384 = vtanh.pop %v4383
    %v4385 = vmul.f32 %v4384, %v231
    %v4386 = vsel %vm152, %v4385, 0.0
    %4387 = vadd.xlane.f32.xlu0 %v4386
    %v4388 = vpop.xlane.xlu0 %4387
    %v4389 = vadd.f32 %v4388, %v38
    %v4390 = vxor.u32 %v4389, 2147483648
    %v4391 = vmul.f32 %v4390, 1.442695
    %v4392 = vpow.pop %v4391
    %v4393 = vadd.f32 %v4392, 1.0
    %v4394 = vrcp.pop %v4393
    %v4395 = vmul.f32 1.0, %v4394
    %v4396 = vadd.f32 %v4304, %v4395
    %v4397 = vsub.f32 %v4396, 1.0
    %v4398 = vmax.f32 %v4397, 0.0
    %v4399 = vsub.f32 %v4395, %v4398
    %v4400 = vadd.f32 %v4303, %v4384
    %v4401 = vmul.f32 %v4399, %v4384
    %v4402 = vadd.f32 %v4400, %v4401
    %v4403 = vsel %vm4307, 1, 0
    %vm4404 = vcmp.eq.s32.totalorder %v4403, 1
    %v4405 = vsel %vm4404, %v4402, %v4303
    %v4406 = vsel %vm4307, %v4396, %v4304
    %v4407 = vadd.f32 %v4306, 1.0
    %v4408 = vsel %vm4307, %v4407, %v4306
    %vm4409 = vcmp.lt.f32.partialorder %v4406, 0.99
    %v4410 = vsub.f32 0.0, %v4406
    %v4411 = vsel %vm4409, %v4410, %v4309
    %v4413 = vsel %vm152, %v4384, 0
    %4415 = vmatprep.subr.mxu0 0.0
    %4416 = vmatpush1.msra.mxu0 0.0
    %4417 = vmatprep.subr.mxu0 0.0
    %4418 = vmatpush1.msra.mxu0 0.0
    %4419 = vmatprep.subr.mxu0 0.0
    %4420 = vmatpush1.msra.mxu0 0.0
    %4421 = vmatprep.subr.mxu0 0.0
    %4422 = vmatpush1.msra.mxu0 0.0
    %4423 = vmatprep.subr.mxu0 0.0
    %4424 = vmatpush1.msra.mxu0 0.0
    %4425 = vmatprep.subr.mxu0 0.0
    %4426 = vmatpush1.msra.mxu0 0.0
    %4427 = vmatprep.subr.mxu0 0.0
    %4428 = vmatpush1.msra.mxu0 0.0
    %4429 = vmatprep.subr.mxu0 0.0
    %4430 = vmatpush1.msra.mxu0 0.0
    %4431 = vmatprep.subr.mxu0 0.0
    %4432 = vmatpush1.msra.mxu0 0.0
    %4433 = vmatprep.subr.mxu0 0.0
    %4434 = vmatpush1.msra.mxu0 0.0
    %4435 = vmatprep.subr.mxu0 0.0
    %4436 = vmatpush1.msra.mxu0 0.0
    %4437 = vmatprep.subr.mxu0 0.0
    %4438 = vmatpush1.msra.mxu0 0.0
    %4439 = vmatprep.subr.mxu0 0.0
    %4440 = vmatpush1.msra.mxu0 %v32
    %4441 = vmatprep.subr.mxu0 0.0
    %4442 = vmatpush1.msra.mxu0 %v31
    %4443 = vmatprep.subr.mxu0 0.0
    %4444 = vmatpush1.msra.mxu0 %v30
    %4445 = vmatprep.subr.mxu0 0.0
    %4446 = vmatpush1.msra.mxu0 %v29
    %4447 = vmatprep.subr.mxu0 0.0
    %4448 = vmatpush2.msra.mxu0 0.0
    %4449 = vmatprep.subr.mxu0 0.0
    %4450 = vmatpush2.msra.mxu0 0.0
    %4451 = vmatprep.subr.mxu0 0.0
    %4452 = vmatpush2.msra.mxu0 0.0
    %4453 = vmatprep.subr.mxu0 0.0
    %4454 = vmatpush2.msra.mxu0 0.0
    %4455 = vmatprep.subr.mxu0 0.0
    %4456 = vmatpush2.msra.mxu0 0.0
    %4457 = vmatprep.subr.mxu0 0.0
    %4458 = vmatpush2.msra.mxu0 0.0
    %4459 = vmatprep.subr.mxu0 0.0
    %4460 = vmatpush2.msra.mxu0 0.0
    %4461 = vmatprep.subr.mxu0 0.0
    %4462 = vmatpush2.msra.mxu0 0.0
    %4463 = vmatprep.subr.mxu0 0.0
    %4464 = vmatpush2.msra.mxu0 0.0
    %4465 = vmatprep.subr.mxu0 0.0
    %4466 = vmatpush2.msra.mxu0 0.0
    %4467 = vmatprep.subr.mxu0 0.0
    %4468 = vmatpush2.msra.mxu0 0.0
    %4469 = vmatprep.subr.mxu0 0.0
    %4470 = vmatpush2.msra.mxu0 0.0
    %4471 = vmatprep.subr.mxu0 0.0
    %4472 = vmatpush2.msra.mxu0 0.0
    %4473 = vmatprep.subr.mxu0 0.0
    %4474 = vmatpush2.msra.mxu0 0.0
    %4475 = vmatprep.subr.mxu0 0.0
    %4476 = vmatpush2.msra.mxu0 0.0
    %4477 = vmatprep.subr.mxu0 0.0
    %4478 = vmatpush2.msra.mxu0 0.0
    %4479 = vmatprep.mubr.f32.mxu0 0.0
    %4480 = vmatmul.mubr.f32.gmra.mxu0 %v4413
    %v4481 = vpop.f32.mrf.mxu0
    %v4482 = vadd.f32 0.0, %v4481
    %v4483 = vpop.f32.mrf.mxu0
    %4484 = vdwg.mxu0
    %v4485 = vadd.f32 %v3811, %v4482
    %v4486 = vtanh.pop %v4485
    %v4487 = vmul.f32 %v4486, %v231
    %v4488 = vsel %vm152, %v4487, 0.0
    %4489 = vadd.xlane.f32.xlu0 %v4488
    %v4490 = vpop.xlane.xlu0 %4489
    %v4491 = vadd.f32 %v4490, %v38
    %v4492 = vxor.u32 %v4491, 2147483648
    %v4493 = vmul.f32 %v4492, 1.442695
    %v4494 = vpow.pop %v4493
    %v4495 = vadd.f32 %v4494, 1.0
    %v4496 = vrcp.pop %v4495
    %v4497 = vmul.f32 1.0, %v4496
    %v4498 = vadd.f32 %v4406, %v4497
    %v4499 = vsub.f32 %v4498, 1.0
    %v4500 = vmax.f32 %v4499, 0.0
    %v4501 = vsub.f32 %v4497, %v4500
    %v4502 = vadd.f32 %v4405, %v4486
    %v4503 = vmul.f32 %v4501, %v4486
    %v4504 = vadd.f32 %v4502, %v4503
    %v4505 = vsel %vm4409, 1, 0
    %vm4506 = vcmp.eq.s32.totalorder %v4505, 1
    %v4507 = vsel %vm4506, %v4504, %v4405
    %v4508 = vsel %vm4409, %v4498, %v4406
    %v4509 = vadd.f32 %v4408, 1.0
    %v4510 = vsel %vm4409, %v4509, %v4408
    %vm4511 = vcmp.lt.f32.partialorder %v4508, 0.99
    %v4512 = vsub.f32 0.0, %v4508
    %v4513 = vsel %vm4511, %v4512, %v4411
    %v4515 = vsel %vm152, %v4486, 0
    %4517 = vmatprep.subr.mxu0 0.0
    %4518 = vmatpush1.msra.mxu0 0.0
    %4519 = vmatprep.subr.mxu0 0.0
    %4520 = vmatpush1.msra.mxu0 0.0
    %4521 = vmatprep.subr.mxu0 0.0
    %4522 = vmatpush1.msra.mxu0 0.0
    %4523 = vmatprep.subr.mxu0 0.0
    %4524 = vmatpush1.msra.mxu0 0.0
    %4525 = vmatprep.subr.mxu0 0.0
    %4526 = vmatpush1.msra.mxu0 0.0
    %4527 = vmatprep.subr.mxu0 0.0
    %4528 = vmatpush1.msra.mxu0 0.0
    %4529 = vmatprep.subr.mxu0 0.0
    %4530 = vmatpush1.msra.mxu0 0.0
    %4531 = vmatprep.subr.mxu0 0.0
    %4532 = vmatpush1.msra.mxu0 0.0
    %4533 = vmatprep.subr.mxu0 0.0
    %4534 = vmatpush1.msra.mxu0 0.0
    %4535 = vmatprep.subr.mxu0 0.0
    %4536 = vmatpush1.msra.mxu0 0.0
    %4537 = vmatprep.subr.mxu0 0.0
    %4538 = vmatpush1.msra.mxu0 0.0
    %4539 = vmatprep.subr.mxu0 0.0
    %4540 = vmatpush1.msra.mxu0 0.0
    %4541 = vmatprep.subr.mxu0 0.0
    %4542 = vmatpush1.msra.mxu0 %v32
    %4543 = vmatprep.subr.mxu0 0.0
    %4544 = vmatpush1.msra.mxu0 %v31
    %4545 = vmatprep.subr.mxu0 0.0
    %4546 = vmatpush1.msra.mxu0 %v30
    %4547 = vmatprep.subr.mxu0 0.0
    %4548 = vmatpush1.msra.mxu0 %v29
    %4549 = vmatprep.subr.mxu0 0.0
    %4550 = vmatpush2.msra.mxu0 0.0
    %4551 = vmatprep.subr.mxu0 0.0
    %4552 = vmatpush2.msra.mxu0 0.0
    %4553 = vmatprep.subr.mxu0 0.0
    %4554 = vmatpush2.msra.mxu0 0.0
    %4555 = vmatprep.subr.mxu0 0.0
    %4556 = vmatpush2.msra.mxu0 0.0
    %4557 = vmatprep.subr.mxu0 0.0
    %4558 = vmatpush2.msra.mxu0 0.0
    %4559 = vmatprep.subr.mxu0 0.0
    %4560 = vmatpush2.msra.mxu0 0.0
    %4561 = vmatprep.subr.mxu0 0.0
    %4562 = vmatpush2.msra.mxu0 0.0
    %4563 = vmatprep.subr.mxu0 0.0
    %4564 = vmatpush2.msra.mxu0 0.0
    %4565 = vmatprep.subr.mxu0 0.0
    %4566 = vmatpush2.msra.mxu0 0.0
    %4567 = vmatprep.subr.mxu0 0.0
    %4568 = vmatpush2.msra.mxu0 0.0
    %4569 = vmatprep.subr.mxu0 0.0
    %4570 = vmatpush2.msra.mxu0 0.0
    %4571 = vmatprep.subr.mxu0 0.0
    %4572 = vmatpush2.msra.mxu0 0.0
    %4573 = vmatprep.subr.mxu0 0.0
    %4574 = vmatpush2.msra.mxu0 0.0
    %4575 = vmatprep.subr.mxu0 0.0
    %4576 = vmatpush2.msra.mxu0 0.0
    %4577 = vmatprep.subr.mxu0 0.0
    %4578 = vmatpush2.msra.mxu0 0.0
    %4579 = vmatprep.subr.mxu0 0.0
    %4580 = vmatpush2.msra.mxu0 0.0
    %4581 = vmatprep.mubr.f32.mxu0 0.0
    %4582 = vmatmul.mubr.f32.gmra.mxu0 %v4515
    %v4583 = vpop.f32.mrf.mxu0
    %v4584 = vadd.f32 0.0, %v4583
    %v4585 = vpop.f32.mrf.mxu0
    %4586 = vdwg.mxu0
    %v4587 = vadd.f32 %v3811, %v4584
    %v4588 = vtanh.pop %v4587
    %v4589 = vmul.f32 %v4588, %v231
    %v4590 = vsel %vm152, %v4589, 0.0
    %4591 = vadd.xlane.f32.xlu0 %v4590
    %v4592 = vpop.xlane.xlu0 %4591
    %v4593 = vadd.f32 %v4592, %v38
    %v4594 = vxor.u32 %v4593, 2147483648
    %v4595 = vmul.f32 %v4594, 1.442695
    %v4596 = vpow.pop %v4595
    %v4597 = vadd.f32 %v4596, 1.0
    %v4598 = vrcp.pop %v4597
    %v4599 = vmul.f32 1.0, %v4598
    %v4600 = vadd.f32 %v4508, %v4599
    %v4601 = vsub.f32 %v4600, 1.0
    %v4602 = vmax.f32 %v4601, 0.0
    %v4603 = vsub.f32 %v4599, %v4602
    %v4604 = vadd.f32 %v4507, %v4588
    %v4605 = vmul.f32 %v4603, %v4588
    %v4606 = vadd.f32 %v4604, %v4605
    %v4607 = vsel %vm4511, 1, 0
    %vm4608 = vcmp.eq.s32.totalorder %v4607, 1
    %v4609 = vsel %vm4608, %v4606, %v4507
    %v4610 = vsel %vm4511, %v4600, %v4508
    %v4611 = vadd.f32 %v4510, 1.0
    %v4612 = vsel %vm4511, %v4611, %v4510
    %vm4613 = vcmp.lt.f32.partialorder %v4610, 0.99
    %v4614 = vsub.f32 0.0, %v4610
    %v4615 = vsel %vm4613, %v4614, %v4513
    %v4617 = vsel %vm152, %v4588, 0
    %4619 = vmatprep.subr.mxu0 0.0
    %4620 = vmatpush1.msra.mxu0 0.0
    %4621 = vmatprep.subr.mxu0 0.0
    %4622 = vmatpush1.msra.mxu0 0.0
    %4623 = vmatprep.subr.mxu0 0.0
    %4624 = vmatpush1.msra.mxu0 0.0
    %4625 = vmatprep.subr.mxu0 0.0
    %4626 = vmatpush1.msra.mxu0 0.0
    %4627 = vmatprep.subr.mxu0 0.0
    %4628 = vmatpush1.msra.mxu0 0.0
    %4629 = vmatprep.subr.mxu0 0.0
    %4630 = vmatpush1.msra.mxu0 0.0
    %4631 = vmatprep.subr.mxu0 0.0
    %4632 = vmatpush1.msra.mxu0 0.0
    %4633 = vmatprep.subr.mxu0 0.0
    %4634 = vmatpush1.msra.mxu0 0.0
    %4635 = vmatprep.subr.mxu0 0.0
    %4636 = vmatpush1.msra.mxu0 0.0
    %4637 = vmatprep.subr.mxu0 0.0
    %4638 = vmatpush1.msra.mxu0 0.0
    %4639 = vmatprep.subr.mxu0 0.0
    %4640 = vmatpush1.msra.mxu0 0.0
    %4641 = vmatprep.subr.mxu0 0.0
    %4642 = vmatpush1.msra.mxu0 0.0
    %4643 = vmatprep.subr.mxu0 0.0
    %4644 = vmatpush1.msra.mxu0 %v32
    %4645 = vmatprep.subr.mxu0 0.0
    %4646 = vmatpush1.msra.mxu0 %v31
    %4647 = vmatprep.subr.mxu0 0.0
    %4648 = vmatpush1.msra.mxu0 %v30
    %4649 = vmatprep.subr.mxu0 0.0
    %4650 = vmatpush1.msra.mxu0 %v29
    %4651 = vmatprep.subr.mxu0 0.0
    %4652 = vmatpush2.msra.mxu0 0.0
    %4653 = vmatprep.subr.mxu0 0.0
    %4654 = vmatpush2.msra.mxu0 0.0
    %4655 = vmatprep.subr.mxu0 0.0
    %4656 = vmatpush2.msra.mxu0 0.0
    %4657 = vmatprep.subr.mxu0 0.0
    %4658 = vmatpush2.msra.mxu0 0.0
    %4659 = vmatprep.subr.mxu0 0.0
    %4660 = vmatpush2.msra.mxu0 0.0
    %4661 = vmatprep.subr.mxu0 0.0
    %4662 = vmatpush2.msra.mxu0 0.0
    %4663 = vmatprep.subr.mxu0 0.0
    %4664 = vmatpush2.msra.mxu0 0.0
    %4665 = vmatprep.subr.mxu0 0.0
    %4666 = vmatpush2.msra.mxu0 0.0
    %4667 = vmatprep.subr.mxu0 0.0
    %4668 = vmatpush2.msra.mxu0 0.0
    %4669 = vmatprep.subr.mxu0 0.0
    %4670 = vmatpush2.msra.mxu0 0.0
    %4671 = vmatprep.subr.mxu0 0.0
    %4672 = vmatpush2.msra.mxu0 0.0
    %4673 = vmatprep.subr.mxu0 0.0
    %4674 = vmatpush2.msra.mxu0 0.0
    %4675 = vmatprep.subr.mxu0 0.0
    %4676 = vmatpush2.msra.mxu0 0.0
    %4677 = vmatprep.subr.mxu0 0.0
    %4678 = vmatpush2.msra.mxu0 0.0
    %4679 = vmatprep.subr.mxu0 0.0
    %4680 = vmatpush2.msra.mxu0 0.0
    %4681 = vmatprep.subr.mxu0 0.0
    %4682 = vmatpush2.msra.mxu0 0.0
    %4683 = vmatprep.mubr.f32.mxu0 0.0
    %4684 = vmatmul.mubr.f32.gmra.mxu0 %v4617
    %v4685 = vpop.f32.mrf.mxu0
    %v4686 = vadd.f32 0.0, %v4685
    %v4687 = vpop.f32.mrf.mxu0
    %4688 = vdwg.mxu0
    %v4689 = vadd.f32 %v3811, %v4686
    %v4690 = vtanh.pop %v4689
    %v4691 = vmul.f32 %v4690, %v231
    %v4692 = vsel %vm152, %v4691, 0.0
    %4693 = vadd.xlane.f32.xlu0 %v4692
    %v4694 = vpop.xlane.xlu0 %4693
    %v4695 = vadd.f32 %v4694, %v38
    %v4696 = vxor.u32 %v4695, 2147483648
    %v4697 = vmul.f32 %v4696, 1.442695
    %v4698 = vpow.pop %v4697
    %v4699 = vadd.f32 %v4698, 1.0
    %v4700 = vrcp.pop %v4699
    %v4701 = vmul.f32 1.0, %v4700
    %v4702 = vadd.f32 %v4610, %v4701
    %v4703 = vsub.f32 %v4702, 1.0
    %v4704 = vmax.f32 %v4703, 0.0
    %v4705 = vsub.f32 %v4701, %v4704
    %v4706 = vadd.f32 %v4609, %v4690
    %v4707 = vmul.f32 %v4705, %v4690
    %v4708 = vadd.f32 %v4706, %v4707
    %v4709 = vsel %vm4613, 1, 0
    %vm4710 = vcmp.eq.s32.totalorder %v4709, 1
    %v4711 = vsel %vm4710, %v4708, %v4609
    %v4712 = vsel %vm4613, %v4702, %v4610
    %v4713 = vadd.f32 %v4612, 1.0
    %v4714 = vsel %vm4613, %v4713, %v4612
    %vm4715 = vcmp.lt.f32.partialorder %v4712, 0.99
    %v4716 = vsub.f32 0.0, %v4712
    %v4717 = vsel %vm4715, %v4716, %v4615
    %v4719 = vsel %vm152, %v4690, 0
    %4721 = vmatprep.subr.mxu0 0.0
    %4722 = vmatpush1.msra.mxu0 0.0
    %4723 = vmatprep.subr.mxu0 0.0
    %4724 = vmatpush1.msra.mxu0 0.0
    %4725 = vmatprep.subr.mxu0 0.0
    %4726 = vmatpush1.msra.mxu0 0.0
    %4727 = vmatprep.subr.mxu0 0.0
    %4728 = vmatpush1.msra.mxu0 0.0
    %4729 = vmatprep.subr.mxu0 0.0
    %4730 = vmatpush1.msra.mxu0 0.0
    %4731 = vmatprep.subr.mxu0 0.0
    %4732 = vmatpush1.msra.mxu0 0.0
    %4733 = vmatprep.subr.mxu0 0.0
    %4734 = vmatpush1.msra.mxu0 0.0
    %4735 = vmatprep.subr.mxu0 0.0
    %4736 = vmatpush1.msra.mxu0 0.0
    %4737 = vmatprep.subr.mxu0 0.0
    %4738 = vmatpush1.msra.mxu0 0.0
    %4739 = vmatprep.subr.mxu0 0.0
    %4740 = vmatpush1.msra.mxu0 0.0
    %4741 = vmatprep.subr.mxu0 0.0
    %4742 = vmatpush1.msra.mxu0 0.0
    %4743 = vmatprep.subr.mxu0 0.0
    %4744 = vmatpush1.msra.mxu0 0.0
    %4745 = vmatprep.subr.mxu0 0.0
    %4746 = vmatpush1.msra.mxu0 %v32
    %4747 = vmatprep.subr.mxu0 0.0
    %4748 = vmatpush1.msra.mxu0 %v31
    %4749 = vmatprep.subr.mxu0 0.0
    %4750 = vmatpush1.msra.mxu0 %v30
    %4751 = vmatprep.subr.mxu0 0.0
    %4752 = vmatpush1.msra.mxu0 %v29
    %4753 = vmatprep.subr.mxu0 0.0
    %4754 = vmatpush2.msra.mxu0 0.0
    %4755 = vmatprep.subr.mxu0 0.0
    %4756 = vmatpush2.msra.mxu0 0.0
    %4757 = vmatprep.subr.mxu0 0.0
    %4758 = vmatpush2.msra.mxu0 0.0
    %4759 = vmatprep.subr.mxu0 0.0
    %4760 = vmatpush2.msra.mxu0 0.0
    %4761 = vmatprep.subr.mxu0 0.0
    %4762 = vmatpush2.msra.mxu0 0.0
    %4763 = vmatprep.subr.mxu0 0.0
    %4764 = vmatpush2.msra.mxu0 0.0
    %4765 = vmatprep.subr.mxu0 0.0
    %4766 = vmatpush2.msra.mxu0 0.0
    %4767 = vmatprep.subr.mxu0 0.0
    %4768 = vmatpush2.msra.mxu0 0.0
    %4769 = vmatprep.subr.mxu0 0.0
    %4770 = vmatpush2.msra.mxu0 0.0
    %4771 = vmatprep.subr.mxu0 0.0
    %4772 = vmatpush2.msra.mxu0 0.0
    %4773 = vmatprep.subr.mxu0 0.0
    %4774 = vmatpush2.msra.mxu0 0.0
    %4775 = vmatprep.subr.mxu0 0.0
    %4776 = vmatpush2.msra.mxu0 0.0
    %4777 = vmatprep.subr.mxu0 0.0
    %4778 = vmatpush2.msra.mxu0 0.0
    %4779 = vmatprep.subr.mxu0 0.0
    %4780 = vmatpush2.msra.mxu0 0.0
    %4781 = vmatprep.subr.mxu0 0.0
    %4782 = vmatpush2.msra.mxu0 0.0
    %4783 = vmatprep.subr.mxu0 0.0
    %4784 = vmatpush2.msra.mxu0 0.0
    %4785 = vmatprep.mubr.f32.mxu0 0.0
    %4786 = vmatmul.mubr.f32.gmra.mxu0 %v4719
    %v4787 = vpop.f32.mrf.mxu0
    %v4788 = vadd.f32 0.0, %v4787
    %v4789 = vpop.f32.mrf.mxu0
    %4790 = vdwg.mxu0
    %v4791 = vadd.f32 %v3811, %v4788
    %v4792 = vtanh.pop %v4791
    %v4793 = vmul.f32 %v4792, %v231
    %v4794 = vsel %vm152, %v4793, 0.0
    %4795 = vadd.xlane.f32.xlu0 %v4794
    %v4796 = vpop.xlane.xlu0 %4795
    %v4797 = vadd.f32 %v4796, %v38
    %v4798 = vxor.u32 %v4797, 2147483648
    %v4799 = vmul.f32 %v4798, 1.442695
    %v4800 = vpow.pop %v4799
    %v4801 = vadd.f32 %v4800, 1.0
    %v4802 = vrcp.pop %v4801
    %v4803 = vmul.f32 1.0, %v4802
    %v4804 = vadd.f32 %v4712, %v4803
    %v4805 = vsub.f32 %v4804, 1.0
    %v4806 = vmax.f32 %v4805, 0.0
    %v4807 = vsub.f32 %v4803, %v4806
    %v4808 = vadd.f32 %v4711, %v4792
    %v4809 = vmul.f32 %v4807, %v4792
    %v4810 = vadd.f32 %v4808, %v4809
    %v4811 = vsel %vm4715, 1, 0
    %vm4812 = vcmp.eq.s32.totalorder %v4811, 1
    %v4813 = vsel %vm4812, %v4810, %v4711
    %v4814 = vsel %vm4715, %v4804, %v4712
    %v4815 = vadd.f32 %v4714, 1.0
    %v4816 = vsel %vm4715, %v4815, %v4714
    %vm4817 = vcmp.lt.f32.partialorder %v4814, 0.99
    %v4818 = vsub.f32 0.0, %v4814
    %v4819 = vsel %vm4817, %v4818, %v4717
    %v4821 = vsel %vm152, %v4792, 0
    %4823 = vmatprep.subr.mxu0 0.0
    %4824 = vmatpush1.msra.mxu0 0.0
    %4825 = vmatprep.subr.mxu0 0.0
    %4826 = vmatpush1.msra.mxu0 0.0
    %4827 = vmatprep.subr.mxu0 0.0
    %4828 = vmatpush1.msra.mxu0 0.0
    %4829 = vmatprep.subr.mxu0 0.0
    %4830 = vmatpush1.msra.mxu0 0.0
    %4831 = vmatprep.subr.mxu0 0.0
    %4832 = vmatpush1.msra.mxu0 0.0
    %4833 = vmatprep.subr.mxu0 0.0
    %4834 = vmatpush1.msra.mxu0 0.0
    %4835 = vmatprep.subr.mxu0 0.0
    %4836 = vmatpush1.msra.mxu0 0.0
    %4837 = vmatprep.subr.mxu0 0.0
    %4838 = vmatpush1.msra.mxu0 0.0
    %4839 = vmatprep.subr.mxu0 0.0
    %4840 = vmatpush1.msra.mxu0 0.0
    %4841 = vmatprep.subr.mxu0 0.0
    %4842 = vmatpush1.msra.mxu0 0.0
    %4843 = vmatprep.subr.mxu0 0.0
    %4844 = vmatpush1.msra.mxu0 0.0
    %4845 = vmatprep.subr.mxu0 0.0
    %4846 = vmatpush1.msra.mxu0 0.0
    %4847 = vmatprep.subr.mxu0 0.0
    %4848 = vmatpush1.msra.mxu0 %v32
    %4849 = vmatprep.subr.mxu0 0.0
    %4850 = vmatpush1.msra.mxu0 %v31
    %4851 = vmatprep.subr.mxu0 0.0
    %4852 = vmatpush1.msra.mxu0 %v30
    %4853 = vmatprep.subr.mxu0 0.0
    %4854 = vmatpush1.msra.mxu0 %v29
    %4855 = vmatprep.subr.mxu0 0.0
    %4856 = vmatpush2.msra.mxu0 0.0
    %4857 = vmatprep.subr.mxu0 0.0
    %4858 = vmatpush2.msra.mxu0 0.0
    %4859 = vmatprep.subr.mxu0 0.0
    %4860 = vmatpush2.msra.mxu0 0.0
    %4861 = vmatprep.subr.mxu0 0.0
    %4862 = vmatpush2.msra.mxu0 0.0
    %4863 = vmatprep.subr.mxu0 0.0
    %4864 = vmatpush2.msra.mxu0 0.0
    %4865 = vmatprep.subr.mxu0 0.0
    %4866 = vmatpush2.msra.mxu0 0.0
    %4867 = vmatprep.subr.mxu0 0.0
    %4868 = vmatpush2.msra.mxu0 0.0
    %4869 = vmatprep.subr.mxu0 0.0
    %4870 = vmatpush2.msra.mxu0 0.0
    %4871 = vmatprep.subr.mxu0 0.0
    %4872 = vmatpush2.msra.mxu0 0.0
    %4873 = vmatprep.subr.mxu0 0.0
    %4874 = vmatpush2.msra.mxu0 0.0
    %4875 = vmatprep.subr.mxu0 0.0
    %4876 = vmatpush2.msra.mxu0 0.0
    %4877 = vmatprep.subr.mxu0 0.0
    %4878 = vmatpush2.msra.mxu0 0.0
    %4879 = vmatprep.subr.mxu0 0.0
    %4880 = vmatpush2.msra.mxu0 0.0
    %4881 = vmatprep.subr.mxu0 0.0
    %4882 = vmatpush2.msra.mxu0 0.0
    %4883 = vmatprep.subr.mxu0 0.0
    %4884 = vmatpush2.msra.mxu0 0.0
    %4885 = vmatprep.subr.mxu0 0.0
    %4886 = vmatpush2.msra.mxu0 0.0
    %4887 = vmatprep.mubr.f32.mxu0 0.0
    %4888 = vmatmul.mubr.f32.gmra.mxu0 %v4821
    %v4889 = vpop.f32.mrf.mxu0
    %v4890 = vadd.f32 0.0, %v4889
    %v4891 = vpop.f32.mrf.mxu0
    %4892 = vdwg.mxu0
    %v4893 = vadd.f32 %v3811, %v4890
    %v4894 = vtanh.pop %v4893
    %v4895 = vmul.f32 %v4894, %v231
    %v4896 = vsel %vm152, %v4895, 0.0
    %4897 = vadd.xlane.f32.xlu0 %v4896
    %v4898 = vpop.xlane.xlu0 %4897
    %v4899 = vadd.f32 %v4898, %v38
    %v4900 = vxor.u32 %v4899, 2147483648
    %v4901 = vmul.f32 %v4900, 1.442695
    %v4902 = vpow.pop %v4901
    %v4903 = vadd.f32 %v4902, 1.0
    %v4904 = vrcp.pop %v4903
    %v4905 = vmul.f32 1.0, %v4904
    %v4906 = vadd.f32 %v4814, %v4905
    %v4907 = vsub.f32 %v4906, 1.0
    %v4908 = vmax.f32 %v4907, 0.0
    %v4909 = vsub.f32 %v4905, %v4908
    %v4910 = vadd.f32 %v4813, %v4894
    %v4911 = vmul.f32 %v4909, %v4894
    %v4912 = vadd.f32 %v4910, %v4911
    %v4913 = vsel %vm4817, 1, 0
    %vm4914 = vcmp.eq.s32.totalorder %v4913, 1
    %v4915 = vsel %vm4914, %v4912, %v4813
    %v4916 = vsel %vm4817, %v4906, %v4814
    %v4917 = vadd.f32 %v4816, 1.0
    %v4918 = vsel %vm4817, %v4917, %v4816
    %vm4919 = vcmp.lt.f32.partialorder %v4916, 0.99
    %v4920 = vsub.f32 0.0, %v4916
    %v4921 = vsel %vm4919, %v4920, %v4819
    %v4923 = vsel %vm152, %v4894, 0
    %4925 = vmatprep.subr.mxu0 0.0
    %4926 = vmatpush1.msra.mxu0 0.0
    %4927 = vmatprep.subr.mxu0 0.0
    %4928 = vmatpush1.msra.mxu0 0.0
    %4929 = vmatprep.subr.mxu0 0.0
    %4930 = vmatpush1.msra.mxu0 0.0
    %4931 = vmatprep.subr.mxu0 0.0
    %4932 = vmatpush1.msra.mxu0 0.0
    %4933 = vmatprep.subr.mxu0 0.0
    %4934 = vmatpush1.msra.mxu0 0.0
    %4935 = vmatprep.subr.mxu0 0.0
    %4936 = vmatpush1.msra.mxu0 0.0
    %4937 = vmatprep.subr.mxu0 0.0
    %4938 = vmatpush1.msra.mxu0 0.0
    %4939 = vmatprep.subr.mxu0 0.0
    %4940 = vmatpush1.msra.mxu0 0.0
    %4941 = vmatprep.subr.mxu0 0.0
    %4942 = vmatpush1.msra.mxu0 0.0
    %4943 = vmatprep.subr.mxu0 0.0
    %4944 = vmatpush1.msra.mxu0 0.0
    %4945 = vmatprep.subr.mxu0 0.0
    %4946 = vmatpush1.msra.mxu0 0.0
    %4947 = vmatprep.subr.mxu0 0.0
    %4948 = vmatpush1.msra.mxu0 0.0
    %4949 = vmatprep.subr.mxu0 0.0
    %4950 = vmatpush1.msra.mxu0 %v32
    %4951 = vmatprep.subr.mxu0 0.0
    %4952 = vmatpush1.msra.mxu0 %v31
    %4953 = vmatprep.subr.mxu0 0.0
    %4954 = vmatpush1.msra.mxu0 %v30
    %4955 = vmatprep.subr.mxu0 0.0
    %4956 = vmatpush1.msra.mxu0 %v29
    %4957 = vmatprep.subr.mxu0 0.0
    %4958 = vmatpush2.msra.mxu0 0.0
    %4959 = vmatprep.subr.mxu0 0.0
    %4960 = vmatpush2.msra.mxu0 0.0
    %4961 = vmatprep.subr.mxu0 0.0
    %4962 = vmatpush2.msra.mxu0 0.0
    %4963 = vmatprep.subr.mxu0 0.0
    %4964 = vmatpush2.msra.mxu0 0.0
    %4965 = vmatprep.subr.mxu0 0.0
    %4966 = vmatpush2.msra.mxu0 0.0
    %4967 = vmatprep.subr.mxu0 0.0
    %4968 = vmatpush2.msra.mxu0 0.0
    %4969 = vmatprep.subr.mxu0 0.0
    %4970 = vmatpush2.msra.mxu0 0.0
    %4971 = vmatprep.subr.mxu0 0.0
    %4972 = vmatpush2.msra.mxu0 0.0
    %4973 = vmatprep.subr.mxu0 0.0
    %4974 = vmatpush2.msra.mxu0 0.0
    %4975 = vmatprep.subr.mxu0 0.0
    %4976 = vmatpush2.msra.mxu0 0.0
    %4977 = vmatprep.subr.mxu0 0.0
    %4978 = vmatpush2.msra.mxu0 0.0
    %4979 = vmatprep.subr.mxu0 0.0
    %4980 = vmatpush2.msra.mxu0 0.0
    %4981 = vmatprep.subr.mxu0 0.0
    %4982 = vmatpush2.msra.mxu0 0.0
    %4983 = vmatprep.subr.mxu0 0.0
    %4984 = vmatpush2.msra.mxu0 0.0
    %4985 = vmatprep.subr.mxu0 0.0
    %4986 = vmatpush2.msra.mxu0 0.0
    %4987 = vmatprep.subr.mxu0 0.0
    %4988 = vmatpush2.msra.mxu0 0.0
    %4989 = vmatprep.mubr.f32.mxu0 0.0
    %4990 = vmatmul.mubr.f32.gmra.mxu0 %v4923
    %v4991 = vpop.f32.mrf.mxu0
    %v4992 = vadd.f32 0.0, %v4991
    %v4993 = vpop.f32.mrf.mxu0
    %4994 = vdwg.mxu0
    %v4995 = vadd.f32 %v3811, %v4992
    %v4996 = vtanh.pop %v4995
    %v4997 = vmul.f32 %v4996, %v231
    %v4998 = vsel %vm152, %v4997, 0.0
    %4999 = vadd.xlane.f32.xlu0 %v4998
    %v5000 = vpop.xlane.xlu0 %4999
    %v5001 = vadd.f32 %v5000, %v38
    %v5002 = vxor.u32 %v5001, 2147483648
    %v5003 = vmul.f32 %v5002, 1.442695
    %v5004 = vpow.pop %v5003
    %v5005 = vadd.f32 %v5004, 1.0
    %v5006 = vrcp.pop %v5005
    %v5007 = vmul.f32 1.0, %v5006
    %v5008 = vadd.f32 %v4916, %v5007
    %v5009 = vsub.f32 %v5008, 1.0
    %v5010 = vmax.f32 %v5009, 0.0
    %v5011 = vsub.f32 %v5007, %v5010
    %v5012 = vadd.f32 %v4915, %v4996
    %v5013 = vmul.f32 %v5011, %v4996
    %v5014 = vadd.f32 %v5012, %v5013
    %v5015 = vsel %vm4919, 1, 0
    %vm5016 = vcmp.eq.s32.totalorder %v5015, 1
    %v5017 = vsel %vm5016, %v5014, %v4915
    %v5018 = vadd.f32 %v4918, 1.0
    %v5019 = vsel %vm4919, %v5018, %v4918
    %v5020 = vrcp.pop %v5019
    %v5021 = vmul.f32 %v5017, %v5020
    %v5022 = vadd.f32 %v3805, %v4921
    %v5023 = vmul.f32 %v5021, %v1371
    %v5024 = vsel %vm152, %v5023, 0.0
    %5025 = vadd.xlane.f32.xlu0 %v5024
    %v5026 = vpop.xlane.xlu0 %5025
    %v5027 = vadd.f32 %v5026, %v40
    %vm5028 = vcmask 7168
    %v5029 = vsel %vm5028, %v1376, %v2593
    %vm5030 = vcmask 15360
    %v5031 = vsel %vm5030, %v5029, %v3810
    %vm5032 = vcmask 23552
    %v5033 = vsel %vm5032, %v5031, %v5027
    %vm5034 = vcmask 31744
    %v5035 = vsel %vm5034, %v5033, %v1364
    %vm5036 = vcmask 39936
    %v5037 = vsel %vm5036, %v5035, %v2585
    %vm5038 = vcmask 48128
    %v5039 = vsel %vm5038, %v5037, %v3802
    %vm5040 = vcmask 56320
    %v5041 = vsel %vm5040, %v5039, %v5019
    %vm5042 = vcmask 64512
    %v5043 = vsel %vm5042, %v5041, %v5022
    %vm5044 = vcmask 72704
    %v5045 = vsel %vm5044, %v5043, 0.0
    %5046 = vst [vmem:[%s3] sm:$0xff] %v5045
    // Predicated region
    $region18: #{logic_act_forward.1} parent=1 // pred_check
      _
    $region19: #{logic_act_forward.1} parent=1 // pred_check_branch
      %5048 = sbr.rel (0) target = $region21
    $region20: #{logic_act_forward.1} parent=1 // pred_region
      _
    $region21: #{logic_act_forward.1} parent=1 // pred_fallthru
      _
    // Predicated region
    $region22: #{logic_act_forward.1} parent=1 // pred_check
      _
    $region23: #{logic_act_forward.1} parent=1 // pred_check_branch
      %5050 = sbr.rel (0) target = $region25
    $region24: #{logic_act_forward.1} parent=1 // pred_region
      _
    $region25: #{logic_act_forward.1} parent=1 // pred_fallthru
      _
    %5051 = vsyncpa [#allocation3], 1

</llo_original>
